<compile_context>
chip_gen: v7x
topology: tpu7x:2x2x1
jax: 0.10.0
libtpu: 0.0.40
codegen_flags: <defaults>
</compile_context>

<pallas_src>
import math

import jax
import jax.numpy as jnp
from jax.experimental import pallas as pl
from jax.experimental.pallas import tpu as pltpu


# -----------------------------------------------------------------------------
# Kernel factories (one grid step = one batch image; taps assembled in VMEM)
# -----------------------------------------------------------------------------

def _make_stage_a_kernel(h, w, cin, cout):
    """conv1 (3x3, s=1, p=1) with folded bn2 scale, + bn2 bias, + PReLU.  bf16 out."""
    m = h * w

    def kernel(x_ref, w_ref, b_ref, a_ref, o_ref):
        # x_ref: (1, h+2, w+2, cin) bf16 halo tile; w_ref: (9, cin, cout) bf16 (scale folded)
        acc = jnp.zeros((m, cout), jnp.float32)
        for i in range(3):
            for j in range(3):
                xt = x_ref[0, i:i + h, j:j + w, :].reshape(m, cin)
                acc = acc + jnp.dot(xt, w_ref[i * 3 + j],
                                    preferred_element_type=jnp.float32)
        y = acc + b_ref[...]                              # bn2 bias (scale already in W)
        y = jnp.where(y > 0, y, y * a_ref[...])           # PReLU (per-channel slope)
        o_ref[...] = y.reshape(1, h, w, cout).astype(o_ref.dtype)

    return kernel


def _make_stage_b_kernel(ho, wo, cpl, cin, cout, stride, has_ds, hq=None):
    """conv2 (3x3, stride, p=1) with folded bn3 scale, + combined bias, + residual.

    stride == 1 : y_ref is the padded intermediate (1, ho+2, wo+2, cpl).
    stride == 2 : y_ref is the polyphase repack (1, 4*hq, wq, cpl) where
                  y_ref[0, (ri*2+rj)*hq + a, b, :] == padded_inter[2a+ri, 2b+rj, :].
    has_ds      : residual = (xs @ wd) with downsample-BN folded into wd / bias.
    otherwise   : residual = r_ref (identity skip, f32).
    """
    m = ho * wo

    def kernel(*refs):
        if has_ds:
            y_ref, xs_ref, w_ref, wd_ref, b_ref, o_ref = refs
        else:
            y_ref, r_ref, w_ref, b_ref, o_ref = refs

        acc = jnp.zeros((m, cout), jnp.float32)
        for i in range(3):
            for j in range(3):
                if stride == 1:
                    xt = y_ref[0, i:i + ho, j:j + wo, :]
                else:  # stride == 2: polyphase -> contiguous slices only
                    base = ((i % 2) * 2 + (j % 2)) * hq
                    qi, qj = i // 2, j // 2
                    xt = y_ref[0, base + qi:base + qi + ho, qj:qj + wo, :]
                acc = acc + jnp.dot(xt.reshape(m, cpl), w_ref[i * 3 + j],
                                    preferred_element_type=jnp.float32)

        acc = acc + b_ref[...]                            # bn3 bias (+ downsample-BN bias)
        if has_ds:
            acc = acc + jnp.dot(xs_ref[0].reshape(m, cin), wd_ref[...],
                                preferred_element_type=jnp.float32)
        else:
            acc = acc + r_ref[0].reshape(m, cout)         # identity residual (f32)
        o_ref[...] = acc.reshape(1, ho, wo, cout).astype(o_ref.dtype)

    return kernel


# -----------------------------------------------------------------------------
# pallas_call wrapper: 1-D grid over batch images, weights/biases resident
# -----------------------------------------------------------------------------

def _call_batched(kernel_fn, inputs, out_hw_c, out_dtype, n):
    """inputs: list of (array, batched).  batched arrays have leading dim n and are
    streamed one image per grid step; the rest (weights, biases, PReLU slope) are
    whole-array blocks resident in VMEM for the entire grid."""
    in_specs, arrays = [], []
    for arr, batched in inputs:
        if batched:
            blk = (1,) + arr.shape[1:]
            in_specs.append(pl.BlockSpec(blk, lambda b, nd=len(blk): (b,) + (0,) * (nd - 1)))
        else:
            shp = arr.shape
            in_specs.append(pl.BlockSpec(shp, lambda b, nd=len(shp): (0,) * nd))
        arrays.append(arr)

    out_blk = (1,) + out_hw_c
    out_spec = pl.BlockSpec(out_blk, lambda b, nd=len(out_blk): (b,) + (0,) * (nd - 1))

    return pl.pallas_call(
        kernel_fn,
        grid=(n,),
        in_specs=in_specs,
        out_specs=out_spec,
        out_shape=jax.ShapeDtypeStruct((n,) + out_hw_c, out_dtype),
        compiler_params=pltpu.CompilerParams(
            dimension_semantics=("parallel",),
        ),
    )(*arrays)


# -----------------------------------------------------------------------------
# Plain-JAX glue (fused by XLA under jax.jit): BN folding, weight layout, polyphase
# -----------------------------------------------------------------------------

def _bn_fold(bn, eps=2e-5):
    s = bn["gamma"] / jnp.sqrt(bn["var"] + eps)
    return s, bn["beta"] - bn["mean"] * s


def _conv_w_taps(w_oihw):
    """PyTorch (Cout,Cin,KH,KW) -> (KH*KW, Cin, Cout), taps-major (matches kernel loop)."""
    cout, cin, kh, kw = w_oihw.shape
    return jnp.transpose(w_oihw, (2, 3, 1, 0)).reshape(kh * kw, cin, cout)


def _polyphase(x_pad_nhwc, ho, wo):
    """(N, Hp, Wp, C) padded input -> (N, 4*hq, wq, C) with
    out[n, (ri*2+rj)*hq + a, b, :] = x_pad[n, 2a+ri, 2b+rj, :]."""
    n, hp, wp, c = x_pad_nhwc.shape
    hq, wq = ho + 1, wo + 1
    xq = jnp.pad(x_pad_nhwc, ((0, 0), (0, 2 * hq - hp), (0, 2 * wq - wp), (0, 0)))
    xq = xq.reshape(n, hq, 2, wq, 2, c)
    xq = jnp.transpose(xq, (0, 2, 4, 1, 3, 5))            # (N, 2, 2, hq, wq, C)
    return xq.reshape(n, 4 * hq, wq, c), hq


# -----------------------------------------------------------------------------
# BasicBlock_v3 forward (eval mode)
# -----------------------------------------------------------------------------

def basic_block_v3_forward(x_nchw, params, *, stride):
    """x_nchw: (N, Cin, H, W) f32 -> (N, planes, Ho, Wo) f32."""
    x = jnp.transpose(x_nchw, (0, 2, 3, 1)).astype(jnp.float32)   # NHWC, channels on lanes
    n, h, w, cin = x.shape
    planes = params["conv1_w"].shape[0]

    s1, b1 = _bn_fold(params["bn1"])
    s2, b2 = _bn_fold(params["bn2"])
    s3, b3 = _bn_fold(params["bn3"])
    alpha = params["prelu"].reshape(1, planes).astype(jnp.float32)

    # Fold post-conv BN scales into weights (f32), then cast to bf16 for the MXU.
    w1 = (_conv_w_taps(params["conv1_w"]) * s2[None, None, :]).astype(jnp.bfloat16)
    w2 = (_conv_w_taps(params["conv2_w"]) * s3[None, None, :]).astype(jnp.bfloat16)

    # ---- stage A: bn1 -> conv1 (3x3, s=1, p=1) -> bn2 -> PReLU   (one pallas_call)
    y1 = (x * s1 + b1).astype(jnp.bfloat16)               # eval-mode bn1, bf16 before pad
    y1p = jnp.pad(y1, ((0, 0), (1, 1), (1, 1), (0, 0)))   # halo pad once in HBM
    ka = _make_stage_a_kernel(h, w, cin, planes)
    inter = _call_batched(
        ka,
        [(y1p, True),
         (w1, False),
         (b2.reshape(1, planes).astype(jnp.float32), False),
         (alpha, False)],
        (h, w, planes), jnp.bfloat16, n)                   # (N, H, W, planes) bf16

    # ---- stage B: conv2 (3x3, stride, p=1) -> bn3 -> + residual  (one pallas_call)
    ho = (h - 1) // stride + 1
    wo = (w - 1) // stride + 1
    interp = jnp.pad(inter, ((0, 0), (1, 1), (1, 1), (0, 0)))
    if stride == 1:
        y2_in, hq = interp, None
    else:
        y2_in, hq = _polyphase(interp, ho, wo)             # polyphase repack (bf16, tiny)

    has_ds = "downsample" in params
    if has_ds:
        ds = params["downsample"]
        sd, bd = _bn_fold(ds["bn"])
        wd = (jnp.transpose(ds["conv_w"], (2, 3, 1, 0)).reshape(cin, planes)
              * sd[None, :]).astype(jnp.bfloat16)
        xs = x[:, ::stride, ::stride, :][:, :ho, :wo, :].astype(jnp.bfloat16)
        bias = (b3 + bd).reshape(1, planes).astype(jnp.float32)
        kb = _make_stage_b_kernel(ho, wo, planes, cin, planes, stride, True, hq)
        out = _call_batched(
            kb,
            [(y2_in, True), (xs, True), (w2, False), (wd, False), (bias, False)],
            (ho, wo, planes), jnp.float32, n)
    else:
        assert stride == 1 and cin == planes, "identity residual needs matching shapes"
        bias = b3.reshape(1, planes).astype(jnp.float32)
        kb = _make_stage_b_kernel(ho, wo, planes, cin, planes, stride, False, hq)
        out = _call_batched(
            kb,
            [(y2_in, True), (x, True), (w2, False), (bias, False)],
            (ho, wo, planes), jnp.float32, n)

    return jnp.transpose(out, (0, 3, 1, 2))                # back to NCHW


# -----------------------------------------------------------------------------
# Pure-JAX reference (for correctness check)
# -----------------------------------------------------------------------------

def _reference_forward(x_nchw, params, *, stride):
    x = x_nchw.astype(jnp.float32)

    def bn(v, p):
        s = p["gamma"] / jnp.sqrt(p["var"] + 2e-5)
        b = p["beta"] - p["mean"] * s
        return v * s[None, :, None, None] + b[None, :, None, None]

    def conv(v, w, s, pad):
        return jax.lax.conv_general_dilated(
            v, w, window_strides=(s, s), padding=[(pad, pad), (pad, pad)],
            dimension_numbers=("NCHW", "OIHW", "NCHW"))

    out = bn(x, params["bn1"])
    out = conv(out, params["conv1_w"], 1, 1)
    out = bn(out, params["bn2"])
    a = params["prelu"][None, :, None, None]
    out = jnp.where(out > 0, out, out * a)
    out = conv(out, params["conv2_w"], stride, 1)
    out = bn(out, params["bn3"])
    if "downsample" in params:
        r = conv(x, params["downsample"]["conv_w"], stride, 0)
        r = bn(r, params["downsample"]["bn"])
    else:
        r = x
    return out + r


# -----------------------------------------------------------------------------
# Parameter init (deterministic, mirrors the module's conventions)
# -----------------------------------------------------------------------------

def init_params(key, inplanes, planes, with_downsample):
    ks = jax.random.split(key, 8)

    def conv_w(k, cout, cin, kh, kw):
        return jax.random.normal(k, (cout, cin, kh, kw), jnp.float32) * math.sqrt(
            2.0 / (kh * kw * cout))

    def bn_p(k, c):
        k1, k2, k3, k4 = jax.random.split(k, 4)
        return {
            "gamma": jax.random.uniform(k1, (c,), jnp.float32, 0.5, 1.5),
            "beta": jax.random.normal(k2, (c,), jnp.float32) * 0.1,
            "mean": jax.random.normal(k3, (c,), jnp.float32) * 0.1,
            "var": jax.random.uniform(k4, (c,), jnp.float32, 0.5, 1.5),
        }

    p = {
        "bn1": bn_p(ks[0], inplanes),
        "conv1_w": conv_w(ks[1], planes, inplanes, 3, 3),
        "bn2": bn_p(ks[2], planes),
        "prelu": jnp.full((planes,), 0.25, jnp.float32),    # nn.PReLU default
        "conv2_w": conv_w(ks[3], planes, planes, 3, 3),
        "bn3": bn_p(ks[4], planes),
    }
    if with_downsample:
        p["downsample"] = {
            "conv_w": conv_w(ks[5], planes, inplanes, 1, 1),
            "bn": bn_p(ks[6], planes),
        }
    return p


# -----------------------------------------------------------------------------
# Main
# -----------------------------------------------------------------------------

if __name__ == "__main__":
    key = jax.random.PRNGKey(0)
    kx1, kx2, kp1, kp2 = jax.random.split(key, 4)

    forward = jax.jit(basic_block_v3_forward, static_argnames=("stride",))

    # Config 1: layer-body block, identity residual (inplanes = planes = 128, stride 1).
    x1 = jax.random.normal(kx1, (2, 128, 16, 16), jnp.float32)
    params1 = init_params(kp1, 128, 128, with_downsample=False)
    out1 = jax.block_until_ready(forward(x1, params1, stride=1))
    ref1 = _reference_forward(x1, params1, stride=1)
    assert out1.shape == ref1.shape == (2, 128, 16, 16), out1.shape

    # Config 2: layer-head block, 1x1-conv + BN downsample (64 -> 128 channels, stride 2).
    x2 = jax.random.normal(kx2, (2, 64, 16, 16), jnp.float32)
    params2 = init_params(kp2, 64, 128, with_downsample=True)
    out2 = jax.block_until_ready(forward(x2, params2, stride=2))
    ref2 = _reference_forward(x2, params2, stride=2)
    assert out2.shape == ref2.shape == (2, 128, 8, 8), out2.shape

    for out, ref in ((out1, ref1), (out2, ref2)):
        assert bool(jnp.all(jnp.isfinite(out)))
        err = float(jnp.max(jnp.abs(out - ref)) / (jnp.max(jnp.abs(ref)) + 1e-6))
        assert err < 0.08, f"mismatch vs reference: rel_err={err}"   # bf16-matmul tolerance

    print("KERNEL_OK")
</pallas_src>

<mosaic_0001>
module attributes {stable_mosaic.version = 11 : i64} {
  func.func @kernel(%arg0: i32, %arg1: memref<1x18x18x128xbf16, #tpu.memory_space<vmem>>, %arg2: memref<1x16x16x128xf32, #tpu.memory_space<vmem>>, %arg3: memref<9x128x128xbf16, #tpu.memory_space<vmem>>, %arg4: memref<1x128xf32, #tpu.memory_space<vmem>>, %arg5: memref<1x16x16x128xf32, #tpu.memory_space<vmem>>) attributes {dimension_semantics = [#tpu.dimension_semantics<parallel>], iteration_bounds = array<i64: 2>, scalar_prefetch = 0 : i64, scratch_operands = 0 : i64, tpu.core_type = #tpu.core_type<tc>, window_params = [{transform_indices = @transform_0, window_bounds = array<i64: 1, 18, 18, 128>}, {transform_indices = @transform_1, window_bounds = array<i64: 1, 16, 16, 128>}, {pipeline_mode = #tpu.pipeline_mode<synchronous>, transform_indices = @transform_2, window_bounds = array<i64: 9, 128, 128>}, {pipeline_mode = #tpu.pipeline_mode<synchronous>, transform_indices = @transform_3, window_bounds = array<i64: 1, 128>}, {transform_indices = @transform_4, window_bounds = array<i64: 1, 16, 16, 128>}]} {
    %cst = arith.constant 0.000000e+00 : f32
    %0 = vector.broadcast %cst : f32 to vector<256x128xf32>
    %c0 = arith.constant 0 : index
    %c0_0 = arith.constant 0 : index
    %c0_1 = arith.constant 0 : index
    %c0_2 = arith.constant 0 : index
    %1 = vector.load %arg1[%c0, %c0_0, %c0_1, %c0_2] : memref<1x18x18x128xbf16, #tpu.memory_space<vmem>>, vector<1x16x16x128xbf16>
    %2 = vector.shape_cast %1 : vector<1x16x16x128xbf16> to vector<16x16x128xbf16>
    %3 = vector.shape_cast %2 : vector<16x16x128xbf16> to vector<256x128xbf16>
    %c0_3 = arith.constant 0 : index
    %c0_4 = arith.constant 0 : index
    %c0_5 = arith.constant 0 : index
    %4 = vector.load %arg3[%c0_3, %c0_4, %c0_5] : memref<9x128x128xbf16, #tpu.memory_space<vmem>>, vector<1x128x128xbf16>
    %5 = vector.shape_cast %4 : vector<1x128x128xbf16> to vector<128x128xbf16>
    %cst_6 = arith.constant dense<0.000000e+00> : vector<256x128xf32>
    %6 = tpu.matmul %3, %5, %cst_6 {dimension_numbers = #tpu.dot_dimension_numbers<[1], [0], [0], [1], [0, 0, 1, 1], [], []>} : vector<256x128xbf16>, vector<128x128xbf16>, vector<256x128xf32> -> vector<256x128xf32>
    %7 = arith.addf %0, %6 : vector<256x128xf32>
    %c0_7 = arith.constant 0 : index
    %c0_8 = arith.constant 0 : index
    %c1 = arith.constant 1 : index
    %c0_9 = arith.constant 0 : index
    %8 = vector.load %arg1[%c0_7, %c0_8, %c1, %c0_9] : memref<1x18x18x128xbf16, #tpu.memory_space<vmem>>, vector<1x16x16x128xbf16>
    %9 = vector.shape_cast %8 : vector<1x16x16x128xbf16> to vector<16x16x128xbf16>
    %10 = vector.shape_cast %9 : vector<16x16x128xbf16> to vector<256x128xbf16>
    %c1_10 = arith.constant 1 : index
    %c0_11 = arith.constant 0 : index
    %c0_12 = arith.constant 0 : index
    %11 = vector.load %arg3[%c1_10, %c0_11, %c0_12] : memref<9x128x128xbf16, #tpu.memory_space<vmem>>, vector<1x128x128xbf16>
    %12 = vector.shape_cast %11 : vector<1x128x128xbf16> to vector<128x128xbf16>
    %cst_13 = arith.constant dense<0.000000e+00> : vector<256x128xf32>
    %13 = tpu.matmul %10, %12, %cst_13 {dimension_numbers = #tpu.dot_dimension_numbers<[1], [0], [0], [1], [0, 0, 1, 1], [], []>} : vector<256x128xbf16>, vector<128x128xbf16>, vector<256x128xf32> -> vector<256x128xf32>
    %14 = arith.addf %7, %13 : vector<256x128xf32>
    %c0_14 = arith.constant 0 : index
    %c0_15 = arith.constant 0 : index
    %c2 = arith.constant 2 : index
    %c0_16 = arith.constant 0 : index
    %15 = vector.load %arg1[%c0_14, %c0_15, %c2, %c0_16] : memref<1x18x18x128xbf16, #tpu.memory_space<vmem>>, vector<1x16x16x128xbf16>
    %16 = vector.shape_cast %15 : vector<1x16x16x128xbf16> to vector<16x16x128xbf16>
    %17 = vector.shape_cast %16 : vector<16x16x128xbf16> to vector<256x128xbf16>
    %c2_17 = arith.constant 2 : index
    %c0_18 = arith.constant 0 : index
    %c0_19 = arith.constant 0 : index
    %18 = vector.load %arg3[%c2_17, %c0_18, %c0_19] : memref<9x128x128xbf16, #tpu.memory_space<vmem>>, vector<1x128x128xbf16>
    %19 = vector.shape_cast %18 : vector<1x128x128xbf16> to vector<128x128xbf16>
    %cst_20 = arith.constant dense<0.000000e+00> : vector<256x128xf32>
    %20 = tpu.matmul %17, %19, %cst_20 {dimension_numbers = #tpu.dot_dimension_numbers<[1], [0], [0], [1], [0, 0, 1, 1], [], []>} : vector<256x128xbf16>, vector<128x128xbf16>, vector<256x128xf32> -> vector<256x128xf32>
    %21 = arith.addf %14, %20 : vector<256x128xf32>
    %c0_21 = arith.constant 0 : index
    %c1_22 = arith.constant 1 : index
    %c0_23 = arith.constant 0 : index
    %c0_24 = arith.constant 0 : index
    %22 = vector.load %arg1[%c0_21, %c1_22, %c0_23, %c0_24] : memref<1x18x18x128xbf16, #tpu.memory_space<vmem>>, vector<1x16x16x128xbf16>
    %23 = vector.shape_cast %22 : vector<1x16x16x128xbf16> to vector<16x16x128xbf16>
    %24 = vector.shape_cast %23 : vector<16x16x128xbf16> to vector<256x128xbf16>
    %c3 = arith.constant 3 : index
    %c0_25 = arith.constant 0 : index
    %c0_26 = arith.constant 0 : index
    %25 = vector.load %arg3[%c3, %c0_25, %c0_26] : memref<9x128x128xbf16, #tpu.memory_space<vmem>>, vector<1x128x128xbf16>
    %26 = vector.shape_cast %25 : vector<1x128x128xbf16> to vector<128x128xbf16>
    %cst_27 = arith.constant dense<0.000000e+00> : vector<256x128xf32>
    %27 = tpu.matmul %24, %26, %cst_27 {dimension_numbers = #tpu.dot_dimension_numbers<[1], [0], [0], [1], [0, 0, 1, 1], [], []>} : vector<256x128xbf16>, vector<128x128xbf16>, vector<256x128xf32> -> vector<256x128xf32>
    %28 = arith.addf %21, %27 : vector<256x128xf32>
    %c0_28 = arith.constant 0 : index
    %c1_29 = arith.constant 1 : index
    %c1_30 = arith.constant 1 : index
    %c0_31 = arith.constant 0 : index
    %29 = vector.load %arg1[%c0_28, %c1_29, %c1_30, %c0_31] : memref<1x18x18x128xbf16, #tpu.memory_space<vmem>>, vector<1x16x16x128xbf16>
    %30 = vector.shape_cast %29 : vector<1x16x16x128xbf16> to vector<16x16x128xbf16>
    %31 = vector.shape_cast %30 : vector<16x16x128xbf16> to vector<256x128xbf16>
    %c4 = arith.constant 4 : index
    %c0_32 = arith.constant 0 : index
    %c0_33 = arith.constant 0 : index
    %32 = vector.load %arg3[%c4, %c0_32, %c0_33] : memref<9x128x128xbf16, #tpu.memory_space<vmem>>, vector<1x128x128xbf16>
    %33 = vector.shape_cast %32 : vector<1x128x128xbf16> to vector<128x128xbf16>
    %cst_34 = arith.constant dense<0.000000e+00> : vector<256x128xf32>
    %34 = tpu.matmul %31, %33, %cst_34 {dimension_numbers = #tpu.dot_dimension_numbers<[1], [0], [0], [1], [0, 0, 1, 1], [], []>} : vector<256x128xbf16>, vector<128x128xbf16>, vector<256x128xf32> -> vector<256x128xf32>
    %35 = arith.addf %28, %34 : vector<256x128xf32>
    %c0_35 = arith.constant 0 : index
    %c1_36 = arith.constant 1 : index
    %c2_37 = arith.constant 2 : index
    %c0_38 = arith.constant 0 : index
    %36 = vector.load %arg1[%c0_35, %c1_36, %c2_37, %c0_38] : memref<1x18x18x128xbf16, #tpu.memory_space<vmem>>, vector<1x16x16x128xbf16>
    %37 = vector.shape_cast %36 : vector<1x16x16x128xbf16> to vector<16x16x128xbf16>
    %38 = vector.shape_cast %37 : vector<16x16x128xbf16> to vector<256x128xbf16>
    %c5 = arith.constant 5 : index
    %c0_39 = arith.constant 0 : index
    %c0_40 = arith.constant 0 : index
    %39 = vector.load %arg3[%c5, %c0_39, %c0_40] : memref<9x128x128xbf16, #tpu.memory_space<vmem>>, vector<1x128x128xbf16>
    %40 = vector.shape_cast %39 : vector<1x128x128xbf16> to vector<128x128xbf16>
    %cst_41 = arith.constant dense<0.000000e+00> : vector<256x128xf32>
    %41 = tpu.matmul %38, %40, %cst_41 {dimension_numbers = #tpu.dot_dimension_numbers<[1], [0], [0], [1], [0, 0, 1, 1], [], []>} : vector<256x128xbf16>, vector<128x128xbf16>, vector<256x128xf32> -> vector<256x128xf32>
    %42 = arith.addf %35, %41 : vector<256x128xf32>
    %c0_42 = arith.constant 0 : index
    %c2_43 = arith.constant 2 : index
    %c0_44 = arith.constant 0 : index
    %c0_45 = arith.constant 0 : index
    %43 = vector.load %arg1[%c0_42, %c2_43, %c0_44, %c0_45] : memref<1x18x18x128xbf16, #tpu.memory_space<vmem>>, vector<1x16x16x128xbf16>
    %44 = vector.shape_cast %43 : vector<1x16x16x128xbf16> to vector<16x16x128xbf16>
    %45 = vector.shape_cast %44 : vector<16x16x128xbf16> to vector<256x128xbf16>
    %c6 = arith.constant 6 : index
    %c0_46 = arith.constant 0 : index
    %c0_47 = arith.constant 0 : index
    %46 = vector.load %arg3[%c6, %c0_46, %c0_47] : memref<9x128x128xbf16, #tpu.memory_space<vmem>>, vector<1x128x128xbf16>
    %47 = vector.shape_cast %46 : vector<1x128x128xbf16> to vector<128x128xbf16>
    %cst_48 = arith.constant dense<0.000000e+00> : vector<256x128xf32>
    %48 = tpu.matmul %45, %47, %cst_48 {dimension_numbers = #tpu.dot_dimension_numbers<[1], [0], [0], [1], [0, 0, 1, 1], [], []>} : vector<256x128xbf16>, vector<128x128xbf16>, vector<256x128xf32> -> vector<256x128xf32>
    %49 = arith.addf %42, %48 : vector<256x128xf32>
    %c0_49 = arith.constant 0 : index
    %c2_50 = arith.constant 2 : index
    %c1_51 = arith.constant 1 : index
    %c0_52 = arith.constant 0 : index
    %50 = vector.load %arg1[%c0_49, %c2_50, %c1_51, %c0_52] : memref<1x18x18x128xbf16, #tpu.memory_space<vmem>>, vector<1x16x16x128xbf16>
    %51 = vector.shape_cast %50 : vector<1x16x16x128xbf16> to vector<16x16x128xbf16>
    %52 = vector.shape_cast %51 : vector<16x16x128xbf16> to vector<256x128xbf16>
    %c7 = arith.constant 7 : index
    %c0_53 = arith.constant 0 : index
    %c0_54 = arith.constant 0 : index
    %53 = vector.load %arg3[%c7, %c0_53, %c0_54] : memref<9x128x128xbf16, #tpu.memory_space<vmem>>, vector<1x128x128xbf16>
    %54 = vector.shape_cast %53 : vector<1x128x128xbf16> to vector<128x128xbf16>
    %cst_55 = arith.constant dense<0.000000e+00> : vector<256x128xf32>
    %55 = tpu.matmul %52, %54, %cst_55 {dimension_numbers = #tpu.dot_dimension_numbers<[1], [0], [0], [1], [0, 0, 1, 1], [], []>} : vector<256x128xbf16>, vector<128x128xbf16>, vector<256x128xf32> -> vector<256x128xf32>
    %56 = arith.addf %49, %55 : vector<256x128xf32>
    %c0_56 = arith.constant 0 : index
    %c2_57 = arith.constant 2 : index
    %c2_58 = arith.constant 2 : index
    %c0_59 = arith.constant 0 : index
    %57 = vector.load %arg1[%c0_56, %c2_57, %c2_58, %c0_59] : memref<1x18x18x128xbf16, #tpu.memory_space<vmem>>, vector<1x16x16x128xbf16>
    %58 = vector.shape_cast %57 : vector<1x16x16x128xbf16> to vector<16x16x128xbf16>
    %59 = vector.shape_cast %58 : vector<16x16x128xbf16> to vector<256x128xbf16>
    %c8 = arith.constant 8 : index
    %c0_60 = arith.constant 0 : index
    %c0_61 = arith.constant 0 : index
    %60 = vector.load %arg3[%c8, %c0_60, %c0_61] : memref<9x128x128xbf16, #tpu.memory_space<vmem>>, vector<1x128x128xbf16>
    %61 = vector.shape_cast %60 : vector<1x128x128xbf16> to vector<128x128xbf16>
    %cst_62 = arith.constant dense<0.000000e+00> : vector<256x128xf32>
    %62 = tpu.matmul %59, %61, %cst_62 {dimension_numbers = #tpu.dot_dimension_numbers<[1], [0], [0], [1], [0, 0, 1, 1], [], []>} : vector<256x128xbf16>, vector<128x128xbf16>, vector<256x128xf32> -> vector<256x128xf32>
    %63 = arith.addf %56, %62 : vector<256x128xf32>
    %c0_63 = arith.constant 0 : index
    %c0_64 = arith.constant 0 : index
    %64 = vector.load %arg4[%c0_63, %c0_64] : memref<1x128xf32, #tpu.memory_space<vmem>>, vector<1x128xf32>
    %65 = vector.broadcast %64 : vector<1x128xf32> to vector<256x128xf32>
    %66 = arith.addf %63, %65 : vector<256x128xf32>
    %c0_65 = arith.constant 0 : index
    %c0_66 = arith.constant 0 : index
    %c0_67 = arith.constant 0 : index
    %c0_68 = arith.constant 0 : index
    %67 = vector.load %arg2[%c0_65, %c0_66, %c0_67, %c0_68] : memref<1x16x16x128xf32, #tpu.memory_space<vmem>>, vector<1x16x16x128xf32>
    %68 = vector.shape_cast %67 : vector<1x16x16x128xf32> to vector<16x16x128xf32>
    %69 = vector.shape_cast %68 : vector<16x16x128xf32> to vector<256x128xf32>
    %70 = arith.addf %66, %69 : vector<256x128xf32>
    %71 = vector.shape_cast %70 : vector<256x128xf32> to vector<1x16x16x128xf32>
    %c0_69 = arith.constant 0 : index
    %c0_70 = arith.constant 0 : index
    %c0_71 = arith.constant 0 : index
    %c0_72 = arith.constant 0 : index
    %72 = vector.load %arg5[%c0_69, %c0_70, %c0_71, %c0_72] : memref<1x16x16x128xf32, #tpu.memory_space<vmem>>, vector<1x16x16x128xf32>
    tpu.vector_store %arg5[%c0_69, %c0_70, %c0_71, %c0_72], %71 {strides = array<i32>} : memref<1x16x16x128xf32, #tpu.memory_space<vmem>>, vector<1x16x16x128xf32>,
    return
  }
  func.func @transform_0(%arg0: i32) -> (i32, i32, i32, i32) {
    %c0_i32 = arith.constant 0 : i32
    %c0_i32_0 = arith.constant 0 : i32
    %c0_i32_1 = arith.constant 0 : i32
    %c0_i32_2 = arith.constant 0 : i32
    return %arg0, %c0_i32, %c0_i32_0, %c0_i32_1 : i32, i32, i32, i32
  }
  func.func @transform_1(%arg0: i32) -> (i32, i32, i32, i32) {
    %c0_i32 = arith.constant 0 : i32
    %c0_i32_0 = arith.constant 0 : i32
    %c0_i32_1 = arith.constant 0 : i32
    %c0_i32_2 = arith.constant 0 : i32
    return %arg0, %c0_i32, %c0_i32_0, %c0_i32_1 : i32, i32, i32, i32
  }
  func.func @transform_2(%arg0: i32) -> (i32, i32, i32) {
    %c0_i32 = arith.constant 0 : i32
    %c0_i32_0 = arith.constant 0 : i32
    %c0_i32_1 = arith.constant 0 : i32
    %c0_i32_2 = arith.constant 0 : i32
    return %c0_i32, %c0_i32_0, %c0_i32_1 : i32, i32, i32
  }
  func.func @transform_3(%arg0: i32) -> (i32, i32) {
    %c0_i32 = arith.constant 0 : i32
    %c0_i32_0 = arith.constant 0 : i32
    %c0_i32_1 = arith.constant 0 : i32
    return %c0_i32, %c0_i32_0 : i32, i32
  }
  func.func @transform_4(%arg0: i32) -> (i32, i32, i32, i32) {
    %c0_i32 = arith.constant 0 : i32
    %c0_i32_0 = arith.constant 0 : i32
    %c0_i32_1 = arith.constant 0 : i32
    %c0_i32_2 = arith.constant 0 : i32
    return %arg0, %c0_i32, %c0_i32_0, %c0_i32_1 : i32, i32, i32, i32
  }
}

module attributes {stable_mosaic.version = 11 : i64} {
  func.func @kernel(%arg0: i32, %arg1: memref<1x18x18x128xbf16, #tpu.memory_space<vmem>>, %arg2: memref<9x128x128xbf16, #tpu.memory_space<vmem>>, %arg3: memref<1x128xf32, #tpu.memory_space<vmem>>, %arg4: memref<1x128xf32, #tpu.memory_space<vmem>>, %arg5: memref<1x16x16x128xbf16, #tpu.memory_space<vmem>>) attributes {dimension_semantics = [#tpu.dimension_semantics<parallel>], iteration_bounds = array<i64: 2>, scalar_prefetch = 0 : i64, scratch_operands = 0 : i64, tpu.core_type = #tpu.core_type<tc>, window_params = [{transform_indices = @transform_0, window_bounds = array<i64: 1, 18, 18, 128>}, {pipeline_mode = #tpu.pipeline_mode<synchronous>, transform_indices = @transform_1, window_bounds = array<i64: 9, 128, 128>}, {pipeline_mode = #tpu.pipeline_mode<synchronous>, transform_indices = @transform_2, window_bounds = array<i64: 1, 128>}, {pipeline_mode = #tpu.pipeline_mode<synchronous>, transform_indices = @transform_3, window_bounds = array<i64: 1, 128>}, {transform_indices = @transform_4, window_bounds = array<i64: 1, 16, 16, 128>}]} {
    %cst = arith.constant 0.000000e+00 : f32
    %0 = vector.broadcast %cst : f32 to vector<256x128xf32>
    %c0 = arith.constant 0 : index
    %c0_0 = arith.constant 0 : index
    %c0_1 = arith.constant 0 : index
    %c0_2 = arith.constant 0 : index
    %1 = vector.load %arg1[%c0, %c0_0, %c0_1, %c0_2] : memref<1x18x18x128xbf16, #tpu.memory_space<vmem>>, vector<1x16x16x128xbf16>
    %2 = vector.shape_cast %1 : vector<1x16x16x128xbf16> to vector<16x16x128xbf16>
    %3 = vector.shape_cast %2 : vector<16x16x128xbf16> to vector<256x128xbf16>
    %c0_3 = arith.constant 0 : index
    %c0_4 = arith.constant 0 : index
    %c0_5 = arith.constant 0 : index
    %4 = vector.load %arg2[%c0_3, %c0_4, %c0_5] : memref<9x128x128xbf16, #tpu.memory_space<vmem>>, vector<1x128x128xbf16>
    %5 = vector.shape_cast %4 : vector<1x128x128xbf16> to vector<128x128xbf16>
    %cst_6 = arith.constant dense<0.000000e+00> : vector<256x128xf32>
    %6 = tpu.matmul %3, %5, %cst_6 {dimension_numbers = #tpu.dot_dimension_numbers<[1], [0], [0], [1], [0, 0, 1, 1], [], []>} : vector<256x128xbf16>, vector<128x128xbf16>, vector<256x128xf32> -> vector<256x128xf32>
    %7 = arith.addf %0, %6 : vector<256x128xf32>
    %c0_7 = arith.constant 0 : index
    %c0_8 = arith.constant 0 : index
    %c1 = arith.constant 1 : index
    %c0_9 = arith.constant 0 : index
    %8 = vector.load %arg1[%c0_7, %c0_8, %c1, %c0_9] : memref<1x18x18x128xbf16, #tpu.memory_space<vmem>>, vector<1x16x16x128xbf16>
    %9 = vector.shape_cast %8 : vector<1x16x16x128xbf16> to vector<16x16x128xbf16>
    %10 = vector.shape_cast %9 : vector<16x16x128xbf16> to vector<256x128xbf16>
    %c1_10 = arith.constant 1 : index
    %c0_11 = arith.constant 0 : index
    %c0_12 = arith.constant 0 : index
    %11 = vector.load %arg2[%c1_10, %c0_11, %c0_12] : memref<9x128x128xbf16, #tpu.memory_space<vmem>>, vector<1x128x128xbf16>
    %12 = vector.shape_cast %11 : vector<1x128x128xbf16> to vector<128x128xbf16>
    %cst_13 = arith.constant dense<0.000000e+00> : vector<256x128xf32>
    %13 = tpu.matmul %10, %12, %cst_13 {dimension_numbers = #tpu.dot_dimension_numbers<[1], [0], [0], [1], [0, 0, 1, 1], [], []>} : vector<256x128xbf16>, vector<128x128xbf16>, vector<256x128xf32> -> vector<256x128xf32>
    %14 = arith.addf %7, %13 : vector<256x128xf32>
    %c0_14 = arith.constant 0 : index
    %c0_15 = arith.constant 0 : index
    %c2 = arith.constant 2 : index
    %c0_16 = arith.constant 0 : index
    %15 = vector.load %arg1[%c0_14, %c0_15, %c2, %c0_16] : memref<1x18x18x128xbf16, #tpu.memory_space<vmem>>, vector<1x16x16x128xbf16>
    %16 = vector.shape_cast %15 : vector<1x16x16x128xbf16> to vector<16x16x128xbf16>
    %17 = vector.shape_cast %16 : vector<16x16x128xbf16> to vector<256x128xbf16>
    %c2_17 = arith.constant 2 : index
    %c0_18 = arith.constant 0 : index
    %c0_19 = arith.constant 0 : index
    %18 = vector.load %arg2[%c2_17, %c0_18, %c0_19] : memref<9x128x128xbf16, #tpu.memory_space<vmem>>, vector<1x128x128xbf16>
    %19 = vector.shape_cast %18 : vector<1x128x128xbf16> to vector<128x128xbf16>
    %cst_20 = arith.constant dense<0.000000e+00> : vector<256x128xf32>
    %20 = tpu.matmul %17, %19, %cst_20 {dimension_numbers = #tpu.dot_dimension_numbers<[1], [0], [0], [1], [0, 0, 1, 1], [], []>} : vector<256x128xbf16>, vector<128x128xbf16>, vector<256x128xf32> -> vector<256x128xf32>
    %21 = arith.addf %14, %20 : vector<256x128xf32>
    %c0_21 = arith.constant 0 : index
    %c1_22 = arith.constant 1 : index
    %c0_23 = arith.constant 0 : index
    %c0_24 = arith.constant 0 : index
    %22 = vector.load %arg1[%c0_21, %c1_22, %c0_23, %c0_24] : memref<1x18x18x128xbf16, #tpu.memory_space<vmem>>, vector<1x16x16x128xbf16>
    %23 = vector.shape_cast %22 : vector<1x16x16x128xbf16> to vector<16x16x128xbf16>
    %24 = vector.shape_cast %23 : vector<16x16x128xbf16> to vector<256x128xbf16>
    %c3 = arith.constant 3 : index
    %c0_25 = arith.constant 0 : index
    %c0_26 = arith.constant 0 : index
    %25 = vector.load %arg2[%c3, %c0_25, %c0_26] : memref<9x128x128xbf16, #tpu.memory_space<vmem>>, vector<1x128x128xbf16>
    %26 = vector.shape_cast %25 : vector<1x128x128xbf16> to vector<128x128xbf16>
    %cst_27 = arith.constant dense<0.000000e+00> : vector<256x128xf32>
    %27 = tpu.matmul %24, %26, %cst_27 {dimension_numbers = #tpu.dot_dimension_numbers<[1], [0], [0], [1], [0, 0, 1, 1], [], []>} : vector<256x128xbf16>, vector<128x128xbf16>, vector<256x128xf32> -> vector<256x128xf32>
    %28 = arith.addf %21, %27 : vector<256x128xf32>
    %c0_28 = arith.constant 0 : index
    %c1_29 = arith.constant 1 : index
    %c1_30 = arith.constant 1 : index
    %c0_31 = arith.constant 0 : index
    %29 = vector.load %arg1[%c0_28, %c1_29, %c1_30, %c0_31] : memref<1x18x18x128xbf16, #tpu.memory_space<vmem>>, vector<1x16x16x128xbf16>
    %30 = vector.shape_cast %29 : vector<1x16x16x128xbf16> to vector<16x16x128xbf16>
    %31 = vector.shape_cast %30 : vector<16x16x128xbf16> to vector<256x128xbf16>
    %c4 = arith.constant 4 : index
    %c0_32 = arith.constant 0 : index
    %c0_33 = arith.constant 0 : index
    %32 = vector.load %arg2[%c4, %c0_32, %c0_33] : memref<9x128x128xbf16, #tpu.memory_space<vmem>>, vector<1x128x128xbf16>
    %33 = vector.shape_cast %32 : vector<1x128x128xbf16> to vector<128x128xbf16>
    %cst_34 = arith.constant dense<0.000000e+00> : vector<256x128xf32>
    %34 = tpu.matmul %31, %33, %cst_34 {dimension_numbers = #tpu.dot_dimension_numbers<[1], [0], [0], [1], [0, 0, 1, 1], [], []>} : vector<256x128xbf16>, vector<128x128xbf16>, vector<256x128xf32> -> vector<256x128xf32>
    %35 = arith.addf %28, %34 : vector<256x128xf32>
    %c0_35 = arith.constant 0 : index
    %c1_36 = arith.constant 1 : index
    %c2_37 = arith.constant 2 : index
    %c0_38 = arith.constant 0 : index
    %36 = vector.load %arg1[%c0_35, %c1_36, %c2_37, %c0_38] : memref<1x18x18x128xbf16, #tpu.memory_space<vmem>>, vector<1x16x16x128xbf16>
    %37 = vector.shape_cast %36 : vector<1x16x16x128xbf16> to vector<16x16x128xbf16>
    %38 = vector.shape_cast %37 : vector<16x16x128xbf16> to vector<256x128xbf16>
    %c5 = arith.constant 5 : index
    %c0_39 = arith.constant 0 : index
    %c0_40 = arith.constant 0 : index
    %39 = vector.load %arg2[%c5, %c0_39, %c0_40] : memref<9x128x128xbf16, #tpu.memory_space<vmem>>, vector<1x128x128xbf16>
    %40 = vector.shape_cast %39 : vector<1x128x128xbf16> to vector<128x128xbf16>
    %cst_41 = arith.constant dense<0.000000e+00> : vector<256x128xf32>
    %41 = tpu.matmul %38, %40, %cst_41 {dimension_numbers = #tpu.dot_dimension_numbers<[1], [0], [0], [1], [0, 0, 1, 1], [], []>} : vector<256x128xbf16>, vector<128x128xbf16>, vector<256x128xf32> -> vector<256x128xf32>
    %42 = arith.addf %35, %41 : vector<256x128xf32>
    %c0_42 = arith.constant 0 : index
    %c2_43 = arith.constant 2 : index
    %c0_44 = arith.constant 0 : index
    %c0_45 = arith.constant 0 : index
    %43 = vector.load %arg1[%c0_42, %c2_43, %c0_44, %c0_45] : memref<1x18x18x128xbf16, #tpu.memory_space<vmem>>, vector<1x16x16x128xbf16>
    %44 = vector.shape_cast %43 : vector<1x16x16x128xbf16> to vector<16x16x128xbf16>
    %45 = vector.shape_cast %44 : vector<16x16x128xbf16> to vector<256x128xbf16>
    %c6 = arith.constant 6 : index
    %c0_46 = arith.constant 0 : index
    %c0_47 = arith.constant 0 : index
    %46 = vector.load %arg2[%c6, %c0_46, %c0_47] : memref<9x128x128xbf16, #tpu.memory_space<vmem>>, vector<1x128x128xbf16>
    %47 = vector.shape_cast %46 : vector<1x128x128xbf16> to vector<128x128xbf16>
    %cst_48 = arith.constant dense<0.000000e+00> : vector<256x128xf32>
    %48 = tpu.matmul %45, %47, %cst_48 {dimension_numbers = #tpu.dot_dimension_numbers<[1], [0], [0], [1], [0, 0, 1, 1], [], []>} : vector<256x128xbf16>, vector<128x128xbf16>, vector<256x128xf32> -> vector<256x128xf32>
    %49 = arith.addf %42, %48 : vector<256x128xf32>
    %c0_49 = arith.constant 0 : index
    %c2_50 = arith.constant 2 : index
    %c1_51 = arith.constant 1 : index
    %c0_52 = arith.constant 0 : index
    %50 = vector.load %arg1[%c0_49, %c2_50, %c1_51, %c0_52] : memref<1x18x18x128xbf16, #tpu.memory_space<vmem>>, vector<1x16x16x128xbf16>
    %51 = vector.shape_cast %50 : vector<1x16x16x128xbf16> to vector<16x16x128xbf16>
    %52 = vector.shape_cast %51 : vector<16x16x128xbf16> to vector<256x128xbf16>
    %c7 = arith.constant 7 : index
    %c0_53 = arith.constant 0 : index
    %c0_54 = arith.constant 0 : index
    %53 = vector.load %arg2[%c7, %c0_53, %c0_54] : memref<9x128x128xbf16, #tpu.memory_space<vmem>>, vector<1x128x128xbf16>
    %54 = vector.shape_cast %53 : vector<1x128x128xbf16> to vector<128x128xbf16>
    %cst_55 = arith.constant dense<0.000000e+00> : vector<256x128xf32>
    %55 = tpu.matmul %52, %54, %cst_55 {dimension_numbers = #tpu.dot_dimension_numbers<[1], [0], [0], [1], [0, 0, 1, 1], [], []>} : vector<256x128xbf16>, vector<128x128xbf16>, vector<256x128xf32> -> vector<256x128xf32>
    %56 = arith.addf %49, %55 : vector<256x128xf32>
    %c0_56 = arith.constant 0 : index
    %c2_57 = arith.constant 2 : index
    %c2_58 = arith.constant 2 : index
    %c0_59 = arith.constant 0 : index
    %57 = vector.load %arg1[%c0_56, %c2_57, %c2_58, %c0_59] : memref<1x18x18x128xbf16, #tpu.memory_space<vmem>>, vector<1x16x16x128xbf16>
    %58 = vector.shape_cast %57 : vector<1x16x16x128xbf16> to vector<16x16x128xbf16>
    %59 = vector.shape_cast %58 : vector<16x16x128xbf16> to vector<256x128xbf16>
    %c8 = arith.constant 8 : index
    %c0_60 = arith.constant 0 : index
    %c0_61 = arith.constant 0 : index
    %60 = vector.load %arg2[%c8, %c0_60, %c0_61] : memref<9x128x128xbf16, #tpu.memory_space<vmem>>, vector<1x128x128xbf16>
    %61 = vector.shape_cast %60 : vector<1x128x128xbf16> to vector<128x128xbf16>
    %cst_62 = arith.constant dense<0.000000e+00> : vector<256x128xf32>
    %62 = tpu.matmul %59, %61, %cst_62 {dimension_numbers = #tpu.dot_dimension_numbers<[1], [0], [0], [1], [0, 0, 1, 1], [], []>} : vector<256x128xbf16>, vector<128x128xbf16>, vector<256x128xf32> -> vector<256x128xf32>
    %63 = arith.addf %56, %62 : vector<256x128xf32>
    %c0_63 = arith.constant 0 : index
    %c0_64 = arith.constant 0 : index
    %64 = vector.load %arg3[%c0_63, %c0_64] : memref<1x128xf32, #tpu.memory_space<vmem>>, vector<1x128xf32>
    %65 = vector.broadcast %64 : vector<1x128xf32> to vector<256x128xf32>
    %66 = arith.addf %63, %65 : vector<256x128xf32>
    %cst_65 = arith.constant 0.000000e+00 : f32
    %67 = vector.broadcast %cst_65 : f32 to vector<256x128xf32>
    %68 = arith.cmpf ogt, %66, %67 : vector<256x128xf32>
    %c0_66 = arith.constant 0 : index
    %c0_67 = arith.constant 0 : index
    %69 = vector.load %arg4[%c0_66, %c0_67] : memref<1x128xf32, #tpu.memory_space<vmem>>, vector<1x128xf32>
    %70 = vector.broadcast %69 : vector<1x128xf32> to vector<256x128xf32>
    %71 = arith.mulf %66, %70 : vector<256x128xf32>
    %72 = arith.select %68, %66, %71 : vector<256x128xi1>, vector<256x128xf32>
    %73 = vector.shape_cast %72 : vector<256x128xf32> to vector<1x16x16x128xf32>
    %74 = arith.truncf %73 : vector<1x16x16x128xf32> to vector<1x16x16x128xbf16>
    %c0_68 = arith.constant 0 : index
    %c0_69 = arith.constant 0 : index
    %c0_70 = arith.constant 0 : index
    %c0_71 = arith.constant 0 : index
    %75 = vector.load %arg5[%c0_68, %c0_69, %c0_70, %c0_71] : memref<1x16x16x128xbf16, #tpu.memory_space<vmem>>, vector<1x16x16x128xbf16>
    tpu.vector_store %arg5[%c0_68, %c0_69, %c0_70, %c0_71], %74 {strides = array<i32>} : memref<1x16x16x128xbf16, #tpu.memory_space<vmem>>, vector<1x16x16x128xbf16>,
    return
  }
  func.func @transform_0(%arg0: i32) -> (i32, i32, i32, i32) {
    %c0_i32 = arith.constant 0 : i32
    %c0_i32_0 = arith.constant 0 : i32
    %c0_i32_1 = arith.constant 0 : i32
    %c0_i32_2 = arith.constant 0 : i32
    return %arg0, %c0_i32, %c0_i32_0, %c0_i32_1 : i32, i32, i32, i32
  }
  func.func @transform_1(%arg0: i32) -> (i32, i32, i32) {
    %c0_i32 = arith.constant 0 : i32
    %c0_i32_0 = arith.constant 0 : i32
    %c0_i32_1 = arith.constant 0 : i32
    %c0_i32_2 = arith.constant 0 : i32
    return %c0_i32, %c0_i32_0, %c0_i32_1 : i32, i32, i32
  }
  func.func @transform_2(%arg0: i32) -> (i32, i32) {
    %c0_i32 = arith.constant 0 : i32
    %c0_i32_0 = arith.constant 0 : i32
    %c0_i32_1 = arith.constant 0 : i32
    return %c0_i32, %c0_i32_0 : i32, i32
  }
  func.func @transform_3(%arg0: i32) -> (i32, i32) {
    %c0_i32 = arith.constant 0 : i32
    %c0_i32_0 = arith.constant 0 : i32
    %c0_i32_1 = arith.constant 0 : i32
    return %c0_i32, %c0_i32_0 : i32, i32
  }
  func.func @transform_4(%arg0: i32) -> (i32, i32, i32, i32) {
    %c0_i32 = arith.constant 0 : i32
    %c0_i32_0 = arith.constant 0 : i32
    %c0_i32_1 = arith.constant 0 : i32
    %c0_i32_2 = arith.constant 0 : i32
    return %arg0, %c0_i32, %c0_i32_0, %c0_i32_1 : i32, i32, i32, i32
  }
}

</mosaic_0001>

<llo_original>
// kernel: basic_block_v3_forward.3
$region0: #{basic_block_v3_forward.3}
  #allocation0 [shape = 'u32[]', space=smem, size = 0x4, offset = 0x4, fixed_abs, tag = 'smem constant byte address 0x4 - core index']
  #allocation1 [shape = 'u32[144,128]{1,0:T(1,128)}', space=vmem, size = 0x12000, scoped, tag = 'internal scratch']
  %s0 = inlined_call_operand.vmem [shape: bf16[2,18,18,128], index: 0, kind: input, shape index: {}]
  %s1 = inlined_call_operand.vmem [shape: f32[2,16,16,128], index: 1, kind: input, shape index: {}]
  %s2 = inlined_call_operand.vmem [shape: bf16[9,128,128], index: 2, kind: input, shape index: {}]
  %s3 = inlined_call_operand.vmem [shape: f32[1,128], index: 3, kind: input, shape index: {}]
  %s4 = inlined_call_operand.hbm [shape: f32[2,16,16,128], index: 4, kind: output, shape index: {}]
  %s5 = sld [smem:[#allocation0]]
  $region49: #{basic_block_v3_forward.3} parent=0
    _
  %s7 = ssub.s32 1, %s5
  %s8 = scalar_select 0, %s7, %s5
  $region1: #{basic_block_v3_forward.3} parent=0
    #allocation2 [shape = 'u8[262144]{0}', space=vmem, size = 0x40000, scoped, tag = 'output window, operand 0']
    #allocation3 [shape = 's32[2]{0}', space=sflag, size = 0x8, scoped, tag = 'scoped memory for basic_block_v3_forward.3']
    %9 = vsyncpa [#allocation3], 0
    %s10 = scalar_lea.sflag [#allocation3], 1
    %11 = vsyncpa %s10, 0
    loop: start=0, step=1, limit=4
    $region2: #{basic_block_v3_forward.3} parent=1 // loop_pre_header
      _
    $region3: #{basic_block_v3_forward.3} parent=1 // loop_header
      %s13 = sphi 0, %s17
      %p14 = scmp.ge.s32.totalorder %s13, 4
      %s23 = sphi 0, %s25
      %s26 = sphi 0, %s23
      %s27 = sphi 0, %s26
      %s43 = sphi 0, %s27
      %s49 = sphi 0, %s51
      %s52 = sphi 0, %s49
      %s53 = sphi 0, %s52
      %s69 = sphi 0, %s53
      %s73 = sphi 0, %s73
      %s75 = sphi 0, %s73
      %s76 = sphi 0, %s75
      %s90 = sphi 0, %s76
      %s94 = sphi 0, %s94
      %s96 = sphi 0, %s94
      %s97 = sphi 0, %s96
      %s111 = sphi 0, %s97
      %s117 = sphi 0, %s119
      %s120 = sphi 0, %s117
      %s121 = sphi 0, %s120
      %s137 = sphi 0, %s121
    $region4: #{basic_block_v3_forward.3} parent=1 // loop_header_branch
      %16 = sbr.rel (%p14) target = $region8
    $region5: #{basic_block_v3_forward.3} parent=1 // loop_body
      %s18 = ssub.s32 %s13, 1
      %s19 = ssub.s32 %s13, 2
      %s20 = sadd.s32 %s13, 1
      %s21 = ssub.s32 %s13, %s20
      %p22 = scmp.eq.s32.totalorder %s21, 0
      %s24 = sadd.s32 %s23, 1
      %s25 = scalar_select %p22, %s23, %s24
      %p28 = pneg %p22
      %p29 = scmp.eq.s32.totalorder %s13, 1
      %p30 = por %p28, %p29
      %p31 = scmp.ne.s32.totalorder %s23, %s26
      %p32 = scmp.eq.s32.totalorder %s13, 0
      %p33 = por %p31, %p32
      %p34 = scmp.ne.s32.totalorder %s23, %s26
      %p35 = scmp.eq.s32.totalorder %s18, 1
      %p36 = por %p34, %p35
      %p37 = scmp.ne.s32.totalorder %s26, %s27
      %p38 = scmp.eq.s32.totalorder %s18, 0
      %p39 = por %p37, %p38
      %p40 = scmp.ne.s32.totalorder %s26, %s27
      %p41 = scmp.eq.s32.totalorder %s19, 1
      %p42 = por %p40, %p41
      %p44 = scmp.ne.s32.totalorder %s27, %s43
      %p45 = scmp.eq.s32.totalorder %s19, 0
      %p46 = por %p44, %p45
      %s47 = ssub.s32 %s13, %s20
      %p48 = scmp.eq.s32.totalorder %s47, 0
      %s50 = sadd.s32 %s49, 1
      %s51 = scalar_select %p48, %s49, %s50
      %p54 = pneg %p48
      %p55 = scmp.eq.s32.totalorder %s13, 1
      %p56 = por %p54, %p55
      %p57 = scmp.ne.s32.totalorder %s49, %s52
      %p58 = scmp.eq.s32.totalorder %s13, 0
      %p59 = por %p57, %p58
      %p60 = scmp.ne.s32.totalorder %s49, %s52
      %p61 = scmp.eq.s32.totalorder %s18, 1
      %p62 = por %p60, %p61
      %p63 = scmp.ne.s32.totalorder %s52, %s53
      %p64 = scmp.eq.s32.totalorder %s18, 0
      %p65 = por %p63, %p64
      %p66 = scmp.ne.s32.totalorder %s52, %s53
      %p67 = scmp.eq.s32.totalorder %s19, 1
      %p68 = por %p66, %p67
      %p70 = scmp.ne.s32.totalorder %s53, %s69
      %p71 = scmp.eq.s32.totalorder %s19, 0
      %p72 = por %p70, %p71
      %s74 = sadd.s32 %s73, 1
      %p77 = scmp.eq.s32.totalorder %s13, 1
      %p78 = scmp.ne.s32.totalorder %s73, %s75
      %p79 = scmp.eq.s32.totalorder %s13, 0
      %p80 = por %p78, %p79
      %p81 = scmp.ne.s32.totalorder %s73, %s75
      %p82 = scmp.eq.s32.totalorder %s18, 1
      %p83 = por %p81, %p82
      %p84 = scmp.ne.s32.totalorder %s75, %s76
      %p85 = scmp.eq.s32.totalorder %s18, 0
      %p86 = por %p84, %p85
      %p87 = scmp.ne.s32.totalorder %s75, %s76
      %p88 = scmp.eq.s32.totalorder %s19, 1
      %p89 = por %p87, %p88
      %p91 = scmp.ne.s32.totalorder %s76, %s90
      %p92 = scmp.eq.s32.totalorder %s19, 0
      %p93 = por %p91, %p92
      %s95 = sadd.s32 %s94, 1
      %p98 = scmp.eq.s32.totalorder %s13, 1
      %p99 = scmp.ne.s32.totalorder %s94, %s96
      %p100 = scmp.eq.s32.totalorder %s13, 0
      %p101 = por %p99, %p100
      %p102 = scmp.ne.s32.totalorder %s94, %s96
      %p103 = scmp.eq.s32.totalorder %s18, 1
      %p104 = por %p102, %p103
      %p105 = scmp.ne.s32.totalorder %s96, %s97
      %p106 = scmp.eq.s32.totalorder %s18, 0
      %p107 = por %p105, %p106
      %p108 = scmp.ne.s32.totalorder %s96, %s97
      %p109 = scmp.eq.s32.totalorder %s19, 1
      %p110 = por %p108, %p109
      %p112 = scmp.ne.s32.totalorder %s97, %s111
      %p113 = scmp.eq.s32.totalorder %s19, 0
      %p114 = por %p112, %p113
      %s115 = ssub.s32 %s13, %s20
      %p116 = scmp.eq.s32.totalorder %s115, 0
      %s118 = sadd.s32 %s117, 1
      %s119 = scalar_select %p116, %s117, %s118
      %p122 = pneg %p116
      %p123 = scmp.eq.s32.totalorder %s13, 1
      %p124 = por %p122, %p123
      %p125 = scmp.ne.s32.totalorder %s117, %s120
      %p126 = scmp.eq.s32.totalorder %s13, 0
      %p127 = por %p125, %p126
      %p128 = scmp.ne.s32.totalorder %s117, %s120
      %p129 = scmp.eq.s32.totalorder %s18, 1
      %p130 = por %p128, %p129
      %p131 = scmp.ne.s32.totalorder %s120, %s121
      %p132 = scmp.eq.s32.totalorder %s18, 0
      %p133 = por %p131, %p132
      %p134 = scmp.ne.s32.totalorder %s120, %s121
      %p135 = scmp.eq.s32.totalorder %s19, 1
      %p136 = por %p134, %p135
      %p138 = scmp.ne.s32.totalorder %s121, %s137
      %p139 = scmp.eq.s32.totalorder %s19, 0
      %p140 = por %p138, %p139
      %p141 = scmp.le.s32.totalorder 1, %s13
      %p142 = scmp.lt.s32.totalorder %s13, 3
      %p143 = pnand %p141, %p142
      %p144 = pneg %p143
      // Predicated region
      $region9: #{basic_block_v3_forward.3} parent=5 // pred_check
        _
      $region10: #{basic_block_v3_forward.3} parent=5 // pred_check_branch
        %146 = sbr.rel (%p143) target = $region12
      $region11: #{basic_block_v3_forward.3} parent=5 // pred_region
        %s147 = ssub.s32 %s13, 1
        // Predicated region
        $region13: #{basic_block_v3_forward.3} parent=11 // pred_check
          %p148 = pneg %p86
        $region14: #{basic_block_v3_forward.3} parent=11 // pred_check_branch
          %150 = sbr.rel (%p148) target = $region16
        $region15: #{basic_block_v3_forward.3} parent=11 // pred_region
          _
        $region16: #{basic_block_v3_forward.3} parent=11 // pred_fallthru
          _
        // Predicated region
        $region17: #{basic_block_v3_forward.3} parent=11 // pred_check
          %p151 = pneg %p107
        $region18: #{basic_block_v3_forward.3} parent=11 // pred_check_branch
          %153 = sbr.rel (%p151) target = $region20
        $region19: #{basic_block_v3_forward.3} parent=11 // pred_region
          _
        $region20: #{basic_block_v3_forward.3} parent=11 // pred_fallthru
          _
      $region12: #{basic_block_v3_forward.3} parent=5 // pred_fallthru
        _
      %p154 = scmp.lt.s32.totalorder %s13, 2
      // Predicated region
      $region21: #{basic_block_v3_forward.3} parent=5 // pred_check
        %p155 = pneg %p154
      $region22: #{basic_block_v3_forward.3} parent=5 // pred_check_branch
        %157 = sbr.rel (%p155) target = $region24
      $region23: #{basic_block_v3_forward.3} parent=5 // pred_region
        // Predicated region
        $region25: #{basic_block_v3_forward.3} parent=23 // pred_check
          %p158 = pneg %p33
        $region26: #{basic_block_v3_forward.3} parent=23 // pred_check_branch
          %160 = sbr.rel (%p158) target = $region28
        $region27: #{basic_block_v3_forward.3} parent=23 // pred_region
          %p161 = scmp.lt.s32.totalorder %s13, 1
          %s162 = scalar_select %p161, %s13, 1
          %s163 = smul.addr %s162, 54
          %s164 = smul.addr %s163, 4
          %s165 = scalar_lea.vmem %s0, %s164
        $region28: #{basic_block_v3_forward.3} parent=23 // pred_fallthru
          _
        // Predicated region
        $region29: #{basic_block_v3_forward.3} parent=23 // pred_check
          %p166 = pneg %p59
        $region30: #{basic_block_v3_forward.3} parent=23 // pred_check_branch
          %168 = sbr.rel (%p166) target = $region32
        $region31: #{basic_block_v3_forward.3} parent=23 // pred_region
          %p169 = scmp.lt.s32.totalorder %s13, 1
          %s170 = scalar_select %p169, %s13, 1
          %s171 = smul.addr %s170, 32
          %s172 = smul.addr %s171, 8
          %s173 = scalar_lea.vmem %s1, %s172
        $region32: #{basic_block_v3_forward.3} parent=23 // pred_fallthru
          _
      $region24: #{basic_block_v3_forward.3} parent=5 // pred_fallthru
        _
      %p174 = scmp.le.s32.totalorder 1, %s13
      %p175 = scmp.lt.s32.totalorder %s13, 3
      %p176 = pnand %p174, %p175
      %p177 = pneg %p176
      // Predicated region
      $region33: #{basic_block_v3_forward.3} parent=5 // pred_check
        _
      $region34: #{basic_block_v3_forward.3} parent=5 // pred_check_branch
        %179 = sbr.rel (%p176) target = $region36
      $region35: #{basic_block_v3_forward.3} parent=5 // pred_region
        %s180 = ssub.s32 %s13, 1
        %p181 = scmp.lt.s32.totalorder %s18, 1
        %s182 = scalar_select %p181, %s18, 1
        %s183 = smul.addr %s182, 54
        %s184 = smul.addr %s183, 4
        %s185 = scalar_lea.vmem %s0, %s184
        %p186 = pneg %p39
        %p187 = pneg %p36
        %p188 = scmp.lt.s32.totalorder %s18, 1
        %s189 = scalar_select %p188, %s18, 1
        %s190 = smul.addr %s189, 32
        %s191 = smul.addr %s190, 8
        %s192 = scalar_lea.vmem %s1, %s191
        %p193 = pneg %p65
        %p194 = pneg %p62
        %p195 = pneg %p86
        %p196 = pneg %p83
        %p197 = pneg %p107
        %p198 = pneg %p104
        %p199 = pneg %p133
        %p200 = pneg %p130
        %s201 = sand.u32 %s120, 1
        %s202 = scalar_lea.sflag [#allocation3], %s201
        %s203 = sand.u32 %s120, 1
        %s204 = smul.addr %s203, 256
        %s205 = scalar_lea.vmem [#allocation2], %s204
        %p206 = scmp.lt.s32.totalorder %s18, 1
        %s207 = scalar_select %p206, %s18, 1
        %s208 = smul.addr %s207, 54
        %s209 = smul.addr %s208, 4
        %s210 = scalar_lea.vmem %s0, %s209
        %p211 = scmp.lt.s32.totalorder %s18, 1
        %s212 = scalar_select %p211, %s18, 1
        %s213 = smul.addr %s212, 32
        %s214 = smul.addr %s213, 8
        %s215 = scalar_lea.vmem %s1, %s214
        %v217 = vld [vmem:[%s210] sm:$0xf]
        %v218 = vld [vmem:[%s210 + $0x4] sm:$0xf]
        %v219 = vld [vmem:[%s210 + $0xc] sm:$0xf]
        %v220 = vld [vmem:[%s210 + $0x10] sm:$0xf]
        %v221 = vld [vmem:[%s210 + $0x18] sm:$0xf]
        %v222 = vld [vmem:[%s210 + $0x1c] sm:$0xf]
        %v223 = vld [vmem:[%s210 + $0x24] sm:$0xf]
        %v224 = vld [vmem:[%s210 + $0x28] sm:$0xf]
        %v225 = vld [vmem:[%s210 + $0x30] sm:$0xf]
        %v226 = vld [vmem:[%s210 + $0x34] sm:$0xf]
        %v227 = vld [vmem:[%s210 + $0x3c] sm:$0xf]
        %v228 = vld [vmem:[%s210 + $0x40] sm:$0xf]
        %v229 = vld [vmem:[%s210 + $0x48] sm:$0xf]
        %v230 = vld [vmem:[%s210 + $0x4c] sm:$0xf]
        %v231 = vld [vmem:[%s210 + $0x54] sm:$0xf]
        %v232 = vld [vmem:[%s210 + $0x58] sm:$0xf]
        %v233 = vld [vmem:[%s210 + $0x60] sm:$0xf]
        %v234 = vld [vmem:[%s210 + $0x64] sm:$0xf]
        %v235 = vld [vmem:[%s210 + $0x6c] sm:$0xf]
        %v236 = vld [vmem:[%s210 + $0x70] sm:$0xf]
        %v237 = vld [vmem:[%s210 + $0x78] sm:$0xf]
        %v238 = vld [vmem:[%s210 + $0x7c] sm:$0xf]
        %v239 = vld [vmem:[%s210 + $0x84] sm:$0xf]
        %v240 = vld [vmem:[%s210 + $0x88] sm:$0xf]
        %v241 = vld [vmem:[%s210 + $0x90] sm:$0xf]
        %v242 = vld [vmem:[%s210 + $0x94] sm:$0xf]
        %v243 = vld [vmem:[%s210 + $0x9c] sm:$0xf]
        %v244 = vld [vmem:[%s210 + $0xa0] sm:$0xf]
        %v245 = vld [vmem:[%s210 + $0xa8] sm:$0xf]
        %v246 = vld [vmem:[%s210 + $0xac] sm:$0xf]
        %v247 = vld [vmem:[%s210 + $0xb4] sm:$0xf]
        %v248 = vld [vmem:[%s210 + $0xb8] sm:$0xf]
        %v249 = vld [vmem:[%s2] sm:$0xf]
        %v250 = vld [vmem:[%s2 + $0x4] sm:$0xf]
        %v251 = vld [vmem:[%s2 + $0x8] sm:$0xf]
        %v252 = vld [vmem:[%s2 + $0xc] sm:$0xf]
        %v253 = vld [vmem:[%s2 + $0x10] sm:$0xf]
        %v254 = vld [vmem:[%s2 + $0x14] sm:$0xf]
        %v255 = vld [vmem:[%s2 + $0x18] sm:$0xf]
        %v256 = vld [vmem:[%s2 + $0x1c] sm:$0xf]
        %v257 = vld [vmem:[%s2 + $0x20] sm:$0xf]
        %v258 = vld [vmem:[%s2 + $0x24] sm:$0xf]
        %v259 = vld [vmem:[%s2 + $0x28] sm:$0xf]
        %v260 = vld [vmem:[%s2 + $0x2c] sm:$0xf]
        %v261 = vld [vmem:[%s2 + $0x30] sm:$0xf]
        %v262 = vld [vmem:[%s2 + $0x34] sm:$0xf]
        %v263 = vld [vmem:[%s2 + $0x38] sm:$0xf]
        %v264 = vld [vmem:[%s2 + $0x3c] sm:$0xf]
        %v265 = vld [vmem:[%s210 + $0x8] sm:$0x1]
        %v266 = vld [vmem:[%s210 + $0x14] sm:$0x1]
        %v267 = vld [vmem:[%s210 + $0x20] sm:$0x1]
        %v268 = vld [vmem:[%s210 + $0x2c] sm:$0x1]
        %v269 = vld [vmem:[%s210 + $0x38] sm:$0x1]
        %v270 = vld [vmem:[%s210 + $0x44] sm:$0x1]
        %v271 = vld [vmem:[%s210 + $0x50] sm:$0x1]
        %v272 = vld [vmem:[%s210 + $0x5c] sm:$0x1]
        %v273 = vld [vmem:[%s210 + $0x68] sm:$0x1]
        %v274 = vld [vmem:[%s210 + $0x74] sm:$0x1]
        %v275 = vld [vmem:[%s210 + $0x80] sm:$0x1]
        %v276 = vld [vmem:[%s210 + $0x8c] sm:$0x1]
        %v277 = vld [vmem:[%s210 + $0x98] sm:$0x1]
        %v278 = vld [vmem:[%s210 + $0xa4] sm:$0x1]
        %v279 = vld [vmem:[%s210 + $0xb0] sm:$0x1]
        %v280 = vld [vmem:[%s210 + $0xbc] sm:$0x1]
        %vm281 = vsmask.f32 3328
        %vm282 = vsmask.f32 7440
        %vm283 = vmor %vm281, %vm282
        %v285 = vshrl.u32 %v217, 16
        %v287 = vrot.slane %v285, 4
        %v288 = vshll.u32 %v217, 16
        %v290 = vrot.slane %v288, 5
        %v291 = vor.u32 %v287, %v290
        %v292 = vrot.slane %v291, 4
        %v294 = vshll.u32 %v218, 16
        %v296 = vrot.slane %v294, 5
        %v297 = vsel %vm283, %v292, %v296
        %v298 = vshrl.u32 %v218, 16
        %v300 = vrot.slane %v298, 4
        %v301 = vor.u32 %v300, %v296
        %v302 = vrot.slane %v301, 4
        %v304 = vshll.u32 %v265, 16
        %v306 = vrot.slane %v304, 5
        %v307 = vsel %vm283, %v302, %v306
        %v309 = vshrl.u32 %v219, 16
        %v311 = vrot.slane %v309, 4
        %v312 = vshll.u32 %v219, 16
        %v314 = vrot.slane %v312, 5
        %v315 = vor.u32 %v311, %v314
        %v316 = vrot.slane %v315, 4
        %v318 = vshll.u32 %v220, 16
        %v320 = vrot.slane %v318, 5
        %v321 = vsel %vm283, %v316, %v320
        %v322 = vshrl.u32 %v220, 16
        %v324 = vrot.slane %v322, 4
        %v325 = vor.u32 %v324, %v320
        %v326 = vrot.slane %v325, 4
        %v328 = vshll.u32 %v266, 16
        %v330 = vrot.slane %v328, 5
        %v331 = vsel %vm283, %v326, %v330
        %v333 = vshrl.u32 %v221, 16
        %v335 = vrot.slane %v333, 4
        %v336 = vshll.u32 %v221, 16
        %v338 = vrot.slane %v336, 5
        %v339 = vor.u32 %v335, %v338
        %v340 = vrot.slane %v339, 4
        %v342 = vshll.u32 %v222, 16
        %v344 = vrot.slane %v342, 5
        %v345 = vsel %vm283, %v340, %v344
        %v346 = vshrl.u32 %v222, 16
        %v348 = vrot.slane %v346, 4
        %v349 = vor.u32 %v348, %v344
        %v350 = vrot.slane %v349, 4
        %v352 = vshll.u32 %v267, 16
        %v354 = vrot.slane %v352, 5
        %v355 = vsel %vm283, %v350, %v354
        %v357 = vshrl.u32 %v223, 16
        %v359 = vrot.slane %v357, 4
        %v360 = vshll.u32 %v223, 16
        %v362 = vrot.slane %v360, 5
        %v363 = vor.u32 %v359, %v362
        %v364 = vrot.slane %v363, 4
        %v366 = vshll.u32 %v224, 16
        %v368 = vrot.slane %v366, 5
        %v369 = vsel %vm283, %v364, %v368
        %v370 = vshrl.u32 %v224, 16
        %v372 = vrot.slane %v370, 4
        %v373 = vor.u32 %v372, %v368
        %v374 = vrot.slane %v373, 4
        %v376 = vshll.u32 %v268, 16
        %v378 = vrot.slane %v376, 5
        %v379 = vsel %vm283, %v374, %v378
        %v381 = vshrl.u32 %v225, 16
        %v383 = vrot.slane %v381, 4
        %v384 = vshll.u32 %v225, 16
        %v386 = vrot.slane %v384, 5
        %v387 = vor.u32 %v383, %v386
        %v388 = vrot.slane %v387, 4
        %v390 = vshll.u32 %v226, 16
        %v392 = vrot.slane %v390, 5
        %v393 = vsel %vm283, %v388, %v392
        %v394 = vshrl.u32 %v226, 16
        %v396 = vrot.slane %v394, 4
        %v397 = vor.u32 %v396, %v392
        %v398 = vrot.slane %v397, 4
        %v400 = vshll.u32 %v269, 16
        %v402 = vrot.slane %v400, 5
        %v403 = vsel %vm283, %v398, %v402
        %v405 = vshrl.u32 %v227, 16
        %v407 = vrot.slane %v405, 4
        %v408 = vshll.u32 %v227, 16
        %v410 = vrot.slane %v408, 5
        %v411 = vor.u32 %v407, %v410
        %v412 = vrot.slane %v411, 4
        %v414 = vshll.u32 %v228, 16
        %v416 = vrot.slane %v414, 5
        %v417 = vsel %vm283, %v412, %v416
        %v418 = vshrl.u32 %v228, 16
        %v420 = vrot.slane %v418, 4
        %v421 = vor.u32 %v420, %v416
        %v422 = vrot.slane %v421, 4
        %v424 = vshll.u32 %v270, 16
        %v426 = vrot.slane %v424, 5
        %v427 = vsel %vm283, %v422, %v426
        %v429 = vshrl.u32 %v229, 16
        %v431 = vrot.slane %v429, 4
        %v432 = vshll.u32 %v229, 16
        %v434 = vrot.slane %v432, 5
        %v435 = vor.u32 %v431, %v434
        %v436 = vrot.slane %v435, 4
        %v438 = vshll.u32 %v230, 16
        %v440 = vrot.slane %v438, 5
        %v441 = vsel %vm283, %v436, %v440
        %v442 = vshrl.u32 %v230, 16
        %v444 = vrot.slane %v442, 4
        %v445 = vor.u32 %v444, %v440
        %v446 = vrot.slane %v445, 4
        %v448 = vshll.u32 %v271, 16
        %v450 = vrot.slane %v448, 5
        %v451 = vsel %vm283, %v446, %v450
        %v453 = vshrl.u32 %v231, 16
        %v455 = vrot.slane %v453, 4
        %v456 = vshll.u32 %v231, 16
        %v458 = vrot.slane %v456, 5
        %v459 = vor.u32 %v455, %v458
        %v460 = vrot.slane %v459, 4
        %v462 = vshll.u32 %v232, 16
        %v464 = vrot.slane %v462, 5
        %v465 = vsel %vm283, %v460, %v464
        %v466 = vshrl.u32 %v232, 16
        %v468 = vrot.slane %v466, 4
        %v469 = vor.u32 %v468, %v464
        %v470 = vrot.slane %v469, 4
        %v472 = vshll.u32 %v272, 16
        %v474 = vrot.slane %v472, 5
        %v475 = vsel %vm283, %v470, %v474
        %v477 = vshrl.u32 %v233, 16
        %v479 = vrot.slane %v477, 4
        %v480 = vshll.u32 %v233, 16
        %v482 = vrot.slane %v480, 5
        %v483 = vor.u32 %v479, %v482
        %v484 = vrot.slane %v483, 4
        %v486 = vshll.u32 %v234, 16
        %v488 = vrot.slane %v486, 5
        %v489 = vsel %vm283, %v484, %v488
        %v490 = vshrl.u32 %v234, 16
        %v492 = vrot.slane %v490, 4
        %v493 = vor.u32 %v492, %v488
        %v494 = vrot.slane %v493, 4
        %v496 = vshll.u32 %v273, 16
        %v498 = vrot.slane %v496, 5
        %v499 = vsel %vm283, %v494, %v498
        %v501 = vshrl.u32 %v235, 16
        %v503 = vrot.slane %v501, 4
        %v504 = vshll.u32 %v235, 16
        %v506 = vrot.slane %v504, 5
        %v507 = vor.u32 %v503, %v506
        %v508 = vrot.slane %v507, 4
        %v510 = vshll.u32 %v236, 16
        %v512 = vrot.slane %v510, 5
        %v513 = vsel %vm283, %v508, %v512
        %v514 = vshrl.u32 %v236, 16
        %v516 = vrot.slane %v514, 4
        %v517 = vor.u32 %v516, %v512
        %v518 = vrot.slane %v517, 4
        %v520 = vshll.u32 %v274, 16
        %v522 = vrot.slane %v520, 5
        %v523 = vsel %vm283, %v518, %v522
        %v525 = vshrl.u32 %v237, 16
        %v527 = vrot.slane %v525, 4
        %v528 = vshll.u32 %v237, 16
        %v530 = vrot.slane %v528, 5
        %v531 = vor.u32 %v527, %v530
        %v532 = vrot.slane %v531, 4
        %v534 = vshll.u32 %v238, 16
        %v536 = vrot.slane %v534, 5
        %v537 = vsel %vm283, %v532, %v536
        %v538 = vshrl.u32 %v238, 16
        %v540 = vrot.slane %v538, 4
        %v541 = vor.u32 %v540, %v536
        %v542 = vrot.slane %v541, 4
        %v544 = vshll.u32 %v275, 16
        %v546 = vrot.slane %v544, 5
        %v547 = vsel %vm283, %v542, %v546
        %v549 = vshrl.u32 %v239, 16
        %v551 = vrot.slane %v549, 4
        %v552 = vshll.u32 %v239, 16
        %v554 = vrot.slane %v552, 5
        %v555 = vor.u32 %v551, %v554
        %v556 = vrot.slane %v555, 4
        %v558 = vshll.u32 %v240, 16
        %v560 = vrot.slane %v558, 5
        %v561 = vsel %vm283, %v556, %v560
        %v562 = vshrl.u32 %v240, 16
        %v564 = vrot.slane %v562, 4
        %v565 = vor.u32 %v564, %v560
        %v566 = vrot.slane %v565, 4
        %v568 = vshll.u32 %v276, 16
        %v570 = vrot.slane %v568, 5
        %v571 = vsel %vm283, %v566, %v570
        %v573 = vshrl.u32 %v241, 16
        %v575 = vrot.slane %v573, 4
        %v576 = vshll.u32 %v241, 16
        %v578 = vrot.slane %v576, 5
        %v579 = vor.u32 %v575, %v578
        %v580 = vrot.slane %v579, 4
        %v582 = vshll.u32 %v242, 16
        %v584 = vrot.slane %v582, 5
        %v585 = vsel %vm283, %v580, %v584
        %v586 = vshrl.u32 %v242, 16
        %v588 = vrot.slane %v586, 4
        %v589 = vor.u32 %v588, %v584
        %v590 = vrot.slane %v589, 4
        %v592 = vshll.u32 %v277, 16
        %v594 = vrot.slane %v592, 5
        %v595 = vsel %vm283, %v590, %v594
        %v597 = vshrl.u32 %v243, 16
        %v599 = vrot.slane %v597, 4
        %v600 = vshll.u32 %v243, 16
        %v602 = vrot.slane %v600, 5
        %v603 = vor.u32 %v599, %v602
        %v604 = vrot.slane %v603, 4
        %v606 = vshll.u32 %v244, 16
        %v608 = vrot.slane %v606, 5
        %v609 = vsel %vm283, %v604, %v608
        %v610 = vshrl.u32 %v244, 16
        %v612 = vrot.slane %v610, 4
        %v613 = vor.u32 %v612, %v608
        %v614 = vrot.slane %v613, 4
        %v616 = vshll.u32 %v278, 16
        %v618 = vrot.slane %v616, 5
        %v619 = vsel %vm283, %v614, %v618
        %v621 = vshrl.u32 %v245, 16
        %v623 = vrot.slane %v621, 4
        %v624 = vshll.u32 %v245, 16
        %v626 = vrot.slane %v624, 5
        %v627 = vor.u32 %v623, %v626
        %v628 = vrot.slane %v627, 4
        %v630 = vshll.u32 %v246, 16
        %v632 = vrot.slane %v630, 5
        %v633 = vsel %vm283, %v628, %v632
        %v634 = vshrl.u32 %v246, 16
        %v636 = vrot.slane %v634, 4
        %v637 = vor.u32 %v636, %v632
        %v638 = vrot.slane %v637, 4
        %v640 = vshll.u32 %v279, 16
        %v642 = vrot.slane %v640, 5
        %v643 = vsel %vm283, %v638, %v642
        %v645 = vshrl.u32 %v247, 16
        %v647 = vrot.slane %v645, 4
        %v648 = vshll.u32 %v247, 16
        %v650 = vrot.slane %v648, 5
        %v651 = vor.u32 %v647, %v650
        %v652 = vrot.slane %v651, 4
        %v654 = vshll.u32 %v248, 16
        %v656 = vrot.slane %v654, 5
        %v657 = vsel %vm283, %v652, %v656
        %v658 = vshrl.u32 %v248, 16
        %v660 = vrot.slane %v658, 4
        %v661 = vor.u32 %v660, %v656
        %v662 = vrot.slane %v661, 4
        %v664 = vshll.u32 %v280, 16
        %v666 = vrot.slane %v664, 5
        %v667 = vsel %vm283, %v662, %v666
        %s668 = scalar_lea.vmem %s2, 64
        %v669 = vld [vmem:[%s668] sm:$0xf]
        %v670 = vld [vmem:[%s668 + $0x4] sm:$0xf]
        %v671 = vld [vmem:[%s668 + $0x8] sm:$0xf]
        %v672 = vld [vmem:[%s668 + $0xc] sm:$0xf]
        %v673 = vld [vmem:[%s668 + $0x10] sm:$0xf]
        %v674 = vld [vmem:[%s668 + $0x14] sm:$0xf]
        %v675 = vld [vmem:[%s668 + $0x18] sm:$0xf]
        %v676 = vld [vmem:[%s668 + $0x1c] sm:$0xf]
        %v677 = vld [vmem:[%s668 + $0x20] sm:$0xf]
        %v678 = vld [vmem:[%s668 + $0x24] sm:$0xf]
        %v679 = vld [vmem:[%s668 + $0x28] sm:$0xf]
        %v680 = vld [vmem:[%s668 + $0x2c] sm:$0xf]
        %v681 = vld [vmem:[%s668 + $0x30] sm:$0xf]
        %v682 = vld [vmem:[%s668 + $0x34] sm:$0xf]
        %v683 = vld [vmem:[%s668 + $0x38] sm:$0xf]
        %v684 = vld [vmem:[%s668 + $0x3c] sm:$0xf]
        %v685 = vunpack.c.l.b16 %v297
        %v686 = vunpack.c.l.b16 %v307
        %v687 = vunpack.c.l.b16 %v321
        %v688 = vunpack.c.l.b16 %v331
        %v689 = vunpack.c.l.b16 %v345
        %v690 = vunpack.c.l.b16 %v355
        %v691 = vunpack.c.l.b16 %v369
        %v692 = vunpack.c.l.b16 %v379
        %v693 = vunpack.c.l.b16 %v393
        %v694 = vunpack.c.l.b16 %v403
        %v695 = vunpack.c.l.b16 %v417
        %v696 = vunpack.c.l.b16 %v427
        %v697 = vunpack.c.l.b16 %v441
        %v698 = vunpack.c.l.b16 %v451
        %v699 = vunpack.c.l.b16 %v465
        %v700 = vunpack.c.l.b16 %v475
        %v701 = vunpack.c.l.b16 %v489
        %v702 = vunpack.c.l.b16 %v499
        %v703 = vunpack.c.l.b16 %v513
        %v704 = vunpack.c.l.b16 %v523
        %v705 = vunpack.c.l.b16 %v537
        %v706 = vunpack.c.l.b16 %v547
        %v707 = vunpack.c.l.b16 %v561
        %v708 = vunpack.c.l.b16 %v571
        %v709 = vunpack.c.l.b16 %v585
        %v710 = vunpack.c.l.b16 %v595
        %v711 = vunpack.c.l.b16 %v609
        %v712 = vunpack.c.l.b16 %v619
        %v713 = vunpack.c.l.b16 %v633
        %v714 = vunpack.c.l.b16 %v643
        %v715 = vunpack.c.l.b16 %v657
        %v716 = vunpack.c.l.b16 %v667
        %v717 = vpack.c.b16 %v686, %v685
        %v718 = vpack.c.b16 %v688, %v687
        %v719 = vpack.c.b16 %v690, %v689
        %v720 = vpack.c.b16 %v692, %v691
        %v721 = vpack.c.b16 %v694, %v693
        %v722 = vpack.c.b16 %v696, %v695
        %v723 = vpack.c.b16 %v698, %v697
        %v724 = vpack.c.b16 %v700, %v699
        %v725 = vpack.c.b16 %v702, %v701
        %v726 = vpack.c.b16 %v704, %v703
        %v727 = vpack.c.b16 %v706, %v705
        %v728 = vpack.c.b16 %v708, %v707
        %v729 = vpack.c.b16 %v710, %v709
        %v730 = vpack.c.b16 %v712, %v711
        %v731 = vpack.c.b16 %v714, %v713
        %v732 = vpack.c.b16 %v716, %v715
        %v765 = vunpack.c.l.b16 %v669
        %v766 = vunpack.c.l.b16 %v670
        %v767 = vunpack.c.l.b16 %v671
        %v768 = vunpack.c.l.b16 %v672
        %v769 = vunpack.c.l.b16 %v673
        %v770 = vunpack.c.l.b16 %v674
        %v771 = vunpack.c.l.b16 %v675
        %v772 = vunpack.c.l.b16 %v676
        %v773 = vunpack.c.l.b16 %v677
        %v774 = vunpack.c.l.b16 %v678
        %v775 = vunpack.c.l.b16 %v679
        %v776 = vunpack.c.l.b16 %v680
        %v777 = vunpack.c.l.b16 %v681
        %v778 = vunpack.c.l.b16 %v682
        %v779 = vunpack.c.l.b16 %v683
        %v780 = vunpack.c.l.b16 %v684
        %v781 = vpack.c.b16 %v766, %v765
        %v782 = vpack.c.b16 %v768, %v767
        %v783 = vpack.c.b16 %v770, %v769
        %v784 = vpack.c.b16 %v772, %v771
        %v785 = vpack.c.b16 %v774, %v773
        %v786 = vpack.c.b16 %v776, %v775
        %v787 = vpack.c.b16 %v778, %v777
        %v788 = vpack.c.b16 %v780, %v779
        %797 = vmatprep.subr.bf16.mxu0 0
        %798 = vmatpush1.bf16.msra.mxu0 %v781
        %799 = vmatprep.subr.bf16.mxu0 0
        %800 = vmatpush1.bf16.msra.mxu0 %v782
        %801 = vmatprep.subr.bf16.mxu0 0
        %802 = vmatpush1.bf16.msra.mxu0 %v783
        %803 = vmatprep.subr.bf16.mxu0 0
        %804 = vmatpush1.bf16.msra.mxu0 %v784
        %805 = vmatprep.subr.bf16.mxu0 0
        %806 = vmatpush1.bf16.msra.mxu0 %v785
        %807 = vmatprep.subr.bf16.mxu0 0
        %808 = vmatpush1.bf16.msra.mxu0 %v786
        %809 = vmatprep.subr.bf16.mxu0 0
        %810 = vmatpush1.bf16.msra.mxu0 %v787
        %811 = vmatprep.subr.bf16.mxu0 0
        %812 = vmatpush1.bf16.msra.mxu0 %v788
        %813 = vmatprep.subr.bf16.mxu0 0
        %814 = vmatpush1.bf16.msra.mxu0 0
        %815 = vmatprep.subr.bf16.mxu0 0
        %816 = vmatpush1.bf16.msra.mxu0 0
        %817 = vmatprep.subr.bf16.mxu0 0
        %818 = vmatpush1.bf16.msra.mxu0 0
        %819 = vmatprep.subr.bf16.mxu0 0
        %820 = vmatpush1.bf16.msra.mxu0 0
        %821 = vmatprep.subr.bf16.mxu0 0
        %822 = vmatpush1.bf16.msra.mxu0 0
        %823 = vmatprep.subr.bf16.mxu0 0
        %824 = vmatpush1.bf16.msra.mxu0 0
        %825 = vmatprep.subr.bf16.mxu0 0
        %826 = vmatpush1.bf16.msra.mxu0 0
        %827 = vmatprep.subr.bf16.mxu0 0
        %828 = vmatpush1.bf16.msra.mxu0 0
        %829 = vmatprep.mubr.bf16.mxu0 0
        %830 = vmatmul.mubr.bf16.gmra.mrb[0].mxu0 %v717
        %v831 = vpop.f32.mrb[0].mxu0
        %v832 = vadd.f32 0.0, %v831
        %v833 = vpop.f32.mrb[0].mxu0
        %v834 = vpop.f32.mrb[0].mxu0
        %v835 = vadd.f32 0.0, %v834
        %v836 = vpop.f32.mrb[0].mxu0
        %837 = vmatprep.mubr.bf16.mxu0 0
        %838 = vmatmul.mubr.bf16.gmra.mrb[0].mxu0 %v718
        %v839 = vpop.f32.mrb[0].mxu0
        %v840 = vadd.f32 0.0, %v839
        %v841 = vpop.f32.mrb[0].mxu0
        %v842 = vpop.f32.mrb[0].mxu0
        %v843 = vadd.f32 0.0, %v842
        %v844 = vpop.f32.mrb[0].mxu0
        %845 = vmatprep.mubr.bf16.mxu0 0
        %846 = vmatmul.mubr.bf16.gmra.mrb[0].mxu0 %v719
        %v847 = vpop.f32.mrb[0].mxu0
        %v848 = vadd.f32 0.0, %v847
        %v849 = vpop.f32.mrb[0].mxu0
        %v850 = vpop.f32.mrb[0].mxu0
        %v851 = vadd.f32 0.0, %v850
        %v852 = vpop.f32.mrb[0].mxu0
        %853 = vmatprep.mubr.bf16.mxu0 0
        %854 = vmatmul.mubr.bf16.gmra.mrb[0].mxu0 %v720
        %v855 = vpop.f32.mrb[0].mxu0
        %v856 = vadd.f32 0.0, %v855
        %v857 = vpop.f32.mrb[0].mxu0
        %v858 = vpop.f32.mrb[0].mxu0
        %v859 = vadd.f32 0.0, %v858
        %v860 = vpop.f32.mrb[0].mxu0
        %861 = vmatprep.mubr.bf16.mxu0 0
        %862 = vmatmul.mubr.bf16.gmra.mrb[0].mxu0 %v721
        %v863 = vpop.f32.mrb[0].mxu0
        %v864 = vadd.f32 0.0, %v863
        %v865 = vpop.f32.mrb[0].mxu0
        %v866 = vpop.f32.mrb[0].mxu0
        %v867 = vadd.f32 0.0, %v866
        %v868 = vpop.f32.mrb[0].mxu0
        %869 = vmatprep.mubr.bf16.mxu0 0
        %870 = vmatmul.mubr.bf16.gmra.mrb[0].mxu0 %v722
        %v871 = vpop.f32.mrb[0].mxu0
        %v872 = vadd.f32 0.0, %v871
        %v873 = vpop.f32.mrb[0].mxu0
        %v874 = vpop.f32.mrb[0].mxu0
        %v875 = vadd.f32 0.0, %v874
        %v876 = vpop.f32.mrb[0].mxu0
        %877 = vmatprep.mubr.bf16.mxu0 0
        %878 = vmatmul.mubr.bf16.gmra.mrb[0].mxu0 %v723
        %v879 = vpop.f32.mrb[0].mxu0
        %v880 = vadd.f32 0.0, %v879
        %v881 = vpop.f32.mrb[0].mxu0
        %v882 = vpop.f32.mrb[0].mxu0
        %v883 = vadd.f32 0.0, %v882
        %v884 = vpop.f32.mrb[0].mxu0
        %885 = vmatprep.mubr.bf16.mxu0 0
        %886 = vmatmul.mubr.bf16.gmra.mrb[0].mxu0 %v724
        %v887 = vpop.f32.mrb[0].mxu0
        %v888 = vadd.f32 0.0, %v887
        %v889 = vpop.f32.mrb[0].mxu0
        %v890 = vpop.f32.mrb[0].mxu0
        %v891 = vadd.f32 0.0, %v890
        %v892 = vpop.f32.mrb[0].mxu0
        %893 = vmatprep.mubr.bf16.mxu0 0
        %894 = vmatmul.mubr.bf16.gmra.mrb[0].mxu0 %v725
        %v895 = vpop.f32.mrb[0].mxu0
        %v896 = vadd.f32 0.0, %v895
        %v897 = vpop.f32.mrb[0].mxu0
        %v898 = vpop.f32.mrb[0].mxu0
        %v899 = vadd.f32 0.0, %v898
        %v900 = vpop.f32.mrb[0].mxu0
        %901 = vmatprep.mubr.bf16.mxu0 0
        %902 = vmatmul.mubr.bf16.gmra.mrb[0].mxu0 %v726
        %v903 = vpop.f32.mrb[0].mxu0
        %v904 = vadd.f32 0.0, %v903
        %v905 = vpop.f32.mrb[0].mxu0
        %v906 = vpop.f32.mrb[0].mxu0
        %v907 = vadd.f32 0.0, %v906
        %v908 = vpop.f32.mrb[0].mxu0
        %909 = vmatprep.mubr.bf16.mxu0 0
        %910 = vmatmul.mubr.bf16.gmra.mrb[0].mxu0 %v727
        %v911 = vpop.f32.mrb[0].mxu0
        %v912 = vadd.f32 0.0, %v911
        %v913 = vpop.f32.mrb[0].mxu0
        %v914 = vpop.f32.mrb[0].mxu0
        %v915 = vadd.f32 0.0, %v914
        %v916 = vpop.f32.mrb[0].mxu0
        %917 = vmatprep.mubr.bf16.mxu0 0
        %918 = vmatmul.mubr.bf16.gmra.mrb[0].mxu0 %v728
        %v919 = vpop.f32.mrb[0].mxu0
        %v920 = vadd.f32 0.0, %v919
        %v921 = vpop.f32.mrb[0].mxu0
        %v922 = vpop.f32.mrb[0].mxu0
        %v923 = vadd.f32 0.0, %v922
        %v924 = vpop.f32.mrb[0].mxu0
        %925 = vmatprep.mubr.bf16.mxu0 0
        %926 = vmatmul.mubr.bf16.gmra.mrb[0].mxu0 %v729
        %v927 = vpop.f32.mrb[0].mxu0
        %v928 = vadd.f32 0.0, %v927
        %v929 = vpop.f32.mrb[0].mxu0
        %v930 = vpop.f32.mrb[0].mxu0
        %v931 = vadd.f32 0.0, %v930
        %v932 = vpop.f32.mrb[0].mxu0
        %933 = vmatprep.mubr.bf16.mxu0 0
        %934 = vmatmul.mubr.bf16.gmra.mrb[0].mxu0 %v730
        %v935 = vpop.f32.mrb[0].mxu0
        %v936 = vadd.f32 0.0, %v935
        %v937 = vpop.f32.mrb[0].mxu0
        %v938 = vpop.f32.mrb[0].mxu0
        %v939 = vadd.f32 0.0, %v938
        %v940 = vpop.f32.mrb[0].mxu0
        %941 = vmatprep.mubr.bf16.mxu0 0
        %942 = vmatmul.mubr.bf16.gmra.mrb[0].mxu0 %v731
        %v943 = vpop.f32.mrb[0].mxu0
        %v944 = vadd.f32 0.0, %v943
        %v945 = vpop.f32.mrb[0].mxu0
        %v946 = vpop.f32.mrb[0].mxu0
        %v947 = vadd.f32 0.0, %v946
        %v948 = vpop.f32.mrb[0].mxu0
        %949 = vmatprep.mubr.bf16.mxu0 0
        %950 = vmatmul.mubr.bf16.gmra.mrb[0].mxu0 %v732
        %v951 = vpop.f32.mrb[0].mxu0
        %v952 = vadd.f32 0.0, %v951
        %v953 = vpop.f32.mrb[0].mxu0
        %v954 = vpop.f32.mrb[0].mxu0
        %v955 = vadd.f32 0.0, %v954
        %v956 = vpop.f32.mrb[0].mxu0
        %957 = vdwg.mxu0
        %v990 = vunpack.c.l.b16 %v217
        %v991 = vunpack.c.l.b16 %v218
        %v992 = vunpack.c.l.b16 %v219
        %v993 = vunpack.c.l.b16 %v220
        %v994 = vunpack.c.l.b16 %v221
        %v995 = vunpack.c.l.b16 %v222
        %v996 = vunpack.c.l.b16 %v223
        %v997 = vunpack.c.l.b16 %v224
        %v998 = vunpack.c.l.b16 %v225
        %v999 = vunpack.c.l.b16 %v226
        %v1000 = vunpack.c.l.b16 %v227
        %v1001 = vunpack.c.l.b16 %v228
        %v1002 = vunpack.c.l.b16 %v229
        %v1003 = vunpack.c.l.b16 %v230
        %v1004 = vunpack.c.l.b16 %v231
        %v1005 = vunpack.c.l.b16 %v232
        %v1006 = vunpack.c.l.b16 %v233
        %v1007 = vunpack.c.l.b16 %v234
        %v1008 = vunpack.c.l.b16 %v235
        %v1009 = vunpack.c.l.b16 %v236
        %v1010 = vunpack.c.l.b16 %v237
        %v1011 = vunpack.c.l.b16 %v238
        %v1012 = vunpack.c.l.b16 %v239
        %v1013 = vunpack.c.l.b16 %v240
        %v1014 = vunpack.c.l.b16 %v241
        %v1015 = vunpack.c.l.b16 %v242
        %v1016 = vunpack.c.l.b16 %v243
        %v1017 = vunpack.c.l.b16 %v244
        %v1018 = vunpack.c.l.b16 %v245
        %v1019 = vunpack.c.l.b16 %v246
        %v1020 = vunpack.c.l.b16 %v247
        %v1021 = vunpack.c.l.b16 %v248
        %v1022 = vpack.c.b16 %v991, %v990
        %v1023 = vpack.c.b16 %v993, %v992
        %v1024 = vpack.c.b16 %v995, %v994
        %v1025 = vpack.c.b16 %v997, %v996
        %v1026 = vpack.c.b16 %v999, %v998
        %v1027 = vpack.c.b16 %v1001, %v1000
        %v1028 = vpack.c.b16 %v1003, %v1002
        %v1029 = vpack.c.b16 %v1005, %v1004
        %v1030 = vpack.c.b16 %v1007, %v1006
        %v1031 = vpack.c.b16 %v1009, %v1008
        %v1032 = vpack.c.b16 %v1011, %v1010
        %v1033 = vpack.c.b16 %v1013, %v1012
        %v1034 = vpack.c.b16 %v1015, %v1014
        %v1035 = vpack.c.b16 %v1017, %v1016
        %v1036 = vpack.c.b16 %v1019, %v1018
        %v1037 = vpack.c.b16 %v1021, %v1020
        %v1070 = vunpack.c.l.b16 %v249
        %v1071 = vunpack.c.l.b16 %v250
        %v1072 = vunpack.c.l.b16 %v251
        %v1073 = vunpack.c.l.b16 %v252
        %v1074 = vunpack.c.l.b16 %v253
        %v1075 = vunpack.c.l.b16 %v254
        %v1076 = vunpack.c.l.b16 %v255
        %v1077 = vunpack.c.l.b16 %v256
        %v1078 = vunpack.c.l.b16 %v257
        %v1079 = vunpack.c.l.b16 %v258
        %v1080 = vunpack.c.l.b16 %v259
        %v1081 = vunpack.c.l.b16 %v260
        %v1082 = vunpack.c.l.b16 %v261
        %v1083 = vunpack.c.l.b16 %v262
        %v1084 = vunpack.c.l.b16 %v263
        %v1085 = vunpack.c.l.b16 %v264
        %v1086 = vpack.c.b16 %v1071, %v1070
        %v1087 = vpack.c.b16 %v1073, %v1072
        %v1088 = vpack.c.b16 %v1075, %v1074
        %v1089 = vpack.c.b16 %v1077, %v1076
        %v1090 = vpack.c.b16 %v1079, %v1078
        %v1091 = vpack.c.b16 %v1081, %v1080
        %v1092 = vpack.c.b16 %v1083, %v1082
        %v1093 = vpack.c.b16 %v1085, %v1084
        %1102 = vmatprep.subr.bf16.mxu0 0
        %1103 = vmatpush1.bf16.msra.mxu0 %v1086
        %1104 = vmatprep.subr.bf16.mxu0 0
        %1105 = vmatpush1.bf16.msra.mxu0 %v1087
        %1106 = vmatprep.subr.bf16.mxu0 0
        %1107 = vmatpush1.bf16.msra.mxu0 %v1088
        %1108 = vmatprep.subr.bf16.mxu0 0
        %1109 = vmatpush1.bf16.msra.mxu0 %v1089
        %1110 = vmatprep.subr.bf16.mxu0 0
        %1111 = vmatpush1.bf16.msra.mxu0 %v1090
        %1112 = vmatprep.subr.bf16.mxu0 0
        %1113 = vmatpush1.bf16.msra.mxu0 %v1091
        %1114 = vmatprep.subr.bf16.mxu0 0
        %1115 = vmatpush1.bf16.msra.mxu0 %v1092
        %1116 = vmatprep.subr.bf16.mxu0 0
        %1117 = vmatpush1.bf16.msra.mxu0 %v1093
        %1118 = vmatprep.subr.bf16.mxu0 0
        %1119 = vmatpush1.bf16.msra.mxu0 0
        %1120 = vmatprep.subr.bf16.mxu0 0
        %1121 = vmatpush1.bf16.msra.mxu0 0
        %1122 = vmatprep.subr.bf16.mxu0 0
        %1123 = vmatpush1.bf16.msra.mxu0 0
        %1124 = vmatprep.subr.bf16.mxu0 0
        %1125 = vmatpush1.bf16.msra.mxu0 0
        %1126 = vmatprep.subr.bf16.mxu0 0
        %1127 = vmatpush1.bf16.msra.mxu0 0
        %1128 = vmatprep.subr.bf16.mxu0 0
        %1129 = vmatpush1.bf16.msra.mxu0 0
        %1130 = vmatprep.subr.bf16.mxu0 0
        %1131 = vmatpush1.bf16.msra.mxu0 0
        %1132 = vmatprep.subr.bf16.mxu0 0
        %1133 = vmatpush1.bf16.msra.mxu0 0
        %1134 = vmatprep.mubr.bf16.mxu0 0
        %1135 = vmatmul.mubr.bf16.gmra.mrb[0].mxu0 %v1022
        %v1136 = vpop.f32.mrb[0].mxu0
        %v1137 = vadd.f32 %v832, %v1136
        %v1138 = vpop.f32.mrb[0].mxu0
        %v1139 = vpop.f32.mrb[0].mxu0
        %v1140 = vadd.f32 %v835, %v1139
        %v1141 = vpop.f32.mrb[0].mxu0
        %1142 = vmatprep.mubr.bf16.mxu0 0
        %1143 = vmatmul.mubr.bf16.gmra.mrb[0].mxu0 %v1023
        %v1144 = vpop.f32.mrb[0].mxu0
        %v1145 = vadd.f32 %v840, %v1144
        %v1146 = vpop.f32.mrb[0].mxu0
        %v1147 = vpop.f32.mrb[0].mxu0
        %v1148 = vadd.f32 %v843, %v1147
        %v1149 = vpop.f32.mrb[0].mxu0
        %1150 = vmatprep.mubr.bf16.mxu0 0
        %1151 = vmatmul.mubr.bf16.gmra.mrb[0].mxu0 %v1024
        %v1152 = vpop.f32.mrb[0].mxu0
        %v1153 = vadd.f32 %v848, %v1152
        %v1154 = vpop.f32.mrb[0].mxu0
        %v1155 = vpop.f32.mrb[0].mxu0
        %v1156 = vadd.f32 %v851, %v1155
        %v1157 = vpop.f32.mrb[0].mxu0
        %1158 = vmatprep.mubr.bf16.mxu0 0
        %1159 = vmatmul.mubr.bf16.gmra.mrb[0].mxu0 %v1025
        %v1160 = vpop.f32.mrb[0].mxu0
        %v1161 = vadd.f32 %v856, %v1160
        %v1162 = vpop.f32.mrb[0].mxu0
        %v1163 = vpop.f32.mrb[0].mxu0
        %v1164 = vadd.f32 %v859, %v1163
        %v1165 = vpop.f32.mrb[0].mxu0
        %1166 = vmatprep.mubr.bf16.mxu0 0
        %1167 = vmatmul.mubr.bf16.gmra.mrb[0].mxu0 %v1026
        %v1168 = vpop.f32.mrb[0].mxu0
        %v1169 = vadd.f32 %v864, %v1168
        %v1170 = vpop.f32.mrb[0].mxu0
        %v1171 = vpop.f32.mrb[0].mxu0
        %v1172 = vadd.f32 %v867, %v1171
        %v1173 = vpop.f32.mrb[0].mxu0
        %1174 = vmatprep.mubr.bf16.mxu0 0
        %1175 = vmatmul.mubr.bf16.gmra.mrb[0].mxu0 %v1027
        %v1176 = vpop.f32.mrb[0].mxu0
        %v1177 = vadd.f32 %v872, %v1176
        %v1178 = vpop.f32.mrb[0].mxu0
        %v1179 = vpop.f32.mrb[0].mxu0
        %v1180 = vadd.f32 %v875, %v1179
        %v1181 = vpop.f32.mrb[0].mxu0
        %1182 = vmatprep.mubr.bf16.mxu0 0
        %1183 = vmatmul.mubr.bf16.gmra.mrb[0].mxu0 %v1028
        %v1184 = vpop.f32.mrb[0].mxu0
        %v1185 = vadd.f32 %v880, %v1184
        %v1186 = vpop.f32.mrb[0].mxu0
        %v1187 = vpop.f32.mrb[0].mxu0
        %v1188 = vadd.f32 %v883, %v1187
        %v1189 = vpop.f32.mrb[0].mxu0
        %1190 = vmatprep.mubr.bf16.mxu0 0
        %1191 = vmatmul.mubr.bf16.gmra.mrb[0].mxu0 %v1029
        %v1192 = vpop.f32.mrb[0].mxu0
        %v1193 = vadd.f32 %v888, %v1192
        %v1194 = vpop.f32.mrb[0].mxu0
        %v1195 = vpop.f32.mrb[0].mxu0
        %v1196 = vadd.f32 %v891, %v1195
        %v1197 = vpop.f32.mrb[0].mxu0
        %1198 = vmatprep.mubr.bf16.mxu0 0
        %1199 = vmatmul.mubr.bf16.gmra.mrb[0].mxu0 %v1030
        %v1200 = vpop.f32.mrb[0].mxu0
        %v1201 = vadd.f32 %v896, %v1200
        %v1202 = vpop.f32.mrb[0].mxu0
        %v1203 = vpop.f32.mrb[0].mxu0
        %v1204 = vadd.f32 %v899, %v1203
        %v1205 = vpop.f32.mrb[0].mxu0
        %1206 = vmatprep.mubr.bf16.mxu0 0
        %1207 = vmatmul.mubr.bf16.gmra.mrb[0].mxu0 %v1031
        %v1208 = vpop.f32.mrb[0].mxu0
        %v1209 = vadd.f32 %v904, %v1208
        %v1210 = vpop.f32.mrb[0].mxu0
        %v1211 = vpop.f32.mrb[0].mxu0
        %v1212 = vadd.f32 %v907, %v1211
        %v1213 = vpop.f32.mrb[0].mxu0
        %1214 = vmatprep.mubr.bf16.mxu0 0
        %1215 = vmatmul.mubr.bf16.gmra.mrb[0].mxu0 %v1032
        %v1216 = vpop.f32.mrb[0].mxu0
        %v1217 = vadd.f32 %v912, %v1216
        %v1218 = vpop.f32.mrb[0].mxu0
        %v1219 = vpop.f32.mrb[0].mxu0
        %v1220 = vadd.f32 %v915, %v1219
        %v1221 = vpop.f32.mrb[0].mxu0
        %1222 = vmatprep.mubr.bf16.mxu0 0
        %1223 = vmatmul.mubr.bf16.gmra.mrb[0].mxu0 %v1033
        %v1224 = vpop.f32.mrb[0].mxu0
        %v1225 = vadd.f32 %v920, %v1224
        %v1226 = vpop.f32.mrb[0].mxu0
        %v1227 = vpop.f32.mrb[0].mxu0
        %v1228 = vadd.f32 %v923, %v1227
        %v1229 = vpop.f32.mrb[0].mxu0
        %1230 = vmatprep.mubr.bf16.mxu0 0
        %1231 = vmatmul.mubr.bf16.gmra.mrb[0].mxu0 %v1034
        %v1232 = vpop.f32.mrb[0].mxu0
        %v1233 = vadd.f32 %v928, %v1232
        %v1234 = vpop.f32.mrb[0].mxu0
        %v1235 = vpop.f32.mrb[0].mxu0
        %v1236 = vadd.f32 %v931, %v1235
        %v1237 = vpop.f32.mrb[0].mxu0
        %1238 = vmatprep.mubr.bf16.mxu0 0
        %1239 = vmatmul.mubr.bf16.gmra.mrb[0].mxu0 %v1035
        %v1240 = vpop.f32.mrb[0].mxu0
        %v1241 = vadd.f32 %v936, %v1240
        %v1242 = vpop.f32.mrb[0].mxu0
        %v1243 = vpop.f32.mrb[0].mxu0
        %v1244 = vadd.f32 %v939, %v1243
        %v1245 = vpop.f32.mrb[0].mxu0
        %1246 = vmatprep.mubr.bf16.mxu0 0
        %1247 = vmatmul.mubr.bf16.gmra.mrb[0].mxu0 %v1036
        %v1248 = vpop.f32.mrb[0].mxu0
        %v1249 = vadd.f32 %v944, %v1248
        %v1250 = vpop.f32.mrb[0].mxu0
        %v1251 = vpop.f32.mrb[0].mxu0
        %v1252 = vadd.f32 %v947, %v1251
        %v1253 = vpop.f32.mrb[0].mxu0
        %1254 = vmatprep.mubr.bf16.mxu0 0
        %1255 = vmatmul.mubr.bf16.gmra.mrb[0].mxu0 %v1037
        %v1256 = vpop.f32.mrb[0].mxu0
        %v1257 = vadd.f32 %v952, %v1256
        %v1258 = vpop.f32.mrb[0].mxu0
        %v1259 = vpop.f32.mrb[0].mxu0
        %v1260 = vadd.f32 %v955, %v1259
        %v1261 = vpop.f32.mrb[0].mxu0
        %1262 = vdwg.mxu0
        %v1263 = vld [vmem:[%s210] sm:$0xe]
        %v1264 = vld [vmem:[%s210 + $0xc] sm:$0xe]
        %v1265 = vld [vmem:[%s210 + $0x18] sm:$0xe]
        %v1266 = vld [vmem:[%s210 + $0x24] sm:$0xe]
        %v1267 = vld [vmem:[%s210 + $0x30] sm:$0xe]
        %v1268 = vld [vmem:[%s210 + $0x3c] sm:$0xe]
        %v1269 = vld [vmem:[%s210 + $0x48] sm:$0xe]
        %v1270 = vld [vmem:[%s210 + $0x54] sm:$0xe]
        %v1271 = vld [vmem:[%s210 + $0x60] sm:$0xe]
        %v1272 = vld [vmem:[%s210 + $0x6c] sm:$0xe]
        %v1273 = vld [vmem:[%s210 + $0x78] sm:$0xe]
        %v1274 = vld [vmem:[%s210 + $0x84] sm:$0xe]
        %v1275 = vld [vmem:[%s210 + $0x90] sm:$0xe]
        %v1276 = vld [vmem:[%s210 + $0x9c] sm:$0xe]
        %v1277 = vld [vmem:[%s210 + $0xa8] sm:$0xe]
        %v1278 = vld [vmem:[%s210 + $0xb4] sm:$0xe]
        %vm1311 = vcmask 1042432
        %vm1312 = vcmask 1046532
        %vm1313 = vmor %vm1311, %vm1312
        %v1314 = vrot.slane %v1263, 5
        %v1315 = vrot.slane %v1314, 4
        %v1316 = vrot.slane %v218, 5
        %v1317 = vsel %vm1313, %v1315, %v1316
        %v1318 = vrot.slane %v1316, 4
        %v1319 = vrot.slane %v265, 5
        %v1320 = vsel %vm1313, %v1318, %v1319
        %v1321 = vrot.slane %v1264, 5
        %v1322 = vrot.slane %v1321, 4
        %v1323 = vrot.slane %v220, 5
        %v1324 = vsel %vm1313, %v1322, %v1323
        %v1325 = vrot.slane %v1323, 4
        %v1326 = vrot.slane %v266, 5
        %v1327 = vsel %vm1313, %v1325, %v1326
        %v1328 = vrot.slane %v1265, 5
        %v1329 = vrot.slane %v1328, 4
        %v1330 = vrot.slane %v222, 5
        %v1331 = vsel %vm1313, %v1329, %v1330
        %v1332 = vrot.slane %v1330, 4
        %v1333 = vrot.slane %v267, 5
        %v1334 = vsel %vm1313, %v1332, %v1333
        %v1335 = vrot.slane %v1266, 5
        %v1336 = vrot.slane %v1335, 4
        %v1337 = vrot.slane %v224, 5
        %v1338 = vsel %vm1313, %v1336, %v1337
        %v1339 = vrot.slane %v1337, 4
        %v1340 = vrot.slane %v268, 5
        %v1341 = vsel %vm1313, %v1339, %v1340
        %v1342 = vrot.slane %v1267, 5
        %v1343 = vrot.slane %v1342, 4
        %v1344 = vrot.slane %v226, 5
        %v1345 = vsel %vm1313, %v1343, %v1344
        %v1346 = vrot.slane %v1344, 4
        %v1347 = vrot.slane %v269, 5
        %v1348 = vsel %vm1313, %v1346, %v1347
        %v1349 = vrot.slane %v1268, 5
        %v1350 = vrot.slane %v1349, 4
        %v1351 = vrot.slane %v228, 5
        %v1352 = vsel %vm1313, %v1350, %v1351
        %v1353 = vrot.slane %v1351, 4
        %v1354 = vrot.slane %v270, 5
        %v1355 = vsel %vm1313, %v1353, %v1354
        %v1356 = vrot.slane %v1269, 5
        %v1357 = vrot.slane %v1356, 4
        %v1358 = vrot.slane %v230, 5
        %v1359 = vsel %vm1313, %v1357, %v1358
        %v1360 = vrot.slane %v1358, 4
        %v1361 = vrot.slane %v271, 5
        %v1362 = vsel %vm1313, %v1360, %v1361
        %v1363 = vrot.slane %v1270, 5
        %v1364 = vrot.slane %v1363, 4
        %v1365 = vrot.slane %v232, 5
        %v1366 = vsel %vm1313, %v1364, %v1365
        %v1367 = vrot.slane %v1365, 4
        %v1368 = vrot.slane %v272, 5
        %v1369 = vsel %vm1313, %v1367, %v1368
        %v1370 = vrot.slane %v1271, 5
        %v1371 = vrot.slane %v1370, 4
        %v1372 = vrot.slane %v234, 5
        %v1373 = vsel %vm1313, %v1371, %v1372
        %v1374 = vrot.slane %v1372, 4
        %v1375 = vrot.slane %v273, 5
        %v1376 = vsel %vm1313, %v1374, %v1375
        %v1377 = vrot.slane %v1272, 5
        %v1378 = vrot.slane %v1377, 4
        %v1379 = vrot.slane %v236, 5
        %v1380 = vsel %vm1313, %v1378, %v1379
        %v1381 = vrot.slane %v1379, 4
        %v1382 = vrot.slane %v274, 5
        %v1383 = vsel %vm1313, %v1381, %v1382
        %v1384 = vrot.slane %v1273, 5
        %v1385 = vrot.slane %v1384, 4
        %v1386 = vrot.slane %v238, 5
        %v1387 = vsel %vm1313, %v1385, %v1386
        %v1388 = vrot.slane %v1386, 4
        %v1389 = vrot.slane %v275, 5
        %v1390 = vsel %vm1313, %v1388, %v1389
        %v1391 = vrot.slane %v1274, 5
        %v1392 = vrot.slane %v1391, 4
        %v1393 = vrot.slane %v240, 5
        %v1394 = vsel %vm1313, %v1392, %v1393
        %v1395 = vrot.slane %v1393, 4
        %v1396 = vrot.slane %v276, 5
        %v1397 = vsel %vm1313, %v1395, %v1396
        %v1398 = vrot.slane %v1275, 5
        %v1399 = vrot.slane %v1398, 4
        %v1400 = vrot.slane %v242, 5
        %v1401 = vsel %vm1313, %v1399, %v1400
        %v1402 = vrot.slane %v1400, 4
        %v1403 = vrot.slane %v277, 5
        %v1404 = vsel %vm1313, %v1402, %v1403
        %v1405 = vrot.slane %v1276, 5
        %v1406 = vrot.slane %v1405, 4
        %v1407 = vrot.slane %v244, 5
        %v1408 = vsel %vm1313, %v1406, %v1407
        %v1409 = vrot.slane %v1407, 4
        %v1410 = vrot.slane %v278, 5
        %v1411 = vsel %vm1313, %v1409, %v1410
        %v1412 = vrot.slane %v1277, 5
        %v1413 = vrot.slane %v1412, 4
        %v1414 = vrot.slane %v246, 5
        %v1415 = vsel %vm1313, %v1413, %v1414
        %v1416 = vrot.slane %v1414, 4
        %v1417 = vrot.slane %v279, 5
        %v1418 = vsel %vm1313, %v1416, %v1417
        %v1419 = vrot.slane %v1278, 5
        %v1420 = vrot.slane %v1419, 4
        %v1421 = vrot.slane %v248, 5
        %v1422 = vsel %vm1313, %v1420, %v1421
        %v1423 = vrot.slane %v1421, 4
        %v1424 = vrot.slane %v280, 5
        %v1425 = vsel %vm1313, %v1423, %v1424
        %s1426 = scalar_lea.vmem %s2, 128
        %v1427 = vld [vmem:[%s1426] sm:$0xf]
        %v1428 = vld [vmem:[%s1426 + $0x4] sm:$0xf]
        %v1429 = vld [vmem:[%s1426 + $0x8] sm:$0xf]
        %v1430 = vld [vmem:[%s1426 + $0xc] sm:$0xf]
        %v1431 = vld [vmem:[%s1426 + $0x10] sm:$0xf]
        %v1432 = vld [vmem:[%s1426 + $0x14] sm:$0xf]
        %v1433 = vld [vmem:[%s1426 + $0x18] sm:$0xf]
        %v1434 = vld [vmem:[%s1426 + $0x1c] sm:$0xf]
        %v1435 = vld [vmem:[%s1426 + $0x20] sm:$0xf]
        %v1436 = vld [vmem:[%s1426 + $0x24] sm:$0xf]
        %v1437 = vld [vmem:[%s1426 + $0x28] sm:$0xf]
        %v1438 = vld [vmem:[%s1426 + $0x2c] sm:$0xf]
        %v1439 = vld [vmem:[%s1426 + $0x30] sm:$0xf]
        %v1440 = vld [vmem:[%s1426 + $0x34] sm:$0xf]
        %v1441 = vld [vmem:[%s1426 + $0x38] sm:$0xf]
        %v1442 = vld [vmem:[%s1426 + $0x3c] sm:$0xf]
        %v1443 = vunpack.c.l.b16 %v1317
        %v1444 = vunpack.c.l.b16 %v1320
        %v1445 = vunpack.c.l.b16 %v1324
        %v1446 = vunpack.c.l.b16 %v1327
        %v1447 = vunpack.c.l.b16 %v1331
        %v1448 = vunpack.c.l.b16 %v1334
        %v1449 = vunpack.c.l.b16 %v1338
        %v1450 = vunpack.c.l.b16 %v1341
        %v1451 = vunpack.c.l.b16 %v1345
        %v1452 = vunpack.c.l.b16 %v1348
        %v1453 = vunpack.c.l.b16 %v1352
        %v1454 = vunpack.c.l.b16 %v1355
        %v1455 = vunpack.c.l.b16 %v1359
        %v1456 = vunpack.c.l.b16 %v1362
        %v1457 = vunpack.c.l.b16 %v1366
        %v1458 = vunpack.c.l.b16 %v1369
        %v1459 = vunpack.c.l.b16 %v1373
        %v1460 = vunpack.c.l.b16 %v1376
        %v1461 = vunpack.c.l.b16 %v1380
        %v1462 = vunpack.c.l.b16 %v1383
        %v1463 = vunpack.c.l.b16 %v1387
        %v1464 = vunpack.c.l.b16 %v1390
        %v1465 = vunpack.c.l.b16 %v1394
        %v1466 = vunpack.c.l.b16 %v1397
        %v1467 = vunpack.c.l.b16 %v1401
        %v1468 = vunpack.c.l.b16 %v1404
        %v1469 = vunpack.c.l.b16 %v1408
        %v1470 = vunpack.c.l.b16 %v1411
        %v1471 = vunpack.c.l.b16 %v1415
        %v1472 = vunpack.c.l.b16 %v1418
        %v1473 = vunpack.c.l.b16 %v1422
        %v1474 = vunpack.c.l.b16 %v1425
        %v1475 = vpack.c.b16 %v1444, %v1443
        %v1476 = vpack.c.b16 %v1446, %v1445
        %v1477 = vpack.c.b16 %v1448, %v1447
        %v1478 = vpack.c.b16 %v1450, %v1449
        %v1479 = vpack.c.b16 %v1452, %v1451
        %v1480 = vpack.c.b16 %v1454, %v1453
        %v1481 = vpack.c.b16 %v1456, %v1455
        %v1482 = vpack.c.b16 %v1458, %v1457
        %v1483 = vpack.c.b16 %v1460, %v1459
        %v1484 = vpack.c.b16 %v1462, %v1461
        %v1485 = vpack.c.b16 %v1464, %v1463
        %v1486 = vpack.c.b16 %v1466, %v1465
        %v1487 = vpack.c.b16 %v1468, %v1467
        %v1488 = vpack.c.b16 %v1470, %v1469
        %v1489 = vpack.c.b16 %v1472, %v1471
        %v1490 = vpack.c.b16 %v1474, %v1473
        %v1523 = vunpack.c.l.b16 %v1427
        %v1524 = vunpack.c.l.b16 %v1428
        %v1525 = vunpack.c.l.b16 %v1429
        %v1526 = vunpack.c.l.b16 %v1430
        %v1527 = vunpack.c.l.b16 %v1431
        %v1528 = vunpack.c.l.b16 %v1432
        %v1529 = vunpack.c.l.b16 %v1433
        %v1530 = vunpack.c.l.b16 %v1434
        %v1531 = vunpack.c.l.b16 %v1435
        %v1532 = vunpack.c.l.b16 %v1436
        %v1533 = vunpack.c.l.b16 %v1437
        %v1534 = vunpack.c.l.b16 %v1438
        %v1535 = vunpack.c.l.b16 %v1439
        %v1536 = vunpack.c.l.b16 %v1440
        %v1537 = vunpack.c.l.b16 %v1441
        %v1538 = vunpack.c.l.b16 %v1442
        %v1539 = vpack.c.b16 %v1524, %v1523
        %v1540 = vpack.c.b16 %v1526, %v1525
        %v1541 = vpack.c.b16 %v1528, %v1527
        %v1542 = vpack.c.b16 %v1530, %v1529
        %v1543 = vpack.c.b16 %v1532, %v1531
        %v1544 = vpack.c.b16 %v1534, %v1533
        %v1545 = vpack.c.b16 %v1536, %v1535
        %v1546 = vpack.c.b16 %v1538, %v1537
        %1555 = vmatprep.subr.bf16.mxu0 0
        %1556 = vmatpush1.bf16.msra.mxu0 %v1539
        %1557 = vmatprep.subr.bf16.mxu0 0
        %1558 = vmatpush1.bf16.msra.mxu0 %v1540
        %1559 = vmatprep.subr.bf16.mxu0 0
        %1560 = vmatpush1.bf16.msra.mxu0 %v1541
        %1561 = vmatprep.subr.bf16.mxu0 0
        %1562 = vmatpush1.bf16.msra.mxu0 %v1542
        %1563 = vmatprep.subr.bf16.mxu0 0
        %1564 = vmatpush1.bf16.msra.mxu0 %v1543
        %1565 = vmatprep.subr.bf16.mxu0 0
        %1566 = vmatpush1.bf16.msra.mxu0 %v1544
        %1567 = vmatprep.subr.bf16.mxu0 0
        %1568 = vmatpush1.bf16.msra.mxu0 %v1545
        %1569 = vmatprep.subr.bf16.mxu0 0
        %1570 = vmatpush1.bf16.msra.mxu0 %v1546
        %1571 = vmatprep.subr.bf16.mxu0 0
        %1572 = vmatpush1.bf16.msra.mxu0 0
        %1573 = vmatprep.subr.bf16.mxu0 0
        %1574 = vmatpush1.bf16.msra.mxu0 0
        %1575 = vmatprep.subr.bf16.mxu0 0
        %1576 = vmatpush1.bf16.msra.mxu0 0
        %1577 = vmatprep.subr.bf16.mxu0 0
        %1578 = vmatpush1.bf16.msra.mxu0 0
        %1579 = vmatprep.subr.bf16.mxu0 0
        %1580 = vmatpush1.bf16.msra.mxu0 0
        %1581 = vmatprep.subr.bf16.mxu0 0
        %1582 = vmatpush1.bf16.msra.mxu0 0
        %1583 = vmatprep.subr.bf16.mxu0 0
        %1584 = vmatpush1.bf16.msra.mxu0 0
        %1585 = vmatprep.subr.bf16.mxu0 0
        %1586 = vmatpush1.bf16.msra.mxu0 0
        %1587 = vmatprep.mubr.bf16.mxu0 0
        %1588 = vmatmul.mubr.bf16.gmra.mrb[0].mxu0 %v1475
        %v1589 = vpop.f32.mrb[0].mxu0
        %v1590 = vadd.f32 0.0, %v1589
        %v1591 = vpop.f32.mrb[0].mxu0
        %v1592 = vpop.f32.mrb[0].mxu0
        %v1593 = vadd.f32 0.0, %v1592
        %v1594 = vpop.f32.mrb[0].mxu0
        %1595 = vmatprep.mubr.bf16.mxu0 0
        %1596 = vmatmul.mubr.bf16.gmra.mrb[0].mxu0 %v1476
        %v1597 = vpop.f32.mrb[0].mxu0
        %v1598 = vadd.f32 0.0, %v1597
        %v1599 = vpop.f32.mrb[0].mxu0
        %v1600 = vpop.f32.mrb[0].mxu0
        %v1601 = vadd.f32 0.0, %v1600
        %v1602 = vpop.f32.mrb[0].mxu0
        %1603 = vmatprep.mubr.bf16.mxu0 0
        %1604 = vmatmul.mubr.bf16.gmra.mrb[0].mxu0 %v1477
        %v1605 = vpop.f32.mrb[0].mxu0
        %v1606 = vadd.f32 0.0, %v1605
        %v1607 = vpop.f32.mrb[0].mxu0
        %v1608 = vpop.f32.mrb[0].mxu0
        %v1609 = vadd.f32 0.0, %v1608
        %v1610 = vpop.f32.mrb[0].mxu0
        %1611 = vmatprep.mubr.bf16.mxu0 0
        %1612 = vmatmul.mubr.bf16.gmra.mrb[0].mxu0 %v1478
        %v1613 = vpop.f32.mrb[0].mxu0
        %v1614 = vadd.f32 0.0, %v1613
        %v1615 = vpop.f32.mrb[0].mxu0
        %v1616 = vpop.f32.mrb[0].mxu0
        %v1617 = vadd.f32 0.0, %v1616
        %v1618 = vpop.f32.mrb[0].mxu0
        %1619 = vmatprep.mubr.bf16.mxu0 0
        %1620 = vmatmul.mubr.bf16.gmra.mrb[0].mxu0 %v1479
        %v1621 = vpop.f32.mrb[0].mxu0
        %v1622 = vadd.f32 0.0, %v1621
        %v1623 = vpop.f32.mrb[0].mxu0
        %v1624 = vpop.f32.mrb[0].mxu0
        %v1625 = vadd.f32 0.0, %v1624
        %v1626 = vpop.f32.mrb[0].mxu0
        %1627 = vmatprep.mubr.bf16.mxu0 0
        %1628 = vmatmul.mubr.bf16.gmra.mrb[0].mxu0 %v1480
        %v1629 = vpop.f32.mrb[0].mxu0
        %v1630 = vadd.f32 0.0, %v1629
        %v1631 = vpop.f32.mrb[0].mxu0
        %v1632 = vpop.f32.mrb[0].mxu0
        %v1633 = vadd.f32 0.0, %v1632
        %v1634 = vpop.f32.mrb[0].mxu0
        %1635 = vmatprep.mubr.bf16.mxu0 0
        %1636 = vmatmul.mubr.bf16.gmra.mrb[0].mxu0 %v1481
        %v1637 = vpop.f32.mrb[0].mxu0
        %v1638 = vadd.f32 0.0, %v1637
        %v1639 = vpop.f32.mrb[0].mxu0
        %v1640 = vpop.f32.mrb[0].mxu0
        %v1641 = vadd.f32 0.0, %v1640
        %v1642 = vpop.f32.mrb[0].mxu0
        %1643 = vmatprep.mubr.bf16.mxu0 0
        %1644 = vmatmul.mubr.bf16.gmra.mrb[0].mxu0 %v1482
        %v1645 = vpop.f32.mrb[0].mxu0
        %v1646 = vadd.f32 0.0, %v1645
        %v1647 = vpop.f32.mrb[0].mxu0
        %v1648 = vpop.f32.mrb[0].mxu0
        %v1649 = vadd.f32 0.0, %v1648
        %v1650 = vpop.f32.mrb[0].mxu0
        %1651 = vmatprep.mubr.bf16.mxu0 0
        %1652 = vmatmul.mubr.bf16.gmra.mrb[0].mxu0 %v1483
        %v1653 = vpop.f32.mrb[0].mxu0
        %v1654 = vadd.f32 0.0, %v1653
        %v1655 = vpop.f32.mrb[0].mxu0
        %v1656 = vpop.f32.mrb[0].mxu0
        %v1657 = vadd.f32 0.0, %v1656
        %v1658 = vpop.f32.mrb[0].mxu0
        %1659 = vmatprep.mubr.bf16.mxu0 0
        %1660 = vmatmul.mubr.bf16.gmra.mrb[0].mxu0 %v1484
        %v1661 = vpop.f32.mrb[0].mxu0
        %v1662 = vadd.f32 0.0, %v1661
        %v1663 = vpop.f32.mrb[0].mxu0
        %v1664 = vpop.f32.mrb[0].mxu0
        %v1665 = vadd.f32 0.0, %v1664
        %v1666 = vpop.f32.mrb[0].mxu0
        %1667 = vmatprep.mubr.bf16.mxu0 0
        %1668 = vmatmul.mubr.bf16.gmra.mrb[0].mxu0 %v1485
        %v1669 = vpop.f32.mrb[0].mxu0
        %v1670 = vadd.f32 0.0, %v1669
        %v1671 = vpop.f32.mrb[0].mxu0
        %v1672 = vpop.f32.mrb[0].mxu0
        %v1673 = vadd.f32 0.0, %v1672
        %v1674 = vpop.f32.mrb[0].mxu0
        %1675 = vmatprep.mubr.bf16.mxu0 0
        %1676 = vmatmul.mubr.bf16.gmra.mrb[0].mxu0 %v1486
        %v1677 = vpop.f32.mrb[0].mxu0
        %v1678 = vadd.f32 0.0, %v1677
        %v1679 = vpop.f32.mrb[0].mxu0
        %v1680 = vpop.f32.mrb[0].mxu0
        %v1681 = vadd.f32 0.0, %v1680
        %v1682 = vpop.f32.mrb[0].mxu0
        %1683 = vmatprep.mubr.bf16.mxu0 0
        %1684 = vmatmul.mubr.bf16.gmra.mrb[0].mxu0 %v1487
        %v1685 = vpop.f32.mrb[0].mxu0
        %v1686 = vadd.f32 0.0, %v1685
        %v1687 = vpop.f32.mrb[0].mxu0
        %v1688 = vpop.f32.mrb[0].mxu0
        %v1689 = vadd.f32 0.0, %v1688
        %v1690 = vpop.f32.mrb[0].mxu0
        %1691 = vmatprep.mubr.bf16.mxu0 0
        %1692 = vmatmul.mubr.bf16.gmra.mrb[0].mxu0 %v1488
        %v1693 = vpop.f32.mrb[0].mxu0
        %v1694 = vadd.f32 0.0, %v1693
        %v1695 = vpop.f32.mrb[0].mxu0
        %v1696 = vpop.f32.mrb[0].mxu0
        %v1697 = vadd.f32 0.0, %v1696
        %v1698 = vpop.f32.mrb[0].mxu0
        %1699 = vmatprep.mubr.bf16.mxu0 0
        %1700 = vmatmul.mubr.bf16.gmra.mrb[0].mxu0 %v1489
        %v1701 = vpop.f32.mrb[0].mxu0
        %v1702 = vadd.f32 0.0, %v1701
        %v1703 = vpop.f32.mrb[0].mxu0
        %v1704 = vpop.f32.mrb[0].mxu0
        %v1705 = vadd.f32 0.0, %v1704
        %v1706 = vpop.f32.mrb[0].mxu0
        %1707 = vmatprep.mubr.bf16.mxu0 0
        %1708 = vmatmul.mubr.bf16.gmra.mrb[0].mxu0 %v1490
        %v1709 = vpop.f32.mrb[0].mxu0
        %v1710 = vadd.f32 0.0, %v1709
        %v1711 = vpop.f32.mrb[0].mxu0
        %v1712 = vpop.f32.mrb[0].mxu0
        %v1713 = vadd.f32 0.0, %v1712
        %v1714 = vpop.f32.mrb[0].mxu0
        %1715 = vdwg.mxu0
        %v1716 = vadd.f32 %v1137, %v1590
        %v1717 = vadd.f32 %v1140, %v1593
        %v1718 = vadd.f32 %v1145, %v1598
        %v1719 = vadd.f32 %v1148, %v1601
        %v1720 = vadd.f32 %v1153, %v1606
        %v1721 = vadd.f32 %v1156, %v1609
        %v1722 = vadd.f32 %v1161, %v1614
        %v1723 = vadd.f32 %v1164, %v1617
        %v1724 = vadd.f32 %v1169, %v1622
        %v1725 = vadd.f32 %v1172, %v1625
        %v1726 = vadd.f32 %v1177, %v1630
        %v1727 = vadd.f32 %v1180, %v1633
        %v1728 = vadd.f32 %v1185, %v1638
        %v1729 = vadd.f32 %v1188, %v1641
        %v1730 = vadd.f32 %v1193, %v1646
        %v1731 = vadd.f32 %v1196, %v1649
        %v1732 = vadd.f32 %v1201, %v1654
        %v1733 = vadd.f32 %v1204, %v1657
        %v1734 = vadd.f32 %v1209, %v1662
        %v1735 = vadd.f32 %v1212, %v1665
        %v1736 = vadd.f32 %v1217, %v1670
        %v1737 = vadd.f32 %v1220, %v1673
        %v1738 = vadd.f32 %v1225, %v1678
        %v1739 = vadd.f32 %v1228, %v1681
        %v1740 = vadd.f32 %v1233, %v1686
        %v1741 = vadd.f32 %v1236, %v1689
        %v1742 = vadd.f32 %v1241, %v1694
        %v1743 = vadd.f32 %v1244, %v1697
        %v1744 = vadd.f32 %v1249, %v1702
        %v1745 = vadd.f32 %v1252, %v1705
        %v1746 = vadd.f32 %v1257, %v1710
        %v1747 = vadd.f32 %v1260, %v1713
        %s1748 = scalar_lea.vmem %s210, 12
        %v1749 = vld [vmem:[%s1748] sm:$0xf]
        %v1750 = vld [vmem:[%s1748 + $0x4] sm:$0xf]
        %v1751 = vld [vmem:[%s1748 + $0xc] sm:$0xf]
        %v1752 = vld [vmem:[%s1748 + $0x10] sm:$0xf]
        %v1753 = vld [vmem:[%s1748 + $0x18] sm:$0xf]
        %v1754 = vld [vmem:[%s1748 + $0x1c] sm:$0xf]
        %v1755 = vld [vmem:[%s1748 + $0x24] sm:$0xf]
        %v1756 = vld [vmem:[%s1748 + $0x28] sm:$0xf]
        %v1757 = vld [vmem:[%s1748 + $0x30] sm:$0xf]
        %v1758 = vld [vmem:[%s1748 + $0x34] sm:$0xf]
        %v1759 = vld [vmem:[%s1748 + $0x3c] sm:$0xf]
        %v1760 = vld [vmem:[%s1748 + $0x40] sm:$0xf]
        %v1761 = vld [vmem:[%s1748 + $0x48] sm:$0xf]
        %v1762 = vld [vmem:[%s1748 + $0x4c] sm:$0xf]
        %v1763 = vld [vmem:[%s1748 + $0x54] sm:$0xf]
        %v1764 = vld [vmem:[%s1748 + $0x58] sm:$0xf]
        %v1765 = vld [vmem:[%s1748 + $0x60] sm:$0xf]
        %v1766 = vld [vmem:[%s1748 + $0x64] sm:$0xf]
        %v1767 = vld [vmem:[%s1748 + $0x6c] sm:$0xf]
        %v1768 = vld [vmem:[%s1748 + $0x70] sm:$0xf]
        %v1769 = vld [vmem:[%s1748 + $0x78] sm:$0xf]
        %v1770 = vld [vmem:[%s1748 + $0x7c] sm:$0xf]
        %v1771 = vld [vmem:[%s1748 + $0x84] sm:$0xf]
        %v1772 = vld [vmem:[%s1748 + $0x88] sm:$0xf]
        %v1773 = vld [vmem:[%s1748 + $0x90] sm:$0xf]
        %v1774 = vld [vmem:[%s1748 + $0x94] sm:$0xf]
        %v1775 = vld [vmem:[%s1748 + $0x9c] sm:$0xf]
        %v1776 = vld [vmem:[%s1748 + $0xa0] sm:$0xf]
        %v1777 = vld [vmem:[%s1748 + $0xa8] sm:$0xf]
        %v1778 = vld [vmem:[%s1748 + $0xac] sm:$0xf]
        %v1779 = vld [vmem:[%s1748 + $0xb4] sm:$0xf]
        %v1780 = vld [vmem:[%s1748 + $0xb8] sm:$0xf]
        %s1781 = scalar_lea.vmem %s2, 192
        %v1782 = vld [vmem:[%s1781] sm:$0xf]
        %v1783 = vld [vmem:[%s1781 + $0x4] sm:$0xf]
        %v1784 = vld [vmem:[%s1781 + $0x8] sm:$0xf]
        %v1785 = vld [vmem:[%s1781 + $0xc] sm:$0xf]
        %v1786 = vld [vmem:[%s1781 + $0x10] sm:$0xf]
        %v1787 = vld [vmem:[%s1781 + $0x14] sm:$0xf]
        %v1788 = vld [vmem:[%s1781 + $0x18] sm:$0xf]
        %v1789 = vld [vmem:[%s1781 + $0x1c] sm:$0xf]
        %v1790 = vld [vmem:[%s1781 + $0x20] sm:$0xf]
        %v1791 = vld [vmem:[%s1781 + $0x24] sm:$0xf]
        %v1792 = vld [vmem:[%s1781 + $0x28] sm:$0xf]
        %v1793 = vld [vmem:[%s1781 + $0x2c] sm:$0xf]
        %v1794 = vld [vmem:[%s1781 + $0x30] sm:$0xf]
        %v1795 = vld [vmem:[%s1781 + $0x34] sm:$0xf]
        %v1796 = vld [vmem:[%s1781 + $0x38] sm:$0xf]
        %v1797 = vld [vmem:[%s1781 + $0x3c] sm:$0xf]
        %v1830 = vunpack.c.l.b16 %v1749
        %v1831 = vunpack.c.l.b16 %v1750
        %v1832 = vunpack.c.l.b16 %v1751
        %v1833 = vunpack.c.l.b16 %v1752
        %v1834 = vunpack.c.l.b16 %v1753
        %v1835 = vunpack.c.l.b16 %v1754
        %v1836 = vunpack.c.l.b16 %v1755
        %v1837 = vunpack.c.l.b16 %v1756
        %v1838 = vunpack.c.l.b16 %v1757
        %v1839 = vunpack.c.l.b16 %v1758
        %v1840 = vunpack.c.l.b16 %v1759
        %v1841 = vunpack.c.l.b16 %v1760
        %v1842 = vunpack.c.l.b16 %v1761
        %v1843 = vunpack.c.l.b16 %v1762
        %v1844 = vunpack.c.l.b16 %v1763
        %v1845 = vunpack.c.l.b16 %v1764
        %v1846 = vunpack.c.l.b16 %v1765
        %v1847 = vunpack.c.l.b16 %v1766
        %v1848 = vunpack.c.l.b16 %v1767
        %v1849 = vunpack.c.l.b16 %v1768
        %v1850 = vunpack.c.l.b16 %v1769
        %v1851 = vunpack.c.l.b16 %v1770
        %v1852 = vunpack.c.l.b16 %v1771
        %v1853 = vunpack.c.l.b16 %v1772
        %v1854 = vunpack.c.l.b16 %v1773
        %v1855 = vunpack.c.l.b16 %v1774
        %v1856 = vunpack.c.l.b16 %v1775
        %v1857 = vunpack.c.l.b16 %v1776
        %v1858 = vunpack.c.l.b16 %v1777
        %v1859 = vunpack.c.l.b16 %v1778
        %v1860 = vunpack.c.l.b16 %v1779
        %v1861 = vunpack.c.l.b16 %v1780
        %v1862 = vpack.c.b16 %v1831, %v1830
        %v1863 = vpack.c.b16 %v1833, %v1832
        %v1864 = vpack.c.b16 %v1835, %v1834
        %v1865 = vpack.c.b16 %v1837, %v1836
        %v1866 = vpack.c.b16 %v1839, %v1838
        %v1867 = vpack.c.b16 %v1841, %v1840
        %v1868 = vpack.c.b16 %v1843, %v1842
        %v1869 = vpack.c.b16 %v1845, %v1844
        %v1870 = vpack.c.b16 %v1847, %v1846
        %v1871 = vpack.c.b16 %v1849, %v1848
        %v1872 = vpack.c.b16 %v1851, %v1850
        %v1873 = vpack.c.b16 %v1853, %v1852
        %v1874 = vpack.c.b16 %v1855, %v1854
        %v1875 = vpack.c.b16 %v1857, %v1856
        %v1876 = vpack.c.b16 %v1859, %v1858
        %v1877 = vpack.c.b16 %v1861, %v1860
        %v1910 = vunpack.c.l.b16 %v1782
        %v1911 = vunpack.c.l.b16 %v1783
        %v1912 = vunpack.c.l.b16 %v1784
        %v1913 = vunpack.c.l.b16 %v1785
        %v1914 = vunpack.c.l.b16 %v1786
        %v1915 = vunpack.c.l.b16 %v1787
        %v1916 = vunpack.c.l.b16 %v1788
        %v1917 = vunpack.c.l.b16 %v1789
        %v1918 = vunpack.c.l.b16 %v1790
        %v1919 = vunpack.c.l.b16 %v1791
        %v1920 = vunpack.c.l.b16 %v1792
        %v1921 = vunpack.c.l.b16 %v1793
        %v1922 = vunpack.c.l.b16 %v1794
        %v1923 = vunpack.c.l.b16 %v1795
        %v1924 = vunpack.c.l.b16 %v1796
        %v1925 = vunpack.c.l.b16 %v1797
        %v1926 = vpack.c.b16 %v1911, %v1910
        %v1927 = vpack.c.b16 %v1913, %v1912
        %v1928 = vpack.c.b16 %v1915, %v1914
        %v1929 = vpack.c.b16 %v1917, %v1916
        %v1930 = vpack.c.b16 %v1919, %v1918
        %v1931 = vpack.c.b16 %v1921, %v1920
        %v1932 = vpack.c.b16 %v1923, %v1922
        %v1933 = vpack.c.b16 %v1925, %v1924
        %1942 = vmatprep.subr.bf16.mxu0 0
        %1943 = vmatpush1.bf16.msra.mxu0 %v1926
        %1944 = vmatprep.subr.bf16.mxu0 0
        %1945 = vmatpush1.bf16.msra.mxu0 %v1927
        %1946 = vmatprep.subr.bf16.mxu0 0
        %1947 = vmatpush1.bf16.msra.mxu0 %v1928
        %1948 = vmatprep.subr.bf16.mxu0 0
        %1949 = vmatpush1.bf16.msra.mxu0 %v1929
        %1950 = vmatprep.subr.bf16.mxu0 0
        %1951 = vmatpush1.bf16.msra.mxu0 %v1930
        %1952 = vmatprep.subr.bf16.mxu0 0
        %1953 = vmatpush1.bf16.msra.mxu0 %v1931
        %1954 = vmatprep.subr.bf16.mxu0 0
        %1955 = vmatpush1.bf16.msra.mxu0 %v1932
        %1956 = vmatprep.subr.bf16.mxu0 0
        %1957 = vmatpush1.bf16.msra.mxu0 %v1933
        %1958 = vmatprep.subr.bf16.mxu0 0
        %1959 = vmatpush1.bf16.msra.mxu0 0
        %1960 = vmatprep.subr.bf16.mxu0 0
        %1961 = vmatpush1.bf16.msra.mxu0 0
        %1962 = vmatprep.subr.bf16.mxu0 0
        %1963 = vmatpush1.bf16.msra.mxu0 0
        %1964 = vmatprep.subr.bf16.mxu0 0
        %1965 = vmatpush1.bf16.msra.mxu0 0
        %1966 = vmatprep.subr.bf16.mxu0 0
        %1967 = vmatpush1.bf16.msra.mxu0 0
        %1968 = vmatprep.subr.bf16.mxu0 0
        %1969 = vmatpush1.bf16.msra.mxu0 0
        %1970 = vmatprep.subr.bf16.mxu0 0
        %1971 = vmatpush1.bf16.msra.mxu0 0
        %1972 = vmatprep.subr.bf16.mxu0 0
        %1973 = vmatpush1.bf16.msra.mxu0 0
        %1974 = vmatprep.mubr.bf16.mxu0 0
        %1975 = vmatmul.mubr.bf16.gmra.mrb[0].mxu0 %v1862
        %v1976 = vpop.f32.mrb[0].mxu0
        %v1977 = vadd.f32 0.0, %v1976
        %v1978 = vpop.f32.mrb[0].mxu0
        %v1979 = vpop.f32.mrb[0].mxu0
        %v1980 = vadd.f32 0.0, %v1979
        %v1981 = vpop.f32.mrb[0].mxu0
        %1982 = vmatprep.mubr.bf16.mxu0 0
        %1983 = vmatmul.mubr.bf16.gmra.mrb[0].mxu0 %v1863
        %v1984 = vpop.f32.mrb[0].mxu0
        %v1985 = vadd.f32 0.0, %v1984
        %v1986 = vpop.f32.mrb[0].mxu0
        %v1987 = vpop.f32.mrb[0].mxu0
        %v1988 = vadd.f32 0.0, %v1987
        %v1989 = vpop.f32.mrb[0].mxu0
        %1990 = vmatprep.mubr.bf16.mxu0 0
        %1991 = vmatmul.mubr.bf16.gmra.mrb[0].mxu0 %v1864
        %v1992 = vpop.f32.mrb[0].mxu0
        %v1993 = vadd.f32 0.0, %v1992
        %v1994 = vpop.f32.mrb[0].mxu0
        %v1995 = vpop.f32.mrb[0].mxu0
        %v1996 = vadd.f32 0.0, %v1995
        %v1997 = vpop.f32.mrb[0].mxu0
        %1998 = vmatprep.mubr.bf16.mxu0 0
        %1999 = vmatmul.mubr.bf16.gmra.mrb[0].mxu0 %v1865
        %v2000 = vpop.f32.mrb[0].mxu0
        %v2001 = vadd.f32 0.0, %v2000
        %v2002 = vpop.f32.mrb[0].mxu0
        %v2003 = vpop.f32.mrb[0].mxu0
        %v2004 = vadd.f32 0.0, %v2003
        %v2005 = vpop.f32.mrb[0].mxu0
        %2006 = vmatprep.mubr.bf16.mxu0 0
        %2007 = vmatmul.mubr.bf16.gmra.mrb[0].mxu0 %v1866
        %v2008 = vpop.f32.mrb[0].mxu0
        %v2009 = vadd.f32 0.0, %v2008
        %v2010 = vpop.f32.mrb[0].mxu0
        %v2011 = vpop.f32.mrb[0].mxu0
        %v2012 = vadd.f32 0.0, %v2011
        %v2013 = vpop.f32.mrb[0].mxu0
        %2014 = vmatprep.mubr.bf16.mxu0 0
        %2015 = vmatmul.mubr.bf16.gmra.mrb[0].mxu0 %v1867
        %v2016 = vpop.f32.mrb[0].mxu0
        %v2017 = vadd.f32 0.0, %v2016
        %v2018 = vpop.f32.mrb[0].mxu0
        %v2019 = vpop.f32.mrb[0].mxu0
        %v2020 = vadd.f32 0.0, %v2019
        %v2021 = vpop.f32.mrb[0].mxu0
        %2022 = vmatprep.mubr.bf16.mxu0 0
        %2023 = vmatmul.mubr.bf16.gmra.mrb[0].mxu0 %v1868
        %v2024 = vpop.f32.mrb[0].mxu0
        %v2025 = vadd.f32 0.0, %v2024
        %v2026 = vpop.f32.mrb[0].mxu0
        %v2027 = vpop.f32.mrb[0].mxu0
        %v2028 = vadd.f32 0.0, %v2027
        %v2029 = vpop.f32.mrb[0].mxu0
        %2030 = vmatprep.mubr.bf16.mxu0 0
        %2031 = vmatmul.mubr.bf16.gmra.mrb[0].mxu0 %v1869
        %v2032 = vpop.f32.mrb[0].mxu0
        %v2033 = vadd.f32 0.0, %v2032
        %v2034 = vpop.f32.mrb[0].mxu0
        %v2035 = vpop.f32.mrb[0].mxu0
        %v2036 = vadd.f32 0.0, %v2035
        %v2037 = vpop.f32.mrb[0].mxu0
        %2038 = vmatprep.mubr.bf16.mxu0 0
        %2039 = vmatmul.mubr.bf16.gmra.mrb[0].mxu0 %v1870
        %v2040 = vpop.f32.mrb[0].mxu0
        %v2041 = vadd.f32 0.0, %v2040
        %v2042 = vpop.f32.mrb[0].mxu0
        %v2043 = vpop.f32.mrb[0].mxu0
        %v2044 = vadd.f32 0.0, %v2043
        %v2045 = vpop.f32.mrb[0].mxu0
        %2046 = vmatprep.mubr.bf16.mxu0 0
        %2047 = vmatmul.mubr.bf16.gmra.mrb[0].mxu0 %v1871
        %v2048 = vpop.f32.mrb[0].mxu0
        %v2049 = vadd.f32 0.0, %v2048
        %v2050 = vpop.f32.mrb[0].mxu0
        %v2051 = vpop.f32.mrb[0].mxu0
        %v2052 = vadd.f32 0.0, %v2051
        %v2053 = vpop.f32.mrb[0].mxu0
        %2054 = vmatprep.mubr.bf16.mxu0 0
        %2055 = vmatmul.mubr.bf16.gmra.mrb[0].mxu0 %v1872
        %v2056 = vpop.f32.mrb[0].mxu0
        %v2057 = vadd.f32 0.0, %v2056
        %v2058 = vpop.f32.mrb[0].mxu0
        %v2059 = vpop.f32.mrb[0].mxu0
        %v2060 = vadd.f32 0.0, %v2059
        %v2061 = vpop.f32.mrb[0].mxu0
        %2062 = vmatprep.mubr.bf16.mxu0 0
        %2063 = vmatmul.mubr.bf16.gmra.mrb[0].mxu0 %v1873
        %v2064 = vpop.f32.mrb[0].mxu0
        %v2065 = vadd.f32 0.0, %v2064
        %v2066 = vpop.f32.mrb[0].mxu0
        %v2067 = vpop.f32.mrb[0].mxu0
        %v2068 = vadd.f32 0.0, %v2067
        %v2069 = vpop.f32.mrb[0].mxu0
        %2070 = vmatprep.mubr.bf16.mxu0 0
        %2071 = vmatmul.mubr.bf16.gmra.mrb[0].mxu0 %v1874
        %v2072 = vpop.f32.mrb[0].mxu0
        %v2073 = vadd.f32 0.0, %v2072
        %v2074 = vpop.f32.mrb[0].mxu0
        %v2075 = vpop.f32.mrb[0].mxu0
        %v2076 = vadd.f32 0.0, %v2075
        %v2077 = vpop.f32.mrb[0].mxu0
        %2078 = vmatprep.mubr.bf16.mxu0 0
        %2079 = vmatmul.mubr.bf16.gmra.mrb[0].mxu0 %v1875
        %v2080 = vpop.f32.mrb[0].mxu0
        %v2081 = vadd.f32 0.0, %v2080
        %v2082 = vpop.f32.mrb[0].mxu0
        %v2083 = vpop.f32.mrb[0].mxu0
        %v2084 = vadd.f32 0.0, %v2083
        %v2085 = vpop.f32.mrb[0].mxu0
        %2086 = vmatprep.mubr.bf16.mxu0 0
        %2087 = vmatmul.mubr.bf16.gmra.mrb[0].mxu0 %v1876
        %v2088 = vpop.f32.mrb[0].mxu0
        %v2089 = vadd.f32 0.0, %v2088
        %v2090 = vpop.f32.mrb[0].mxu0
        %v2091 = vpop.f32.mrb[0].mxu0
        %v2092 = vadd.f32 0.0, %v2091
        %v2093 = vpop.f32.mrb[0].mxu0
        %2094 = vmatprep.mubr.bf16.mxu0 0
        %2095 = vmatmul.mubr.bf16.gmra.mrb[0].mxu0 %v1877
        %v2096 = vpop.f32.mrb[0].mxu0
        %v2097 = vadd.f32 0.0, %v2096
        %v2098 = vpop.f32.mrb[0].mxu0
        %v2099 = vpop.f32.mrb[0].mxu0
        %v2100 = vadd.f32 0.0, %v2099
        %v2101 = vpop.f32.mrb[0].mxu0
        %2102 = vdwg.mxu0
        %v2103 = vadd.f32 %v1716, %v1977
        %v2104 = vadd.f32 %v1717, %v1980
        %v2105 = vadd.f32 %v1718, %v1985
        %v2106 = vadd.f32 %v1719, %v1988
        %v2107 = vadd.f32 %v1720, %v1993
        %v2108 = vadd.f32 %v1721, %v1996
        %v2109 = vadd.f32 %v1722, %v2001
        %v2110 = vadd.f32 %v1723, %v2004
        %v2111 = vadd.f32 %v1724, %v2009
        %v2112 = vadd.f32 %v1725, %v2012
        %v2113 = vadd.f32 %v1726, %v2017
        %v2114 = vadd.f32 %v1727, %v2020
        %v2115 = vadd.f32 %v1728, %v2025
        %v2116 = vadd.f32 %v1729, %v2028
        %v2117 = vadd.f32 %v1730, %v2033
        %v2118 = vadd.f32 %v1731, %v2036
        %v2119 = vadd.f32 %v1732, %v2041
        %v2120 = vadd.f32 %v1733, %v2044
        %v2121 = vadd.f32 %v1734, %v2049
        %v2122 = vadd.f32 %v1735, %v2052
        %v2123 = vadd.f32 %v1736, %v2057
        %v2124 = vadd.f32 %v1737, %v2060
        %v2125 = vadd.f32 %v1738, %v2065
        %v2126 = vadd.f32 %v1739, %v2068
        %v2127 = vadd.f32 %v1740, %v2073
        %v2128 = vadd.f32 %v1741, %v2076
        %v2129 = vadd.f32 %v1742, %v2081
        %v2130 = vadd.f32 %v1743, %v2084
        %v2131 = vadd.f32 %v1744, %v2089
        %v2132 = vadd.f32 %v1745, %v2092
        %v2133 = vadd.f32 %v1746, %v2097
        %v2134 = vadd.f32 %v1747, %v2100
        %v2135 = vld [vmem:[%s1748] sm:$0xf]
        %v2136 = vld [vmem:[%s1748 + $0x4] sm:$0xf]
        %v2137 = vld [vmem:[%s1748 + $0x8] sm:$0x1]
        %v2138 = vld [vmem:[%s1748 + $0xc] sm:$0xf]
        %v2139 = vld [vmem:[%s1748 + $0x10] sm:$0xf]
        %v2140 = vld [vmem:[%s1748 + $0x14] sm:$0x1]
        %v2141 = vld [vmem:[%s1748 + $0x18] sm:$0xf]
        %v2142 = vld [vmem:[%s1748 + $0x1c] sm:$0xf]
        %v2143 = vld [vmem:[%s1748 + $0x20] sm:$0x1]
        %v2144 = vld [vmem:[%s1748 + $0x24] sm:$0xf]
        %v2145 = vld [vmem:[%s1748 + $0x28] sm:$0xf]
        %v2146 = vld [vmem:[%s1748 + $0x2c] sm:$0x1]
        %v2147 = vld [vmem:[%s1748 + $0x30] sm:$0xf]
        %v2148 = vld [vmem:[%s1748 + $0x34] sm:$0xf]
        %v2149 = vld [vmem:[%s1748 + $0x38] sm:$0x1]
        %v2150 = vld [vmem:[%s1748 + $0x3c] sm:$0xf]
        %v2151 = vld [vmem:[%s1748 + $0x40] sm:$0xf]
        %v2152 = vld [vmem:[%s1748 + $0x44] sm:$0x1]
        %v2153 = vld [vmem:[%s1748 + $0x48] sm:$0xf]
        %v2154 = vld [vmem:[%s1748 + $0x4c] sm:$0xf]
        %v2155 = vld [vmem:[%s1748 + $0x50] sm:$0x1]
        %v2156 = vld [vmem:[%s1748 + $0x54] sm:$0xf]
        %v2157 = vld [vmem:[%s1748 + $0x58] sm:$0xf]
        %v2158 = vld [vmem:[%s1748 + $0x5c] sm:$0x1]
        %v2159 = vld [vmem:[%s1748 + $0x60] sm:$0xf]
        %v2160 = vld [vmem:[%s1748 + $0x64] sm:$0xf]
        %v2161 = vld [vmem:[%s1748 + $0x68] sm:$0x1]
        %v2162 = vld [vmem:[%s1748 + $0x6c] sm:$0xf]
        %v2163 = vld [vmem:[%s1748 + $0x70] sm:$0xf]
        %v2164 = vld [vmem:[%s1748 + $0x74] sm:$0x1]
        %v2165 = vld [vmem:[%s1748 + $0x78] sm:$0xf]
        %v2166 = vld [vmem:[%s1748 + $0x7c] sm:$0xf]
        %v2167 = vld [vmem:[%s1748 + $0x80] sm:$0x1]
        %v2168 = vld [vmem:[%s1748 + $0x84] sm:$0xf]
        %v2169 = vld [vmem:[%s1748 + $0x88] sm:$0xf]
        %v2170 = vld [vmem:[%s1748 + $0x8c] sm:$0x1]
        %v2171 = vld [vmem:[%s1748 + $0x90] sm:$0xf]
        %v2172 = vld [vmem:[%s1748 + $0x94] sm:$0xf]
        %v2173 = vld [vmem:[%s1748 + $0x98] sm:$0x1]
        %v2174 = vld [vmem:[%s1748 + $0x9c] sm:$0xf]
        %v2175 = vld [vmem:[%s1748 + $0xa0] sm:$0xf]
        %v2176 = vld [vmem:[%s1748 + $0xa4] sm:$0x1]
        %v2177 = vld [vmem:[%s1748 + $0xa8] sm:$0xf]
        %v2178 = vld [vmem:[%s1748 + $0xac] sm:$0xf]
        %v2179 = vld [vmem:[%s1748 + $0xb0] sm:$0x1]
        %v2180 = vld [vmem:[%s1748 + $0xb4] sm:$0xf]
        %v2181 = vld [vmem:[%s1748 + $0xb8] sm:$0xf]
        %v2182 = vld [vmem:[%s1748 + $0xbc] sm:$0x1]
        %v2184 = vshrl.u32 %v2135, 16
        %v2186 = vrot.slane %v2184, 4
        %v2187 = vshll.u32 %v2135, 16
        %v2189 = vrot.slane %v2187, 5
        %v2190 = vor.u32 %v2186, %v2189
        %v2191 = vrot.slane %v2190, 4
        %v2193 = vshll.u32 %v2136, 16
        %v2195 = vrot.slane %v2193, 5
        %v2196 = vsel %vm283, %v2191, %v2195
        %v2197 = vshrl.u32 %v2136, 16
        %v2199 = vrot.slane %v2197, 4
        %v2200 = vor.u32 %v2199, %v2195
        %v2201 = vrot.slane %v2200, 4
        %v2203 = vshll.u32 %v2137, 16
        %v2205 = vrot.slane %v2203, 5
        %v2206 = vsel %vm283, %v2201, %v2205
        %v2208 = vshrl.u32 %v2138, 16
        %v2210 = vrot.slane %v2208, 4
        %v2211 = vshll.u32 %v2138, 16
        %v2213 = vrot.slane %v2211, 5
        %v2214 = vor.u32 %v2210, %v2213
        %v2215 = vrot.slane %v2214, 4
        %v2217 = vshll.u32 %v2139, 16
        %v2219 = vrot.slane %v2217, 5
        %v2220 = vsel %vm283, %v2215, %v2219
        %v2221 = vshrl.u32 %v2139, 16
        %v2223 = vrot.slane %v2221, 4
        %v2224 = vor.u32 %v2223, %v2219
        %v2225 = vrot.slane %v2224, 4
        %v2227 = vshll.u32 %v2140, 16
        %v2229 = vrot.slane %v2227, 5
        %v2230 = vsel %vm283, %v2225, %v2229
        %v2232 = vshrl.u32 %v2141, 16
        %v2234 = vrot.slane %v2232, 4
        %v2235 = vshll.u32 %v2141, 16
        %v2237 = vrot.slane %v2235, 5
        %v2238 = vor.u32 %v2234, %v2237
        %v2239 = vrot.slane %v2238, 4
        %v2241 = vshll.u32 %v2142, 16
        %v2243 = vrot.slane %v2241, 5
        %v2244 = vsel %vm283, %v2239, %v2243
        %v2245 = vshrl.u32 %v2142, 16
        %v2247 = vrot.slane %v2245, 4
        %v2248 = vor.u32 %v2247, %v2243
        %v2249 = vrot.slane %v2248, 4
        %v2251 = vshll.u32 %v2143, 16
        %v2253 = vrot.slane %v2251, 5
        %v2254 = vsel %vm283, %v2249, %v2253
        %v2256 = vshrl.u32 %v2144, 16
        %v2258 = vrot.slane %v2256, 4
        %v2259 = vshll.u32 %v2144, 16
        %v2261 = vrot.slane %v2259, 5
        %v2262 = vor.u32 %v2258, %v2261
        %v2263 = vrot.slane %v2262, 4
        %v2265 = vshll.u32 %v2145, 16
        %v2267 = vrot.slane %v2265, 5
        %v2268 = vsel %vm283, %v2263, %v2267
        %v2269 = vshrl.u32 %v2145, 16
        %v2271 = vrot.slane %v2269, 4
        %v2272 = vor.u32 %v2271, %v2267
        %v2273 = vrot.slane %v2272, 4
        %v2275 = vshll.u32 %v2146, 16
        %v2277 = vrot.slane %v2275, 5
        %v2278 = vsel %vm283, %v2273, %v2277
        %v2280 = vshrl.u32 %v2147, 16
        %v2282 = vrot.slane %v2280, 4
        %v2283 = vshll.u32 %v2147, 16
        %v2285 = vrot.slane %v2283, 5
        %v2286 = vor.u32 %v2282, %v2285
        %v2287 = vrot.slane %v2286, 4
        %v2289 = vshll.u32 %v2148, 16
        %v2291 = vrot.slane %v2289, 5
        %v2292 = vsel %vm283, %v2287, %v2291
        %v2293 = vshrl.u32 %v2148, 16
        %v2295 = vrot.slane %v2293, 4
        %v2296 = vor.u32 %v2295, %v2291
        %v2297 = vrot.slane %v2296, 4
        %v2299 = vshll.u32 %v2149, 16
        %v2301 = vrot.slane %v2299, 5
        %v2302 = vsel %vm283, %v2297, %v2301
        %v2304 = vshrl.u32 %v2150, 16
        %v2306 = vrot.slane %v2304, 4
        %v2307 = vshll.u32 %v2150, 16
        %v2309 = vrot.slane %v2307, 5
        %v2310 = vor.u32 %v2306, %v2309
        %v2311 = vrot.slane %v2310, 4
        %v2313 = vshll.u32 %v2151, 16
        %v2315 = vrot.slane %v2313, 5
        %v2316 = vsel %vm283, %v2311, %v2315
        %v2317 = vshrl.u32 %v2151, 16
        %v2319 = vrot.slane %v2317, 4
        %v2320 = vor.u32 %v2319, %v2315
        %v2321 = vrot.slane %v2320, 4
        %v2323 = vshll.u32 %v2152, 16
        %v2325 = vrot.slane %v2323, 5
        %v2326 = vsel %vm283, %v2321, %v2325
        %v2328 = vshrl.u32 %v2153, 16
        %v2330 = vrot.slane %v2328, 4
        %v2331 = vshll.u32 %v2153, 16
        %v2333 = vrot.slane %v2331, 5
        %v2334 = vor.u32 %v2330, %v2333
        %v2335 = vrot.slane %v2334, 4
        %v2337 = vshll.u32 %v2154, 16
        %v2339 = vrot.slane %v2337, 5
        %v2340 = vsel %vm283, %v2335, %v2339
        %v2341 = vshrl.u32 %v2154, 16
        %v2343 = vrot.slane %v2341, 4
        %v2344 = vor.u32 %v2343, %v2339
        %v2345 = vrot.slane %v2344, 4
        %v2347 = vshll.u32 %v2155, 16
        %v2349 = vrot.slane %v2347, 5
        %v2350 = vsel %vm283, %v2345, %v2349
        %v2352 = vshrl.u32 %v2156, 16
        %v2354 = vrot.slane %v2352, 4
        %v2355 = vshll.u32 %v2156, 16
        %v2357 = vrot.slane %v2355, 5
        %v2358 = vor.u32 %v2354, %v2357
        %v2359 = vrot.slane %v2358, 4
        %v2361 = vshll.u32 %v2157, 16
        %v2363 = vrot.slane %v2361, 5
        %v2364 = vsel %vm283, %v2359, %v2363
        %v2365 = vshrl.u32 %v2157, 16
        %v2367 = vrot.slane %v2365, 4
        %v2368 = vor.u32 %v2367, %v2363
        %v2369 = vrot.slane %v2368, 4
        %v2371 = vshll.u32 %v2158, 16
        %v2373 = vrot.slane %v2371, 5
        %v2374 = vsel %vm283, %v2369, %v2373
        %v2376 = vshrl.u32 %v2159, 16
        %v2378 = vrot.slane %v2376, 4
        %v2379 = vshll.u32 %v2159, 16
        %v2381 = vrot.slane %v2379, 5
        %v2382 = vor.u32 %v2378, %v2381
        %v2383 = vrot.slane %v2382, 4
        %v2385 = vshll.u32 %v2160, 16
        %v2387 = vrot.slane %v2385, 5
        %v2388 = vsel %vm283, %v2383, %v2387
        %v2389 = vshrl.u32 %v2160, 16
        %v2391 = vrot.slane %v2389, 4
        %v2392 = vor.u32 %v2391, %v2387
        %v2393 = vrot.slane %v2392, 4
        %v2395 = vshll.u32 %v2161, 16
        %v2397 = vrot.slane %v2395, 5
        %v2398 = vsel %vm283, %v2393, %v2397
        %v2400 = vshrl.u32 %v2162, 16
        %v2402 = vrot.slane %v2400, 4
        %v2403 = vshll.u32 %v2162, 16
        %v2405 = vrot.slane %v2403, 5
        %v2406 = vor.u32 %v2402, %v2405
        %v2407 = vrot.slane %v2406, 4
        %v2409 = vshll.u32 %v2163, 16
        %v2411 = vrot.slane %v2409, 5
        %v2412 = vsel %vm283, %v2407, %v2411
        %v2413 = vshrl.u32 %v2163, 16
        %v2415 = vrot.slane %v2413, 4
        %v2416 = vor.u32 %v2415, %v2411
        %v2417 = vrot.slane %v2416, 4
        %v2419 = vshll.u32 %v2164, 16
        %v2421 = vrot.slane %v2419, 5
        %v2422 = vsel %vm283, %v2417, %v2421
        %v2424 = vshrl.u32 %v2165, 16
        %v2426 = vrot.slane %v2424, 4
        %v2427 = vshll.u32 %v2165, 16
        %v2429 = vrot.slane %v2427, 5
        %v2430 = vor.u32 %v2426, %v2429
        %v2431 = vrot.slane %v2430, 4
        %v2433 = vshll.u32 %v2166, 16
        %v2435 = vrot.slane %v2433, 5
        %v2436 = vsel %vm283, %v2431, %v2435
        %v2437 = vshrl.u32 %v2166, 16
        %v2439 = vrot.slane %v2437, 4
        %v2440 = vor.u32 %v2439, %v2435
        %v2441 = vrot.slane %v2440, 4
        %v2443 = vshll.u32 %v2167, 16
        %v2445 = vrot.slane %v2443, 5
        %v2446 = vsel %vm283, %v2441, %v2445
        %v2448 = vshrl.u32 %v2168, 16
        %v2450 = vrot.slane %v2448, 4
        %v2451 = vshll.u32 %v2168, 16
        %v2453 = vrot.slane %v2451, 5
        %v2454 = vor.u32 %v2450, %v2453
        %v2455 = vrot.slane %v2454, 4
        %v2457 = vshll.u32 %v2169, 16
        %v2459 = vrot.slane %v2457, 5
        %v2460 = vsel %vm283, %v2455, %v2459
        %v2461 = vshrl.u32 %v2169, 16
        %v2463 = vrot.slane %v2461, 4
        %v2464 = vor.u32 %v2463, %v2459
        %v2465 = vrot.slane %v2464, 4
        %v2467 = vshll.u32 %v2170, 16
        %v2469 = vrot.slane %v2467, 5
        %v2470 = vsel %vm283, %v2465, %v2469
        %v2472 = vshrl.u32 %v2171, 16
        %v2474 = vrot.slane %v2472, 4
        %v2475 = vshll.u32 %v2171, 16
        %v2477 = vrot.slane %v2475, 5
        %v2478 = vor.u32 %v2474, %v2477
        %v2479 = vrot.slane %v2478, 4
        %v2481 = vshll.u32 %v2172, 16
        %v2483 = vrot.slane %v2481, 5
        %v2484 = vsel %vm283, %v2479, %v2483
        %v2485 = vshrl.u32 %v2172, 16
        %v2487 = vrot.slane %v2485, 4
        %v2488 = vor.u32 %v2487, %v2483
        %v2489 = vrot.slane %v2488, 4
        %v2491 = vshll.u32 %v2173, 16
        %v2493 = vrot.slane %v2491, 5
        %v2494 = vsel %vm283, %v2489, %v2493
        %v2496 = vshrl.u32 %v2174, 16
        %v2498 = vrot.slane %v2496, 4
        %v2499 = vshll.u32 %v2174, 16
        %v2501 = vrot.slane %v2499, 5
        %v2502 = vor.u32 %v2498, %v2501
        %v2503 = vrot.slane %v2502, 4
        %v2505 = vshll.u32 %v2175, 16
        %v2507 = vrot.slane %v2505, 5
        %v2508 = vsel %vm283, %v2503, %v2507
        %v2509 = vshrl.u32 %v2175, 16
        %v2511 = vrot.slane %v2509, 4
        %v2512 = vor.u32 %v2511, %v2507
        %v2513 = vrot.slane %v2512, 4
        %v2515 = vshll.u32 %v2176, 16
        %v2517 = vrot.slane %v2515, 5
        %v2518 = vsel %vm283, %v2513, %v2517
        %v2520 = vshrl.u32 %v2177, 16
        %v2522 = vrot.slane %v2520, 4
        %v2523 = vshll.u32 %v2177, 16
        %v2525 = vrot.slane %v2523, 5
        %v2526 = vor.u32 %v2522, %v2525
        %v2527 = vrot.slane %v2526, 4
        %v2529 = vshll.u32 %v2178, 16
        %v2531 = vrot.slane %v2529, 5
        %v2532 = vsel %vm283, %v2527, %v2531
        %v2533 = vshrl.u32 %v2178, 16
        %v2535 = vrot.slane %v2533, 4
        %v2536 = vor.u32 %v2535, %v2531
        %v2537 = vrot.slane %v2536, 4
        %v2539 = vshll.u32 %v2179, 16
        %v2541 = vrot.slane %v2539, 5
        %v2542 = vsel %vm283, %v2537, %v2541
        %v2544 = vshrl.u32 %v2180, 16
        %v2546 = vrot.slane %v2544, 4
        %v2547 = vshll.u32 %v2180, 16
        %v2549 = vrot.slane %v2547, 5
        %v2550 = vor.u32 %v2546, %v2549
        %v2551 = vrot.slane %v2550, 4
        %v2553 = vshll.u32 %v2181, 16
        %v2555 = vrot.slane %v2553, 5
        %v2556 = vsel %vm283, %v2551, %v2555
        %v2557 = vshrl.u32 %v2181, 16
        %v2559 = vrot.slane %v2557, 4
        %v2560 = vor.u32 %v2559, %v2555
        %v2561 = vrot.slane %v2560, 4
        %v2563 = vshll.u32 %v2182, 16
        %v2565 = vrot.slane %v2563, 5
        %v2566 = vsel %vm283, %v2561, %v2565
        %s2567 = scalar_lea.vmem %s2, 256
        %v2568 = vld [vmem:[%s2567] sm:$0xf]
        %v2569 = vld [vmem:[%s2567 + $0x4] sm:$0xf]
        %v2570 = vld [vmem:[%s2567 + $0x8] sm:$0xf]
        %v2571 = vld [vmem:[%s2567 + $0xc] sm:$0xf]
        %v2572 = vld [vmem:[%s2567 + $0x10] sm:$0xf]
        %v2573 = vld [vmem:[%s2567 + $0x14] sm:$0xf]
        %v2574 = vld [vmem:[%s2567 + $0x18] sm:$0xf]
        %v2575 = vld [vmem:[%s2567 + $0x1c] sm:$0xf]
        %v2576 = vld [vmem:[%s2567 + $0x20] sm:$0xf]
        %v2577 = vld [vmem:[%s2567 + $0x24] sm:$0xf]
        %v2578 = vld [vmem:[%s2567 + $0x28] sm:$0xf]
        %v2579 = vld [vmem:[%s2567 + $0x2c] sm:$0xf]
        %v2580 = vld [vmem:[%s2567 + $0x30] sm:$0xf]
        %v2581 = vld [vmem:[%s2567 + $0x34] sm:$0xf]
        %v2582 = vld [vmem:[%s2567 + $0x38] sm:$0xf]
        %v2583 = vld [vmem:[%s2567 + $0x3c] sm:$0xf]
        %v2584 = vunpack.c.l.b16 %v2196
        %v2585 = vunpack.c.l.b16 %v2206
        %v2586 = vunpack.c.l.b16 %v2220
        %v2587 = vunpack.c.l.b16 %v2230
        %v2588 = vunpack.c.l.b16 %v2244
        %v2589 = vunpack.c.l.b16 %v2254
        %v2590 = vunpack.c.l.b16 %v2268
        %v2591 = vunpack.c.l.b16 %v2278
        %v2592 = vunpack.c.l.b16 %v2292
        %v2593 = vunpack.c.l.b16 %v2302
        %v2594 = vunpack.c.l.b16 %v2316
        %v2595 = vunpack.c.l.b16 %v2326
        %v2596 = vunpack.c.l.b16 %v2340
        %v2597 = vunpack.c.l.b16 %v2350
        %v2598 = vunpack.c.l.b16 %v2364
        %v2599 = vunpack.c.l.b16 %v2374
        %v2600 = vunpack.c.l.b16 %v2388
        %v2601 = vunpack.c.l.b16 %v2398
        %v2602 = vunpack.c.l.b16 %v2412
        %v2603 = vunpack.c.l.b16 %v2422
        %v2604 = vunpack.c.l.b16 %v2436
        %v2605 = vunpack.c.l.b16 %v2446
        %v2606 = vunpack.c.l.b16 %v2460
        %v2607 = vunpack.c.l.b16 %v2470
        %v2608 = vunpack.c.l.b16 %v2484
        %v2609 = vunpack.c.l.b16 %v2494
        %v2610 = vunpack.c.l.b16 %v2508
        %v2611 = vunpack.c.l.b16 %v2518
        %v2612 = vunpack.c.l.b16 %v2532
        %v2613 = vunpack.c.l.b16 %v2542
        %v2614 = vunpack.c.l.b16 %v2556
        %v2615 = vunpack.c.l.b16 %v2566
        %v2616 = vpack.c.b16 %v2585, %v2584
        %v2617 = vpack.c.b16 %v2587, %v2586
        %v2618 = vpack.c.b16 %v2589, %v2588
        %v2619 = vpack.c.b16 %v2591, %v2590
        %v2620 = vpack.c.b16 %v2593, %v2592
        %v2621 = vpack.c.b16 %v2595, %v2594
        %v2622 = vpack.c.b16 %v2597, %v2596
        %v2623 = vpack.c.b16 %v2599, %v2598
        %v2624 = vpack.c.b16 %v2601, %v2600
        %v2625 = vpack.c.b16 %v2603, %v2602
        %v2626 = vpack.c.b16 %v2605, %v2604
        %v2627 = vpack.c.b16 %v2607, %v2606
        %v2628 = vpack.c.b16 %v2609, %v2608
        %v2629 = vpack.c.b16 %v2611, %v2610
        %v2630 = vpack.c.b16 %v2613, %v2612
        %v2631 = vpack.c.b16 %v2615, %v2614
        %v2664 = vunpack.c.l.b16 %v2568
        %v2665 = vunpack.c.l.b16 %v2569
        %v2666 = vunpack.c.l.b16 %v2570
        %v2667 = vunpack.c.l.b16 %v2571
        %v2668 = vunpack.c.l.b16 %v2572
        %v2669 = vunpack.c.l.b16 %v2573
        %v2670 = vunpack.c.l.b16 %v2574
        %v2671 = vunpack.c.l.b16 %v2575
        %v2672 = vunpack.c.l.b16 %v2576
        %v2673 = vunpack.c.l.b16 %v2577
        %v2674 = vunpack.c.l.b16 %v2578
        %v2675 = vunpack.c.l.b16 %v2579
        %v2676 = vunpack.c.l.b16 %v2580
        %v2677 = vunpack.c.l.b16 %v2581
        %v2678 = vunpack.c.l.b16 %v2582
        %v2679 = vunpack.c.l.b16 %v2583
        %v2680 = vpack.c.b16 %v2665, %v2664
        %v2681 = vpack.c.b16 %v2667, %v2666
        %v2682 = vpack.c.b16 %v2669, %v2668
        %v2683 = vpack.c.b16 %v2671, %v2670
        %v2684 = vpack.c.b16 %v2673, %v2672
        %v2685 = vpack.c.b16 %v2675, %v2674
        %v2686 = vpack.c.b16 %v2677, %v2676
        %v2687 = vpack.c.b16 %v2679, %v2678
        %2696 = vmatprep.subr.bf16.mxu0 0
        %2697 = vmatpush1.bf16.msra.mxu0 %v2680
        %2698 = vmatprep.subr.bf16.mxu0 0
        %2699 = vmatpush1.bf16.msra.mxu0 %v2681
        %2700 = vmatprep.subr.bf16.mxu0 0
        %2701 = vmatpush1.bf16.msra.mxu0 %v2682
        %2702 = vmatprep.subr.bf16.mxu0 0
        %2703 = vmatpush1.bf16.msra.mxu0 %v2683
        %2704 = vmatprep.subr.bf16.mxu0 0
        %2705 = vmatpush1.bf16.msra.mxu0 %v2684
        %2706 = vmatprep.subr.bf16.mxu0 0
        %2707 = vmatpush1.bf16.msra.mxu0 %v2685
        %2708 = vmatprep.subr.bf16.mxu0 0
        %2709 = vmatpush1.bf16.msra.mxu0 %v2686
        %2710 = vmatprep.subr.bf16.mxu0 0
        %2711 = vmatpush1.bf16.msra.mxu0 %v2687
        %2712 = vmatprep.subr.bf16.mxu0 0
        %2713 = vmatpush1.bf16.msra.mxu0 0
        %2714 = vmatprep.subr.bf16.mxu0 0
        %2715 = vmatpush1.bf16.msra.mxu0 0
        %2716 = vmatprep.subr.bf16.mxu0 0
        %2717 = vmatpush1.bf16.msra.mxu0 0
        %2718 = vmatprep.subr.bf16.mxu0 0
        %2719 = vmatpush1.bf16.msra.mxu0 0
        %2720 = vmatprep.subr.bf16.mxu0 0
        %2721 = vmatpush1.bf16.msra.mxu0 0
        %2722 = vmatprep.subr.bf16.mxu0 0
        %2723 = vmatpush1.bf16.msra.mxu0 0
        %2724 = vmatprep.subr.bf16.mxu0 0
        %2725 = vmatpush1.bf16.msra.mxu0 0
        %2726 = vmatprep.subr.bf16.mxu0 0
        %2727 = vmatpush1.bf16.msra.mxu0 0
        %2728 = vmatprep.mubr.bf16.mxu0 0
        %2729 = vmatmul.mubr.bf16.gmra.mrb[0].mxu0 %v2616
        %v2730 = vpop.f32.mrb[0].mxu0
        %v2731 = vadd.f32 0.0, %v2730
        %v2732 = vpop.f32.mrb[0].mxu0
        %v2733 = vpop.f32.mrb[0].mxu0
        %v2734 = vadd.f32 0.0, %v2733
        %v2735 = vpop.f32.mrb[0].mxu0
        %2736 = vmatprep.mubr.bf16.mxu0 0
        %2737 = vmatmul.mubr.bf16.gmra.mrb[0].mxu0 %v2617
        %v2738 = vpop.f32.mrb[0].mxu0
        %v2739 = vadd.f32 0.0, %v2738
        %v2740 = vpop.f32.mrb[0].mxu0
        %v2741 = vpop.f32.mrb[0].mxu0
        %v2742 = vadd.f32 0.0, %v2741
        %v2743 = vpop.f32.mrb[0].mxu0
        %2744 = vmatprep.mubr.bf16.mxu0 0
        %2745 = vmatmul.mubr.bf16.gmra.mrb[0].mxu0 %v2618
        %v2746 = vpop.f32.mrb[0].mxu0
        %v2747 = vadd.f32 0.0, %v2746
        %v2748 = vpop.f32.mrb[0].mxu0
        %v2749 = vpop.f32.mrb[0].mxu0
        %v2750 = vadd.f32 0.0, %v2749
        %v2751 = vpop.f32.mrb[0].mxu0
        %2752 = vmatprep.mubr.bf16.mxu0 0
        %2753 = vmatmul.mubr.bf16.gmra.mrb[0].mxu0 %v2619
        %v2754 = vpop.f32.mrb[0].mxu0
        %v2755 = vadd.f32 0.0, %v2754
        %v2756 = vpop.f32.mrb[0].mxu0
        %v2757 = vpop.f32.mrb[0].mxu0
        %v2758 = vadd.f32 0.0, %v2757
        %v2759 = vpop.f32.mrb[0].mxu0
        %2760 = vmatprep.mubr.bf16.mxu0 0
        %2761 = vmatmul.mubr.bf16.gmra.mrb[0].mxu0 %v2620
        %v2762 = vpop.f32.mrb[0].mxu0
        %v2763 = vadd.f32 0.0, %v2762
        %v2764 = vpop.f32.mrb[0].mxu0
        %v2765 = vpop.f32.mrb[0].mxu0
        %v2766 = vadd.f32 0.0, %v2765
        %v2767 = vpop.f32.mrb[0].mxu0
        %2768 = vmatprep.mubr.bf16.mxu0 0
        %2769 = vmatmul.mubr.bf16.gmra.mrb[0].mxu0 %v2621
        %v2770 = vpop.f32.mrb[0].mxu0
        %v2771 = vadd.f32 0.0, %v2770
        %v2772 = vpop.f32.mrb[0].mxu0
        %v2773 = vpop.f32.mrb[0].mxu0
        %v2774 = vadd.f32 0.0, %v2773
        %v2775 = vpop.f32.mrb[0].mxu0
        %2776 = vmatprep.mubr.bf16.mxu0 0
        %2777 = vmatmul.mubr.bf16.gmra.mrb[0].mxu0 %v2622
        %v2778 = vpop.f32.mrb[0].mxu0
        %v2779 = vadd.f32 0.0, %v2778
        %v2780 = vpop.f32.mrb[0].mxu0
        %v2781 = vpop.f32.mrb[0].mxu0
        %v2782 = vadd.f32 0.0, %v2781
        %v2783 = vpop.f32.mrb[0].mxu0
        %2784 = vmatprep.mubr.bf16.mxu0 0
        %2785 = vmatmul.mubr.bf16.gmra.mrb[0].mxu0 %v2623
        %v2786 = vpop.f32.mrb[0].mxu0
        %v2787 = vadd.f32 0.0, %v2786
        %v2788 = vpop.f32.mrb[0].mxu0
        %v2789 = vpop.f32.mrb[0].mxu0
        %v2790 = vadd.f32 0.0, %v2789
        %v2791 = vpop.f32.mrb[0].mxu0
        %2792 = vmatprep.mubr.bf16.mxu0 0
        %2793 = vmatmul.mubr.bf16.gmra.mrb[0].mxu0 %v2624
        %v2794 = vpop.f32.mrb[0].mxu0
        %v2795 = vadd.f32 0.0, %v2794
        %v2796 = vpop.f32.mrb[0].mxu0
        %v2797 = vpop.f32.mrb[0].mxu0
        %v2798 = vadd.f32 0.0, %v2797
        %v2799 = vpop.f32.mrb[0].mxu0
        %2800 = vmatprep.mubr.bf16.mxu0 0
        %2801 = vmatmul.mubr.bf16.gmra.mrb[0].mxu0 %v2625
        %v2802 = vpop.f32.mrb[0].mxu0
        %v2803 = vadd.f32 0.0, %v2802
        %v2804 = vpop.f32.mrb[0].mxu0
        %v2805 = vpop.f32.mrb[0].mxu0
        %v2806 = vadd.f32 0.0, %v2805
        %v2807 = vpop.f32.mrb[0].mxu0
        %2808 = vmatprep.mubr.bf16.mxu0 0
        %2809 = vmatmul.mubr.bf16.gmra.mrb[0].mxu0 %v2626
        %v2810 = vpop.f32.mrb[0].mxu0
        %v2811 = vadd.f32 0.0, %v2810
        %v2812 = vpop.f32.mrb[0].mxu0
        %v2813 = vpop.f32.mrb[0].mxu0
        %v2814 = vadd.f32 0.0, %v2813
        %v2815 = vpop.f32.mrb[0].mxu0
        %2816 = vmatprep.mubr.bf16.mxu0 0
        %2817 = vmatmul.mubr.bf16.gmra.mrb[0].mxu0 %v2627
        %v2818 = vpop.f32.mrb[0].mxu0
        %v2819 = vadd.f32 0.0, %v2818
        %v2820 = vpop.f32.mrb[0].mxu0
        %v2821 = vpop.f32.mrb[0].mxu0
        %v2822 = vadd.f32 0.0, %v2821
        %v2823 = vpop.f32.mrb[0].mxu0
        %2824 = vmatprep.mubr.bf16.mxu0 0
        %2825 = vmatmul.mubr.bf16.gmra.mrb[0].mxu0 %v2628
        %v2826 = vpop.f32.mrb[0].mxu0
        %v2827 = vadd.f32 0.0, %v2826
        %v2828 = vpop.f32.mrb[0].mxu0
        %v2829 = vpop.f32.mrb[0].mxu0
        %v2830 = vadd.f32 0.0, %v2829
        %v2831 = vpop.f32.mrb[0].mxu0
        %2832 = vmatprep.mubr.bf16.mxu0 0
        %2833 = vmatmul.mubr.bf16.gmra.mrb[0].mxu0 %v2629
        %v2834 = vpop.f32.mrb[0].mxu0
        %v2835 = vadd.f32 0.0, %v2834
        %v2836 = vpop.f32.mrb[0].mxu0
        %v2837 = vpop.f32.mrb[0].mxu0
        %v2838 = vadd.f32 0.0, %v2837
        %v2839 = vpop.f32.mrb[0].mxu0
        %2840 = vmatprep.mubr.bf16.mxu0 0
        %2841 = vmatmul.mubr.bf16.gmra.mrb[0].mxu0 %v2630
        %v2842 = vpop.f32.mrb[0].mxu0
        %v2843 = vadd.f32 0.0, %v2842
        %v2844 = vpop.f32.mrb[0].mxu0
        %v2845 = vpop.f32.mrb[0].mxu0
        %v2846 = vadd.f32 0.0, %v2845
        %v2847 = vpop.f32.mrb[0].mxu0
        %2848 = vmatprep.mubr.bf16.mxu0 0
        %2849 = vmatmul.mubr.bf16.gmra.mrb[0].mxu0 %v2631
        %v2850 = vpop.f32.mrb[0].mxu0
        %v2851 = vadd.f32 0.0, %v2850
        %v2852 = vpop.f32.mrb[0].mxu0
        %v2853 = vpop.f32.mrb[0].mxu0
        %v2854 = vadd.f32 0.0, %v2853
        %v2855 = vpop.f32.mrb[0].mxu0
        %2856 = vdwg.mxu0
        %v2857 = vadd.f32 %v2103, %v2731
        %v2858 = vadd.f32 %v2104, %v2734
        %v2859 = vadd.f32 %v2105, %v2739
        %v2860 = vadd.f32 %v2106, %v2742
        %v2861 = vadd.f32 %v2107, %v2747
        %v2862 = vadd.f32 %v2108, %v2750
        %v2863 = vadd.f32 %v2109, %v2755
        %v2864 = vadd.f32 %v2110, %v2758
        %v2865 = vadd.f32 %v2111, %v2763
        %v2866 = vadd.f32 %v2112, %v2766
        %v2867 = vadd.f32 %v2113, %v2771
        %v2868 = vadd.f32 %v2114, %v2774
        %v2869 = vadd.f32 %v2115, %v2779
        %v2870 = vadd.f32 %v2116, %v2782
        %v2871 = vadd.f32 %v2117, %v2787
        %v2872 = vadd.f32 %v2118, %v2790
        %v2873 = vadd.f32 %v2119, %v2795
        %v2874 = vadd.f32 %v2120, %v2798
        %v2875 = vadd.f32 %v2121, %v2803
        %v2876 = vadd.f32 %v2122, %v2806
        %v2877 = vadd.f32 %v2123, %v2811
        %v2878 = vadd.f32 %v2124, %v2814
        %v2879 = vadd.f32 %v2125, %v2819
        %v2880 = vadd.f32 %v2126, %v2822
        %v2881 = vadd.f32 %v2127, %v2827
        %v2882 = vadd.f32 %v2128, %v2830
        %v2883 = vadd.f32 %v2129, %v2835
        %v2884 = vadd.f32 %v2130, %v2838
        %v2885 = vadd.f32 %v2131, %v2843
        %v2886 = vadd.f32 %v2132, %v2846
        %v2887 = vadd.f32 %v2133, %v2851
        %v2888 = vadd.f32 %v2134, %v2854
        %v2889 = vld [vmem:[%s1748] sm:$0xe]
        %v2890 = vld [vmem:[%s1748 + $0xc] sm:$0xe]
        %v2891 = vld [vmem:[%s1748 + $0x18] sm:$0xe]
        %v2892 = vld [vmem:[%s1748 + $0x24] sm:$0xe]
        %v2893 = vld [vmem:[%s1748 + $0x30] sm:$0xe]
        %v2894 = vld [vmem:[%s1748 + $0x3c] sm:$0xe]
        %v2895 = vld [vmem:[%s1748 + $0x48] sm:$0xe]
        %v2896 = vld [vmem:[%s1748 + $0x54] sm:$0xe]
        %v2897 = vld [vmem:[%s1748 + $0x60] sm:$0xe]
        %v2898 = vld [vmem:[%s1748 + $0x6c] sm:$0xe]
        %v2899 = vld [vmem:[%s1748 + $0x78] sm:$0xe]
        %v2900 = vld [vmem:[%s1748 + $0x84] sm:$0xe]
        %v2901 = vld [vmem:[%s1748 + $0x90] sm:$0xe]
        %v2902 = vld [vmem:[%s1748 + $0x9c] sm:$0xe]
        %v2903 = vld [vmem:[%s1748 + $0xa8] sm:$0xe]
        %v2904 = vld [vmem:[%s1748 + $0xb4] sm:$0xe]
        %v2953 = vrot.slane %v2889, 5
        %v2954 = vrot.slane %v2953, 4
        %v2955 = vrot.slane %v2136, 5
        %v2956 = vsel %vm1313, %v2954, %v2955
        %v2957 = vrot.slane %v2955, 4
        %v2958 = vrot.slane %v2137, 5
        %v2959 = vsel %vm1313, %v2957, %v2958
        %v2960 = vrot.slane %v2890, 5
        %v2961 = vrot.slane %v2960, 4
        %v2962 = vrot.slane %v2139, 5
        %v2963 = vsel %vm1313, %v2961, %v2962
        %v2964 = vrot.slane %v2962, 4
        %v2965 = vrot.slane %v2140, 5
        %v2966 = vsel %vm1313, %v2964, %v2965
        %v2967 = vrot.slane %v2891, 5
        %v2968 = vrot.slane %v2967, 4
        %v2969 = vrot.slane %v2142, 5
        %v2970 = vsel %vm1313, %v2968, %v2969
        %v2971 = vrot.slane %v2969, 4
        %v2972 = vrot.slane %v2143, 5
        %v2973 = vsel %vm1313, %v2971, %v2972
        %v2974 = vrot.slane %v2892, 5
        %v2975 = vrot.slane %v2974, 4
        %v2976 = vrot.slane %v2145, 5
        %v2977 = vsel %vm1313, %v2975, %v2976
        %v2978 = vrot.slane %v2976, 4
        %v2979 = vrot.slane %v2146, 5
        %v2980 = vsel %vm1313, %v2978, %v2979
        %v2981 = vrot.slane %v2893, 5
        %v2982 = vrot.slane %v2981, 4
        %v2983 = vrot.slane %v2148, 5
        %v2984 = vsel %vm1313, %v2982, %v2983
        %v2985 = vrot.slane %v2983, 4
        %v2986 = vrot.slane %v2149, 5
        %v2987 = vsel %vm1313, %v2985, %v2986
        %v2988 = vrot.slane %v2894, 5
        %v2989 = vrot.slane %v2988, 4
        %v2990 = vrot.slane %v2151, 5
        %v2991 = vsel %vm1313, %v2989, %v2990
        %v2992 = vrot.slane %v2990, 4
        %v2993 = vrot.slane %v2152, 5
        %v2994 = vsel %vm1313, %v2992, %v2993
        %v2995 = vrot.slane %v2895, 5
        %v2996 = vrot.slane %v2995, 4
        %v2997 = vrot.slane %v2154, 5
        %v2998 = vsel %vm1313, %v2996, %v2997
        %v2999 = vrot.slane %v2997, 4
        %v3000 = vrot.slane %v2155, 5
        %v3001 = vsel %vm1313, %v2999, %v3000
        %v3002 = vrot.slane %v2896, 5
        %v3003 = vrot.slane %v3002, 4
        %v3004 = vrot.slane %v2157, 5
        %v3005 = vsel %vm1313, %v3003, %v3004
        %v3006 = vrot.slane %v3004, 4
        %v3007 = vrot.slane %v2158, 5
        %v3008 = vsel %vm1313, %v3006, %v3007
        %v3009 = vrot.slane %v2897, 5
        %v3010 = vrot.slane %v3009, 4
        %v3011 = vrot.slane %v2160, 5
        %v3012 = vsel %vm1313, %v3010, %v3011
        %v3013 = vrot.slane %v3011, 4
        %v3014 = vrot.slane %v2161, 5
        %v3015 = vsel %vm1313, %v3013, %v3014
        %v3016 = vrot.slane %v2898, 5
        %v3017 = vrot.slane %v3016, 4
        %v3018 = vrot.slane %v2163, 5
        %v3019 = vsel %vm1313, %v3017, %v3018
        %v3020 = vrot.slane %v3018, 4
        %v3021 = vrot.slane %v2164, 5
        %v3022 = vsel %vm1313, %v3020, %v3021
        %v3023 = vrot.slane %v2899, 5
        %v3024 = vrot.slane %v3023, 4
        %v3025 = vrot.slane %v2166, 5
        %v3026 = vsel %vm1313, %v3024, %v3025
        %v3027 = vrot.slane %v3025, 4
        %v3028 = vrot.slane %v2167, 5
        %v3029 = vsel %vm1313, %v3027, %v3028
        %v3030 = vrot.slane %v2900, 5
        %v3031 = vrot.slane %v3030, 4
        %v3032 = vrot.slane %v2169, 5
        %v3033 = vsel %vm1313, %v3031, %v3032
        %v3034 = vrot.slane %v3032, 4
        %v3035 = vrot.slane %v2170, 5
        %v3036 = vsel %vm1313, %v3034, %v3035
        %v3037 = vrot.slane %v2901, 5
        %v3038 = vrot.slane %v3037, 4
        %v3039 = vrot.slane %v2172, 5
        %v3040 = vsel %vm1313, %v3038, %v3039
        %v3041 = vrot.slane %v3039, 4
        %v3042 = vrot.slane %v2173, 5
        %v3043 = vsel %vm1313, %v3041, %v3042
        %v3044 = vrot.slane %v2902, 5
        %v3045 = vrot.slane %v3044, 4
        %v3046 = vrot.slane %v2175, 5
        %v3047 = vsel %vm1313, %v3045, %v3046
        %v3048 = vrot.slane %v3046, 4
        %v3049 = vrot.slane %v2176, 5
        %v3050 = vsel %vm1313, %v3048, %v3049
        %v3051 = vrot.slane %v2903, 5
        %v3052 = vrot.slane %v3051, 4
        %v3053 = vrot.slane %v2178, 5
        %v3054 = vsel %vm1313, %v3052, %v3053
        %v3055 = vrot.slane %v3053, 4
        %v3056 = vrot.slane %v2179, 5
        %v3057 = vsel %vm1313, %v3055, %v3056
        %v3058 = vrot.slane %v2904, 5
        %v3059 = vrot.slane %v3058, 4
        %v3060 = vrot.slane %v2181, 5
        %v3061 = vsel %vm1313, %v3059, %v3060
        %v3062 = vrot.slane %v3060, 4
        %v3063 = vrot.slane %v2182, 5
        %v3064 = vsel %vm1313, %v3062, %v3063
        %s3065 = scalar_lea.vmem %s2, 320
        %v3066 = vld [vmem:[%s3065] sm:$0xf]
        %v3067 = vld [vmem:[%s3065 + $0x4] sm:$0xf]
        %v3068 = vld [vmem:[%s3065 + $0x8] sm:$0xf]
        %v3069 = vld [vmem:[%s3065 + $0xc] sm:$0xf]
        %v3070 = vld [vmem:[%s3065 + $0x10] sm:$0xf]
        %v3071 = vld [vmem:[%s3065 + $0x14] sm:$0xf]
        %v3072 = vld [vmem:[%s3065 + $0x18] sm:$0xf]
        %v3073 = vld [vmem:[%s3065 + $0x1c] sm:$0xf]
        %v3074 = vld [vmem:[%s3065 + $0x20] sm:$0xf]
        %v3075 = vld [vmem:[%s3065 + $0x24] sm:$0xf]
        %v3076 = vld [vmem:[%s3065 + $0x28] sm:$0xf]
        %v3077 = vld [vmem:[%s3065 + $0x2c] sm:$0xf]
        %v3078 = vld [vmem:[%s3065 + $0x30] sm:$0xf]
        %v3079 = vld [vmem:[%s3065 + $0x34] sm:$0xf]
        %v3080 = vld [vmem:[%s3065 + $0x38] sm:$0xf]
        %v3081 = vld [vmem:[%s3065 + $0x3c] sm:$0xf]
        %v3082 = vunpack.c.l.b16 %v2956
        %v3083 = vunpack.c.l.b16 %v2959
        %v3084 = vunpack.c.l.b16 %v2963
        %v3085 = vunpack.c.l.b16 %v2966
        %v3086 = vunpack.c.l.b16 %v2970
        %v3087 = vunpack.c.l.b16 %v2973
        %v3088 = vunpack.c.l.b16 %v2977
        %v3089 = vunpack.c.l.b16 %v2980
        %v3090 = vunpack.c.l.b16 %v2984
        %v3091 = vunpack.c.l.b16 %v2987
        %v3092 = vunpack.c.l.b16 %v2991
        %v3093 = vunpack.c.l.b16 %v2994
        %v3094 = vunpack.c.l.b16 %v2998
        %v3095 = vunpack.c.l.b16 %v3001
        %v3096 = vunpack.c.l.b16 %v3005
        %v3097 = vunpack.c.l.b16 %v3008
        %v3098 = vunpack.c.l.b16 %v3012
        %v3099 = vunpack.c.l.b16 %v3015
        %v3100 = vunpack.c.l.b16 %v3019
        %v3101 = vunpack.c.l.b16 %v3022
        %v3102 = vunpack.c.l.b16 %v3026
        %v3103 = vunpack.c.l.b16 %v3029
        %v3104 = vunpack.c.l.b16 %v3033
        %v3105 = vunpack.c.l.b16 %v3036
        %v3106 = vunpack.c.l.b16 %v3040
        %v3107 = vunpack.c.l.b16 %v3043
        %v3108 = vunpack.c.l.b16 %v3047
        %v3109 = vunpack.c.l.b16 %v3050
        %v3110 = vunpack.c.l.b16 %v3054
        %v3111 = vunpack.c.l.b16 %v3057
        %v3112 = vunpack.c.l.b16 %v3061
        %v3113 = vunpack.c.l.b16 %v3064
        %v3114 = vpack.c.b16 %v3083, %v3082
        %v3115 = vpack.c.b16 %v3085, %v3084
        %v3116 = vpack.c.b16 %v3087, %v3086
        %v3117 = vpack.c.b16 %v3089, %v3088
        %v3118 = vpack.c.b16 %v3091, %v3090
        %v3119 = vpack.c.b16 %v3093, %v3092
        %v3120 = vpack.c.b16 %v3095, %v3094
        %v3121 = vpack.c.b16 %v3097, %v3096
        %v3122 = vpack.c.b16 %v3099, %v3098
        %v3123 = vpack.c.b16 %v3101, %v3100
        %v3124 = vpack.c.b16 %v3103, %v3102
        %v3125 = vpack.c.b16 %v3105, %v3104
        %v3126 = vpack.c.b16 %v3107, %v3106
        %v3127 = vpack.c.b16 %v3109, %v3108
        %v3128 = vpack.c.b16 %v3111, %v3110
        %v3129 = vpack.c.b16 %v3113, %v3112
        %v3162 = vunpack.c.l.b16 %v3066
        %v3163 = vunpack.c.l.b16 %v3067
        %v3164 = vunpack.c.l.b16 %v3068
        %v3165 = vunpack.c.l.b16 %v3069
        %v3166 = vunpack.c.l.b16 %v3070
        %v3167 = vunpack.c.l.b16 %v3071
        %v3168 = vunpack.c.l.b16 %v3072
        %v3169 = vunpack.c.l.b16 %v3073
        %v3170 = vunpack.c.l.b16 %v3074
        %v3171 = vunpack.c.l.b16 %v3075
        %v3172 = vunpack.c.l.b16 %v3076
        %v3173 = vunpack.c.l.b16 %v3077
        %v3174 = vunpack.c.l.b16 %v3078
        %v3175 = vunpack.c.l.b16 %v3079
        %v3176 = vunpack.c.l.b16 %v3080
        %v3177 = vunpack.c.l.b16 %v3081
        %v3178 = vpack.c.b16 %v3163, %v3162
        %v3179 = vpack.c.b16 %v3165, %v3164
        %v3180 = vpack.c.b16 %v3167, %v3166
        %v3181 = vpack.c.b16 %v3169, %v3168
        %v3182 = vpack.c.b16 %v3171, %v3170
        %v3183 = vpack.c.b16 %v3173, %v3172
        %v3184 = vpack.c.b16 %v3175, %v3174
        %v3185 = vpack.c.b16 %v3177, %v3176
        %3194 = vmatprep.subr.bf16.mxu0 0
        %3195 = vmatpush1.bf16.msra.mxu0 %v3178
        %3196 = vmatprep.subr.bf16.mxu0 0
        %3197 = vmatpush1.bf16.msra.mxu0 %v3179
        %3198 = vmatprep.subr.bf16.mxu0 0
        %3199 = vmatpush1.bf16.msra.mxu0 %v3180
        %3200 = vmatprep.subr.bf16.mxu0 0
        %3201 = vmatpush1.bf16.msra.mxu0 %v3181
        %3202 = vmatprep.subr.bf16.mxu0 0
        %3203 = vmatpush1.bf16.msra.mxu0 %v3182
        %3204 = vmatprep.subr.bf16.mxu0 0
        %3205 = vmatpush1.bf16.msra.mxu0 %v3183
        %3206 = vmatprep.subr.bf16.mxu0 0
        %3207 = vmatpush1.bf16.msra.mxu0 %v3184
        %3208 = vmatprep.subr.bf16.mxu0 0
        %3209 = vmatpush1.bf16.msra.mxu0 %v3185
        %3210 = vmatprep.subr.bf16.mxu0 0
        %3211 = vmatpush1.bf16.msra.mxu0 0
        %3212 = vmatprep.subr.bf16.mxu0 0
        %3213 = vmatpush1.bf16.msra.mxu0 0
        %3214 = vmatprep.subr.bf16.mxu0 0
        %3215 = vmatpush1.bf16.msra.mxu0 0
        %3216 = vmatprep.subr.bf16.mxu0 0
        %3217 = vmatpush1.bf16.msra.mxu0 0
        %3218 = vmatprep.subr.bf16.mxu0 0
        %3219 = vmatpush1.bf16.msra.mxu0 0
        %3220 = vmatprep.subr.bf16.mxu0 0
        %3221 = vmatpush1.bf16.msra.mxu0 0
        %3222 = vmatprep.subr.bf16.mxu0 0
        %3223 = vmatpush1.bf16.msra.mxu0 0
        %3224 = vmatprep.subr.bf16.mxu0 0
        %3225 = vmatpush1.bf16.msra.mxu0 0
        %3226 = vmatprep.mubr.bf16.mxu0 0
        %3227 = vmatmul.mubr.bf16.gmra.mrb[0].mxu0 %v3114
        %v3228 = vpop.f32.mrb[0].mxu0
        %v3229 = vadd.f32 0.0, %v3228
        %v3230 = vpop.f32.mrb[0].mxu0
        %v3231 = vpop.f32.mrb[0].mxu0
        %v3232 = vadd.f32 0.0, %v3231
        %v3233 = vpop.f32.mrb[0].mxu0
        %3234 = vmatprep.mubr.bf16.mxu0 0
        %3235 = vmatmul.mubr.bf16.gmra.mrb[0].mxu0 %v3115
        %v3236 = vpop.f32.mrb[0].mxu0
        %v3237 = vadd.f32 0.0, %v3236
        %v3238 = vpop.f32.mrb[0].mxu0
        %v3239 = vpop.f32.mrb[0].mxu0
        %v3240 = vadd.f32 0.0, %v3239
        %v3241 = vpop.f32.mrb[0].mxu0
        %3242 = vmatprep.mubr.bf16.mxu0 0
        %3243 = vmatmul.mubr.bf16.gmra.mrb[0].mxu0 %v3116
        %v3244 = vpop.f32.mrb[0].mxu0
        %v3245 = vadd.f32 0.0, %v3244
        %v3246 = vpop.f32.mrb[0].mxu0
        %v3247 = vpop.f32.mrb[0].mxu0
        %v3248 = vadd.f32 0.0, %v3247
        %v3249 = vpop.f32.mrb[0].mxu0
        %3250 = vmatprep.mubr.bf16.mxu0 0
        %3251 = vmatmul.mubr.bf16.gmra.mrb[0].mxu0 %v3117
        %v3252 = vpop.f32.mrb[0].mxu0
        %v3253 = vadd.f32 0.0, %v3252
        %v3254 = vpop.f32.mrb[0].mxu0
        %v3255 = vpop.f32.mrb[0].mxu0
        %v3256 = vadd.f32 0.0, %v3255
        %v3257 = vpop.f32.mrb[0].mxu0
        %3258 = vmatprep.mubr.bf16.mxu0 0
        %3259 = vmatmul.mubr.bf16.gmra.mrb[0].mxu0 %v3118
        %v3260 = vpop.f32.mrb[0].mxu0
        %v3261 = vadd.f32 0.0, %v3260
        %v3262 = vpop.f32.mrb[0].mxu0
        %v3263 = vpop.f32.mrb[0].mxu0
        %v3264 = vadd.f32 0.0, %v3263
        %v3265 = vpop.f32.mrb[0].mxu0
        %3266 = vmatprep.mubr.bf16.mxu0 0
        %3267 = vmatmul.mubr.bf16.gmra.mrb[0].mxu0 %v3119
        %v3268 = vpop.f32.mrb[0].mxu0
        %v3269 = vadd.f32 0.0, %v3268
        %v3270 = vpop.f32.mrb[0].mxu0
        %v3271 = vpop.f32.mrb[0].mxu0
        %v3272 = vadd.f32 0.0, %v3271
        %v3273 = vpop.f32.mrb[0].mxu0
        %3274 = vmatprep.mubr.bf16.mxu0 0
        %3275 = vmatmul.mubr.bf16.gmra.mrb[0].mxu0 %v3120
        %v3276 = vpop.f32.mrb[0].mxu0
        %v3277 = vadd.f32 0.0, %v3276
        %v3278 = vpop.f32.mrb[0].mxu0
        %v3279 = vpop.f32.mrb[0].mxu0
        %v3280 = vadd.f32 0.0, %v3279
        %v3281 = vpop.f32.mrb[0].mxu0
        %3282 = vmatprep.mubr.bf16.mxu0 0
        %3283 = vmatmul.mubr.bf16.gmra.mrb[0].mxu0 %v3121
        %v3284 = vpop.f32.mrb[0].mxu0
        %v3285 = vadd.f32 0.0, %v3284
        %v3286 = vpop.f32.mrb[0].mxu0
        %v3287 = vpop.f32.mrb[0].mxu0
        %v3288 = vadd.f32 0.0, %v3287
        %v3289 = vpop.f32.mrb[0].mxu0
        %3290 = vmatprep.mubr.bf16.mxu0 0
        %3291 = vmatmul.mubr.bf16.gmra.mrb[0].mxu0 %v3122
        %v3292 = vpop.f32.mrb[0].mxu0
        %v3293 = vadd.f32 0.0, %v3292
        %v3294 = vpop.f32.mrb[0].mxu0
        %v3295 = vpop.f32.mrb[0].mxu0
        %v3296 = vadd.f32 0.0, %v3295
        %v3297 = vpop.f32.mrb[0].mxu0
        %3298 = vmatprep.mubr.bf16.mxu0 0
        %3299 = vmatmul.mubr.bf16.gmra.mrb[0].mxu0 %v3123
        %v3300 = vpop.f32.mrb[0].mxu0
        %v3301 = vadd.f32 0.0, %v3300
        %v3302 = vpop.f32.mrb[0].mxu0
        %v3303 = vpop.f32.mrb[0].mxu0
        %v3304 = vadd.f32 0.0, %v3303
        %v3305 = vpop.f32.mrb[0].mxu0
        %3306 = vmatprep.mubr.bf16.mxu0 0
        %3307 = vmatmul.mubr.bf16.gmra.mrb[0].mxu0 %v3124
        %v3308 = vpop.f32.mrb[0].mxu0
        %v3309 = vadd.f32 0.0, %v3308
        %v3310 = vpop.f32.mrb[0].mxu0
        %v3311 = vpop.f32.mrb[0].mxu0
        %v3312 = vadd.f32 0.0, %v3311
        %v3313 = vpop.f32.mrb[0].mxu0
        %3314 = vmatprep.mubr.bf16.mxu0 0
        %3315 = vmatmul.mubr.bf16.gmra.mrb[0].mxu0 %v3125
        %v3316 = vpop.f32.mrb[0].mxu0
        %v3317 = vadd.f32 0.0, %v3316
        %v3318 = vpop.f32.mrb[0].mxu0
        %v3319 = vpop.f32.mrb[0].mxu0
        %v3320 = vadd.f32 0.0, %v3319
        %v3321 = vpop.f32.mrb[0].mxu0
        %3322 = vmatprep.mubr.bf16.mxu0 0
        %3323 = vmatmul.mubr.bf16.gmra.mrb[0].mxu0 %v3126
        %v3324 = vpop.f32.mrb[0].mxu0
        %v3325 = vadd.f32 0.0, %v3324
        %v3326 = vpop.f32.mrb[0].mxu0
        %v3327 = vpop.f32.mrb[0].mxu0
        %v3328 = vadd.f32 0.0, %v3327
        %v3329 = vpop.f32.mrb[0].mxu0
        %3330 = vmatprep.mubr.bf16.mxu0 0
        %3331 = vmatmul.mubr.bf16.gmra.mrb[0].mxu0 %v3127
        %v3332 = vpop.f32.mrb[0].mxu0
        %v3333 = vadd.f32 0.0, %v3332
        %v3334 = vpop.f32.mrb[0].mxu0
        %v3335 = vpop.f32.mrb[0].mxu0
        %v3336 = vadd.f32 0.0, %v3335
        %v3337 = vpop.f32.mrb[0].mxu0
        %3338 = vmatprep.mubr.bf16.mxu0 0
        %3339 = vmatmul.mubr.bf16.gmra.mrb[0].mxu0 %v3128
        %v3340 = vpop.f32.mrb[0].mxu0
        %v3341 = vadd.f32 0.0, %v3340
        %v3342 = vpop.f32.mrb[0].mxu0
        %v3343 = vpop.f32.mrb[0].mxu0
        %v3344 = vadd.f32 0.0, %v3343
        %v3345 = vpop.f32.mrb[0].mxu0
        %3346 = vmatprep.mubr.bf16.mxu0 0
        %3347 = vmatmul.mubr.bf16.gmra.mrb[0].mxu0 %v3129
        %v3348 = vpop.f32.mrb[0].mxu0
        %v3349 = vadd.f32 0.0, %v3348
        %v3350 = vpop.f32.mrb[0].mxu0
        %v3351 = vpop.f32.mrb[0].mxu0
        %v3352 = vadd.f32 0.0, %v3351
        %v3353 = vpop.f32.mrb[0].mxu0
        %3354 = vdwg.mxu0
        %v3355 = vadd.f32 %v2857, %v3229
        %v3356 = vadd.f32 %v2858, %v3232
        %v3357 = vadd.f32 %v2859, %v3237
        %v3358 = vadd.f32 %v2860, %v3240
        %v3359 = vadd.f32 %v2861, %v3245
        %v3360 = vadd.f32 %v2862, %v3248
        %v3361 = vadd.f32 %v2863, %v3253
        %v3362 = vadd.f32 %v2864, %v3256
        %v3363 = vadd.f32 %v2865, %v3261
        %v3364 = vadd.f32 %v2866, %v3264
        %v3365 = vadd.f32 %v2867, %v3269
        %v3366 = vadd.f32 %v2868, %v3272
        %v3367 = vadd.f32 %v2869, %v3277
        %v3368 = vadd.f32 %v2870, %v3280
        %v3369 = vadd.f32 %v2871, %v3285
        %v3370 = vadd.f32 %v2872, %v3288
        %v3371 = vadd.f32 %v2873, %v3293
        %v3372 = vadd.f32 %v2874, %v3296
        %v3373 = vadd.f32 %v2875, %v3301
        %v3374 = vadd.f32 %v2876, %v3304
        %v3375 = vadd.f32 %v2877, %v3309
        %v3376 = vadd.f32 %v2878, %v3312
        %v3377 = vadd.f32 %v2879, %v3317
        %v3378 = vadd.f32 %v2880, %v3320
        %v3379 = vadd.f32 %v2881, %v3325
        %v3380 = vadd.f32 %v2882, %v3328
        %v3381 = vadd.f32 %v2883, %v3333
        %v3382 = vadd.f32 %v2884, %v3336
        %v3383 = vadd.f32 %v2885, %v3341
        %v3384 = vadd.f32 %v2886, %v3344
        %v3385 = vadd.f32 %v2887, %v3349
        %v3386 = vadd.f32 %v2888, %v3352
        %s3387 = scalar_lea.vmem %s210, 24
        %v3388 = vld [vmem:[%s3387] sm:$0xf]
        %v3389 = vld [vmem:[%s3387 + $0x4] sm:$0xf]
        %v3390 = vld [vmem:[%s3387 + $0xc] sm:$0xf]
        %v3391 = vld [vmem:[%s3387 + $0x10] sm:$0xf]
        %v3392 = vld [vmem:[%s3387 + $0x18] sm:$0xf]
        %v3393 = vld [vmem:[%s3387 + $0x1c] sm:$0xf]
        %v3394 = vld [vmem:[%s3387 + $0x24] sm:$0xf]
        %v3395 = vld [vmem:[%s3387 + $0x28] sm:$0xf]
        %v3396 = vld [vmem:[%s3387 + $0x30] sm:$0xf]
        %v3397 = vld [vmem:[%s3387 + $0x34] sm:$0xf]
        %v3398 = vld [vmem:[%s3387 + $0x3c] sm:$0xf]
        %v3399 = vld [vmem:[%s3387 + $0x40] sm:$0xf]
        %v3400 = vld [vmem:[%s3387 + $0x48] sm:$0xf]
        %v3401 = vld [vmem:[%s3387 + $0x4c] sm:$0xf]
        %v3402 = vld [vmem:[%s3387 + $0x54] sm:$0xf]
        %v3403 = vld [vmem:[%s3387 + $0x58] sm:$0xf]
        %v3404 = vld [vmem:[%s3387 + $0x60] sm:$0xf]
        %v3405 = vld [vmem:[%s3387 + $0x64] sm:$0xf]
        %v3406 = vld [vmem:[%s3387 + $0x6c] sm:$0xf]
        %v3407 = vld [vmem:[%s3387 + $0x70] sm:$0xf]
        %v3408 = vld [vmem:[%s3387 + $0x78] sm:$0xf]
        %v3409 = vld [vmem:[%s3387 + $0x7c] sm:$0xf]
        %v3410 = vld [vmem:[%s3387 + $0x84] sm:$0xf]
        %v3411 = vld [vmem:[%s3387 + $0x88] sm:$0xf]
        %v3412 = vld [vmem:[%s3387 + $0x90] sm:$0xf]
        %v3413 = vld [vmem:[%s3387 + $0x94] sm:$0xf]
        %v3414 = vld [vmem:[%s3387 + $0x9c] sm:$0xf]
        %v3415 = vld [vmem:[%s3387 + $0xa0] sm:$0xf]
        %v3416 = vld [vmem:[%s3387 + $0xa8] sm:$0xf]
        %v3417 = vld [vmem:[%s3387 + $0xac] sm:$0xf]
        %v3418 = vld [vmem:[%s3387 + $0xb4] sm:$0xf]
        %v3419 = vld [vmem:[%s3387 + $0xb8] sm:$0xf]
        %s3420 = scalar_lea.vmem %s2, 384
        %v3421 = vld [vmem:[%s3420] sm:$0xf]
        %v3422 = vld [vmem:[%s3420 + $0x4] sm:$0xf]
        %v3423 = vld [vmem:[%s3420 + $0x8] sm:$0xf]
        %v3424 = vld [vmem:[%s3420 + $0xc] sm:$0xf]
        %v3425 = vld [vmem:[%s3420 + $0x10] sm:$0xf]
        %v3426 = vld [vmem:[%s3420 + $0x14] sm:$0xf]
        %v3427 = vld [vmem:[%s3420 + $0x18] sm:$0xf]
        %v3428 = vld [vmem:[%s3420 + $0x1c] sm:$0xf]
        %v3429 = vld [vmem:[%s3420 + $0x20] sm:$0xf]
        %v3430 = vld [vmem:[%s3420 + $0x24] sm:$0xf]
        %v3431 = vld [vmem:[%s3420 + $0x28] sm:$0xf]
        %v3432 = vld [vmem:[%s3420 + $0x2c] sm:$0xf]
        %v3433 = vld [vmem:[%s3420 + $0x30] sm:$0xf]
        %v3434 = vld [vmem:[%s3420 + $0x34] sm:$0xf]
        %v3435 = vld [vmem:[%s3420 + $0x38] sm:$0xf]
        %v3436 = vld [vmem:[%s3420 + $0x3c] sm:$0xf]
        %v3469 = vunpack.c.l.b16 %v3388
        %v3470 = vunpack.c.l.b16 %v3389
        %v3471 = vunpack.c.l.b16 %v3390
        %v3472 = vunpack.c.l.b16 %v3391
        %v3473 = vunpack.c.l.b16 %v3392
        %v3474 = vunpack.c.l.b16 %v3393
        %v3475 = vunpack.c.l.b16 %v3394
        %v3476 = vunpack.c.l.b16 %v3395
        %v3477 = vunpack.c.l.b16 %v3396
        %v3478 = vunpack.c.l.b16 %v3397
        %v3479 = vunpack.c.l.b16 %v3398
        %v3480 = vunpack.c.l.b16 %v3399
        %v3481 = vunpack.c.l.b16 %v3400
        %v3482 = vunpack.c.l.b16 %v3401
        %v3483 = vunpack.c.l.b16 %v3402
        %v3484 = vunpack.c.l.b16 %v3403
        %v3485 = vunpack.c.l.b16 %v3404
        %v3486 = vunpack.c.l.b16 %v3405
        %v3487 = vunpack.c.l.b16 %v3406
        %v3488 = vunpack.c.l.b16 %v3407
        %v3489 = vunpack.c.l.b16 %v3408
        %v3490 = vunpack.c.l.b16 %v3409
        %v3491 = vunpack.c.l.b16 %v3410
        %v3492 = vunpack.c.l.b16 %v3411
        %v3493 = vunpack.c.l.b16 %v3412
        %v3494 = vunpack.c.l.b16 %v3413
        %v3495 = vunpack.c.l.b16 %v3414
        %v3496 = vunpack.c.l.b16 %v3415
        %v3497 = vunpack.c.l.b16 %v3416
        %v3498 = vunpack.c.l.b16 %v3417
        %v3499 = vunpack.c.l.b16 %v3418
        %v3500 = vunpack.c.l.b16 %v3419
        %v3501 = vpack.c.b16 %v3470, %v3469
        %v3502 = vpack.c.b16 %v3472, %v3471
        %v3503 = vpack.c.b16 %v3474, %v3473
        %v3504 = vpack.c.b16 %v3476, %v3475
        %v3505 = vpack.c.b16 %v3478, %v3477
        %v3506 = vpack.c.b16 %v3480, %v3479
        %v3507 = vpack.c.b16 %v3482, %v3481
        %v3508 = vpack.c.b16 %v3484, %v3483
        %v3509 = vpack.c.b16 %v3486, %v3485
        %v3510 = vpack.c.b16 %v3488, %v3487
        %v3511 = vpack.c.b16 %v3490, %v3489
        %v3512 = vpack.c.b16 %v3492, %v3491
        %v3513 = vpack.c.b16 %v3494, %v3493
        %v3514 = vpack.c.b16 %v3496, %v3495
        %v3515 = vpack.c.b16 %v3498, %v3497
        %v3516 = vpack.c.b16 %v3500, %v3499
        %v3549 = vunpack.c.l.b16 %v3421
        %v3550 = vunpack.c.l.b16 %v3422
        %v3551 = vunpack.c.l.b16 %v3423
        %v3552 = vunpack.c.l.b16 %v3424
        %v3553 = vunpack.c.l.b16 %v3425
        %v3554 = vunpack.c.l.b16 %v3426
        %v3555 = vunpack.c.l.b16 %v3427
        %v3556 = vunpack.c.l.b16 %v3428
        %v3557 = vunpack.c.l.b16 %v3429
        %v3558 = vunpack.c.l.b16 %v3430
        %v3559 = vunpack.c.l.b16 %v3431
        %v3560 = vunpack.c.l.b16 %v3432
        %v3561 = vunpack.c.l.b16 %v3433
        %v3562 = vunpack.c.l.b16 %v3434
        %v3563 = vunpack.c.l.b16 %v3435
        %v3564 = vunpack.c.l.b16 %v3436
        %v3565 = vpack.c.b16 %v3550, %v3549
        %v3566 = vpack.c.b16 %v3552, %v3551
        %v3567 = vpack.c.b16 %v3554, %v3553
        %v3568 = vpack.c.b16 %v3556, %v3555
        %v3569 = vpack.c.b16 %v3558, %v3557
        %v3570 = vpack.c.b16 %v3560, %v3559
        %v3571 = vpack.c.b16 %v3562, %v3561
        %v3572 = vpack.c.b16 %v3564, %v3563
        %3581 = vmatprep.subr.bf16.mxu0 0
        %3582 = vmatpush1.bf16.msra.mxu0 %v3565
        %3583 = vmatprep.subr.bf16.mxu0 0
        %3584 = vmatpush1.bf16.msra.mxu0 %v3566
        %3585 = vmatprep.subr.bf16.mxu0 0
        %3586 = vmatpush1.bf16.msra.mxu0 %v3567
        %3587 = vmatprep.subr.bf16.mxu0 0
        %3588 = vmatpush1.bf16.msra.mxu0 %v3568
        %3589 = vmatprep.subr.bf16.mxu0 0
        %3590 = vmatpush1.bf16.msra.mxu0 %v3569
        %3591 = vmatprep.subr.bf16.mxu0 0
        %3592 = vmatpush1.bf16.msra.mxu0 %v3570
        %3593 = vmatprep.subr.bf16.mxu0 0
        %3594 = vmatpush1.bf16.msra.mxu0 %v3571
        %3595 = vmatprep.subr.bf16.mxu0 0
        %3596 = vmatpush1.bf16.msra.mxu0 %v3572
        %3597 = vmatprep.subr.bf16.mxu0 0
        %3598 = vmatpush1.bf16.msra.mxu0 0
        %3599 = vmatprep.subr.bf16.mxu0 0
        %3600 = vmatpush1.bf16.msra.mxu0 0
        %3601 = vmatprep.subr.bf16.mxu0 0
        %3602 = vmatpush1.bf16.msra.mxu0 0
        %3603 = vmatprep.subr.bf16.mxu0 0
        %3604 = vmatpush1.bf16.msra.mxu0 0
        %3605 = vmatprep.subr.bf16.mxu0 0
        %3606 = vmatpush1.bf16.msra.mxu0 0
        %3607 = vmatprep.subr.bf16.mxu0 0
        %3608 = vmatpush1.bf16.msra.mxu0 0
        %3609 = vmatprep.subr.bf16.mxu0 0
        %3610 = vmatpush1.bf16.msra.mxu0 0
        %3611 = vmatprep.subr.bf16.mxu0 0
        %3612 = vmatpush1.bf16.msra.mxu0 0
        %3613 = vmatprep.mubr.bf16.mxu0 0
        %3614 = vmatmul.mubr.bf16.gmra.mrb[0].mxu0 %v3501
        %v3615 = vpop.f32.mrb[0].mxu0
        %v3616 = vadd.f32 0.0, %v3615
        %v3617 = vpop.f32.mrb[0].mxu0
        %v3618 = vpop.f32.mrb[0].mxu0
        %v3619 = vadd.f32 0.0, %v3618
        %v3620 = vpop.f32.mrb[0].mxu0
        %3621 = vmatprep.mubr.bf16.mxu0 0
        %3622 = vmatmul.mubr.bf16.gmra.mrb[0].mxu0 %v3502
        %v3623 = vpop.f32.mrb[0].mxu0
        %v3624 = vadd.f32 0.0, %v3623
        %v3625 = vpop.f32.mrb[0].mxu0
        %v3626 = vpop.f32.mrb[0].mxu0
        %v3627 = vadd.f32 0.0, %v3626
        %v3628 = vpop.f32.mrb[0].mxu0
        %3629 = vmatprep.mubr.bf16.mxu0 0
        %3630 = vmatmul.mubr.bf16.gmra.mrb[0].mxu0 %v3503
        %v3631 = vpop.f32.mrb[0].mxu0
        %v3632 = vadd.f32 0.0, %v3631
        %v3633 = vpop.f32.mrb[0].mxu0
        %v3634 = vpop.f32.mrb[0].mxu0
        %v3635 = vadd.f32 0.0, %v3634
        %v3636 = vpop.f32.mrb[0].mxu0
        %3637 = vmatprep.mubr.bf16.mxu0 0
        %3638 = vmatmul.mubr.bf16.gmra.mrb[0].mxu0 %v3504
        %v3639 = vpop.f32.mrb[0].mxu0
        %v3640 = vadd.f32 0.0, %v3639
        %v3641 = vpop.f32.mrb[0].mxu0
        %v3642 = vpop.f32.mrb[0].mxu0
        %v3643 = vadd.f32 0.0, %v3642
        %v3644 = vpop.f32.mrb[0].mxu0
        %3645 = vmatprep.mubr.bf16.mxu0 0
        %3646 = vmatmul.mubr.bf16.gmra.mrb[0].mxu0 %v3505
        %v3647 = vpop.f32.mrb[0].mxu0
        %v3648 = vadd.f32 0.0, %v3647
        %v3649 = vpop.f32.mrb[0].mxu0
        %v3650 = vpop.f32.mrb[0].mxu0
        %v3651 = vadd.f32 0.0, %v3650
        %v3652 = vpop.f32.mrb[0].mxu0
        %3653 = vmatprep.mubr.bf16.mxu0 0
        %3654 = vmatmul.mubr.bf16.gmra.mrb[0].mxu0 %v3506
        %v3655 = vpop.f32.mrb[0].mxu0
        %v3656 = vadd.f32 0.0, %v3655
        %v3657 = vpop.f32.mrb[0].mxu0
        %v3658 = vpop.f32.mrb[0].mxu0
        %v3659 = vadd.f32 0.0, %v3658
        %v3660 = vpop.f32.mrb[0].mxu0
        %3661 = vmatprep.mubr.bf16.mxu0 0
        %3662 = vmatmul.mubr.bf16.gmra.mrb[0].mxu0 %v3507
        %v3663 = vpop.f32.mrb[0].mxu0
        %v3664 = vadd.f32 0.0, %v3663
        %v3665 = vpop.f32.mrb[0].mxu0
        %v3666 = vpop.f32.mrb[0].mxu0
        %v3667 = vadd.f32 0.0, %v3666
        %v3668 = vpop.f32.mrb[0].mxu0
        %3669 = vmatprep.mubr.bf16.mxu0 0
        %3670 = vmatmul.mubr.bf16.gmra.mrb[0].mxu0 %v3508
        %v3671 = vpop.f32.mrb[0].mxu0
        %v3672 = vadd.f32 0.0, %v3671
        %v3673 = vpop.f32.mrb[0].mxu0
        %v3674 = vpop.f32.mrb[0].mxu0
        %v3675 = vadd.f32 0.0, %v3674
        %v3676 = vpop.f32.mrb[0].mxu0
        %3677 = vmatprep.mubr.bf16.mxu0 0
        %3678 = vmatmul.mubr.bf16.gmra.mrb[0].mxu0 %v3509
        %v3679 = vpop.f32.mrb[0].mxu0
        %v3680 = vadd.f32 0.0, %v3679
        %v3681 = vpop.f32.mrb[0].mxu0
        %v3682 = vpop.f32.mrb[0].mxu0
        %v3683 = vadd.f32 0.0, %v3682
        %v3684 = vpop.f32.mrb[0].mxu0
        %3685 = vmatprep.mubr.bf16.mxu0 0
        %3686 = vmatmul.mubr.bf16.gmra.mrb[0].mxu0 %v3510
        %v3687 = vpop.f32.mrb[0].mxu0
        %v3688 = vadd.f32 0.0, %v3687
        %v3689 = vpop.f32.mrb[0].mxu0
        %v3690 = vpop.f32.mrb[0].mxu0
        %v3691 = vadd.f32 0.0, %v3690
        %v3692 = vpop.f32.mrb[0].mxu0
        %3693 = vmatprep.mubr.bf16.mxu0 0
        %3694 = vmatmul.mubr.bf16.gmra.mrb[0].mxu0 %v3511
        %v3695 = vpop.f32.mrb[0].mxu0
        %v3696 = vadd.f32 0.0, %v3695
        %v3697 = vpop.f32.mrb[0].mxu0
        %v3698 = vpop.f32.mrb[0].mxu0
        %v3699 = vadd.f32 0.0, %v3698
        %v3700 = vpop.f32.mrb[0].mxu0
        %3701 = vmatprep.mubr.bf16.mxu0 0
        %3702 = vmatmul.mubr.bf16.gmra.mrb[0].mxu0 %v3512
        %v3703 = vpop.f32.mrb[0].mxu0
        %v3704 = vadd.f32 0.0, %v3703
        %v3705 = vpop.f32.mrb[0].mxu0
        %v3706 = vpop.f32.mrb[0].mxu0
        %v3707 = vadd.f32 0.0, %v3706
        %v3708 = vpop.f32.mrb[0].mxu0
        %3709 = vmatprep.mubr.bf16.mxu0 0
        %3710 = vmatmul.mubr.bf16.gmra.mrb[0].mxu0 %v3513
        %v3711 = vpop.f32.mrb[0].mxu0
        %v3712 = vadd.f32 0.0, %v3711
        %v3713 = vpop.f32.mrb[0].mxu0
        %v3714 = vpop.f32.mrb[0].mxu0
        %v3715 = vadd.f32 0.0, %v3714
        %v3716 = vpop.f32.mrb[0].mxu0
        %3717 = vmatprep.mubr.bf16.mxu0 0
        %3718 = vmatmul.mubr.bf16.gmra.mrb[0].mxu0 %v3514
        %v3719 = vpop.f32.mrb[0].mxu0
        %v3720 = vadd.f32 0.0, %v3719
        %v3721 = vpop.f32.mrb[0].mxu0
        %v3722 = vpop.f32.mrb[0].mxu0
        %v3723 = vadd.f32 0.0, %v3722
        %v3724 = vpop.f32.mrb[0].mxu0
        %3725 = vmatprep.mubr.bf16.mxu0 0
        %3726 = vmatmul.mubr.bf16.gmra.mrb[0].mxu0 %v3515
        %v3727 = vpop.f32.mrb[0].mxu0
        %v3728 = vadd.f32 0.0, %v3727
        %v3729 = vpop.f32.mrb[0].mxu0
        %v3730 = vpop.f32.mrb[0].mxu0
        %v3731 = vadd.f32 0.0, %v3730
        %v3732 = vpop.f32.mrb[0].mxu0
        %3733 = vmatprep.mubr.bf16.mxu0 0
        %3734 = vmatmul.mubr.bf16.gmra.mrb[0].mxu0 %v3516
        %v3735 = vpop.f32.mrb[0].mxu0
        %v3736 = vadd.f32 0.0, %v3735
        %v3737 = vpop.f32.mrb[0].mxu0
        %v3738 = vpop.f32.mrb[0].mxu0
        %v3739 = vadd.f32 0.0, %v3738
        %v3740 = vpop.f32.mrb[0].mxu0
        %3741 = vdwg.mxu0
        %v3742 = vadd.f32 %v3355, %v3616
        %v3743 = vadd.f32 %v3356, %v3619
        %v3744 = vadd.f32 %v3357, %v3624
        %v3745 = vadd.f32 %v3358, %v3627
        %v3746 = vadd.f32 %v3359, %v3632
        %v3747 = vadd.f32 %v3360, %v3635
        %v3748 = vadd.f32 %v3361, %v3640
        %v3749 = vadd.f32 %v3362, %v3643
        %v3750 = vadd.f32 %v3363, %v3648
        %v3751 = vadd.f32 %v3364, %v3651
        %v3752 = vadd.f32 %v3365, %v3656
        %v3753 = vadd.f32 %v3366, %v3659
        %v3754 = vadd.f32 %v3367, %v3664
        %v3755 = vadd.f32 %v3368, %v3667
        %v3756 = vadd.f32 %v3369, %v3672
        %v3757 = vadd.f32 %v3370, %v3675
        %v3758 = vadd.f32 %v3371, %v3680
        %v3759 = vadd.f32 %v3372, %v3683
        %v3760 = vadd.f32 %v3373, %v3688
        %v3761 = vadd.f32 %v3374, %v3691
        %v3762 = vadd.f32 %v3375, %v3696
        %v3763 = vadd.f32 %v3376, %v3699
        %v3764 = vadd.f32 %v3377, %v3704
        %v3765 = vadd.f32 %v3378, %v3707
        %v3766 = vadd.f32 %v3379, %v3712
        %v3767 = vadd.f32 %v3380, %v3715
        %v3768 = vadd.f32 %v3381, %v3720
        %v3769 = vadd.f32 %v3382, %v3723
        %v3770 = vadd.f32 %v3383, %v3728
        %v3771 = vadd.f32 %v3384, %v3731
        %v3772 = vadd.f32 %v3385, %v3736
        %v3773 = vadd.f32 %v3386, %v3739
        %v3774 = vld [vmem:[%s3387] sm:$0xf]
        %v3775 = vld [vmem:[%s3387 + $0x4] sm:$0xf]
        %v3776 = vld [vmem:[%s3387 + $0x8] sm:$0x1]
        %v3777 = vld [vmem:[%s3387 + $0xc] sm:$0xf]
        %v3778 = vld [vmem:[%s3387 + $0x10] sm:$0xf]
        %v3779 = vld [vmem:[%s3387 + $0x14] sm:$0x1]
        %v3780 = vld [vmem:[%s3387 + $0x18] sm:$0xf]
        %v3781 = vld [vmem:[%s3387 + $0x1c] sm:$0xf]
        %v3782 = vld [vmem:[%s3387 + $0x20] sm:$0x1]
        %v3783 = vld [vmem:[%s3387 + $0x24] sm:$0xf]
        %v3784 = vld [vmem:[%s3387 + $0x28] sm:$0xf]
        %v3785 = vld [vmem:[%s3387 + $0x2c] sm:$0x1]
        %v3786 = vld [vmem:[%s3387 + $0x30] sm:$0xf]
        %v3787 = vld [vmem:[%s3387 + $0x34] sm:$0xf]
        %v3788 = vld [vmem:[%s3387 + $0x38] sm:$0x1]
        %v3789 = vld [vmem:[%s3387 + $0x3c] sm:$0xf]
        %v3790 = vld [vmem:[%s3387 + $0x40] sm:$0xf]
        %v3791 = vld [vmem:[%s3387 + $0x44] sm:$0x1]
        %v3792 = vld [vmem:[%s3387 + $0x48] sm:$0xf]
        %v3793 = vld [vmem:[%s3387 + $0x4c] sm:$0xf]
        %v3794 = vld [vmem:[%s3387 + $0x50] sm:$0x1]
        %v3795 = vld [vmem:[%s3387 + $0x54] sm:$0xf]
        %v3796 = vld [vmem:[%s3387 + $0x58] sm:$0xf]
        %v3797 = vld [vmem:[%s3387 + $0x5c] sm:$0x1]
        %v3798 = vld [vmem:[%s3387 + $0x60] sm:$0xf]
        %v3799 = vld [vmem:[%s3387 + $0x64] sm:$0xf]
        %v3800 = vld [vmem:[%s3387 + $0x68] sm:$0x1]
        %v3801 = vld [vmem:[%s3387 + $0x6c] sm:$0xf]
        %v3802 = vld [vmem:[%s3387 + $0x70] sm:$0xf]
        %v3803 = vld [vmem:[%s3387 + $0x74] sm:$0x1]
        %v3804 = vld [vmem:[%s3387 + $0x78] sm:$0xf]
        %v3805 = vld [vmem:[%s3387 + $0x7c] sm:$0xf]
        %v3806 = vld [vmem:[%s3387 + $0x80] sm:$0x1]
        %v3807 = vld [vmem:[%s3387 + $0x84] sm:$0xf]
        %v3808 = vld [vmem:[%s3387 + $0x88] sm:$0xf]
        %v3809 = vld [vmem:[%s3387 + $0x8c] sm:$0x1]
        %v3810 = vld [vmem:[%s3387 + $0x90] sm:$0xf]
        %v3811 = vld [vmem:[%s3387 + $0x94] sm:$0xf]
        %v3812 = vld [vmem:[%s3387 + $0x98] sm:$0x1]
        %v3813 = vld [vmem:[%s3387 + $0x9c] sm:$0xf]
        %v3814 = vld [vmem:[%s3387 + $0xa0] sm:$0xf]
        %v3815 = vld [vmem:[%s3387 + $0xa4] sm:$0x1]
        %v3816 = vld [vmem:[%s3387 + $0xa8] sm:$0xf]
        %v3817 = vld [vmem:[%s3387 + $0xac] sm:$0xf]
        %v3818 = vld [vmem:[%s3387 + $0xb0] sm:$0x1]
        %v3819 = vld [vmem:[%s3387 + $0xb4] sm:$0xf]
        %v3820 = vld [vmem:[%s3387 + $0xb8] sm:$0xf]
        %v3821 = vld [vmem:[%s3387 + $0xbc] sm:$0x1]
        %v3823 = vshrl.u32 %v3774, 16
        %v3825 = vrot.slane %v3823, 4
        %v3826 = vshll.u32 %v3774, 16
        %v3828 = vrot.slane %v3826, 5
        %v3829 = vor.u32 %v3825, %v3828
        %v3830 = vrot.slane %v3829, 4
        %v3832 = vshll.u32 %v3775, 16
        %v3834 = vrot.slane %v3832, 5
        %v3835 = vsel %vm283, %v3830, %v3834
        %v3836 = vshrl.u32 %v3775, 16
        %v3838 = vrot.slane %v3836, 4
        %v3839 = vor.u32 %v3838, %v3834
        %v3840 = vrot.slane %v3839, 4
        %v3842 = vshll.u32 %v3776, 16
        %v3844 = vrot.slane %v3842, 5
        %v3845 = vsel %vm283, %v3840, %v3844
        %v3847 = vshrl.u32 %v3777, 16
        %v3849 = vrot.slane %v3847, 4
        %v3850 = vshll.u32 %v3777, 16
        %v3852 = vrot.slane %v3850, 5
        %v3853 = vor.u32 %v3849, %v3852
        %v3854 = vrot.slane %v3853, 4
        %v3856 = vshll.u32 %v3778, 16
        %v3858 = vrot.slane %v3856, 5
        %v3859 = vsel %vm283, %v3854, %v3858
        %v3860 = vshrl.u32 %v3778, 16
        %v3862 = vrot.slane %v3860, 4
        %v3863 = vor.u32 %v3862, %v3858
        %v3864 = vrot.slane %v3863, 4
        %v3866 = vshll.u32 %v3779, 16
        %v3868 = vrot.slane %v3866, 5
        %v3869 = vsel %vm283, %v3864, %v3868
        %v3871 = vshrl.u32 %v3780, 16
        %v3873 = vrot.slane %v3871, 4
        %v3874 = vshll.u32 %v3780, 16
        %v3876 = vrot.slane %v3874, 5
        %v3877 = vor.u32 %v3873, %v3876
        %v3878 = vrot.slane %v3877, 4
        %v3880 = vshll.u32 %v3781, 16
        %v3882 = vrot.slane %v3880, 5
        %v3883 = vsel %vm283, %v3878, %v3882
        %v3884 = vshrl.u32 %v3781, 16
        %v3886 = vrot.slane %v3884, 4
        %v3887 = vor.u32 %v3886, %v3882
        %v3888 = vrot.slane %v3887, 4
        %v3890 = vshll.u32 %v3782, 16
        %v3892 = vrot.slane %v3890, 5
        %v3893 = vsel %vm283, %v3888, %v3892
        %v3895 = vshrl.u32 %v3783, 16
        %v3897 = vrot.slane %v3895, 4
        %v3898 = vshll.u32 %v3783, 16
        %v3900 = vrot.slane %v3898, 5
        %v3901 = vor.u32 %v3897, %v3900
        %v3902 = vrot.slane %v3901, 4
        %v3904 = vshll.u32 %v3784, 16
        %v3906 = vrot.slane %v3904, 5
        %v3907 = vsel %vm283, %v3902, %v3906
        %v3908 = vshrl.u32 %v3784, 16
        %v3910 = vrot.slane %v3908, 4
        %v3911 = vor.u32 %v3910, %v3906
        %v3912 = vrot.slane %v3911, 4
        %v3914 = vshll.u32 %v3785, 16
        %v3916 = vrot.slane %v3914, 5
        %v3917 = vsel %vm283, %v3912, %v3916
        %v3919 = vshrl.u32 %v3786, 16
        %v3921 = vrot.slane %v3919, 4
        %v3922 = vshll.u32 %v3786, 16
        %v3924 = vrot.slane %v3922, 5
        %v3925 = vor.u32 %v3921, %v3924
        %v3926 = vrot.slane %v3925, 4
        %v3928 = vshll.u32 %v3787, 16
        %v3930 = vrot.slane %v3928, 5
        %v3931 = vsel %vm283, %v3926, %v3930
        %v3932 = vshrl.u32 %v3787, 16
        %v3934 = vrot.slane %v3932, 4
        %v3935 = vor.u32 %v3934, %v3930
        %v3936 = vrot.slane %v3935, 4
        %v3938 = vshll.u32 %v3788, 16
        %v3940 = vrot.slane %v3938, 5
        %v3941 = vsel %vm283, %v3936, %v3940
        %v3943 = vshrl.u32 %v3789, 16
        %v3945 = vrot.slane %v3943, 4
        %v3946 = vshll.u32 %v3789, 16
        %v3948 = vrot.slane %v3946, 5
        %v3949 = vor.u32 %v3945, %v3948
        %v3950 = vrot.slane %v3949, 4
        %v3952 = vshll.u32 %v3790, 16
        %v3954 = vrot.slane %v3952, 5
        %v3955 = vsel %vm283, %v3950, %v3954
        %v3956 = vshrl.u32 %v3790, 16
        %v3958 = vrot.slane %v3956, 4
        %v3959 = vor.u32 %v3958, %v3954
        %v3960 = vrot.slane %v3959, 4
        %v3962 = vshll.u32 %v3791, 16
        %v3964 = vrot.slane %v3962, 5
        %v3965 = vsel %vm283, %v3960, %v3964
        %v3967 = vshrl.u32 %v3792, 16
        %v3969 = vrot.slane %v3967, 4
        %v3970 = vshll.u32 %v3792, 16
        %v3972 = vrot.slane %v3970, 5
        %v3973 = vor.u32 %v3969, %v3972
        %v3974 = vrot.slane %v3973, 4
        %v3976 = vshll.u32 %v3793, 16
        %v3978 = vrot.slane %v3976, 5
        %v3979 = vsel %vm283, %v3974, %v3978
        %v3980 = vshrl.u32 %v3793, 16
        %v3982 = vrot.slane %v3980, 4
        %v3983 = vor.u32 %v3982, %v3978
        %v3984 = vrot.slane %v3983, 4
        %v3986 = vshll.u32 %v3794, 16
        %v3988 = vrot.slane %v3986, 5
        %v3989 = vsel %vm283, %v3984, %v3988
        %v3991 = vshrl.u32 %v3795, 16
        %v3993 = vrot.slane %v3991, 4
        %v3994 = vshll.u32 %v3795, 16
        %v3996 = vrot.slane %v3994, 5
        %v3997 = vor.u32 %v3993, %v3996
        %v3998 = vrot.slane %v3997, 4
        %v4000 = vshll.u32 %v3796, 16
        %v4002 = vrot.slane %v4000, 5
        %v4003 = vsel %vm283, %v3998, %v4002
        %v4004 = vshrl.u32 %v3796, 16
        %v4006 = vrot.slane %v4004, 4
        %v4007 = vor.u32 %v4006, %v4002
        %v4008 = vrot.slane %v4007, 4
        %v4010 = vshll.u32 %v3797, 16
        %v4012 = vrot.slane %v4010, 5
        %v4013 = vsel %vm283, %v4008, %v4012
        %v4015 = vshrl.u32 %v3798, 16
        %v4017 = vrot.slane %v4015, 4
        %v4018 = vshll.u32 %v3798, 16
        %v4020 = vrot.slane %v4018, 5
        %v4021 = vor.u32 %v4017, %v4020
        %v4022 = vrot.slane %v4021, 4
        %v4024 = vshll.u32 %v3799, 16
        %v4026 = vrot.slane %v4024, 5
        %v4027 = vsel %vm283, %v4022, %v4026
        %v4028 = vshrl.u32 %v3799, 16
        %v4030 = vrot.slane %v4028, 4
        %v4031 = vor.u32 %v4030, %v4026
        %v4032 = vrot.slane %v4031, 4
        %v4034 = vshll.u32 %v3800, 16
        %v4036 = vrot.slane %v4034, 5
        %v4037 = vsel %vm283, %v4032, %v4036
        %v4039 = vshrl.u32 %v3801, 16
        %v4041 = vrot.slane %v4039, 4
        %v4042 = vshll.u32 %v3801, 16
        %v4044 = vrot.slane %v4042, 5
        %v4045 = vor.u32 %v4041, %v4044
        %v4046 = vrot.slane %v4045, 4
        %v4048 = vshll.u32 %v3802, 16
        %v4050 = vrot.slane %v4048, 5
        %v4051 = vsel %vm283, %v4046, %v4050
        %v4052 = vshrl.u32 %v3802, 16
        %v4054 = vrot.slane %v4052, 4
        %v4055 = vor.u32 %v4054, %v4050
        %v4056 = vrot.slane %v4055, 4
        %v4058 = vshll.u32 %v3803, 16
        %v4060 = vrot.slane %v4058, 5
        %v4061 = vsel %vm283, %v4056, %v4060
        %v4063 = vshrl.u32 %v3804, 16
        %v4065 = vrot.slane %v4063, 4
        %v4066 = vshll.u32 %v3804, 16
        %v4068 = vrot.slane %v4066, 5
        %v4069 = vor.u32 %v4065, %v4068
        %v4070 = vrot.slane %v4069, 4
        %v4072 = vshll.u32 %v3805, 16
        %v4074 = vrot.slane %v4072, 5
        %v4075 = vsel %vm283, %v4070, %v4074
        %v4076 = vshrl.u32 %v3805, 16
        %v4078 = vrot.slane %v4076, 4
        %v4079 = vor.u32 %v4078, %v4074
        %v4080 = vrot.slane %v4079, 4
        %v4082 = vshll.u32 %v3806, 16
        %v4084 = vrot.slane %v4082, 5
        %v4085 = vsel %vm283, %v4080, %v4084
        %v4087 = vshrl.u32 %v3807, 16
        %v4089 = vrot.slane %v4087, 4
        %v4090 = vshll.u32 %v3807, 16
        %v4092 = vrot.slane %v4090, 5
        %v4093 = vor.u32 %v4089, %v4092
        %v4094 = vrot.slane %v4093, 4
        %v4096 = vshll.u32 %v3808, 16
        %v4098 = vrot.slane %v4096, 5
        %v4099 = vsel %vm283, %v4094, %v4098
        %v4100 = vshrl.u32 %v3808, 16
        %v4102 = vrot.slane %v4100, 4
        %v4103 = vor.u32 %v4102, %v4098
        %v4104 = vrot.slane %v4103, 4
        %v4106 = vshll.u32 %v3809, 16
        %v4108 = vrot.slane %v4106, 5
        %v4109 = vsel %vm283, %v4104, %v4108
        %v4111 = vshrl.u32 %v3810, 16
        %v4113 = vrot.slane %v4111, 4
        %v4114 = vshll.u32 %v3810, 16
        %v4116 = vrot.slane %v4114, 5
        %v4117 = vor.u32 %v4113, %v4116
        %v4118 = vrot.slane %v4117, 4
        %v4120 = vshll.u32 %v3811, 16
        %v4122 = vrot.slane %v4120, 5
        %v4123 = vsel %vm283, %v4118, %v4122
        %v4124 = vshrl.u32 %v3811, 16
        %v4126 = vrot.slane %v4124, 4
        %v4127 = vor.u32 %v4126, %v4122
        %v4128 = vrot.slane %v4127, 4
        %v4130 = vshll.u32 %v3812, 16
        %v4132 = vrot.slane %v4130, 5
        %v4133 = vsel %vm283, %v4128, %v4132
        %v4135 = vshrl.u32 %v3813, 16
        %v4137 = vrot.slane %v4135, 4
        %v4138 = vshll.u32 %v3813, 16
        %v4140 = vrot.slane %v4138, 5
        %v4141 = vor.u32 %v4137, %v4140
        %v4142 = vrot.slane %v4141, 4
        %v4144 = vshll.u32 %v3814, 16
        %v4146 = vrot.slane %v4144, 5
        %v4147 = vsel %vm283, %v4142, %v4146
        %v4148 = vshrl.u32 %v3814, 16
        %v4150 = vrot.slane %v4148, 4
        %v4151 = vor.u32 %v4150, %v4146
        %v4152 = vrot.slane %v4151, 4
        %v4154 = vshll.u32 %v3815, 16
        %v4156 = vrot.slane %v4154, 5
        %v4157 = vsel %vm283, %v4152, %v4156
        %v4159 = vshrl.u32 %v3816, 16
        %v4161 = vrot.slane %v4159, 4
        %v4162 = vshll.u32 %v3816, 16
        %v4164 = vrot.slane %v4162, 5
        %v4165 = vor.u32 %v4161, %v4164
        %v4166 = vrot.slane %v4165, 4
        %v4168 = vshll.u32 %v3817, 16
        %v4170 = vrot.slane %v4168, 5
        %v4171 = vsel %vm283, %v4166, %v4170
        %v4172 = vshrl.u32 %v3817, 16
        %v4174 = vrot.slane %v4172, 4
        %v4175 = vor.u32 %v4174, %v4170
        %v4176 = vrot.slane %v4175, 4
        %v4178 = vshll.u32 %v3818, 16
        %v4180 = vrot.slane %v4178, 5
        %v4181 = vsel %vm283, %v4176, %v4180
        %v4183 = vshrl.u32 %v3819, 16
        %v4185 = vrot.slane %v4183, 4
        %v4186 = vshll.u32 %v3819, 16
        %v4188 = vrot.slane %v4186, 5
        %v4189 = vor.u32 %v4185, %v4188
        %v4190 = vrot.slane %v4189, 4
        %v4192 = vshll.u32 %v3820, 16
        %v4194 = vrot.slane %v4192, 5
        %v4195 = vsel %vm283, %v4190, %v4194
        %v4196 = vshrl.u32 %v3820, 16
        %v4198 = vrot.slane %v4196, 4
        %v4199 = vor.u32 %v4198, %v4194
        %v4200 = vrot.slane %v4199, 4
        %v4202 = vshll.u32 %v3821, 16
        %v4204 = vrot.slane %v4202, 5
        %v4205 = vsel %vm283, %v4200, %v4204
        %s4206 = scalar_lea.vmem %s2, 448
        %v4207 = vld [vmem:[%s4206] sm:$0xf]
        %v4208 = vld [vmem:[%s4206 + $0x4] sm:$0xf]
        %v4209 = vld [vmem:[%s4206 + $0x8] sm:$0xf]
        %v4210 = vld [vmem:[%s4206 + $0xc] sm:$0xf]
        %v4211 = vld [vmem:[%s4206 + $0x10] sm:$0xf]
        %v4212 = vld [vmem:[%s4206 + $0x14] sm:$0xf]
        %v4213 = vld [vmem:[%s4206 + $0x18] sm:$0xf]
        %v4214 = vld [vmem:[%s4206 + $0x1c] sm:$0xf]
        %v4215 = vld [vmem:[%s4206 + $0x20] sm:$0xf]
        %v4216 = vld [vmem:[%s4206 + $0x24] sm:$0xf]
        %v4217 = vld [vmem:[%s4206 + $0x28] sm:$0xf]
        %v4218 = vld [vmem:[%s4206 + $0x2c] sm:$0xf]
        %v4219 = vld [vmem:[%s4206 + $0x30] sm:$0xf]
        %v4220 = vld [vmem:[%s4206 + $0x34] sm:$0xf]
        %v4221 = vld [vmem:[%s4206 + $0x38] sm:$0xf]
        %v4222 = vld [vmem:[%s4206 + $0x3c] sm:$0xf]
        %v4223 = vunpack.c.l.b16 %v3835
        %v4224 = vunpack.c.l.b16 %v3845
        %v4225 = vunpack.c.l.b16 %v3859
        %v4226 = vunpack.c.l.b16 %v3869
        %v4227 = vunpack.c.l.b16 %v3883
        %v4228 = vunpack.c.l.b16 %v3893
        %v4229 = vunpack.c.l.b16 %v3907
        %v4230 = vunpack.c.l.b16 %v3917
        %v4231 = vunpack.c.l.b16 %v3931
        %v4232 = vunpack.c.l.b16 %v3941
        %v4233 = vunpack.c.l.b16 %v3955
        %v4234 = vunpack.c.l.b16 %v3965
        %v4235 = vunpack.c.l.b16 %v3979
        %v4236 = vunpack.c.l.b16 %v3989
        %v4237 = vunpack.c.l.b16 %v4003
        %v4238 = vunpack.c.l.b16 %v4013
        %v4239 = vunpack.c.l.b16 %v4027
        %v4240 = vunpack.c.l.b16 %v4037
        %v4241 = vunpack.c.l.b16 %v4051
        %v4242 = vunpack.c.l.b16 %v4061
        %v4243 = vunpack.c.l.b16 %v4075
        %v4244 = vunpack.c.l.b16 %v4085
        %v4245 = vunpack.c.l.b16 %v4099
        %v4246 = vunpack.c.l.b16 %v4109
        %v4247 = vunpack.c.l.b16 %v4123
        %v4248 = vunpack.c.l.b16 %v4133
        %v4249 = vunpack.c.l.b16 %v4147
        %v4250 = vunpack.c.l.b16 %v4157
        %v4251 = vunpack.c.l.b16 %v4171
        %v4252 = vunpack.c.l.b16 %v4181
        %v4253 = vunpack.c.l.b16 %v4195
        %v4254 = vunpack.c.l.b16 %v4205
        %v4255 = vpack.c.b16 %v4224, %v4223
        %v4256 = vpack.c.b16 %v4226, %v4225
        %v4257 = vpack.c.b16 %v4228, %v4227
        %v4258 = vpack.c.b16 %v4230, %v4229
        %v4259 = vpack.c.b16 %v4232, %v4231
        %v4260 = vpack.c.b16 %v4234, %v4233
        %v4261 = vpack.c.b16 %v4236, %v4235
        %v4262 = vpack.c.b16 %v4238, %v4237
        %v4263 = vpack.c.b16 %v4240, %v4239
        %v4264 = vpack.c.b16 %v4242, %v4241
        %v4265 = vpack.c.b16 %v4244, %v4243
        %v4266 = vpack.c.b16 %v4246, %v4245
        %v4267 = vpack.c.b16 %v4248, %v4247
        %v4268 = vpack.c.b16 %v4250, %v4249
        %v4269 = vpack.c.b16 %v4252, %v4251
        %v4270 = vpack.c.b16 %v4254, %v4253
        %v4303 = vunpack.c.l.b16 %v4207
        %v4304 = vunpack.c.l.b16 %v4208
        %v4305 = vunpack.c.l.b16 %v4209
        %v4306 = vunpack.c.l.b16 %v4210
        %v4307 = vunpack.c.l.b16 %v4211
        %v4308 = vunpack.c.l.b16 %v4212
        %v4309 = vunpack.c.l.b16 %v4213
        %v4310 = vunpack.c.l.b16 %v4214
        %v4311 = vunpack.c.l.b16 %v4215
        %v4312 = vunpack.c.l.b16 %v4216
        %v4313 = vunpack.c.l.b16 %v4217
        %v4314 = vunpack.c.l.b16 %v4218
        %v4315 = vunpack.c.l.b16 %v4219
        %v4316 = vunpack.c.l.b16 %v4220
        %v4317 = vunpack.c.l.b16 %v4221
        %v4318 = vunpack.c.l.b16 %v4222
        %v4319 = vpack.c.b16 %v4304, %v4303
        %v4320 = vpack.c.b16 %v4306, %v4305
        %v4321 = vpack.c.b16 %v4308, %v4307
        %v4322 = vpack.c.b16 %v4310, %v4309
        %v4323 = vpack.c.b16 %v4312, %v4311
        %v4324 = vpack.c.b16 %v4314, %v4313
        %v4325 = vpack.c.b16 %v4316, %v4315
        %v4326 = vpack.c.b16 %v4318, %v4317
        %4335 = vmatprep.subr.bf16.mxu0 0
        %4336 = vmatpush1.bf16.msra.mxu0 %v4319
        %4337 = vmatprep.subr.bf16.mxu0 0
        %4338 = vmatpush1.bf16.msra.mxu0 %v4320
        %4339 = vmatprep.subr.bf16.mxu0 0
        %4340 = vmatpush1.bf16.msra.mxu0 %v4321
        %4341 = vmatprep.subr.bf16.mxu0 0
        %4342 = vmatpush1.bf16.msra.mxu0 %v4322
        %4343 = vmatprep.subr.bf16.mxu0 0
        %4344 = vmatpush1.bf16.msra.mxu0 %v4323
        %4345 = vmatprep.subr.bf16.mxu0 0
        %4346 = vmatpush1.bf16.msra.mxu0 %v4324
        %4347 = vmatprep.subr.bf16.mxu0 0
        %4348 = vmatpush1.bf16.msra.mxu0 %v4325
        %4349 = vmatprep.subr.bf16.mxu0 0
        %4350 = vmatpush1.bf16.msra.mxu0 %v4326
        %4351 = vmatprep.subr.bf16.mxu0 0
        %4352 = vmatpush1.bf16.msra.mxu0 0
        %4353 = vmatprep.subr.bf16.mxu0 0
        %4354 = vmatpush1.bf16.msra.mxu0 0
        %4355 = vmatprep.subr.bf16.mxu0 0
        %4356 = vmatpush1.bf16.msra.mxu0 0
        %4357 = vmatprep.subr.bf16.mxu0 0
        %4358 = vmatpush1.bf16.msra.mxu0 0
        %4359 = vmatprep.subr.bf16.mxu0 0
        %4360 = vmatpush1.bf16.msra.mxu0 0
        %4361 = vmatprep.subr.bf16.mxu0 0
        %4362 = vmatpush1.bf16.msra.mxu0 0
        %4363 = vmatprep.subr.bf16.mxu0 0
        %4364 = vmatpush1.bf16.msra.mxu0 0
        %4365 = vmatprep.subr.bf16.mxu0 0
        %4366 = vmatpush1.bf16.msra.mxu0 0
        %4367 = vmatprep.mubr.bf16.mxu0 0
        %4368 = vmatmul.mubr.bf16.gmra.mrb[0].mxu0 %v4255
        %v4369 = vpop.f32.mrb[0].mxu0
        %v4370 = vadd.f32 0.0, %v4369
        %v4371 = vpop.f32.mrb[0].mxu0
        %v4372 = vpop.f32.mrb[0].mxu0
        %v4373 = vadd.f32 0.0, %v4372
        %v4374 = vpop.f32.mrb[0].mxu0
        %4375 = vmatprep.mubr.bf16.mxu0 0
        %4376 = vmatmul.mubr.bf16.gmra.mrb[0].mxu0 %v4256
        %v4377 = vpop.f32.mrb[0].mxu0
        %v4378 = vadd.f32 0.0, %v4377
        %v4379 = vpop.f32.mrb[0].mxu0
        %v4380 = vpop.f32.mrb[0].mxu0
        %v4381 = vadd.f32 0.0, %v4380
        %v4382 = vpop.f32.mrb[0].mxu0
        %4383 = vmatprep.mubr.bf16.mxu0 0
        %4384 = vmatmul.mubr.bf16.gmra.mrb[0].mxu0 %v4257
        %v4385 = vpop.f32.mrb[0].mxu0
        %v4386 = vadd.f32 0.0, %v4385
        %v4387 = vpop.f32.mrb[0].mxu0
        %v4388 = vpop.f32.mrb[0].mxu0
        %v4389 = vadd.f32 0.0, %v4388
        %v4390 = vpop.f32.mrb[0].mxu0
        %4391 = vmatprep.mubr.bf16.mxu0 0
        %4392 = vmatmul.mubr.bf16.gmra.mrb[0].mxu0 %v4258
        %v4393 = vpop.f32.mrb[0].mxu0
        %v4394 = vadd.f32 0.0, %v4393
        %v4395 = vpop.f32.mrb[0].mxu0
        %v4396 = vpop.f32.mrb[0].mxu0
        %v4397 = vadd.f32 0.0, %v4396
        %v4398 = vpop.f32.mrb[0].mxu0
        %4399 = vmatprep.mubr.bf16.mxu0 0
        %4400 = vmatmul.mubr.bf16.gmra.mrb[0].mxu0 %v4259
        %v4401 = vpop.f32.mrb[0].mxu0
        %v4402 = vadd.f32 0.0, %v4401
        %v4403 = vpop.f32.mrb[0].mxu0
        %v4404 = vpop.f32.mrb[0].mxu0
        %v4405 = vadd.f32 0.0, %v4404
        %v4406 = vpop.f32.mrb[0].mxu0
        %4407 = vmatprep.mubr.bf16.mxu0 0
        %4408 = vmatmul.mubr.bf16.gmra.mrb[0].mxu0 %v4260
        %v4409 = vpop.f32.mrb[0].mxu0
        %v4410 = vadd.f32 0.0, %v4409
        %v4411 = vpop.f32.mrb[0].mxu0
        %v4412 = vpop.f32.mrb[0].mxu0
        %v4413 = vadd.f32 0.0, %v4412
        %v4414 = vpop.f32.mrb[0].mxu0
        %4415 = vmatprep.mubr.bf16.mxu0 0
        %4416 = vmatmul.mubr.bf16.gmra.mrb[0].mxu0 %v4261
        %v4417 = vpop.f32.mrb[0].mxu0
        %v4418 = vadd.f32 0.0, %v4417
        %v4419 = vpop.f32.mrb[0].mxu0
        %v4420 = vpop.f32.mrb[0].mxu0
        %v4421 = vadd.f32 0.0, %v4420
        %v4422 = vpop.f32.mrb[0].mxu0
        %4423 = vmatprep.mubr.bf16.mxu0 0
        %4424 = vmatmul.mubr.bf16.gmra.mrb[0].mxu0 %v4262
        %v4425 = vpop.f32.mrb[0].mxu0
        %v4426 = vadd.f32 0.0, %v4425
        %v4427 = vpop.f32.mrb[0].mxu0
        %v4428 = vpop.f32.mrb[0].mxu0
        %v4429 = vadd.f32 0.0, %v4428
        %v4430 = vpop.f32.mrb[0].mxu0
        %4431 = vmatprep.mubr.bf16.mxu0 0
        %4432 = vmatmul.mubr.bf16.gmra.mrb[0].mxu0 %v4263
        %v4433 = vpop.f32.mrb[0].mxu0
        %v4434 = vadd.f32 0.0, %v4433
        %v4435 = vpop.f32.mrb[0].mxu0
        %v4436 = vpop.f32.mrb[0].mxu0
        %v4437 = vadd.f32 0.0, %v4436
        %v4438 = vpop.f32.mrb[0].mxu0
        %4439 = vmatprep.mubr.bf16.mxu0 0
        %4440 = vmatmul.mubr.bf16.gmra.mrb[0].mxu0 %v4264
        %v4441 = vpop.f32.mrb[0].mxu0
        %v4442 = vadd.f32 0.0, %v4441
        %v4443 = vpop.f32.mrb[0].mxu0
        %v4444 = vpop.f32.mrb[0].mxu0
        %v4445 = vadd.f32 0.0, %v4444
        %v4446 = vpop.f32.mrb[0].mxu0
        %4447 = vmatprep.mubr.bf16.mxu0 0
        %4448 = vmatmul.mubr.bf16.gmra.mrb[0].mxu0 %v4265
        %v4449 = vpop.f32.mrb[0].mxu0
        %v4450 = vadd.f32 0.0, %v4449
        %v4451 = vpop.f32.mrb[0].mxu0
        %v4452 = vpop.f32.mrb[0].mxu0
        %v4453 = vadd.f32 0.0, %v4452
        %v4454 = vpop.f32.mrb[0].mxu0
        %4455 = vmatprep.mubr.bf16.mxu0 0
        %4456 = vmatmul.mubr.bf16.gmra.mrb[0].mxu0 %v4266
        %v4457 = vpop.f32.mrb[0].mxu0
        %v4458 = vadd.f32 0.0, %v4457
        %v4459 = vpop.f32.mrb[0].mxu0
        %v4460 = vpop.f32.mrb[0].mxu0
        %v4461 = vadd.f32 0.0, %v4460
        %v4462 = vpop.f32.mrb[0].mxu0
        %4463 = vmatprep.mubr.bf16.mxu0 0
        %4464 = vmatmul.mubr.bf16.gmra.mrb[0].mxu0 %v4267
        %v4465 = vpop.f32.mrb[0].mxu0
        %v4466 = vadd.f32 0.0, %v4465
        %v4467 = vpop.f32.mrb[0].mxu0
        %v4468 = vpop.f32.mrb[0].mxu0
        %v4469 = vadd.f32 0.0, %v4468
        %v4470 = vpop.f32.mrb[0].mxu0
        %4471 = vmatprep.mubr.bf16.mxu0 0
        %4472 = vmatmul.mubr.bf16.gmra.mrb[0].mxu0 %v4268
        %v4473 = vpop.f32.mrb[0].mxu0
        %v4474 = vadd.f32 0.0, %v4473
        %v4475 = vpop.f32.mrb[0].mxu0
        %v4476 = vpop.f32.mrb[0].mxu0
        %v4477 = vadd.f32 0.0, %v4476
        %v4478 = vpop.f32.mrb[0].mxu0
        %4479 = vmatprep.mubr.bf16.mxu0 0
        %4480 = vmatmul.mubr.bf16.gmra.mrb[0].mxu0 %v4269
        %v4481 = vpop.f32.mrb[0].mxu0
        %v4482 = vadd.f32 0.0, %v4481
        %v4483 = vpop.f32.mrb[0].mxu0
        %v4484 = vpop.f32.mrb[0].mxu0
        %v4485 = vadd.f32 0.0, %v4484
        %v4486 = vpop.f32.mrb[0].mxu0
        %4487 = vmatprep.mubr.bf16.mxu0 0
        %4488 = vmatmul.mubr.bf16.gmra.mrb[0].mxu0 %v4270
        %v4489 = vpop.f32.mrb[0].mxu0
        %v4490 = vadd.f32 0.0, %v4489
        %v4491 = vpop.f32.mrb[0].mxu0
        %v4492 = vpop.f32.mrb[0].mxu0
        %v4493 = vadd.f32 0.0, %v4492
        %v4494 = vpop.f32.mrb[0].mxu0
        %4495 = vdwg.mxu0
        %v4496 = vadd.f32 %v3742, %v4370
        %v4497 = vadd.f32 %v3743, %v4373
        %v4498 = vadd.f32 %v3744, %v4378
        %v4499 = vadd.f32 %v3745, %v4381
        %v4500 = vadd.f32 %v3746, %v4386
        %v4501 = vadd.f32 %v3747, %v4389
        %v4502 = vadd.f32 %v3748, %v4394
        %v4503 = vadd.f32 %v3749, %v4397
        %v4504 = vadd.f32 %v3750, %v4402
        %v4505 = vadd.f32 %v3751, %v4405
        %v4506 = vadd.f32 %v3752, %v4410
        %v4507 = vadd.f32 %v3753, %v4413
        %v4508 = vadd.f32 %v3754, %v4418
        %v4509 = vadd.f32 %v3755, %v4421
        %v4510 = vadd.f32 %v3756, %v4426
        %v4511 = vadd.f32 %v3757, %v4429
        %v4512 = vadd.f32 %v3758, %v4434
        %v4513 = vadd.f32 %v3759, %v4437
        %v4514 = vadd.f32 %v3760, %v4442
        %v4515 = vadd.f32 %v3761, %v4445
        %v4516 = vadd.f32 %v3762, %v4450
        %v4517 = vadd.f32 %v3763, %v4453
        %v4518 = vadd.f32 %v3764, %v4458
        %v4519 = vadd.f32 %v3765, %v4461
        %v4520 = vadd.f32 %v3766, %v4466
        %v4521 = vadd.f32 %v3767, %v4469
        %v4522 = vadd.f32 %v3768, %v4474
        %v4523 = vadd.f32 %v3769, %v4477
        %v4524 = vadd.f32 %v3770, %v4482
        %v4525 = vadd.f32 %v3771, %v4485
        %v4526 = vadd.f32 %v3772, %v4490
        %v4527 = vadd.f32 %v3773, %v4493
        %v4528 = vld [vmem:[%s3387] sm:$0xe]
        %v4529 = vld [vmem:[%s3387 + $0xc] sm:$0xe]
        %v4530 = vld [vmem:[%s3387 + $0x18] sm:$0xe]
        %v4531 = vld [vmem:[%s3387 + $0x24] sm:$0xe]
        %v4532 = vld [vmem:[%s3387 + $0x30] sm:$0xe]
        %v4533 = vld [vmem:[%s3387 + $0x3c] sm:$0xe]
        %v4534 = vld [vmem:[%s3387 + $0x48] sm:$0xe]
        %v4535 = vld [vmem:[%s3387 + $0x54] sm:$0xe]
        %v4536 = vld [vmem:[%s3387 + $0x60] sm:$0xe]
        %v4537 = vld [vmem:[%s3387 + $0x6c] sm:$0xe]
        %v4538 = vld [vmem:[%s3387 + $0x78] sm:$0xe]
        %v4539 = vld [vmem:[%s3387 + $0x84] sm:$0xe]
        %v4540 = vld [vmem:[%s3387 + $0x90] sm:$0xe]
        %v4541 = vld [vmem:[%s3387 + $0x9c] sm:$0xe]
        %v4542 = vld [vmem:[%s3387 + $0xa8] sm:$0xe]
        %v4543 = vld [vmem:[%s3387 + $0xb4] sm:$0xe]
        %v4592 = vrot.slane %v4528, 5
        %v4593 = vrot.slane %v4592, 4
        %v4594 = vrot.slane %v3775, 5
        %v4595 = vsel %vm1313, %v4593, %v4594
        %v4596 = vrot.slane %v4594, 4
        %v4597 = vrot.slane %v3776, 5
        %v4598 = vsel %vm1313, %v4596, %v4597
        %v4599 = vrot.slane %v4529, 5
        %v4600 = vrot.slane %v4599, 4
        %v4601 = vrot.slane %v3778, 5
        %v4602 = vsel %vm1313, %v4600, %v4601
        %v4603 = vrot.slane %v4601, 4
        %v4604 = vrot.slane %v3779, 5
        %v4605 = vsel %vm1313, %v4603, %v4604
        %v4606 = vrot.slane %v4530, 5
        %v4607 = vrot.slane %v4606, 4
        %v4608 = vrot.slane %v3781, 5
        %v4609 = vsel %vm1313, %v4607, %v4608
        %v4610 = vrot.slane %v4608, 4
        %v4611 = vrot.slane %v3782, 5
        %v4612 = vsel %vm1313, %v4610, %v4611
        %v4613 = vrot.slane %v4531, 5
        %v4614 = vrot.slane %v4613, 4
        %v4615 = vrot.slane %v3784, 5
        %v4616 = vsel %vm1313, %v4614, %v4615
        %v4617 = vrot.slane %v4615, 4
        %v4618 = vrot.slane %v3785, 5
        %v4619 = vsel %vm1313, %v4617, %v4618
        %v4620 = vrot.slane %v4532, 5
        %v4621 = vrot.slane %v4620, 4
        %v4622 = vrot.slane %v3787, 5
        %v4623 = vsel %vm1313, %v4621, %v4622
        %v4624 = vrot.slane %v4622, 4
        %v4625 = vrot.slane %v3788, 5
        %v4626 = vsel %vm1313, %v4624, %v4625
        %v4627 = vrot.slane %v4533, 5
        %v4628 = vrot.slane %v4627, 4
        %v4629 = vrot.slane %v3790, 5
        %v4630 = vsel %vm1313, %v4628, %v4629
        %v4631 = vrot.slane %v4629, 4
        %v4632 = vrot.slane %v3791, 5
        %v4633 = vsel %vm1313, %v4631, %v4632
        %v4634 = vrot.slane %v4534, 5
        %v4635 = vrot.slane %v4634, 4
        %v4636 = vrot.slane %v3793, 5
        %v4637 = vsel %vm1313, %v4635, %v4636
        %v4638 = vrot.slane %v4636, 4
        %v4639 = vrot.slane %v3794, 5
        %v4640 = vsel %vm1313, %v4638, %v4639
        %v4641 = vrot.slane %v4535, 5
        %v4642 = vrot.slane %v4641, 4
        %v4643 = vrot.slane %v3796, 5
        %v4644 = vsel %vm1313, %v4642, %v4643
        %v4645 = vrot.slane %v4643, 4
        %v4646 = vrot.slane %v3797, 5
        %v4647 = vsel %vm1313, %v4645, %v4646
        %v4648 = vrot.slane %v4536, 5
        %v4649 = vrot.slane %v4648, 4
        %v4650 = vrot.slane %v3799, 5
        %v4651 = vsel %vm1313, %v4649, %v4650
        %v4652 = vrot.slane %v4650, 4
        %v4653 = vrot.slane %v3800, 5
        %v4654 = vsel %vm1313, %v4652, %v4653
        %v4655 = vrot.slane %v4537, 5
        %v4656 = vrot.slane %v4655, 4
        %v4657 = vrot.slane %v3802, 5
        %v4658 = vsel %vm1313, %v4656, %v4657
        %v4659 = vrot.slane %v4657, 4
        %v4660 = vrot.slane %v3803, 5
        %v4661 = vsel %vm1313, %v4659, %v4660
        %v4662 = vrot.slane %v4538, 5
        %v4663 = vrot.slane %v4662, 4
        %v4664 = vrot.slane %v3805, 5
        %v4665 = vsel %vm1313, %v4663, %v4664
        %v4666 = vrot.slane %v4664, 4
        %v4667 = vrot.slane %v3806, 5
        %v4668 = vsel %vm1313, %v4666, %v4667
        %v4669 = vrot.slane %v4539, 5
        %v4670 = vrot.slane %v4669, 4
        %v4671 = vrot.slane %v3808, 5
        %v4672 = vsel %vm1313, %v4670, %v4671
        %v4673 = vrot.slane %v4671, 4
        %v4674 = vrot.slane %v3809, 5
        %v4675 = vsel %vm1313, %v4673, %v4674
        %v4676 = vrot.slane %v4540, 5
        %v4677 = vrot.slane %v4676, 4
        %v4678 = vrot.slane %v3811, 5
        %v4679 = vsel %vm1313, %v4677, %v4678
        %v4680 = vrot.slane %v4678, 4
        %v4681 = vrot.slane %v3812, 5
        %v4682 = vsel %vm1313, %v4680, %v4681
        %v4683 = vrot.slane %v4541, 5
        %v4684 = vrot.slane %v4683, 4
        %v4685 = vrot.slane %v3814, 5
        %v4686 = vsel %vm1313, %v4684, %v4685
        %v4687 = vrot.slane %v4685, 4
        %v4688 = vrot.slane %v3815, 5
        %v4689 = vsel %vm1313, %v4687, %v4688
        %v4690 = vrot.slane %v4542, 5
        %v4691 = vrot.slane %v4690, 4
        %v4692 = vrot.slane %v3817, 5
        %v4693 = vsel %vm1313, %v4691, %v4692
        %v4694 = vrot.slane %v4692, 4
        %v4695 = vrot.slane %v3818, 5
        %v4696 = vsel %vm1313, %v4694, %v4695
        %v4697 = vrot.slane %v4543, 5
        %v4698 = vrot.slane %v4697, 4
        %v4699 = vrot.slane %v3820, 5
        %v4700 = vsel %vm1313, %v4698, %v4699
        %v4701 = vrot.slane %v4699, 4
        %v4702 = vrot.slane %v3821, 5
        %v4703 = vsel %vm1313, %v4701, %v4702
        %s4704 = scalar_lea.vmem %s2, 512
        %v4705 = vld [vmem:[%s4704] sm:$0xf]
        %v4706 = vld [vmem:[%s4704 + $0x4] sm:$0xf]
        %v4707 = vld [vmem:[%s4704 + $0x8] sm:$0xf]
        %v4708 = vld [vmem:[%s4704 + $0xc] sm:$0xf]
        %v4709 = vld [vmem:[%s4704 + $0x10] sm:$0xf]
        %v4710 = vld [vmem:[%s4704 + $0x14] sm:$0xf]
        %v4711 = vld [vmem:[%s4704 + $0x18] sm:$0xf]
        %v4712 = vld [vmem:[%s4704 + $0x1c] sm:$0xf]
        %v4713 = vld [vmem:[%s4704 + $0x20] sm:$0xf]
        %v4714 = vld [vmem:[%s4704 + $0x24] sm:$0xf]
        %v4715 = vld [vmem:[%s4704 + $0x28] sm:$0xf]
        %v4716 = vld [vmem:[%s4704 + $0x2c] sm:$0xf]
        %v4717 = vld [vmem:[%s4704 + $0x30] sm:$0xf]
        %v4718 = vld [vmem:[%s4704 + $0x34] sm:$0xf]
        %v4719 = vld [vmem:[%s4704 + $0x38] sm:$0xf]
        %v4720 = vld [vmem:[%s4704 + $0x3c] sm:$0xf]
        %v4721 = vunpack.c.l.b16 %v4595
        %v4722 = vunpack.c.l.b16 %v4598
        %v4723 = vunpack.c.l.b16 %v4602
        %v4724 = vunpack.c.l.b16 %v4605
        %v4725 = vunpack.c.l.b16 %v4609
        %v4726 = vunpack.c.l.b16 %v4612
        %v4727 = vunpack.c.l.b16 %v4616
        %v4728 = vunpack.c.l.b16 %v4619
        %v4729 = vunpack.c.l.b16 %v4623
        %v4730 = vunpack.c.l.b16 %v4626
        %v4731 = vunpack.c.l.b16 %v4630
        %v4732 = vunpack.c.l.b16 %v4633
        %v4733 = vunpack.c.l.b16 %v4637
        %v4734 = vunpack.c.l.b16 %v4640
        %v4735 = vunpack.c.l.b16 %v4644
        %v4736 = vunpack.c.l.b16 %v4647
        %v4737 = vunpack.c.l.b16 %v4651
        %v4738 = vunpack.c.l.b16 %v4654
        %v4739 = vunpack.c.l.b16 %v4658
        %v4740 = vunpack.c.l.b16 %v4661
        %v4741 = vunpack.c.l.b16 %v4665
        %v4742 = vunpack.c.l.b16 %v4668
        %v4743 = vunpack.c.l.b16 %v4672
        %v4744 = vunpack.c.l.b16 %v4675
        %v4745 = vunpack.c.l.b16 %v4679
        %v4746 = vunpack.c.l.b16 %v4682
        %v4747 = vunpack.c.l.b16 %v4686
        %v4748 = vunpack.c.l.b16 %v4689
        %v4749 = vunpack.c.l.b16 %v4693
        %v4750 = vunpack.c.l.b16 %v4696
        %v4751 = vunpack.c.l.b16 %v4700
        %v4752 = vunpack.c.l.b16 %v4703
        %v4753 = vpack.c.b16 %v4722, %v4721
        %v4754 = vpack.c.b16 %v4724, %v4723
        %v4755 = vpack.c.b16 %v4726, %v4725
        %v4756 = vpack.c.b16 %v4728, %v4727
        %v4757 = vpack.c.b16 %v4730, %v4729
        %v4758 = vpack.c.b16 %v4732, %v4731
        %v4759 = vpack.c.b16 %v4734, %v4733
        %v4760 = vpack.c.b16 %v4736, %v4735
        %v4761 = vpack.c.b16 %v4738, %v4737
        %v4762 = vpack.c.b16 %v4740, %v4739
        %v4763 = vpack.c.b16 %v4742, %v4741
        %v4764 = vpack.c.b16 %v4744, %v4743
        %v4765 = vpack.c.b16 %v4746, %v4745
        %v4766 = vpack.c.b16 %v4748, %v4747
        %v4767 = vpack.c.b16 %v4750, %v4749
        %v4768 = vpack.c.b16 %v4752, %v4751
        %v4801 = vunpack.c.l.b16 %v4705
        %v4802 = vunpack.c.l.b16 %v4706
        %v4803 = vunpack.c.l.b16 %v4707
        %v4804 = vunpack.c.l.b16 %v4708
        %v4805 = vunpack.c.l.b16 %v4709
        %v4806 = vunpack.c.l.b16 %v4710
        %v4807 = vunpack.c.l.b16 %v4711
        %v4808 = vunpack.c.l.b16 %v4712
        %v4809 = vunpack.c.l.b16 %v4713
        %v4810 = vunpack.c.l.b16 %v4714
        %v4811 = vunpack.c.l.b16 %v4715
        %v4812 = vunpack.c.l.b16 %v4716
        %v4813 = vunpack.c.l.b16 %v4717
        %v4814 = vunpack.c.l.b16 %v4718
        %v4815 = vunpack.c.l.b16 %v4719
        %v4816 = vunpack.c.l.b16 %v4720
        %v4817 = vpack.c.b16 %v4802, %v4801
        %v4818 = vpack.c.b16 %v4804, %v4803
        %v4819 = vpack.c.b16 %v4806, %v4805
        %v4820 = vpack.c.b16 %v4808, %v4807
        %v4821 = vpack.c.b16 %v4810, %v4809
        %v4822 = vpack.c.b16 %v4812, %v4811
        %v4823 = vpack.c.b16 %v4814, %v4813
        %v4824 = vpack.c.b16 %v4816, %v4815
        %4833 = vmatprep.subr.bf16.mxu0 0
        %4834 = vmatpush1.bf16.msra.mxu0 %v4817
        %4835 = vmatprep.subr.bf16.mxu0 0
        %4836 = vmatpush1.bf16.msra.mxu0 %v4818
        %4837 = vmatprep.subr.bf16.mxu0 0
        %4838 = vmatpush1.bf16.msra.mxu0 %v4819
        %4839 = vmatprep.subr.bf16.mxu0 0
        %4840 = vmatpush1.bf16.msra.mxu0 %v4820
        %4841 = vmatprep.subr.bf16.mxu0 0
        %4842 = vmatpush1.bf16.msra.mxu0 %v4821
        %4843 = vmatprep.subr.bf16.mxu0 0
        %4844 = vmatpush1.bf16.msra.mxu0 %v4822
        %4845 = vmatprep.subr.bf16.mxu0 0
        %4846 = vmatpush1.bf16.msra.mxu0 %v4823
        %4847 = vmatprep.subr.bf16.mxu0 0
        %4848 = vmatpush1.bf16.msra.mxu0 %v4824
        %4849 = vmatprep.subr.bf16.mxu0 0
        %4850 = vmatpush1.bf16.msra.mxu0 0
        %4851 = vmatprep.subr.bf16.mxu0 0
        %4852 = vmatpush1.bf16.msra.mxu0 0
        %4853 = vmatprep.subr.bf16.mxu0 0
        %4854 = vmatpush1.bf16.msra.mxu0 0
        %4855 = vmatprep.subr.bf16.mxu0 0
        %4856 = vmatpush1.bf16.msra.mxu0 0
        %4857 = vmatprep.subr.bf16.mxu0 0
        %4858 = vmatpush1.bf16.msra.mxu0 0
        %4859 = vmatprep.subr.bf16.mxu0 0
        %4860 = vmatpush1.bf16.msra.mxu0 0
        %4861 = vmatprep.subr.bf16.mxu0 0
        %4862 = vmatpush1.bf16.msra.mxu0 0
        %4863 = vmatprep.subr.bf16.mxu0 0
        %4864 = vmatpush1.bf16.msra.mxu0 0
        %4865 = vmatprep.mubr.bf16.mxu0 0
        %4866 = vmatmul.mubr.bf16.gmra.mrb[0].mxu0 %v4753
        %v4867 = vpop.f32.mrb[0].mxu0
        %v4868 = vadd.f32 0.0, %v4867
        %v4869 = vpop.f32.mrb[0].mxu0
        %v4870 = vpop.f32.mrb[0].mxu0
        %v4871 = vadd.f32 0.0, %v4870
        %v4872 = vpop.f32.mrb[0].mxu0
        %4873 = vmatprep.mubr.bf16.mxu0 0
        %4874 = vmatmul.mubr.bf16.gmra.mrb[0].mxu0 %v4754
        %v4875 = vpop.f32.mrb[0].mxu0
        %v4876 = vadd.f32 0.0, %v4875
        %v4877 = vpop.f32.mrb[0].mxu0
        %v4878 = vpop.f32.mrb[0].mxu0
        %v4879 = vadd.f32 0.0, %v4878
        %v4880 = vpop.f32.mrb[0].mxu0
        %4881 = vmatprep.mubr.bf16.mxu0 0
        %4882 = vmatmul.mubr.bf16.gmra.mrb[0].mxu0 %v4755
        %v4883 = vpop.f32.mrb[0].mxu0
        %v4884 = vadd.f32 0.0, %v4883
        %v4885 = vpop.f32.mrb[0].mxu0
        %v4886 = vpop.f32.mrb[0].mxu0
        %v4887 = vadd.f32 0.0, %v4886
        %v4888 = vpop.f32.mrb[0].mxu0
        %4889 = vmatprep.mubr.bf16.mxu0 0
        %4890 = vmatmul.mubr.bf16.gmra.mrb[0].mxu0 %v4756
        %v4891 = vpop.f32.mrb[0].mxu0
        %v4892 = vadd.f32 0.0, %v4891
        %v4893 = vpop.f32.mrb[0].mxu0
        %v4894 = vpop.f32.mrb[0].mxu0
        %v4895 = vadd.f32 0.0, %v4894
        %v4896 = vpop.f32.mrb[0].mxu0
        %4897 = vmatprep.mubr.bf16.mxu0 0
        %4898 = vmatmul.mubr.bf16.gmra.mrb[0].mxu0 %v4757
        %v4899 = vpop.f32.mrb[0].mxu0
        %v4900 = vadd.f32 0.0, %v4899
        %v4901 = vpop.f32.mrb[0].mxu0
        %v4902 = vpop.f32.mrb[0].mxu0
        %v4903 = vadd.f32 0.0, %v4902
        %v4904 = vpop.f32.mrb[0].mxu0
        %4905 = vmatprep.mubr.bf16.mxu0 0
        %4906 = vmatmul.mubr.bf16.gmra.mrb[0].mxu0 %v4758
        %v4907 = vpop.f32.mrb[0].mxu0
        %v4908 = vadd.f32 0.0, %v4907
        %v4909 = vpop.f32.mrb[0].mxu0
        %v4910 = vpop.f32.mrb[0].mxu0
        %v4911 = vadd.f32 0.0, %v4910
        %v4912 = vpop.f32.mrb[0].mxu0
        %4913 = vmatprep.mubr.bf16.mxu0 0
        %4914 = vmatmul.mubr.bf16.gmra.mrb[0].mxu0 %v4759
        %v4915 = vpop.f32.mrb[0].mxu0
        %v4916 = vadd.f32 0.0, %v4915
        %v4917 = vpop.f32.mrb[0].mxu0
        %v4918 = vpop.f32.mrb[0].mxu0
        %v4919 = vadd.f32 0.0, %v4918
        %v4920 = vpop.f32.mrb[0].mxu0
        %4921 = vmatprep.mubr.bf16.mxu0 0
        %4922 = vmatmul.mubr.bf16.gmra.mrb[0].mxu0 %v4760
        %v4923 = vpop.f32.mrb[0].mxu0
        %v4924 = vadd.f32 0.0, %v4923
        %v4925 = vpop.f32.mrb[0].mxu0
        %v4926 = vpop.f32.mrb[0].mxu0
        %v4927 = vadd.f32 0.0, %v4926
        %v4928 = vpop.f32.mrb[0].mxu0
        %4929 = vmatprep.mubr.bf16.mxu0 0
        %4930 = vmatmul.mubr.bf16.gmra.mrb[0].mxu0 %v4761
        %v4931 = vpop.f32.mrb[0].mxu0
        %v4932 = vadd.f32 0.0, %v4931
        %v4933 = vpop.f32.mrb[0].mxu0
        %v4934 = vpop.f32.mrb[0].mxu0
        %v4935 = vadd.f32 0.0, %v4934
        %v4936 = vpop.f32.mrb[0].mxu0
        %4937 = vmatprep.mubr.bf16.mxu0 0
        %4938 = vmatmul.mubr.bf16.gmra.mrb[0].mxu0 %v4762
        %v4939 = vpop.f32.mrb[0].mxu0
        %v4940 = vadd.f32 0.0, %v4939
        %v4941 = vpop.f32.mrb[0].mxu0
        %v4942 = vpop.f32.mrb[0].mxu0
        %v4943 = vadd.f32 0.0, %v4942
        %v4944 = vpop.f32.mrb[0].mxu0
        %4945 = vmatprep.mubr.bf16.mxu0 0
        %4946 = vmatmul.mubr.bf16.gmra.mrb[0].mxu0 %v4763
        %v4947 = vpop.f32.mrb[0].mxu0
        %v4948 = vadd.f32 0.0, %v4947
        %v4949 = vpop.f32.mrb[0].mxu0
        %v4950 = vpop.f32.mrb[0].mxu0
        %v4951 = vadd.f32 0.0, %v4950
        %v4952 = vpop.f32.mrb[0].mxu0
        %4953 = vmatprep.mubr.bf16.mxu0 0
        %4954 = vmatmul.mubr.bf16.gmra.mrb[0].mxu0 %v4764
        %v4955 = vpop.f32.mrb[0].mxu0
        %v4956 = vadd.f32 0.0, %v4955
        %v4957 = vpop.f32.mrb[0].mxu0
        %v4958 = vpop.f32.mrb[0].mxu0
        %v4959 = vadd.f32 0.0, %v4958
        %v4960 = vpop.f32.mrb[0].mxu0
        %4961 = vmatprep.mubr.bf16.mxu0 0
        %4962 = vmatmul.mubr.bf16.gmra.mrb[0].mxu0 %v4765
        %v4963 = vpop.f32.mrb[0].mxu0
        %v4964 = vadd.f32 0.0, %v4963
        %v4965 = vpop.f32.mrb[0].mxu0
        %v4966 = vpop.f32.mrb[0].mxu0
        %v4967 = vadd.f32 0.0, %v4966
        %v4968 = vpop.f32.mrb[0].mxu0
        %4969 = vmatprep.mubr.bf16.mxu0 0
        %4970 = vmatmul.mubr.bf16.gmra.mrb[0].mxu0 %v4766
        %v4971 = vpop.f32.mrb[0].mxu0
        %v4972 = vadd.f32 0.0, %v4971
        %v4973 = vpop.f32.mrb[0].mxu0
        %v4974 = vpop.f32.mrb[0].mxu0
        %v4975 = vadd.f32 0.0, %v4974
        %v4976 = vpop.f32.mrb[0].mxu0
        %4977 = vmatprep.mubr.bf16.mxu0 0
        %4978 = vmatmul.mubr.bf16.gmra.mrb[0].mxu0 %v4767
        %v4979 = vpop.f32.mrb[0].mxu0
        %v4980 = vadd.f32 0.0, %v4979
        %v4981 = vpop.f32.mrb[0].mxu0
        %v4982 = vpop.f32.mrb[0].mxu0
        %v4983 = vadd.f32 0.0, %v4982
        %v4984 = vpop.f32.mrb[0].mxu0
        %4985 = vmatprep.mubr.bf16.mxu0 0
        %4986 = vmatmul.mubr.bf16.gmra.mrb[0].mxu0 %v4768
        %v4987 = vpop.f32.mrb[0].mxu0
        %v4988 = vadd.f32 0.0, %v4987
        %v4989 = vpop.f32.mrb[0].mxu0
        %v4990 = vpop.f32.mrb[0].mxu0
        %v4991 = vadd.f32 0.0, %v4990
        %v4992 = vpop.f32.mrb[0].mxu0
        %4993 = vdwg.mxu0
        %v4994 = vadd.f32 %v4496, %v4868
        %v4995 = vadd.f32 %v4497, %v4871
        %v4996 = vadd.f32 %v4498, %v4876
        %v4997 = vadd.f32 %v4499, %v4879
        %v4998 = vadd.f32 %v4500, %v4884
        %v4999 = vadd.f32 %v4501, %v4887
        %v5000 = vadd.f32 %v4502, %v4892
        %v5001 = vadd.f32 %v4503, %v4895
        %v5002 = vadd.f32 %v4504, %v4900
        %v5003 = vadd.f32 %v4505, %v4903
        %v5004 = vadd.f32 %v4506, %v4908
        %v5005 = vadd.f32 %v4507, %v4911
        %v5006 = vadd.f32 %v4508, %v4916
        %v5007 = vadd.f32 %v4509, %v4919
        %v5008 = vadd.f32 %v4510, %v4924
        %v5009 = vadd.f32 %v4511, %v4927
        %v5010 = vadd.f32 %v4512, %v4932
        %v5011 = vadd.f32 %v4513, %v4935
        %v5012 = vadd.f32 %v4514, %v4940
        %v5013 = vadd.f32 %v4515, %v4943
        %v5014 = vadd.f32 %v4516, %v4948
        %v5015 = vadd.f32 %v4517, %v4951
        %v5016 = vadd.f32 %v4518, %v4956
        %v5017 = vadd.f32 %v4519, %v4959
        %v5018 = vadd.f32 %v4520, %v4964
        %v5019 = vadd.f32 %v4521, %v4967
        %v5020 = vadd.f32 %v4522, %v4972
        %v5021 = vadd.f32 %v4523, %v4975
        %v5022 = vadd.f32 %v4524, %v4980
        %v5023 = vadd.f32 %v4525, %v4983
        %v5024 = vadd.f32 %v4526, %v4988
        %v5025 = vadd.f32 %v4527, %v4991
        %v5026 = vld [vmem:[%s3] sm:$0x1]
        %v5028 = vlaneseq
        %v5029 = vshrl.u32 %v5028, 7
        %v5030 = vsub.s32 0, %v5029
        %v5031 = vrot.slane %v5026, %v5030
        %v5033 = vadd.f32 %v4994, %v5031
        %v5034 = vadd.f32 %v4995, %v5031
        %v5035 = vadd.f32 %v4996, %v5031
        %v5036 = vadd.f32 %v4997, %v5031
        %v5037 = vadd.f32 %v4998, %v5031
        %v5038 = vadd.f32 %v4999, %v5031
        %v5039 = vadd.f32 %v5000, %v5031
        %v5040 = vadd.f32 %v5001, %v5031
        %v5041 = vadd.f32 %v5002, %v5031
        %v5042 = vadd.f32 %v5003, %v5031
        %v5043 = vadd.f32 %v5004, %v5031
        %v5044 = vadd.f32 %v5005, %v5031
        %v5045 = vadd.f32 %v5006, %v5031
        %v5046 = vadd.f32 %v5007, %v5031
        %v5047 = vadd.f32 %v5008, %v5031
        %v5048 = vadd.f32 %v5009, %v5031
        %v5049 = vadd.f32 %v5010, %v5031
        %v5050 = vadd.f32 %v5011, %v5031
        %v5051 = vadd.f32 %v5012, %v5031
        %v5052 = vadd.f32 %v5013, %v5031
        %v5053 = vadd.f32 %v5014, %v5031
        %v5054 = vadd.f32 %v5015, %v5031
        %v5055 = vadd.f32 %v5016, %v5031
        %v5056 = vadd.f32 %v5017, %v5031
        %v5057 = vadd.f32 %v5018, %v5031
        %v5058 = vadd.f32 %v5019, %v5031
        %v5059 = vadd.f32 %v5020, %v5031
        %v5060 = vadd.f32 %v5021, %v5031
        %v5061 = vadd.f32 %v5022, %v5031
        %v5062 = vadd.f32 %v5023, %v5031
        %v5063 = vadd.f32 %v5024, %v5031
        %v5064 = vadd.f32 %v5025, %v5031
        %v5065 = vld [vmem:[%s215] sm:$0xff]
        %v5066 = vld [vmem:[%s215 + $0x8] sm:$0xff]
        %v5067 = vld [vmem:[%s215 + $0x10] sm:$0xff]
        %v5068 = vld [vmem:[%s215 + $0x18] sm:$0xff]
        %v5069 = vld [vmem:[%s215 + $0x20] sm:$0xff]
        %v5070 = vld [vmem:[%s215 + $0x28] sm:$0xff]
        %v5071 = vld [vmem:[%s215 + $0x30] sm:$0xff]
        %v5072 = vld [vmem:[%s215 + $0x38] sm:$0xff]
        %v5073 = vld [vmem:[%s215 + $0x40] sm:$0xff]
        %v5074 = vld [vmem:[%s215 + $0x48] sm:$0xff]
        %v5075 = vld [vmem:[%s215 + $0x50] sm:$0xff]
        %v5076 = vld [vmem:[%s215 + $0x58] sm:$0xff]
        %v5077 = vld [vmem:[%s215 + $0x60] sm:$0xff]
        %v5078 = vld [vmem:[%s215 + $0x68] sm:$0xff]
        %v5079 = vld [vmem:[%s215 + $0x70] sm:$0xff]
        %v5080 = vld [vmem:[%s215 + $0x78] sm:$0xff]
        %v5081 = vld [vmem:[%s215 + $0x80] sm:$0xff]
        %v5082 = vld [vmem:[%s215 + $0x88] sm:$0xff]
        %v5083 = vld [vmem:[%s215 + $0x90] sm:$0xff]
        %v5084 = vld [vmem:[%s215 + $0x98] sm:$0xff]
        %v5085 = vld [vmem:[%s215 + $0xa0] sm:$0xff]
        %v5086 = vld [vmem:[%s215 + $0xa8] sm:$0xff]
        %v5087 = vld [vmem:[%s215 + $0xb0] sm:$0xff]
        %v5088 = vld [vmem:[%s215 + $0xb8] sm:$0xff]
        %v5089 = vld [vmem:[%s215 + $0xc0] sm:$0xff]
        %v5090 = vld [vmem:[%s215 + $0xc8] sm:$0xff]
        %v5091 = vld [vmem:[%s215 + $0xd0] sm:$0xff]
        %v5092 = vld [vmem:[%s215 + $0xd8] sm:$0xff]
        %v5093 = vld [vmem:[%s215 + $0xe0] sm:$0xff]
        %v5094 = vld [vmem:[%s215 + $0xe8] sm:$0xff]
        %v5095 = vld [vmem:[%s215 + $0xf0] sm:$0xff]
        %v5096 = vld [vmem:[%s215 + $0xf8] sm:$0xff]
        %v5097 = vadd.f32 %v5033, %v5065
        %v5098 = vadd.f32 %v5034, %v5066
        %v5099 = vadd.f32 %v5035, %v5067
        %v5100 = vadd.f32 %v5036, %v5068
        %v5101 = vadd.f32 %v5037, %v5069
        %v5102 = vadd.f32 %v5038, %v5070
        %v5103 = vadd.f32 %v5039, %v5071
        %v5104 = vadd.f32 %v5040, %v5072
        %v5105 = vadd.f32 %v5041, %v5073
        %v5106 = vadd.f32 %v5042, %v5074
        %v5107 = vadd.f32 %v5043, %v5075
        %v5108 = vadd.f32 %v5044, %v5076
        %v5109 = vadd.f32 %v5045, %v5077
        %v5110 = vadd.f32 %v5046, %v5078
        %v5111 = vadd.f32 %v5047, %v5079
        %v5112 = vadd.f32 %v5048, %v5080
        %v5113 = vadd.f32 %v5049, %v5081
        %v5114 = vadd.f32 %v5050, %v5082
        %v5115 = vadd.f32 %v5051, %v5083
        %v5116 = vadd.f32 %v5052, %v5084
        %v5117 = vadd.f32 %v5053, %v5085
        %v5118 = vadd.f32 %v5054, %v5086
        %v5119 = vadd.f32 %v5055, %v5087
        %v5120 = vadd.f32 %v5056, %v5088
        %v5121 = vadd.f32 %v5057, %v5089
        %v5122 = vadd.f32 %v5058, %v5090
        %v5123 = vadd.f32 %v5059, %v5091
        %v5124 = vadd.f32 %v5060, %v5092
        %v5125 = vadd.f32 %v5061, %v5093
        %v5126 = vadd.f32 %v5062, %v5094
        %v5127 = vadd.f32 %v5063, %v5095
        %v5128 = vadd.f32 %v5064, %v5096
        %5129 = vst [vmem:[%s205] sm:$0xff] %v5097
        %5130 = vst [vmem:[%s205 + $0x8] sm:$0xff] %v5098
        %5131 = vst [vmem:[%s205 + $0x10] sm:$0xff] %v5099
        %5132 = vst [vmem:[%s205 + $0x18] sm:$0xff] %v5100
        %5133 = vst [vmem:[%s205 + $0x20] sm:$0xff] %v5101
        %5134 = vst [vmem:[%s205 + $0x28] sm:$0xff] %v5102
        %5135 = vst [vmem:[%s205 + $0x30] sm:$0xff] %v5103
        %5136 = vst [vmem:[%s205 + $0x38] sm:$0xff] %v5104
        %5137 = vst [vmem:[%s205 + $0x40] sm:$0xff] %v5105
        %5138 = vst [vmem:[%s205 + $0x48] sm:$0xff] %v5106
        %5139 = vst [vmem:[%s205 + $0x50] sm:$0xff] %v5107
        %5140 = vst [vmem:[%s205 + $0x58] sm:$0xff] %v5108
        %5141 = vst [vmem:[%s205 + $0x60] sm:$0xff] %v5109
        %5142 = vst [vmem:[%s205 + $0x68] sm:$0xff] %v5110
        %5143 = vst [vmem:[%s205 + $0x70] sm:$0xff] %v5111
        %5144 = vst [vmem:[%s205 + $0x78] sm:$0xff] %v5112
        %5145 = vst [vmem:[%s205 + $0x80] sm:$0xff] %v5113
        %5146 = vst [vmem:[%s205 + $0x88] sm:$0xff] %v5114
        %5147 = vst [vmem:[%s205 + $0x90] sm:$0xff] %v5115
        %5148 = vst [vmem:[%s205 + $0x98] sm:$0xff] %v5116
        %5149 = vst [vmem:[%s205 + $0xa0] sm:$0xff] %v5117
        %5150 = vst [vmem:[%s205 + $0xa8] sm:$0xff] %v5118
        %5151 = vst [vmem:[%s205 + $0xb0] sm:$0xff] %v5119
        %5152 = vst [vmem:[%s205 + $0xb8] sm:$0xff] %v5120
        %5153 = vst [vmem:[%s205 + $0xc0] sm:$0xff] %v5121
        %5154 = vst [vmem:[%s205 + $0xc8] sm:$0xff] %v5122
        %5155 = vst [vmem:[%s205 + $0xd0] sm:$0xff] %v5123
        %5156 = vst [vmem:[%s205 + $0xd8] sm:$0xff] %v5124
        %5157 = vst [vmem:[%s205 + $0xe0] sm:$0xff] %v5125
        %5158 = vst [vmem:[%s205 + $0xe8] sm:$0xff] %v5126
        %5159 = vst [vmem:[%s205 + $0xf0] sm:$0xff] %v5127
        %5160 = vst [vmem:[%s205 + $0xf8] sm:$0xff] %v5128
        %s5161 = sand.u32 %s120, 1
        %s5162 = scalar_lea.sflag [#allocation3], %s5161
        %s5163 = sand.u32 %s120, 1
        %s5164 = smul.addr %s5163, 256
        %s5165 = scalar_lea.vmem [#allocation2], %s5164
        // Predicated region
        $region37: #{basic_block_v3_forward.3} parent=35 // pred_check
          %p5166 = pneg %p130
        $region38: #{basic_block_v3_forward.3} parent=35 // pred_check_branch
          %5168 = sbr.rel (%p5166) target = $region40
        $region39: #{basic_block_v3_forward.3} parent=35 // pred_region
          %s5170 = ssub.s32 4096, 4096
          %5171 = vsyncadd %s5162, %s5170
          %s5172 = smul.addr %s18, 32
          %s5173 = smul.addr %s5172, 128
          %s5174 = scalar_lea.hbm %s4, %s5173
          %s5175 = sshll.u32 %s5165, 4
          %s5176 = int_to_ptr.vmem [resolvable:$true] %s5175
          %5181 = dma.vmem_to_hbm [thread:$0]  %s5176, 4096, %s5174, %s5162, 128, 128, 8
        $region40: #{basic_block_v3_forward.3} parent=35 // pred_fallthru
          _
      $region36: #{basic_block_v3_forward.3} parent=5 // pred_fallthru
        _
      %p5182 = scmp.le.s32.totalorder 2, %s13
      // Predicated region
      $region41: #{basic_block_v3_forward.3} parent=5 // pred_check
        %p5183 = pneg %p5182
      $region42: #{basic_block_v3_forward.3} parent=5 // pred_check_branch
        %5185 = sbr.rel (%p5183) target = $region44
      $region43: #{basic_block_v3_forward.3} parent=5 // pred_region
        %s5186 = ssub.s32 %s13, 2
        // Predicated region
        $region45: #{basic_block_v3_forward.3} parent=43 // pred_check
          %p5187 = pneg %p136
        $region46: #{basic_block_v3_forward.3} parent=43 // pred_check_branch
          %5189 = sbr.rel (%p5187) target = $region48
        $region47: #{basic_block_v3_forward.3} parent=43 // pred_region
          %s5190 = sand.u32 %s121, 1
          %s5191 = scalar_lea.sflag [#allocation3], %s5190
          %s5192 = sand.u32 %s121, 1
          %s5193 = smul.addr %s5192, 256
          %s5194 = scalar_lea.vmem [#allocation2], %s5193
          %5195 = dma.done %s5191, 4096
        $region48: #{basic_block_v3_forward.3} parent=43 // pred_fallthru
          _
      $region44: #{basic_block_v3_forward.3} parent=5 // pred_fallthru
        _
    $region6: #{basic_block_v3_forward.3} parent=1 // loop_footer
      %s17 = sadd.s32 1, %s13
    $region7: #{basic_block_v3_forward.3} parent=1 // loop_footer_branch
      %12 = sbr.rel target = $region3
    $region8: #{basic_block_v3_forward.3} parent=1 // loop_exit
      _
    %5196 = vsyncpa [#allocation3], 1
    %s5197 = scalar_lea.sflag [#allocation3], 1
    %5198 = vsyncpa %s5197, 1

// kernel: basic_block_v3_forward.2
$region0: #{basic_block_v3_forward.2}
  #allocation0 [shape = 'u32[]', space=smem, size = 0x4, offset = 0x4, fixed_abs, tag = 'smem constant byte address 0x4 - core index']
  #allocation1 [shape = 'u32[144,128]{1,0:T(1,128)}', space=vmem, size = 0x12000, scoped, tag = 'internal scratch']
  %s0 = inlined_call_operand.vmem [shape: bf16[2,18,18,128], index: 0, kind: input, shape index: {}]
  %s1 = inlined_call_operand.vmem [shape: bf16[9,128,128], index: 1, kind: input, shape index: {}]
  %s2 = inlined_call_operand.vmem [shape: f32[1,128], index: 2, kind: input, shape index: {}]
  %s3 = inlined_call_operand.vmem [shape: f32[1,128], index: 3, kind: input, shape index: {}]
  %s4 = inlined_call_operand.vmem [shape: bf16[2,16,16,128], index: 4, kind: output, shape index: {}]
  %s5 = sld [smem:[#allocation0]]
  $region49: #{basic_block_v3_forward.2} parent=0
    _
  %s7 = ssub.s32 1, %s5
  %s8 = scalar_select 0, %s7, %s5
  loop: start=0, step=1, limit=4
  $region2: #{basic_block_v3_forward.2} parent=0 // loop_pre_header
    _
  $region3: #{basic_block_v3_forward.2} parent=0 // loop_header
    %s10 = sphi 0, %s14
    %p11 = scmp.ge.s32.totalorder %s10, 4
    %s20 = sphi 0, %s22
    %s23 = sphi 0, %s20
    %s24 = sphi 0, %s23
    %s40 = sphi 0, %s24
    %s44 = sphi 0, %s44
    %s46 = sphi 0, %s44
    %s47 = sphi 0, %s46
    %s61 = sphi 0, %s47
    %s65 = sphi 0, %s65
    %s67 = sphi 0, %s65
    %s68 = sphi 0, %s67
    %s82 = sphi 0, %s68
    %s86 = sphi 0, %s86
    %s88 = sphi 0, %s86
    %s89 = sphi 0, %s88
    %s103 = sphi 0, %s89
    %s109 = sphi 0, %s111
    %s112 = sphi 0, %s109
    %s113 = sphi 0, %s112
    %s129 = sphi 0, %s113
  $region4: #{basic_block_v3_forward.2} parent=0 // loop_header_branch
    %13 = sbr.rel (%p11) target = $region8
  $region5: #{basic_block_v3_forward.2} parent=0 // loop_body
    %s15 = ssub.s32 %s10, 1
    %s16 = ssub.s32 %s10, 2
    %s17 = sadd.s32 %s10, 1
    %s18 = ssub.s32 %s10, %s17
    %p19 = scmp.eq.s32.totalorder %s18, 0
    %s21 = sadd.s32 %s20, 1
    %s22 = scalar_select %p19, %s20, %s21
    %p25 = pneg %p19
    %p26 = scmp.eq.s32.totalorder %s10, 1
    %p27 = por %p25, %p26
    %p28 = scmp.ne.s32.totalorder %s20, %s23
    %p29 = scmp.eq.s32.totalorder %s10, 0
    %p30 = por %p28, %p29
    %p31 = scmp.ne.s32.totalorder %s20, %s23
    %p32 = scmp.eq.s32.totalorder %s15, 1
    %p33 = por %p31, %p32
    %p34 = scmp.ne.s32.totalorder %s23, %s24
    %p35 = scmp.eq.s32.totalorder %s15, 0
    %p36 = por %p34, %p35
    %p37 = scmp.ne.s32.totalorder %s23, %s24
    %p38 = scmp.eq.s32.totalorder %s16, 1
    %p39 = por %p37, %p38
    %p41 = scmp.ne.s32.totalorder %s24, %s40
    %p42 = scmp.eq.s32.totalorder %s16, 0
    %p43 = por %p41, %p42
    %s45 = sadd.s32 %s44, 1
    %p48 = scmp.eq.s32.totalorder %s10, 1
    %p49 = scmp.ne.s32.totalorder %s44, %s46
    %p50 = scmp.eq.s32.totalorder %s10, 0
    %p51 = por %p49, %p50
    %p52 = scmp.ne.s32.totalorder %s44, %s46
    %p53 = scmp.eq.s32.totalorder %s15, 1
    %p54 = por %p52, %p53
    %p55 = scmp.ne.s32.totalorder %s46, %s47
    %p56 = scmp.eq.s32.totalorder %s15, 0
    %p57 = por %p55, %p56
    %p58 = scmp.ne.s32.totalorder %s46, %s47
    %p59 = scmp.eq.s32.totalorder %s16, 1
    %p60 = por %p58, %p59
    %p62 = scmp.ne.s32.totalorder %s47, %s61
    %p63 = scmp.eq.s32.totalorder %s16, 0
    %p64 = por %p62, %p63
    %s66 = sadd.s32 %s65, 1
    %p69 = scmp.eq.s32.totalorder %s10, 1
    %p70 = scmp.ne.s32.totalorder %s65, %s67
    %p71 = scmp.eq.s32.totalorder %s10, 0
    %p72 = por %p70, %p71
    %p73 = scmp.ne.s32.totalorder %s65, %s67
    %p74 = scmp.eq.s32.totalorder %s15, 1
    %p75 = por %p73, %p74
    %p76 = scmp.ne.s32.totalorder %s67, %s68
    %p77 = scmp.eq.s32.totalorder %s15, 0
    %p78 = por %p76, %p77
    %p79 = scmp.ne.s32.totalorder %s67, %s68
    %p80 = scmp.eq.s32.totalorder %s16, 1
    %p81 = por %p79, %p80
    %p83 = scmp.ne.s32.totalorder %s68, %s82
    %p84 = scmp.eq.s32.totalorder %s16, 0
    %p85 = por %p83, %p84
    %s87 = sadd.s32 %s86, 1
    %p90 = scmp.eq.s32.totalorder %s10, 1
    %p91 = scmp.ne.s32.totalorder %s86, %s88
    %p92 = scmp.eq.s32.totalorder %s10, 0
    %p93 = por %p91, %p92
    %p94 = scmp.ne.s32.totalorder %s86, %s88
    %p95 = scmp.eq.s32.totalorder %s15, 1
    %p96 = por %p94, %p95
    %p97 = scmp.ne.s32.totalorder %s88, %s89
    %p98 = scmp.eq.s32.totalorder %s15, 0
    %p99 = por %p97, %p98
    %p100 = scmp.ne.s32.totalorder %s88, %s89
    %p101 = scmp.eq.s32.totalorder %s16, 1
    %p102 = por %p100, %p101
    %p104 = scmp.ne.s32.totalorder %s89, %s103
    %p105 = scmp.eq.s32.totalorder %s16, 0
    %p106 = por %p104, %p105
    %s107 = ssub.s32 %s10, %s17
    %p108 = scmp.eq.s32.totalorder %s107, 0
    %s110 = sadd.s32 %s109, 1
    %s111 = scalar_select %p108, %s109, %s110
    %p114 = pneg %p108
    %p115 = scmp.eq.s32.totalorder %s10, 1
    %p116 = por %p114, %p115
    %p117 = scmp.ne.s32.totalorder %s109, %s112
    %p118 = scmp.eq.s32.totalorder %s10, 0
    %p119 = por %p117, %p118
    %p120 = scmp.ne.s32.totalorder %s109, %s112
    %p121 = scmp.eq.s32.totalorder %s15, 1
    %p122 = por %p120, %p121
    %p123 = scmp.ne.s32.totalorder %s112, %s113
    %p124 = scmp.eq.s32.totalorder %s15, 0
    %p125 = por %p123, %p124
    %p126 = scmp.ne.s32.totalorder %s112, %s113
    %p127 = scmp.eq.s32.totalorder %s16, 1
    %p128 = por %p126, %p127
    %p130 = scmp.ne.s32.totalorder %s113, %s129
    %p131 = scmp.eq.s32.totalorder %s16, 0
    %p132 = por %p130, %p131
    %p133 = scmp.le.s32.totalorder 1, %s10
    %p134 = scmp.lt.s32.totalorder %s10, 3
    %p135 = pnand %p133, %p134
    %p136 = pneg %p135
    // Predicated region
    $region9: #{basic_block_v3_forward.2} parent=5 // pred_check
      _
    $region10: #{basic_block_v3_forward.2} parent=5 // pred_check_branch
      %138 = sbr.rel (%p135) target = $region12
    $region11: #{basic_block_v3_forward.2} parent=5 // pred_region
      %s139 = ssub.s32 %s10, 1
      // Predicated region
      $region13: #{basic_block_v3_forward.2} parent=11 // pred_check
        %p140 = pneg %p57
      $region14: #{basic_block_v3_forward.2} parent=11 // pred_check_branch
        %142 = sbr.rel (%p140) target = $region16
      $region15: #{basic_block_v3_forward.2} parent=11 // pred_region
        _
      $region16: #{basic_block_v3_forward.2} parent=11 // pred_fallthru
        _
      // Predicated region
      $region17: #{basic_block_v3_forward.2} parent=11 // pred_check
        %p143 = pneg %p78
      $region18: #{basic_block_v3_forward.2} parent=11 // pred_check_branch
        %145 = sbr.rel (%p143) target = $region20
      $region19: #{basic_block_v3_forward.2} parent=11 // pred_region
        _
      $region20: #{basic_block_v3_forward.2} parent=11 // pred_fallthru
        _
      // Predicated region
      $region21: #{basic_block_v3_forward.2} parent=11 // pred_check
        %p146 = pneg %p99
      $region22: #{basic_block_v3_forward.2} parent=11 // pred_check_branch
        %148 = sbr.rel (%p146) target = $region24
      $region23: #{basic_block_v3_forward.2} parent=11 // pred_region
        _
      $region24: #{basic_block_v3_forward.2} parent=11 // pred_fallthru
        _
    $region12: #{basic_block_v3_forward.2} parent=5 // pred_fallthru
      _
    %p149 = scmp.lt.s32.totalorder %s10, 2
    // Predicated region
    $region25: #{basic_block_v3_forward.2} parent=5 // pred_check
      %p150 = pneg %p149
    $region26: #{basic_block_v3_forward.2} parent=5 // pred_check_branch
      %152 = sbr.rel (%p150) target = $region28
    $region27: #{basic_block_v3_forward.2} parent=5 // pred_region
      // Predicated region
      $region29: #{basic_block_v3_forward.2} parent=27 // pred_check
        %p153 = pneg %p30
      $region30: #{basic_block_v3_forward.2} parent=27 // pred_check_branch
        %155 = sbr.rel (%p153) target = $region32
      $region31: #{basic_block_v3_forward.2} parent=27 // pred_region
        %p156 = scmp.lt.s32.totalorder %s10, 1
        %s157 = scalar_select %p156, %s10, 1
        %s158 = smul.addr %s157, 54
        %s159 = smul.addr %s158, 4
        %s160 = scalar_lea.vmem %s0, %s159
      $region32: #{basic_block_v3_forward.2} parent=27 // pred_fallthru
        _
    $region28: #{basic_block_v3_forward.2} parent=5 // pred_fallthru
      _
    %p161 = scmp.le.s32.totalorder 1, %s10
    %p162 = scmp.lt.s32.totalorder %s10, 3
    %p163 = pnand %p161, %p162
    %p164 = pneg %p163
    // Predicated region
    $region33: #{basic_block_v3_forward.2} parent=5 // pred_check
      _
    $region34: #{basic_block_v3_forward.2} parent=5 // pred_check_branch
      %166 = sbr.rel (%p163) target = $region36
    $region35: #{basic_block_v3_forward.2} parent=5 // pred_region
      %s167 = ssub.s32 %s10, 1
      %p168 = scmp.lt.s32.totalorder %s15, 1
      %s169 = scalar_select %p168, %s15, 1
      %s170 = smul.addr %s169, 54
      %s171 = smul.addr %s170, 4
      %s172 = scalar_lea.vmem %s0, %s171
      %p173 = pneg %p36
      %p174 = pneg %p33
      %p175 = pneg %p57
      %p176 = pneg %p54
      %p177 = pneg %p78
      %p178 = pneg %p75
      %p179 = pneg %p99
      %p180 = pneg %p96
      %p181 = pneg %p125
      %p182 = pneg %p122
      %p183 = scmp.lt.s32.totalorder %s15, 1
      %s184 = scalar_select %p183, %s15, 1
      %s185 = smul.addr %s184, 32
      %s186 = smul.addr %s185, 4
      %s187 = scalar_lea.vmem %s4, %s186
      %p188 = scmp.lt.s32.totalorder %s15, 1
      %s189 = scalar_select %p188, %s15, 1
      %s190 = smul.addr %s189, 54
      %s191 = smul.addr %s190, 4
      %s192 = scalar_lea.vmem %s0, %s191
      %p193 = scmp.lt.s32.totalorder %s15, 1
      %s194 = scalar_select %p193, %s15, 1
      %s195 = smul.addr %s194, 32
      %s196 = smul.addr %s195, 4
      %s197 = scalar_lea.vmem %s4, %s196
      %v199 = vld [vmem:[%s192] sm:$0xf]
      %v200 = vld [vmem:[%s192 + $0x4] sm:$0xf]
      %v201 = vld [vmem:[%s192 + $0xc] sm:$0xf]
      %v202 = vld [vmem:[%s192 + $0x10] sm:$0xf]
      %v203 = vld [vmem:[%s192 + $0x18] sm:$0xf]
      %v204 = vld [vmem:[%s192 + $0x1c] sm:$0xf]
      %v205 = vld [vmem:[%s192 + $0x24] sm:$0xf]
      %v206 = vld [vmem:[%s192 + $0x28] sm:$0xf]
      %v207 = vld [vmem:[%s192 + $0x30] sm:$0xf]
      %v208 = vld [vmem:[%s192 + $0x34] sm:$0xf]
      %v209 = vld [vmem:[%s192 + $0x3c] sm:$0xf]
      %v210 = vld [vmem:[%s192 + $0x40] sm:$0xf]
      %v211 = vld [vmem:[%s192 + $0x48] sm:$0xf]
      %v212 = vld [vmem:[%s192 + $0x4c] sm:$0xf]
      %v213 = vld [vmem:[%s192 + $0x54] sm:$0xf]
      %v214 = vld [vmem:[%s192 + $0x58] sm:$0xf]
      %v215 = vld [vmem:[%s192 + $0x60] sm:$0xf]
      %v216 = vld [vmem:[%s192 + $0x64] sm:$0xf]
      %v217 = vld [vmem:[%s192 + $0x6c] sm:$0xf]
      %v218 = vld [vmem:[%s192 + $0x70] sm:$0xf]
      %v219 = vld [vmem:[%s192 + $0x78] sm:$0xf]
      %v220 = vld [vmem:[%s192 + $0x7c] sm:$0xf]
      %v221 = vld [vmem:[%s192 + $0x84] sm:$0xf]
      %v222 = vld [vmem:[%s192 + $0x88] sm:$0xf]
      %v223 = vld [vmem:[%s192 + $0x90] sm:$0xf]
      %v224 = vld [vmem:[%s192 + $0x94] sm:$0xf]
      %v225 = vld [vmem:[%s192 + $0x9c] sm:$0xf]
      %v226 = vld [vmem:[%s192 + $0xa0] sm:$0xf]
      %v227 = vld [vmem:[%s192 + $0xa8] sm:$0xf]
      %v228 = vld [vmem:[%s192 + $0xac] sm:$0xf]
      %v229 = vld [vmem:[%s192 + $0xb4] sm:$0xf]
      %v230 = vld [vmem:[%s192 + $0xb8] sm:$0xf]
      %v231 = vld [vmem:[%s1] sm:$0xf]
      %v232 = vld [vmem:[%s1 + $0x4] sm:$0xf]
      %v233 = vld [vmem:[%s1 + $0x8] sm:$0xf]
      %v234 = vld [vmem:[%s1 + $0xc] sm:$0xf]
      %v235 = vld [vmem:[%s1 + $0x10] sm:$0xf]
      %v236 = vld [vmem:[%s1 + $0x14] sm:$0xf]
      %v237 = vld [vmem:[%s1 + $0x18] sm:$0xf]
      %v238 = vld [vmem:[%s1 + $0x1c] sm:$0xf]
      %v239 = vld [vmem:[%s1 + $0x20] sm:$0xf]
      %v240 = vld [vmem:[%s1 + $0x24] sm:$0xf]
      %v241 = vld [vmem:[%s1 + $0x28] sm:$0xf]
      %v242 = vld [vmem:[%s1 + $0x2c] sm:$0xf]
      %v243 = vld [vmem:[%s1 + $0x30] sm:$0xf]
      %v244 = vld [vmem:[%s1 + $0x34] sm:$0xf]
      %v245 = vld [vmem:[%s1 + $0x38] sm:$0xf]
      %v246 = vld [vmem:[%s1 + $0x3c] sm:$0xf]
      %v247 = vld [vmem:[%s192 + $0x8] sm:$0x1]
      %v248 = vld [vmem:[%s192 + $0x14] sm:$0x1]
      %v249 = vld [vmem:[%s192 + $0x20] sm:$0x1]
      %v250 = vld [vmem:[%s192 + $0x2c] sm:$0x1]
      %v251 = vld [vmem:[%s192 + $0x38] sm:$0x1]
      %v252 = vld [vmem:[%s192 + $0x44] sm:$0x1]
      %v253 = vld [vmem:[%s192 + $0x50] sm:$0x1]
      %v254 = vld [vmem:[%s192 + $0x5c] sm:$0x1]
      %v255 = vld [vmem:[%s192 + $0x68] sm:$0x1]
      %v256 = vld [vmem:[%s192 + $0x74] sm:$0x1]
      %v257 = vld [vmem:[%s192 + $0x80] sm:$0x1]
      %v258 = vld [vmem:[%s192 + $0x8c] sm:$0x1]
      %v259 = vld [vmem:[%s192 + $0x98] sm:$0x1]
      %v260 = vld [vmem:[%s192 + $0xa4] sm:$0x1]
      %v261 = vld [vmem:[%s192 + $0xb0] sm:$0x1]
      %v262 = vld [vmem:[%s192 + $0xbc] sm:$0x1]
      %vm263 = vsmask.f32 3328
      %vm264 = vsmask.f32 7440
      %vm265 = vmor %vm263, %vm264
      %v267 = vshrl.u32 %v199, 16
      %v269 = vrot.slane %v267, 4
      %v270 = vshll.u32 %v199, 16
      %v272 = vrot.slane %v270, 5
      %v273 = vor.u32 %v269, %v272
      %v274 = vrot.slane %v273, 4
      %v276 = vshll.u32 %v200, 16
      %v278 = vrot.slane %v276, 5
      %v279 = vsel %vm265, %v274, %v278
      %v280 = vshrl.u32 %v200, 16
      %v282 = vrot.slane %v280, 4
      %v283 = vor.u32 %v282, %v278
      %v284 = vrot.slane %v283, 4
      %v286 = vshll.u32 %v247, 16
      %v288 = vrot.slane %v286, 5
      %v289 = vsel %vm265, %v284, %v288
      %v291 = vshrl.u32 %v201, 16
      %v293 = vrot.slane %v291, 4
      %v294 = vshll.u32 %v201, 16
      %v296 = vrot.slane %v294, 5
      %v297 = vor.u32 %v293, %v296
      %v298 = vrot.slane %v297, 4
      %v300 = vshll.u32 %v202, 16
      %v302 = vrot.slane %v300, 5
      %v303 = vsel %vm265, %v298, %v302
      %v304 = vshrl.u32 %v202, 16
      %v306 = vrot.slane %v304, 4
      %v307 = vor.u32 %v306, %v302
      %v308 = vrot.slane %v307, 4
      %v310 = vshll.u32 %v248, 16
      %v312 = vrot.slane %v310, 5
      %v313 = vsel %vm265, %v308, %v312
      %v315 = vshrl.u32 %v203, 16
      %v317 = vrot.slane %v315, 4
      %v318 = vshll.u32 %v203, 16
      %v320 = vrot.slane %v318, 5
      %v321 = vor.u32 %v317, %v320
      %v322 = vrot.slane %v321, 4
      %v324 = vshll.u32 %v204, 16
      %v326 = vrot.slane %v324, 5
      %v327 = vsel %vm265, %v322, %v326
      %v328 = vshrl.u32 %v204, 16
      %v330 = vrot.slane %v328, 4
      %v331 = vor.u32 %v330, %v326
      %v332 = vrot.slane %v331, 4
      %v334 = vshll.u32 %v249, 16
      %v336 = vrot.slane %v334, 5
      %v337 = vsel %vm265, %v332, %v336
      %v339 = vshrl.u32 %v205, 16
      %v341 = vrot.slane %v339, 4
      %v342 = vshll.u32 %v205, 16
      %v344 = vrot.slane %v342, 5
      %v345 = vor.u32 %v341, %v344
      %v346 = vrot.slane %v345, 4
      %v348 = vshll.u32 %v206, 16
      %v350 = vrot.slane %v348, 5
      %v351 = vsel %vm265, %v346, %v350
      %v352 = vshrl.u32 %v206, 16
      %v354 = vrot.slane %v352, 4
      %v355 = vor.u32 %v354, %v350
      %v356 = vrot.slane %v355, 4
      %v358 = vshll.u32 %v250, 16
      %v360 = vrot.slane %v358, 5
      %v361 = vsel %vm265, %v356, %v360
      %v363 = vshrl.u32 %v207, 16
      %v365 = vrot.slane %v363, 4
      %v366 = vshll.u32 %v207, 16
      %v368 = vrot.slane %v366, 5
      %v369 = vor.u32 %v365, %v368
      %v370 = vrot.slane %v369, 4
      %v372 = vshll.u32 %v208, 16
      %v374 = vrot.slane %v372, 5
      %v375 = vsel %vm265, %v370, %v374
      %v376 = vshrl.u32 %v208, 16
      %v378 = vrot.slane %v376, 4
      %v379 = vor.u32 %v378, %v374
      %v380 = vrot.slane %v379, 4
      %v382 = vshll.u32 %v251, 16
      %v384 = vrot.slane %v382, 5
      %v385 = vsel %vm265, %v380, %v384
      %v387 = vshrl.u32 %v209, 16
      %v389 = vrot.slane %v387, 4
      %v390 = vshll.u32 %v209, 16
      %v392 = vrot.slane %v390, 5
      %v393 = vor.u32 %v389, %v392
      %v394 = vrot.slane %v393, 4
      %v396 = vshll.u32 %v210, 16
      %v398 = vrot.slane %v396, 5
      %v399 = vsel %vm265, %v394, %v398
      %v400 = vshrl.u32 %v210, 16
      %v402 = vrot.slane %v400, 4
      %v403 = vor.u32 %v402, %v398
      %v404 = vrot.slane %v403, 4
      %v406 = vshll.u32 %v252, 16
      %v408 = vrot.slane %v406, 5
      %v409 = vsel %vm265, %v404, %v408
      %v411 = vshrl.u32 %v211, 16
      %v413 = vrot.slane %v411, 4
      %v414 = vshll.u32 %v211, 16
      %v416 = vrot.slane %v414, 5
      %v417 = vor.u32 %v413, %v416
      %v418 = vrot.slane %v417, 4
      %v420 = vshll.u32 %v212, 16
      %v422 = vrot.slane %v420, 5
      %v423 = vsel %vm265, %v418, %v422
      %v424 = vshrl.u32 %v212, 16
      %v426 = vrot.slane %v424, 4
      %v427 = vor.u32 %v426, %v422
      %v428 = vrot.slane %v427, 4
      %v430 = vshll.u32 %v253, 16
      %v432 = vrot.slane %v430, 5
      %v433 = vsel %vm265, %v428, %v432
      %v435 = vshrl.u32 %v213, 16
      %v437 = vrot.slane %v435, 4
      %v438 = vshll.u32 %v213, 16
      %v440 = vrot.slane %v438, 5
      %v441 = vor.u32 %v437, %v440
      %v442 = vrot.slane %v441, 4
      %v444 = vshll.u32 %v214, 16
      %v446 = vrot.slane %v444, 5
      %v447 = vsel %vm265, %v442, %v446
      %v448 = vshrl.u32 %v214, 16
      %v450 = vrot.slane %v448, 4
      %v451 = vor.u32 %v450, %v446
      %v452 = vrot.slane %v451, 4
      %v454 = vshll.u32 %v254, 16
      %v456 = vrot.slane %v454, 5
      %v457 = vsel %vm265, %v452, %v456
      %v459 = vshrl.u32 %v215, 16
      %v461 = vrot.slane %v459, 4
      %v462 = vshll.u32 %v215, 16
      %v464 = vrot.slane %v462, 5
      %v465 = vor.u32 %v461, %v464
      %v466 = vrot.slane %v465, 4
      %v468 = vshll.u32 %v216, 16
      %v470 = vrot.slane %v468, 5
      %v471 = vsel %vm265, %v466, %v470
      %v472 = vshrl.u32 %v216, 16
      %v474 = vrot.slane %v472, 4
      %v475 = vor.u32 %v474, %v470
      %v476 = vrot.slane %v475, 4
      %v478 = vshll.u32 %v255, 16
      %v480 = vrot.slane %v478, 5
      %v481 = vsel %vm265, %v476, %v480
      %v483 = vshrl.u32 %v217, 16
      %v485 = vrot.slane %v483, 4
      %v486 = vshll.u32 %v217, 16
      %v488 = vrot.slane %v486, 5
      %v489 = vor.u32 %v485, %v488
      %v490 = vrot.slane %v489, 4
      %v492 = vshll.u32 %v218, 16
      %v494 = vrot.slane %v492, 5
      %v495 = vsel %vm265, %v490, %v494
      %v496 = vshrl.u32 %v218, 16
      %v498 = vrot.slane %v496, 4
      %v499 = vor.u32 %v498, %v494
      %v500 = vrot.slane %v499, 4
      %v502 = vshll.u32 %v256, 16
      %v504 = vrot.slane %v502, 5
      %v505 = vsel %vm265, %v500, %v504
      %v507 = vshrl.u32 %v219, 16
      %v509 = vrot.slane %v507, 4
      %v510 = vshll.u32 %v219, 16
      %v512 = vrot.slane %v510, 5
      %v513 = vor.u32 %v509, %v512
      %v514 = vrot.slane %v513, 4
      %v516 = vshll.u32 %v220, 16
      %v518 = vrot.slane %v516, 5
      %v519 = vsel %vm265, %v514, %v518
      %v520 = vshrl.u32 %v220, 16
      %v522 = vrot.slane %v520, 4
      %v523 = vor.u32 %v522, %v518
      %v524 = vrot.slane %v523, 4
      %v526 = vshll.u32 %v257, 16
      %v528 = vrot.slane %v526, 5
      %v529 = vsel %vm265, %v524, %v528
      %v531 = vshrl.u32 %v221, 16
      %v533 = vrot.slane %v531, 4
      %v534 = vshll.u32 %v221, 16
      %v536 = vrot.slane %v534, 5
      %v537 = vor.u32 %v533, %v536
      %v538 = vrot.slane %v537, 4
      %v540 = vshll.u32 %v222, 16
      %v542 = vrot.slane %v540, 5
      %v543 = vsel %vm265, %v538, %v542
      %v544 = vshrl.u32 %v222, 16
      %v546 = vrot.slane %v544, 4
      %v547 = vor.u32 %v546, %v542
      %v548 = vrot.slane %v547, 4
      %v550 = vshll.u32 %v258, 16
      %v552 = vrot.slane %v550, 5
      %v553 = vsel %vm265, %v548, %v552
      %v555 = vshrl.u32 %v223, 16
      %v557 = vrot.slane %v555, 4
      %v558 = vshll.u32 %v223, 16
      %v560 = vrot.slane %v558, 5
      %v561 = vor.u32 %v557, %v560
      %v562 = vrot.slane %v561, 4
      %v564 = vshll.u32 %v224, 16
      %v566 = vrot.slane %v564, 5
      %v567 = vsel %vm265, %v562, %v566
      %v568 = vshrl.u32 %v224, 16
      %v570 = vrot.slane %v568, 4
      %v571 = vor.u32 %v570, %v566
      %v572 = vrot.slane %v571, 4
      %v574 = vshll.u32 %v259, 16
      %v576 = vrot.slane %v574, 5
      %v577 = vsel %vm265, %v572, %v576
      %v579 = vshrl.u32 %v225, 16
      %v581 = vrot.slane %v579, 4
      %v582 = vshll.u32 %v225, 16
      %v584 = vrot.slane %v582, 5
      %v585 = vor.u32 %v581, %v584
      %v586 = vrot.slane %v585, 4
      %v588 = vshll.u32 %v226, 16
      %v590 = vrot.slane %v588, 5
      %v591 = vsel %vm265, %v586, %v590
      %v592 = vshrl.u32 %v226, 16
      %v594 = vrot.slane %v592, 4
      %v595 = vor.u32 %v594, %v590
      %v596 = vrot.slane %v595, 4
      %v598 = vshll.u32 %v260, 16
      %v600 = vrot.slane %v598, 5
      %v601 = vsel %vm265, %v596, %v600
      %v603 = vshrl.u32 %v227, 16
      %v605 = vrot.slane %v603, 4
      %v606 = vshll.u32 %v227, 16
      %v608 = vrot.slane %v606, 5
      %v609 = vor.u32 %v605, %v608
      %v610 = vrot.slane %v609, 4
      %v612 = vshll.u32 %v228, 16
      %v614 = vrot.slane %v612, 5
      %v615 = vsel %vm265, %v610, %v614
      %v616 = vshrl.u32 %v228, 16
      %v618 = vrot.slane %v616, 4
      %v619 = vor.u32 %v618, %v614
      %v620 = vrot.slane %v619, 4
      %v622 = vshll.u32 %v261, 16
      %v624 = vrot.slane %v622, 5
      %v625 = vsel %vm265, %v620, %v624
      %v627 = vshrl.u32 %v229, 16
      %v629 = vrot.slane %v627, 4
      %v630 = vshll.u32 %v229, 16
      %v632 = vrot.slane %v630, 5
      %v633 = vor.u32 %v629, %v632
      %v634 = vrot.slane %v633, 4
      %v636 = vshll.u32 %v230, 16
      %v638 = vrot.slane %v636, 5
      %v639 = vsel %vm265, %v634, %v638
      %v640 = vshrl.u32 %v230, 16
      %v642 = vrot.slane %v640, 4
      %v643 = vor.u32 %v642, %v638
      %v644 = vrot.slane %v643, 4
      %v646 = vshll.u32 %v262, 16
      %v648 = vrot.slane %v646, 5
      %v649 = vsel %vm265, %v644, %v648
      %s650 = scalar_lea.vmem %s1, 64
      %v651 = vld [vmem:[%s650] sm:$0xf]
      %v652 = vld [vmem:[%s650 + $0x4] sm:$0xf]
      %v653 = vld [vmem:[%s650 + $0x8] sm:$0xf]
      %v654 = vld [vmem:[%s650 + $0xc] sm:$0xf]
      %v655 = vld [vmem:[%s650 + $0x10] sm:$0xf]
      %v656 = vld [vmem:[%s650 + $0x14] sm:$0xf]
      %v657 = vld [vmem:[%s650 + $0x18] sm:$0xf]
      %v658 = vld [vmem:[%s650 + $0x1c] sm:$0xf]
      %v659 = vld [vmem:[%s650 + $0x20] sm:$0xf]
      %v660 = vld [vmem:[%s650 + $0x24] sm:$0xf]
      %v661 = vld [vmem:[%s650 + $0x28] sm:$0xf]
      %v662 = vld [vmem:[%s650 + $0x2c] sm:$0xf]
      %v663 = vld [vmem:[%s650 + $0x30] sm:$0xf]
      %v664 = vld [vmem:[%s650 + $0x34] sm:$0xf]
      %v665 = vld [vmem:[%s650 + $0x38] sm:$0xf]
      %v666 = vld [vmem:[%s650 + $0x3c] sm:$0xf]
      %v667 = vunpack.c.l.b16 %v279
      %v668 = vunpack.c.l.b16 %v289
      %v669 = vunpack.c.l.b16 %v303
      %v670 = vunpack.c.l.b16 %v313
      %v671 = vunpack.c.l.b16 %v327
      %v672 = vunpack.c.l.b16 %v337
      %v673 = vunpack.c.l.b16 %v351
      %v674 = vunpack.c.l.b16 %v361
      %v675 = vunpack.c.l.b16 %v375
      %v676 = vunpack.c.l.b16 %v385
      %v677 = vunpack.c.l.b16 %v399
      %v678 = vunpack.c.l.b16 %v409
      %v679 = vunpack.c.l.b16 %v423
      %v680 = vunpack.c.l.b16 %v433
      %v681 = vunpack.c.l.b16 %v447
      %v682 = vunpack.c.l.b16 %v457
      %v683 = vunpack.c.l.b16 %v471
      %v684 = vunpack.c.l.b16 %v481
      %v685 = vunpack.c.l.b16 %v495
      %v686 = vunpack.c.l.b16 %v505
      %v687 = vunpack.c.l.b16 %v519
      %v688 = vunpack.c.l.b16 %v529
      %v689 = vunpack.c.l.b16 %v543
      %v690 = vunpack.c.l.b16 %v553
      %v691 = vunpack.c.l.b16 %v567
      %v692 = vunpack.c.l.b16 %v577
      %v693 = vunpack.c.l.b16 %v591
      %v694 = vunpack.c.l.b16 %v601
      %v695 = vunpack.c.l.b16 %v615
      %v696 = vunpack.c.l.b16 %v625
      %v697 = vunpack.c.l.b16 %v639
      %v698 = vunpack.c.l.b16 %v649
      %v699 = vpack.c.b16 %v668, %v667
      %v700 = vpack.c.b16 %v670, %v669
      %v701 = vpack.c.b16 %v672, %v671
      %v702 = vpack.c.b16 %v674, %v673
      %v703 = vpack.c.b16 %v676, %v675
      %v704 = vpack.c.b16 %v678, %v677
      %v705 = vpack.c.b16 %v680, %v679
      %v706 = vpack.c.b16 %v682, %v681
      %v707 = vpack.c.b16 %v684, %v683
      %v708 = vpack.c.b16 %v686, %v685
      %v709 = vpack.c.b16 %v688, %v687
      %v710 = vpack.c.b16 %v690, %v689
      %v711 = vpack.c.b16 %v692, %v691
      %v712 = vpack.c.b16 %v694, %v693
      %v713 = vpack.c.b16 %v696, %v695
      %v714 = vpack.c.b16 %v698, %v697
      %v747 = vunpack.c.l.b16 %v651
      %v748 = vunpack.c.l.b16 %v652
      %v749 = vunpack.c.l.b16 %v653
      %v750 = vunpack.c.l.b16 %v654
      %v751 = vunpack.c.l.b16 %v655
      %v752 = vunpack.c.l.b16 %v656
      %v753 = vunpack.c.l.b16 %v657
      %v754 = vunpack.c.l.b16 %v658
      %v755 = vunpack.c.l.b16 %v659
      %v756 = vunpack.c.l.b16 %v660
      %v757 = vunpack.c.l.b16 %v661
      %v758 = vunpack.c.l.b16 %v662
      %v759 = vunpack.c.l.b16 %v663
      %v760 = vunpack.c.l.b16 %v664
      %v761 = vunpack.c.l.b16 %v665
      %v762 = vunpack.c.l.b16 %v666
      %v763 = vpack.c.b16 %v748, %v747
      %v764 = vpack.c.b16 %v750, %v749
      %v765 = vpack.c.b16 %v752, %v751
      %v766 = vpack.c.b16 %v754, %v753
      %v767 = vpack.c.b16 %v756, %v755
      %v768 = vpack.c.b16 %v758, %v757
      %v769 = vpack.c.b16 %v760, %v759
      %v770 = vpack.c.b16 %v762, %v761
      %779 = vmatprep.subr.bf16.mxu0 0
      %780 = vmatpush1.bf16.msra.mxu0 %v763
      %781 = vmatprep.subr.bf16.mxu0 0
      %782 = vmatpush1.bf16.msra.mxu0 %v764
      %783 = vmatprep.subr.bf16.mxu0 0
      %784 = vmatpush1.bf16.msra.mxu0 %v765
      %785 = vmatprep.subr.bf16.mxu0 0
      %786 = vmatpush1.bf16.msra.mxu0 %v766
      %787 = vmatprep.subr.bf16.mxu0 0
      %788 = vmatpush1.bf16.msra.mxu0 %v767
      %789 = vmatprep.subr.bf16.mxu0 0
      %790 = vmatpush1.bf16.msra.mxu0 %v768
      %791 = vmatprep.subr.bf16.mxu0 0
      %792 = vmatpush1.bf16.msra.mxu0 %v769
      %793 = vmatprep.subr.bf16.mxu0 0
      %794 = vmatpush1.bf16.msra.mxu0 %v770
      %795 = vmatprep.subr.bf16.mxu0 0
      %796 = vmatpush1.bf16.msra.mxu0 0
      %797 = vmatprep.subr.bf16.mxu0 0
      %798 = vmatpush1.bf16.msra.mxu0 0
      %799 = vmatprep.subr.bf16.mxu0 0
      %800 = vmatpush1.bf16.msra.mxu0 0
      %801 = vmatprep.subr.bf16.mxu0 0
      %802 = vmatpush1.bf16.msra.mxu0 0
      %803 = vmatprep.subr.bf16.mxu0 0
      %804 = vmatpush1.bf16.msra.mxu0 0
      %805 = vmatprep.subr.bf16.mxu0 0
      %806 = vmatpush1.bf16.msra.mxu0 0
      %807 = vmatprep.subr.bf16.mxu0 0
      %808 = vmatpush1.bf16.msra.mxu0 0
      %809 = vmatprep.subr.bf16.mxu0 0
      %810 = vmatpush1.bf16.msra.mxu0 0
      %811 = vmatprep.mubr.bf16.mxu0 0
      %812 = vmatmul.mubr.bf16.gmra.mrb[0].mxu0 %v699
      %v813 = vpop.f32.mrb[0].mxu0
      %v814 = vadd.f32 0.0, %v813
      %v815 = vpop.f32.mrb[0].mxu0
      %v816 = vpop.f32.mrb[0].mxu0
      %v817 = vadd.f32 0.0, %v816
      %v818 = vpop.f32.mrb[0].mxu0
      %819 = vmatprep.mubr.bf16.mxu0 0
      %820 = vmatmul.mubr.bf16.gmra.mrb[0].mxu0 %v700
      %v821 = vpop.f32.mrb[0].mxu0
      %v822 = vadd.f32 0.0, %v821
      %v823 = vpop.f32.mrb[0].mxu0
      %v824 = vpop.f32.mrb[0].mxu0
      %v825 = vadd.f32 0.0, %v824
      %v826 = vpop.f32.mrb[0].mxu0
      %827 = vmatprep.mubr.bf16.mxu0 0
      %828 = vmatmul.mubr.bf16.gmra.mrb[0].mxu0 %v701
      %v829 = vpop.f32.mrb[0].mxu0
      %v830 = vadd.f32 0.0, %v829
      %v831 = vpop.f32.mrb[0].mxu0
      %v832 = vpop.f32.mrb[0].mxu0
      %v833 = vadd.f32 0.0, %v832
      %v834 = vpop.f32.mrb[0].mxu0
      %835 = vmatprep.mubr.bf16.mxu0 0
      %836 = vmatmul.mubr.bf16.gmra.mrb[0].mxu0 %v702
      %v837 = vpop.f32.mrb[0].mxu0
      %v838 = vadd.f32 0.0, %v837
      %v839 = vpop.f32.mrb[0].mxu0
      %v840 = vpop.f32.mrb[0].mxu0
      %v841 = vadd.f32 0.0, %v840
      %v842 = vpop.f32.mrb[0].mxu0
      %843 = vmatprep.mubr.bf16.mxu0 0
      %844 = vmatmul.mubr.bf16.gmra.mrb[0].mxu0 %v703
      %v845 = vpop.f32.mrb[0].mxu0
      %v846 = vadd.f32 0.0, %v845
      %v847 = vpop.f32.mrb[0].mxu0
      %v848 = vpop.f32.mrb[0].mxu0
      %v849 = vadd.f32 0.0, %v848
      %v850 = vpop.f32.mrb[0].mxu0
      %851 = vmatprep.mubr.bf16.mxu0 0
      %852 = vmatmul.mubr.bf16.gmra.mrb[0].mxu0 %v704
      %v853 = vpop.f32.mrb[0].mxu0
      %v854 = vadd.f32 0.0, %v853
      %v855 = vpop.f32.mrb[0].mxu0
      %v856 = vpop.f32.mrb[0].mxu0
      %v857 = vadd.f32 0.0, %v856
      %v858 = vpop.f32.mrb[0].mxu0
      %859 = vmatprep.mubr.bf16.mxu0 0
      %860 = vmatmul.mubr.bf16.gmra.mrb[0].mxu0 %v705
      %v861 = vpop.f32.mrb[0].mxu0
      %v862 = vadd.f32 0.0, %v861
      %v863 = vpop.f32.mrb[0].mxu0
      %v864 = vpop.f32.mrb[0].mxu0
      %v865 = vadd.f32 0.0, %v864
      %v866 = vpop.f32.mrb[0].mxu0
      %867 = vmatprep.mubr.bf16.mxu0 0
      %868 = vmatmul.mubr.bf16.gmra.mrb[0].mxu0 %v706
      %v869 = vpop.f32.mrb[0].mxu0
      %v870 = vadd.f32 0.0, %v869
      %v871 = vpop.f32.mrb[0].mxu0
      %v872 = vpop.f32.mrb[0].mxu0
      %v873 = vadd.f32 0.0, %v872
      %v874 = vpop.f32.mrb[0].mxu0
      %875 = vmatprep.mubr.bf16.mxu0 0
      %876 = vmatmul.mubr.bf16.gmra.mrb[0].mxu0 %v707
      %v877 = vpop.f32.mrb[0].mxu0
      %v878 = vadd.f32 0.0, %v877
      %v879 = vpop.f32.mrb[0].mxu0
      %v880 = vpop.f32.mrb[0].mxu0
      %v881 = vadd.f32 0.0, %v880
      %v882 = vpop.f32.mrb[0].mxu0
      %883 = vmatprep.mubr.bf16.mxu0 0
      %884 = vmatmul.mubr.bf16.gmra.mrb[0].mxu0 %v708
      %v885 = vpop.f32.mrb[0].mxu0
      %v886 = vadd.f32 0.0, %v885
      %v887 = vpop.f32.mrb[0].mxu0
      %v888 = vpop.f32.mrb[0].mxu0
      %v889 = vadd.f32 0.0, %v888
      %v890 = vpop.f32.mrb[0].mxu0
      %891 = vmatprep.mubr.bf16.mxu0 0
      %892 = vmatmul.mubr.bf16.gmra.mrb[0].mxu0 %v709
      %v893 = vpop.f32.mrb[0].mxu0
      %v894 = vadd.f32 0.0, %v893
      %v895 = vpop.f32.mrb[0].mxu0
      %v896 = vpop.f32.mrb[0].mxu0
      %v897 = vadd.f32 0.0, %v896
      %v898 = vpop.f32.mrb[0].mxu0
      %899 = vmatprep.mubr.bf16.mxu0 0
      %900 = vmatmul.mubr.bf16.gmra.mrb[0].mxu0 %v710
      %v901 = vpop.f32.mrb[0].mxu0
      %v902 = vadd.f32 0.0, %v901
      %v903 = vpop.f32.mrb[0].mxu0
      %v904 = vpop.f32.mrb[0].mxu0
      %v905 = vadd.f32 0.0, %v904
      %v906 = vpop.f32.mrb[0].mxu0
      %907 = vmatprep.mubr.bf16.mxu0 0
      %908 = vmatmul.mubr.bf16.gmra.mrb[0].mxu0 %v711
      %v909 = vpop.f32.mrb[0].mxu0
      %v910 = vadd.f32 0.0, %v909
      %v911 = vpop.f32.mrb[0].mxu0
      %v912 = vpop.f32.mrb[0].mxu0
      %v913 = vadd.f32 0.0, %v912
      %v914 = vpop.f32.mrb[0].mxu0
      %915 = vmatprep.mubr.bf16.mxu0 0
      %916 = vmatmul.mubr.bf16.gmra.mrb[0].mxu0 %v712
      %v917 = vpop.f32.mrb[0].mxu0
      %v918 = vadd.f32 0.0, %v917
      %v919 = vpop.f32.mrb[0].mxu0
      %v920 = vpop.f32.mrb[0].mxu0
      %v921 = vadd.f32 0.0, %v920
      %v922 = vpop.f32.mrb[0].mxu0
      %923 = vmatprep.mubr.bf16.mxu0 0
      %924 = vmatmul.mubr.bf16.gmra.mrb[0].mxu0 %v713
      %v925 = vpop.f32.mrb[0].mxu0
      %v926 = vadd.f32 0.0, %v925
      %v927 = vpop.f32.mrb[0].mxu0
      %v928 = vpop.f32.mrb[0].mxu0
      %v929 = vadd.f32 0.0, %v928
      %v930 = vpop.f32.mrb[0].mxu0
      %931 = vmatprep.mubr.bf16.mxu0 0
      %932 = vmatmul.mubr.bf16.gmra.mrb[0].mxu0 %v714
      %v933 = vpop.f32.mrb[0].mxu0
      %v934 = vadd.f32 0.0, %v933
      %v935 = vpop.f32.mrb[0].mxu0
      %v936 = vpop.f32.mrb[0].mxu0
      %v937 = vadd.f32 0.0, %v936
      %v938 = vpop.f32.mrb[0].mxu0
      %939 = vdwg.mxu0
      %v972 = vunpack.c.l.b16 %v199
      %v973 = vunpack.c.l.b16 %v200
      %v974 = vunpack.c.l.b16 %v201
      %v975 = vunpack.c.l.b16 %v202
      %v976 = vunpack.c.l.b16 %v203
      %v977 = vunpack.c.l.b16 %v204
      %v978 = vunpack.c.l.b16 %v205
      %v979 = vunpack.c.l.b16 %v206
      %v980 = vunpack.c.l.b16 %v207
      %v981 = vunpack.c.l.b16 %v208
      %v982 = vunpack.c.l.b16 %v209
      %v983 = vunpack.c.l.b16 %v210
      %v984 = vunpack.c.l.b16 %v211
      %v985 = vunpack.c.l.b16 %v212
      %v986 = vunpack.c.l.b16 %v213
      %v987 = vunpack.c.l.b16 %v214
      %v988 = vunpack.c.l.b16 %v215
      %v989 = vunpack.c.l.b16 %v216
      %v990 = vunpack.c.l.b16 %v217
      %v991 = vunpack.c.l.b16 %v218
      %v992 = vunpack.c.l.b16 %v219
      %v993 = vunpack.c.l.b16 %v220
      %v994 = vunpack.c.l.b16 %v221
      %v995 = vunpack.c.l.b16 %v222
      %v996 = vunpack.c.l.b16 %v223
      %v997 = vunpack.c.l.b16 %v224
      %v998 = vunpack.c.l.b16 %v225
      %v999 = vunpack.c.l.b16 %v226
      %v1000 = vunpack.c.l.b16 %v227
      %v1001 = vunpack.c.l.b16 %v228
      %v1002 = vunpack.c.l.b16 %v229
      %v1003 = vunpack.c.l.b16 %v230
      %v1004 = vpack.c.b16 %v973, %v972
      %v1005 = vpack.c.b16 %v975, %v974
      %v1006 = vpack.c.b16 %v977, %v976
      %v1007 = vpack.c.b16 %v979, %v978
      %v1008 = vpack.c.b16 %v981, %v980
      %v1009 = vpack.c.b16 %v983, %v982
      %v1010 = vpack.c.b16 %v985, %v984
      %v1011 = vpack.c.b16 %v987, %v986
      %v1012 = vpack.c.b16 %v989, %v988
      %v1013 = vpack.c.b16 %v991, %v990
      %v1014 = vpack.c.b16 %v993, %v992
      %v1015 = vpack.c.b16 %v995, %v994
      %v1016 = vpack.c.b16 %v997, %v996
      %v1017 = vpack.c.b16 %v999, %v998
      %v1018 = vpack.c.b16 %v1001, %v1000
      %v1019 = vpack.c.b16 %v1003, %v1002
      %v1052 = vunpack.c.l.b16 %v231
      %v1053 = vunpack.c.l.b16 %v232
      %v1054 = vunpack.c.l.b16 %v233
      %v1055 = vunpack.c.l.b16 %v234
      %v1056 = vunpack.c.l.b16 %v235
      %v1057 = vunpack.c.l.b16 %v236
      %v1058 = vunpack.c.l.b16 %v237
      %v1059 = vunpack.c.l.b16 %v238
      %v1060 = vunpack.c.l.b16 %v239
      %v1061 = vunpack.c.l.b16 %v240
      %v1062 = vunpack.c.l.b16 %v241
      %v1063 = vunpack.c.l.b16 %v242
      %v1064 = vunpack.c.l.b16 %v243
      %v1065 = vunpack.c.l.b16 %v244
      %v1066 = vunpack.c.l.b16 %v245
      %v1067 = vunpack.c.l.b16 %v246
      %v1068 = vpack.c.b16 %v1053, %v1052
      %v1069 = vpack.c.b16 %v1055, %v1054
      %v1070 = vpack.c.b16 %v1057, %v1056
      %v1071 = vpack.c.b16 %v1059, %v1058
      %v1072 = vpack.c.b16 %v1061, %v1060
      %v1073 = vpack.c.b16 %v1063, %v1062
      %v1074 = vpack.c.b16 %v1065, %v1064
      %v1075 = vpack.c.b16 %v1067, %v1066
      %1084 = vmatprep.subr.bf16.mxu0 0
      %1085 = vmatpush1.bf16.msra.mxu0 %v1068
      %1086 = vmatprep.subr.bf16.mxu0 0
      %1087 = vmatpush1.bf16.msra.mxu0 %v1069
      %1088 = vmatprep.subr.bf16.mxu0 0
      %1089 = vmatpush1.bf16.msra.mxu0 %v1070
      %1090 = vmatprep.subr.bf16.mxu0 0
      %1091 = vmatpush1.bf16.msra.mxu0 %v1071
      %1092 = vmatprep.subr.bf16.mxu0 0
      %1093 = vmatpush1.bf16.msra.mxu0 %v1072
      %1094 = vmatprep.subr.bf16.mxu0 0
      %1095 = vmatpush1.bf16.msra.mxu0 %v1073
      %1096 = vmatprep.subr.bf16.mxu0 0
      %1097 = vmatpush1.bf16.msra.mxu0 %v1074
      %1098 = vmatprep.subr.bf16.mxu0 0
      %1099 = vmatpush1.bf16.msra.mxu0 %v1075
      %1100 = vmatprep.subr.bf16.mxu0 0
      %1101 = vmatpush1.bf16.msra.mxu0 0
      %1102 = vmatprep.subr.bf16.mxu0 0
      %1103 = vmatpush1.bf16.msra.mxu0 0
      %1104 = vmatprep.subr.bf16.mxu0 0
      %1105 = vmatpush1.bf16.msra.mxu0 0
      %1106 = vmatprep.subr.bf16.mxu0 0
      %1107 = vmatpush1.bf16.msra.mxu0 0
      %1108 = vmatprep.subr.bf16.mxu0 0
      %1109 = vmatpush1.bf16.msra.mxu0 0
      %1110 = vmatprep.subr.bf16.mxu0 0
      %1111 = vmatpush1.bf16.msra.mxu0 0
      %1112 = vmatprep.subr.bf16.mxu0 0
      %1113 = vmatpush1.bf16.msra.mxu0 0
      %1114 = vmatprep.subr.bf16.mxu0 0
      %1115 = vmatpush1.bf16.msra.mxu0 0
      %1116 = vmatprep.mubr.bf16.mxu0 0
      %1117 = vmatmul.mubr.bf16.gmra.mrb[0].mxu0 %v1004
      %v1118 = vpop.f32.mrb[0].mxu0
      %v1119 = vadd.f32 %v814, %v1118
      %v1120 = vpop.f32.mrb[0].mxu0
      %v1121 = vpop.f32.mrb[0].mxu0
      %v1122 = vadd.f32 %v817, %v1121
      %v1123 = vpop.f32.mrb[0].mxu0
      %1124 = vmatprep.mubr.bf16.mxu0 0
      %1125 = vmatmul.mubr.bf16.gmra.mrb[0].mxu0 %v1005
      %v1126 = vpop.f32.mrb[0].mxu0
      %v1127 = vadd.f32 %v822, %v1126
      %v1128 = vpop.f32.mrb[0].mxu0
      %v1129 = vpop.f32.mrb[0].mxu0
      %v1130 = vadd.f32 %v825, %v1129
      %v1131 = vpop.f32.mrb[0].mxu0
      %1132 = vmatprep.mubr.bf16.mxu0 0
      %1133 = vmatmul.mubr.bf16.gmra.mrb[0].mxu0 %v1006
      %v1134 = vpop.f32.mrb[0].mxu0
      %v1135 = vadd.f32 %v830, %v1134
      %v1136 = vpop.f32.mrb[0].mxu0
      %v1137 = vpop.f32.mrb[0].mxu0
      %v1138 = vadd.f32 %v833, %v1137
      %v1139 = vpop.f32.mrb[0].mxu0
      %1140 = vmatprep.mubr.bf16.mxu0 0
      %1141 = vmatmul.mubr.bf16.gmra.mrb[0].mxu0 %v1007
      %v1142 = vpop.f32.mrb[0].mxu0
      %v1143 = vadd.f32 %v838, %v1142
      %v1144 = vpop.f32.mrb[0].mxu0
      %v1145 = vpop.f32.mrb[0].mxu0
      %v1146 = vadd.f32 %v841, %v1145
      %v1147 = vpop.f32.mrb[0].mxu0
      %1148 = vmatprep.mubr.bf16.mxu0 0
      %1149 = vmatmul.mubr.bf16.gmra.mrb[0].mxu0 %v1008
      %v1150 = vpop.f32.mrb[0].mxu0
      %v1151 = vadd.f32 %v846, %v1150
      %v1152 = vpop.f32.mrb[0].mxu0
      %v1153 = vpop.f32.mrb[0].mxu0
      %v1154 = vadd.f32 %v849, %v1153
      %v1155 = vpop.f32.mrb[0].mxu0
      %1156 = vmatprep.mubr.bf16.mxu0 0
      %1157 = vmatmul.mubr.bf16.gmra.mrb[0].mxu0 %v1009
      %v1158 = vpop.f32.mrb[0].mxu0
      %v1159 = vadd.f32 %v854, %v1158
      %v1160 = vpop.f32.mrb[0].mxu0
      %v1161 = vpop.f32.mrb[0].mxu0
      %v1162 = vadd.f32 %v857, %v1161
      %v1163 = vpop.f32.mrb[0].mxu0
      %1164 = vmatprep.mubr.bf16.mxu0 0
      %1165 = vmatmul.mubr.bf16.gmra.mrb[0].mxu0 %v1010
      %v1166 = vpop.f32.mrb[0].mxu0
      %v1167 = vadd.f32 %v862, %v1166
      %v1168 = vpop.f32.mrb[0].mxu0
      %v1169 = vpop.f32.mrb[0].mxu0
      %v1170 = vadd.f32 %v865, %v1169
      %v1171 = vpop.f32.mrb[0].mxu0
      %1172 = vmatprep.mubr.bf16.mxu0 0
      %1173 = vmatmul.mubr.bf16.gmra.mrb[0].mxu0 %v1011
      %v1174 = vpop.f32.mrb[0].mxu0
      %v1175 = vadd.f32 %v870, %v1174
      %v1176 = vpop.f32.mrb[0].mxu0
      %v1177 = vpop.f32.mrb[0].mxu0
      %v1178 = vadd.f32 %v873, %v1177
      %v1179 = vpop.f32.mrb[0].mxu0
      %1180 = vmatprep.mubr.bf16.mxu0 0
      %1181 = vmatmul.mubr.bf16.gmra.mrb[0].mxu0 %v1012
      %v1182 = vpop.f32.mrb[0].mxu0
      %v1183 = vadd.f32 %v878, %v1182
      %v1184 = vpop.f32.mrb[0].mxu0
      %v1185 = vpop.f32.mrb[0].mxu0
      %v1186 = vadd.f32 %v881, %v1185
      %v1187 = vpop.f32.mrb[0].mxu0
      %1188 = vmatprep.mubr.bf16.mxu0 0
      %1189 = vmatmul.mubr.bf16.gmra.mrb[0].mxu0 %v1013
      %v1190 = vpop.f32.mrb[0].mxu0
      %v1191 = vadd.f32 %v886, %v1190
      %v1192 = vpop.f32.mrb[0].mxu0
      %v1193 = vpop.f32.mrb[0].mxu0
      %v1194 = vadd.f32 %v889, %v1193
      %v1195 = vpop.f32.mrb[0].mxu0
      %1196 = vmatprep.mubr.bf16.mxu0 0
      %1197 = vmatmul.mubr.bf16.gmra.mrb[0].mxu0 %v1014
      %v1198 = vpop.f32.mrb[0].mxu0
      %v1199 = vadd.f32 %v894, %v1198
      %v1200 = vpop.f32.mrb[0].mxu0
      %v1201 = vpop.f32.mrb[0].mxu0
      %v1202 = vadd.f32 %v897, %v1201
      %v1203 = vpop.f32.mrb[0].mxu0
      %1204 = vmatprep.mubr.bf16.mxu0 0
      %1205 = vmatmul.mubr.bf16.gmra.mrb[0].mxu0 %v1015
      %v1206 = vpop.f32.mrb[0].mxu0
      %v1207 = vadd.f32 %v902, %v1206
      %v1208 = vpop.f32.mrb[0].mxu0
      %v1209 = vpop.f32.mrb[0].mxu0
      %v1210 = vadd.f32 %v905, %v1209
      %v1211 = vpop.f32.mrb[0].mxu0
      %1212 = vmatprep.mubr.bf16.mxu0 0
      %1213 = vmatmul.mubr.bf16.gmra.mrb[0].mxu0 %v1016
      %v1214 = vpop.f32.mrb[0].mxu0
      %v1215 = vadd.f32 %v910, %v1214
      %v1216 = vpop.f32.mrb[0].mxu0
      %v1217 = vpop.f32.mrb[0].mxu0
      %v1218 = vadd.f32 %v913, %v1217
      %v1219 = vpop.f32.mrb[0].mxu0
      %1220 = vmatprep.mubr.bf16.mxu0 0
      %1221 = vmatmul.mubr.bf16.gmra.mrb[0].mxu0 %v1017
      %v1222 = vpop.f32.mrb[0].mxu0
      %v1223 = vadd.f32 %v918, %v1222
      %v1224 = vpop.f32.mrb[0].mxu0
      %v1225 = vpop.f32.mrb[0].mxu0
      %v1226 = vadd.f32 %v921, %v1225
      %v1227 = vpop.f32.mrb[0].mxu0
      %1228 = vmatprep.mubr.bf16.mxu0 0
      %1229 = vmatmul.mubr.bf16.gmra.mrb[0].mxu0 %v1018
      %v1230 = vpop.f32.mrb[0].mxu0
      %v1231 = vadd.f32 %v926, %v1230
      %v1232 = vpop.f32.mrb[0].mxu0
      %v1233 = vpop.f32.mrb[0].mxu0
      %v1234 = vadd.f32 %v929, %v1233
      %v1235 = vpop.f32.mrb[0].mxu0
      %1236 = vmatprep.mubr.bf16.mxu0 0
      %1237 = vmatmul.mubr.bf16.gmra.mrb[0].mxu0 %v1019
      %v1238 = vpop.f32.mrb[0].mxu0
      %v1239 = vadd.f32 %v934, %v1238
      %v1240 = vpop.f32.mrb[0].mxu0
      %v1241 = vpop.f32.mrb[0].mxu0
      %v1242 = vadd.f32 %v937, %v1241
      %v1243 = vpop.f32.mrb[0].mxu0
      %1244 = vdwg.mxu0
      %v1245 = vld [vmem:[%s192] sm:$0xe]
      %v1246 = vld [vmem:[%s192 + $0xc] sm:$0xe]
      %v1247 = vld [vmem:[%s192 + $0x18] sm:$0xe]
      %v1248 = vld [vmem:[%s192 + $0x24] sm:$0xe]
      %v1249 = vld [vmem:[%s192 + $0x30] sm:$0xe]
      %v1250 = vld [vmem:[%s192 + $0x3c] sm:$0xe]
      %v1251 = vld [vmem:[%s192 + $0x48] sm:$0xe]
      %v1252 = vld [vmem:[%s192 + $0x54] sm:$0xe]
      %v1253 = vld [vmem:[%s192 + $0x60] sm:$0xe]
      %v1254 = vld [vmem:[%s192 + $0x6c] sm:$0xe]
      %v1255 = vld [vmem:[%s192 + $0x78] sm:$0xe]
      %v1256 = vld [vmem:[%s192 + $0x84] sm:$0xe]
      %v1257 = vld [vmem:[%s192 + $0x90] sm:$0xe]
      %v1258 = vld [vmem:[%s192 + $0x9c] sm:$0xe]
      %v1259 = vld [vmem:[%s192 + $0xa8] sm:$0xe]
      %v1260 = vld [vmem:[%s192 + $0xb4] sm:$0xe]
      %vm1293 = vcmask 1042432
      %vm1294 = vcmask 1046532
      %vm1295 = vmor %vm1293, %vm1294
      %v1296 = vrot.slane %v1245, 5
      %v1297 = vrot.slane %v1296, 4
      %v1298 = vrot.slane %v200, 5
      %v1299 = vsel %vm1295, %v1297, %v1298
      %v1300 = vrot.slane %v1298, 4
      %v1301 = vrot.slane %v247, 5
      %v1302 = vsel %vm1295, %v1300, %v1301
      %v1303 = vrot.slane %v1246, 5
      %v1304 = vrot.slane %v1303, 4
      %v1305 = vrot.slane %v202, 5
      %v1306 = vsel %vm1295, %v1304, %v1305
      %v1307 = vrot.slane %v1305, 4
      %v1308 = vrot.slane %v248, 5
      %v1309 = vsel %vm1295, %v1307, %v1308
      %v1310 = vrot.slane %v1247, 5
      %v1311 = vrot.slane %v1310, 4
      %v1312 = vrot.slane %v204, 5
      %v1313 = vsel %vm1295, %v1311, %v1312
      %v1314 = vrot.slane %v1312, 4
      %v1315 = vrot.slane %v249, 5
      %v1316 = vsel %vm1295, %v1314, %v1315
      %v1317 = vrot.slane %v1248, 5
      %v1318 = vrot.slane %v1317, 4
      %v1319 = vrot.slane %v206, 5
      %v1320 = vsel %vm1295, %v1318, %v1319
      %v1321 = vrot.slane %v1319, 4
      %v1322 = vrot.slane %v250, 5
      %v1323 = vsel %vm1295, %v1321, %v1322
      %v1324 = vrot.slane %v1249, 5
      %v1325 = vrot.slane %v1324, 4
      %v1326 = vrot.slane %v208, 5
      %v1327 = vsel %vm1295, %v1325, %v1326
      %v1328 = vrot.slane %v1326, 4
      %v1329 = vrot.slane %v251, 5
      %v1330 = vsel %vm1295, %v1328, %v1329
      %v1331 = vrot.slane %v1250, 5
      %v1332 = vrot.slane %v1331, 4
      %v1333 = vrot.slane %v210, 5
      %v1334 = vsel %vm1295, %v1332, %v1333
      %v1335 = vrot.slane %v1333, 4
      %v1336 = vrot.slane %v252, 5
      %v1337 = vsel %vm1295, %v1335, %v1336
      %v1338 = vrot.slane %v1251, 5
      %v1339 = vrot.slane %v1338, 4
      %v1340 = vrot.slane %v212, 5
      %v1341 = vsel %vm1295, %v1339, %v1340
      %v1342 = vrot.slane %v1340, 4
      %v1343 = vrot.slane %v253, 5
      %v1344 = vsel %vm1295, %v1342, %v1343
      %v1345 = vrot.slane %v1252, 5
      %v1346 = vrot.slane %v1345, 4
      %v1347 = vrot.slane %v214, 5
      %v1348 = vsel %vm1295, %v1346, %v1347
      %v1349 = vrot.slane %v1347, 4
      %v1350 = vrot.slane %v254, 5
      %v1351 = vsel %vm1295, %v1349, %v1350
      %v1352 = vrot.slane %v1253, 5
      %v1353 = vrot.slane %v1352, 4
      %v1354 = vrot.slane %v216, 5
      %v1355 = vsel %vm1295, %v1353, %v1354
      %v1356 = vrot.slane %v1354, 4
      %v1357 = vrot.slane %v255, 5
      %v1358 = vsel %vm1295, %v1356, %v1357
      %v1359 = vrot.slane %v1254, 5
      %v1360 = vrot.slane %v1359, 4
      %v1361 = vrot.slane %v218, 5
      %v1362 = vsel %vm1295, %v1360, %v1361
      %v1363 = vrot.slane %v1361, 4
      %v1364 = vrot.slane %v256, 5
      %v1365 = vsel %vm1295, %v1363, %v1364
      %v1366 = vrot.slane %v1255, 5
      %v1367 = vrot.slane %v1366, 4
      %v1368 = vrot.slane %v220, 5
      %v1369 = vsel %vm1295, %v1367, %v1368
      %v1370 = vrot.slane %v1368, 4
      %v1371 = vrot.slane %v257, 5
      %v1372 = vsel %vm1295, %v1370, %v1371
      %v1373 = vrot.slane %v1256, 5
      %v1374 = vrot.slane %v1373, 4
      %v1375 = vrot.slane %v222, 5
      %v1376 = vsel %vm1295, %v1374, %v1375
      %v1377 = vrot.slane %v1375, 4
      %v1378 = vrot.slane %v258, 5
      %v1379 = vsel %vm1295, %v1377, %v1378
      %v1380 = vrot.slane %v1257, 5
      %v1381 = vrot.slane %v1380, 4
      %v1382 = vrot.slane %v224, 5
      %v1383 = vsel %vm1295, %v1381, %v1382
      %v1384 = vrot.slane %v1382, 4
      %v1385 = vrot.slane %v259, 5
      %v1386 = vsel %vm1295, %v1384, %v1385
      %v1387 = vrot.slane %v1258, 5
      %v1388 = vrot.slane %v1387, 4
      %v1389 = vrot.slane %v226, 5
      %v1390 = vsel %vm1295, %v1388, %v1389
      %v1391 = vrot.slane %v1389, 4
      %v1392 = vrot.slane %v260, 5
      %v1393 = vsel %vm1295, %v1391, %v1392
      %v1394 = vrot.slane %v1259, 5
      %v1395 = vrot.slane %v1394, 4
      %v1396 = vrot.slane %v228, 5
      %v1397 = vsel %vm1295, %v1395, %v1396
      %v1398 = vrot.slane %v1396, 4
      %v1399 = vrot.slane %v261, 5
      %v1400 = vsel %vm1295, %v1398, %v1399
      %v1401 = vrot.slane %v1260, 5
      %v1402 = vrot.slane %v1401, 4
      %v1403 = vrot.slane %v230, 5
      %v1404 = vsel %vm1295, %v1402, %v1403
      %v1405 = vrot.slane %v1403, 4
      %v1406 = vrot.slane %v262, 5
      %v1407 = vsel %vm1295, %v1405, %v1406
      %s1408 = scalar_lea.vmem %s1, 128
      %v1409 = vld [vmem:[%s1408] sm:$0xf]
      %v1410 = vld [vmem:[%s1408 + $0x4] sm:$0xf]
      %v1411 = vld [vmem:[%s1408 + $0x8] sm:$0xf]
      %v1412 = vld [vmem:[%s1408 + $0xc] sm:$0xf]
      %v1413 = vld [vmem:[%s1408 + $0x10] sm:$0xf]
      %v1414 = vld [vmem:[%s1408 + $0x14] sm:$0xf]
      %v1415 = vld [vmem:[%s1408 + $0x18] sm:$0xf]
      %v1416 = vld [vmem:[%s1408 + $0x1c] sm:$0xf]
      %v1417 = vld [vmem:[%s1408 + $0x20] sm:$0xf]
      %v1418 = vld [vmem:[%s1408 + $0x24] sm:$0xf]
      %v1419 = vld [vmem:[%s1408 + $0x28] sm:$0xf]
      %v1420 = vld [vmem:[%s1408 + $0x2c] sm:$0xf]
      %v1421 = vld [vmem:[%s1408 + $0x30] sm:$0xf]
      %v1422 = vld [vmem:[%s1408 + $0x34] sm:$0xf]
      %v1423 = vld [vmem:[%s1408 + $0x38] sm:$0xf]
      %v1424 = vld [vmem:[%s1408 + $0x3c] sm:$0xf]
      %v1425 = vunpack.c.l.b16 %v1299
      %v1426 = vunpack.c.l.b16 %v1302
      %v1427 = vunpack.c.l.b16 %v1306
      %v1428 = vunpack.c.l.b16 %v1309
      %v1429 = vunpack.c.l.b16 %v1313
      %v1430 = vunpack.c.l.b16 %v1316
      %v1431 = vunpack.c.l.b16 %v1320
      %v1432 = vunpack.c.l.b16 %v1323
      %v1433 = vunpack.c.l.b16 %v1327
      %v1434 = vunpack.c.l.b16 %v1330
      %v1435 = vunpack.c.l.b16 %v1334
      %v1436 = vunpack.c.l.b16 %v1337
      %v1437 = vunpack.c.l.b16 %v1341
      %v1438 = vunpack.c.l.b16 %v1344
      %v1439 = vunpack.c.l.b16 %v1348
      %v1440 = vunpack.c.l.b16 %v1351
      %v1441 = vunpack.c.l.b16 %v1355
      %v1442 = vunpack.c.l.b16 %v1358
      %v1443 = vunpack.c.l.b16 %v1362
      %v1444 = vunpack.c.l.b16 %v1365
      %v1445 = vunpack.c.l.b16 %v1369
      %v1446 = vunpack.c.l.b16 %v1372
      %v1447 = vunpack.c.l.b16 %v1376
      %v1448 = vunpack.c.l.b16 %v1379
      %v1449 = vunpack.c.l.b16 %v1383
      %v1450 = vunpack.c.l.b16 %v1386
      %v1451 = vunpack.c.l.b16 %v1390
      %v1452 = vunpack.c.l.b16 %v1393
      %v1453 = vunpack.c.l.b16 %v1397
      %v1454 = vunpack.c.l.b16 %v1400
      %v1455 = vunpack.c.l.b16 %v1404
      %v1456 = vunpack.c.l.b16 %v1407
      %v1457 = vpack.c.b16 %v1426, %v1425
      %v1458 = vpack.c.b16 %v1428, %v1427
      %v1459 = vpack.c.b16 %v1430, %v1429
      %v1460 = vpack.c.b16 %v1432, %v1431
      %v1461 = vpack.c.b16 %v1434, %v1433
      %v1462 = vpack.c.b16 %v1436, %v1435
      %v1463 = vpack.c.b16 %v1438, %v1437
      %v1464 = vpack.c.b16 %v1440, %v1439
      %v1465 = vpack.c.b16 %v1442, %v1441
      %v1466 = vpack.c.b16 %v1444, %v1443
      %v1467 = vpack.c.b16 %v1446, %v1445
      %v1468 = vpack.c.b16 %v1448, %v1447
      %v1469 = vpack.c.b16 %v1450, %v1449
      %v1470 = vpack.c.b16 %v1452, %v1451
      %v1471 = vpack.c.b16 %v1454, %v1453
      %v1472 = vpack.c.b16 %v1456, %v1455
      %v1505 = vunpack.c.l.b16 %v1409
      %v1506 = vunpack.c.l.b16 %v1410
      %v1507 = vunpack.c.l.b16 %v1411
      %v1508 = vunpack.c.l.b16 %v1412
      %v1509 = vunpack.c.l.b16 %v1413
      %v1510 = vunpack.c.l.b16 %v1414
      %v1511 = vunpack.c.l.b16 %v1415
      %v1512 = vunpack.c.l.b16 %v1416
      %v1513 = vunpack.c.l.b16 %v1417
      %v1514 = vunpack.c.l.b16 %v1418
      %v1515 = vunpack.c.l.b16 %v1419
      %v1516 = vunpack.c.l.b16 %v1420
      %v1517 = vunpack.c.l.b16 %v1421
      %v1518 = vunpack.c.l.b16 %v1422
      %v1519 = vunpack.c.l.b16 %v1423
      %v1520 = vunpack.c.l.b16 %v1424
      %v1521 = vpack.c.b16 %v1506, %v1505
      %v1522 = vpack.c.b16 %v1508, %v1507
      %v1523 = vpack.c.b16 %v1510, %v1509
      %v1524 = vpack.c.b16 %v1512, %v1511
      %v1525 = vpack.c.b16 %v1514, %v1513
      %v1526 = vpack.c.b16 %v1516, %v1515
      %v1527 = vpack.c.b16 %v1518, %v1517
      %v1528 = vpack.c.b16 %v1520, %v1519
      %1537 = vmatprep.subr.bf16.mxu0 0
      %1538 = vmatpush1.bf16.msra.mxu0 %v1521
      %1539 = vmatprep.subr.bf16.mxu0 0
      %1540 = vmatpush1.bf16.msra.mxu0 %v1522
      %1541 = vmatprep.subr.bf16.mxu0 0
      %1542 = vmatpush1.bf16.msra.mxu0 %v1523
      %1543 = vmatprep.subr.bf16.mxu0 0
      %1544 = vmatpush1.bf16.msra.mxu0 %v1524
      %1545 = vmatprep.subr.bf16.mxu0 0
      %1546 = vmatpush1.bf16.msra.mxu0 %v1525
      %1547 = vmatprep.subr.bf16.mxu0 0
      %1548 = vmatpush1.bf16.msra.mxu0 %v1526
      %1549 = vmatprep.subr.bf16.mxu0 0
      %1550 = vmatpush1.bf16.msra.mxu0 %v1527
      %1551 = vmatprep.subr.bf16.mxu0 0
      %1552 = vmatpush1.bf16.msra.mxu0 %v1528
      %1553 = vmatprep.subr.bf16.mxu0 0
      %1554 = vmatpush1.bf16.msra.mxu0 0
      %1555 = vmatprep.subr.bf16.mxu0 0
      %1556 = vmatpush1.bf16.msra.mxu0 0
      %1557 = vmatprep.subr.bf16.mxu0 0
      %1558 = vmatpush1.bf16.msra.mxu0 0
      %1559 = vmatprep.subr.bf16.mxu0 0
      %1560 = vmatpush1.bf16.msra.mxu0 0
      %1561 = vmatprep.subr.bf16.mxu0 0
      %1562 = vmatpush1.bf16.msra.mxu0 0
      %1563 = vmatprep.subr.bf16.mxu0 0
      %1564 = vmatpush1.bf16.msra.mxu0 0
      %1565 = vmatprep.subr.bf16.mxu0 0
      %1566 = vmatpush1.bf16.msra.mxu0 0
      %1567 = vmatprep.subr.bf16.mxu0 0
      %1568 = vmatpush1.bf16.msra.mxu0 0
      %1569 = vmatprep.mubr.bf16.mxu0 0
      %1570 = vmatmul.mubr.bf16.gmra.mrb[0].mxu0 %v1457
      %v1571 = vpop.f32.mrb[0].mxu0
      %v1572 = vadd.f32 0.0, %v1571
      %v1573 = vpop.f32.mrb[0].mxu0
      %v1574 = vpop.f32.mrb[0].mxu0
      %v1575 = vadd.f32 0.0, %v1574
      %v1576 = vpop.f32.mrb[0].mxu0
      %1577 = vmatprep.mubr.bf16.mxu0 0
      %1578 = vmatmul.mubr.bf16.gmra.mrb[0].mxu0 %v1458
      %v1579 = vpop.f32.mrb[0].mxu0
      %v1580 = vadd.f32 0.0, %v1579
      %v1581 = vpop.f32.mrb[0].mxu0
      %v1582 = vpop.f32.mrb[0].mxu0
      %v1583 = vadd.f32 0.0, %v1582
      %v1584 = vpop.f32.mrb[0].mxu0
      %1585 = vmatprep.mubr.bf16.mxu0 0
      %1586 = vmatmul.mubr.bf16.gmra.mrb[0].mxu0 %v1459
      %v1587 = vpop.f32.mrb[0].mxu0
      %v1588 = vadd.f32 0.0, %v1587
      %v1589 = vpop.f32.mrb[0].mxu0
      %v1590 = vpop.f32.mrb[0].mxu0
      %v1591 = vadd.f32 0.0, %v1590
      %v1592 = vpop.f32.mrb[0].mxu0
      %1593 = vmatprep.mubr.bf16.mxu0 0
      %1594 = vmatmul.mubr.bf16.gmra.mrb[0].mxu0 %v1460
      %v1595 = vpop.f32.mrb[0].mxu0
      %v1596 = vadd.f32 0.0, %v1595
      %v1597 = vpop.f32.mrb[0].mxu0
      %v1598 = vpop.f32.mrb[0].mxu0
      %v1599 = vadd.f32 0.0, %v1598
      %v1600 = vpop.f32.mrb[0].mxu0
      %1601 = vmatprep.mubr.bf16.mxu0 0
      %1602 = vmatmul.mubr.bf16.gmra.mrb[0].mxu0 %v1461
      %v1603 = vpop.f32.mrb[0].mxu0
      %v1604 = vadd.f32 0.0, %v1603
      %v1605 = vpop.f32.mrb[0].mxu0
      %v1606 = vpop.f32.mrb[0].mxu0
      %v1607 = vadd.f32 0.0, %v1606
      %v1608 = vpop.f32.mrb[0].mxu0
      %1609 = vmatprep.mubr.bf16.mxu0 0
      %1610 = vmatmul.mubr.bf16.gmra.mrb[0].mxu0 %v1462
      %v1611 = vpop.f32.mrb[0].mxu0
      %v1612 = vadd.f32 0.0, %v1611
      %v1613 = vpop.f32.mrb[0].mxu0
      %v1614 = vpop.f32.mrb[0].mxu0
      %v1615 = vadd.f32 0.0, %v1614
      %v1616 = vpop.f32.mrb[0].mxu0
      %1617 = vmatprep.mubr.bf16.mxu0 0
      %1618 = vmatmul.mubr.bf16.gmra.mrb[0].mxu0 %v1463
      %v1619 = vpop.f32.mrb[0].mxu0
      %v1620 = vadd.f32 0.0, %v1619
      %v1621 = vpop.f32.mrb[0].mxu0
      %v1622 = vpop.f32.mrb[0].mxu0
      %v1623 = vadd.f32 0.0, %v1622
      %v1624 = vpop.f32.mrb[0].mxu0
      %1625 = vmatprep.mubr.bf16.mxu0 0
      %1626 = vmatmul.mubr.bf16.gmra.mrb[0].mxu0 %v1464
      %v1627 = vpop.f32.mrb[0].mxu0
      %v1628 = vadd.f32 0.0, %v1627
      %v1629 = vpop.f32.mrb[0].mxu0
      %v1630 = vpop.f32.mrb[0].mxu0
      %v1631 = vadd.f32 0.0, %v1630
      %v1632 = vpop.f32.mrb[0].mxu0
      %1633 = vmatprep.mubr.bf16.mxu0 0
      %1634 = vmatmul.mubr.bf16.gmra.mrb[0].mxu0 %v1465
      %v1635 = vpop.f32.mrb[0].mxu0
      %v1636 = vadd.f32 0.0, %v1635
      %v1637 = vpop.f32.mrb[0].mxu0
      %v1638 = vpop.f32.mrb[0].mxu0
      %v1639 = vadd.f32 0.0, %v1638
      %v1640 = vpop.f32.mrb[0].mxu0
      %1641 = vmatprep.mubr.bf16.mxu0 0
      %1642 = vmatmul.mubr.bf16.gmra.mrb[0].mxu0 %v1466
      %v1643 = vpop.f32.mrb[0].mxu0
      %v1644 = vadd.f32 0.0, %v1643
      %v1645 = vpop.f32.mrb[0].mxu0
      %v1646 = vpop.f32.mrb[0].mxu0
      %v1647 = vadd.f32 0.0, %v1646
      %v1648 = vpop.f32.mrb[0].mxu0
      %1649 = vmatprep.mubr.bf16.mxu0 0
      %1650 = vmatmul.mubr.bf16.gmra.mrb[0].mxu0 %v1467
      %v1651 = vpop.f32.mrb[0].mxu0
      %v1652 = vadd.f32 0.0, %v1651
      %v1653 = vpop.f32.mrb[0].mxu0
      %v1654 = vpop.f32.mrb[0].mxu0
      %v1655 = vadd.f32 0.0, %v1654
      %v1656 = vpop.f32.mrb[0].mxu0
      %1657 = vmatprep.mubr.bf16.mxu0 0
      %1658 = vmatmul.mubr.bf16.gmra.mrb[0].mxu0 %v1468
      %v1659 = vpop.f32.mrb[0].mxu0
      %v1660 = vadd.f32 0.0, %v1659
      %v1661 = vpop.f32.mrb[0].mxu0
      %v1662 = vpop.f32.mrb[0].mxu0
      %v1663 = vadd.f32 0.0, %v1662
      %v1664 = vpop.f32.mrb[0].mxu0
      %1665 = vmatprep.mubr.bf16.mxu0 0
      %1666 = vmatmul.mubr.bf16.gmra.mrb[0].mxu0 %v1469
      %v1667 = vpop.f32.mrb[0].mxu0
      %v1668 = vadd.f32 0.0, %v1667
      %v1669 = vpop.f32.mrb[0].mxu0
      %v1670 = vpop.f32.mrb[0].mxu0
      %v1671 = vadd.f32 0.0, %v1670
      %v1672 = vpop.f32.mrb[0].mxu0
      %1673 = vmatprep.mubr.bf16.mxu0 0
      %1674 = vmatmul.mubr.bf16.gmra.mrb[0].mxu0 %v1470
      %v1675 = vpop.f32.mrb[0].mxu0
      %v1676 = vadd.f32 0.0, %v1675
      %v1677 = vpop.f32.mrb[0].mxu0
      %v1678 = vpop.f32.mrb[0].mxu0
      %v1679 = vadd.f32 0.0, %v1678
      %v1680 = vpop.f32.mrb[0].mxu0
      %1681 = vmatprep.mubr.bf16.mxu0 0
      %1682 = vmatmul.mubr.bf16.gmra.mrb[0].mxu0 %v1471
      %v1683 = vpop.f32.mrb[0].mxu0
      %v1684 = vadd.f32 0.0, %v1683
      %v1685 = vpop.f32.mrb[0].mxu0
      %v1686 = vpop.f32.mrb[0].mxu0
      %v1687 = vadd.f32 0.0, %v1686
      %v1688 = vpop.f32.mrb[0].mxu0
      %1689 = vmatprep.mubr.bf16.mxu0 0
      %1690 = vmatmul.mubr.bf16.gmra.mrb[0].mxu0 %v1472
      %v1691 = vpop.f32.mrb[0].mxu0
      %v1692 = vadd.f32 0.0, %v1691
      %v1693 = vpop.f32.mrb[0].mxu0
      %v1694 = vpop.f32.mrb[0].mxu0
      %v1695 = vadd.f32 0.0, %v1694
      %v1696 = vpop.f32.mrb[0].mxu0
      %1697 = vdwg.mxu0
      %v1698 = vadd.f32 %v1119, %v1572
      %v1699 = vadd.f32 %v1122, %v1575
      %v1700 = vadd.f32 %v1127, %v1580
      %v1701 = vadd.f32 %v1130, %v1583
      %v1702 = vadd.f32 %v1135, %v1588
      %v1703 = vadd.f32 %v1138, %v1591
      %v1704 = vadd.f32 %v1143, %v1596
      %v1705 = vadd.f32 %v1146, %v1599
      %v1706 = vadd.f32 %v1151, %v1604
      %v1707 = vadd.f32 %v1154, %v1607
      %v1708 = vadd.f32 %v1159, %v1612
      %v1709 = vadd.f32 %v1162, %v1615
      %v1710 = vadd.f32 %v1167, %v1620
      %v1711 = vadd.f32 %v1170, %v1623
      %v1712 = vadd.f32 %v1175, %v1628
      %v1713 = vadd.f32 %v1178, %v1631
      %v1714 = vadd.f32 %v1183, %v1636
      %v1715 = vadd.f32 %v1186, %v1639
      %v1716 = vadd.f32 %v1191, %v1644
      %v1717 = vadd.f32 %v1194, %v1647
      %v1718 = vadd.f32 %v1199, %v1652
      %v1719 = vadd.f32 %v1202, %v1655
      %v1720 = vadd.f32 %v1207, %v1660
      %v1721 = vadd.f32 %v1210, %v1663
      %v1722 = vadd.f32 %v1215, %v1668
      %v1723 = vadd.f32 %v1218, %v1671
      %v1724 = vadd.f32 %v1223, %v1676
      %v1725 = vadd.f32 %v1226, %v1679
      %v1726 = vadd.f32 %v1231, %v1684
      %v1727 = vadd.f32 %v1234, %v1687
      %v1728 = vadd.f32 %v1239, %v1692
      %v1729 = vadd.f32 %v1242, %v1695
      %s1730 = scalar_lea.vmem %s192, 12
      %v1731 = vld [vmem:[%s1730] sm:$0xf]
      %v1732 = vld [vmem:[%s1730 + $0x4] sm:$0xf]
      %v1733 = vld [vmem:[%s1730 + $0xc] sm:$0xf]
      %v1734 = vld [vmem:[%s1730 + $0x10] sm:$0xf]
      %v1735 = vld [vmem:[%s1730 + $0x18] sm:$0xf]
      %v1736 = vld [vmem:[%s1730 + $0x1c] sm:$0xf]
      %v1737 = vld [vmem:[%s1730 + $0x24] sm:$0xf]
      %v1738 = vld [vmem:[%s1730 + $0x28] sm:$0xf]
      %v1739 = vld [vmem:[%s1730 + $0x30] sm:$0xf]
      %v1740 = vld [vmem:[%s1730 + $0x34] sm:$0xf]
      %v1741 = vld [vmem:[%s1730 + $0x3c] sm:$0xf]
      %v1742 = vld [vmem:[%s1730 + $0x40] sm:$0xf]
      %v1743 = vld [vmem:[%s1730 + $0x48] sm:$0xf]
      %v1744 = vld [vmem:[%s1730 + $0x4c] sm:$0xf]
      %v1745 = vld [vmem:[%s1730 + $0x54] sm:$0xf]
      %v1746 = vld [vmem:[%s1730 + $0x58] sm:$0xf]
      %v1747 = vld [vmem:[%s1730 + $0x60] sm:$0xf]
      %v1748 = vld [vmem:[%s1730 + $0x64] sm:$0xf]
      %v1749 = vld [vmem:[%s1730 + $0x6c] sm:$0xf]
      %v1750 = vld [vmem:[%s1730 + $0x70] sm:$0xf]
      %v1751 = vld [vmem:[%s1730 + $0x78] sm:$0xf]
      %v1752 = vld [vmem:[%s1730 + $0x7c] sm:$0xf]
      %v1753 = vld [vmem:[%s1730 + $0x84] sm:$0xf]
      %v1754 = vld [vmem:[%s1730 + $0x88] sm:$0xf]
      %v1755 = vld [vmem:[%s1730 + $0x90] sm:$0xf]
      %v1756 = vld [vmem:[%s1730 + $0x94] sm:$0xf]
      %v1757 = vld [vmem:[%s1730 + $0x9c] sm:$0xf]
      %v1758 = vld [vmem:[%s1730 + $0xa0] sm:$0xf]
      %v1759 = vld [vmem:[%s1730 + $0xa8] sm:$0xf]
      %v1760 = vld [vmem:[%s1730 + $0xac] sm:$0xf]
      %v1761 = vld [vmem:[%s1730 + $0xb4] sm:$0xf]
      %v1762 = vld [vmem:[%s1730 + $0xb8] sm:$0xf]
      %s1763 = scalar_lea.vmem %s1, 192
      %v1764 = vld [vmem:[%s1763] sm:$0xf]
      %v1765 = vld [vmem:[%s1763 + $0x4] sm:$0xf]
      %v1766 = vld [vmem:[%s1763 + $0x8] sm:$0xf]
      %v1767 = vld [vmem:[%s1763 + $0xc] sm:$0xf]
      %v1768 = vld [vmem:[%s1763 + $0x10] sm:$0xf]
      %v1769 = vld [vmem:[%s1763 + $0x14] sm:$0xf]
      %v1770 = vld [vmem:[%s1763 + $0x18] sm:$0xf]
      %v1771 = vld [vmem:[%s1763 + $0x1c] sm:$0xf]
      %v1772 = vld [vmem:[%s1763 + $0x20] sm:$0xf]
      %v1773 = vld [vmem:[%s1763 + $0x24] sm:$0xf]
      %v1774 = vld [vmem:[%s1763 + $0x28] sm:$0xf]
      %v1775 = vld [vmem:[%s1763 + $0x2c] sm:$0xf]
      %v1776 = vld [vmem:[%s1763 + $0x30] sm:$0xf]
      %v1777 = vld [vmem:[%s1763 + $0x34] sm:$0xf]
      %v1778 = vld [vmem:[%s1763 + $0x38] sm:$0xf]
      %v1779 = vld [vmem:[%s1763 + $0x3c] sm:$0xf]
      %v1812 = vunpack.c.l.b16 %v1731
      %v1813 = vunpack.c.l.b16 %v1732
      %v1814 = vunpack.c.l.b16 %v1733
      %v1815 = vunpack.c.l.b16 %v1734
      %v1816 = vunpack.c.l.b16 %v1735
      %v1817 = vunpack.c.l.b16 %v1736
      %v1818 = vunpack.c.l.b16 %v1737
      %v1819 = vunpack.c.l.b16 %v1738
      %v1820 = vunpack.c.l.b16 %v1739
      %v1821 = vunpack.c.l.b16 %v1740
      %v1822 = vunpack.c.l.b16 %v1741
      %v1823 = vunpack.c.l.b16 %v1742
      %v1824 = vunpack.c.l.b16 %v1743
      %v1825 = vunpack.c.l.b16 %v1744
      %v1826 = vunpack.c.l.b16 %v1745
      %v1827 = vunpack.c.l.b16 %v1746
      %v1828 = vunpack.c.l.b16 %v1747
      %v1829 = vunpack.c.l.b16 %v1748
      %v1830 = vunpack.c.l.b16 %v1749
      %v1831 = vunpack.c.l.b16 %v1750
      %v1832 = vunpack.c.l.b16 %v1751
      %v1833 = vunpack.c.l.b16 %v1752
      %v1834 = vunpack.c.l.b16 %v1753
      %v1835 = vunpack.c.l.b16 %v1754
      %v1836 = vunpack.c.l.b16 %v1755
      %v1837 = vunpack.c.l.b16 %v1756
      %v1838 = vunpack.c.l.b16 %v1757
      %v1839 = vunpack.c.l.b16 %v1758
      %v1840 = vunpack.c.l.b16 %v1759
      %v1841 = vunpack.c.l.b16 %v1760
      %v1842 = vunpack.c.l.b16 %v1761
      %v1843 = vunpack.c.l.b16 %v1762
      %v1844 = vpack.c.b16 %v1813, %v1812
      %v1845 = vpack.c.b16 %v1815, %v1814
      %v1846 = vpack.c.b16 %v1817, %v1816
      %v1847 = vpack.c.b16 %v1819, %v1818
      %v1848 = vpack.c.b16 %v1821, %v1820
      %v1849 = vpack.c.b16 %v1823, %v1822
      %v1850 = vpack.c.b16 %v1825, %v1824
      %v1851 = vpack.c.b16 %v1827, %v1826
      %v1852 = vpack.c.b16 %v1829, %v1828
      %v1853 = vpack.c.b16 %v1831, %v1830
      %v1854 = vpack.c.b16 %v1833, %v1832
      %v1855 = vpack.c.b16 %v1835, %v1834
      %v1856 = vpack.c.b16 %v1837, %v1836
      %v1857 = vpack.c.b16 %v1839, %v1838
      %v1858 = vpack.c.b16 %v1841, %v1840
      %v1859 = vpack.c.b16 %v1843, %v1842
      %v1892 = vunpack.c.l.b16 %v1764
      %v1893 = vunpack.c.l.b16 %v1765
      %v1894 = vunpack.c.l.b16 %v1766
      %v1895 = vunpack.c.l.b16 %v1767
      %v1896 = vunpack.c.l.b16 %v1768
      %v1897 = vunpack.c.l.b16 %v1769
      %v1898 = vunpack.c.l.b16 %v1770
      %v1899 = vunpack.c.l.b16 %v1771
      %v1900 = vunpack.c.l.b16 %v1772
      %v1901 = vunpack.c.l.b16 %v1773
      %v1902 = vunpack.c.l.b16 %v1774
      %v1903 = vunpack.c.l.b16 %v1775
      %v1904 = vunpack.c.l.b16 %v1776
      %v1905 = vunpack.c.l.b16 %v1777
      %v1906 = vunpack.c.l.b16 %v1778
      %v1907 = vunpack.c.l.b16 %v1779
      %v1908 = vpack.c.b16 %v1893, %v1892
      %v1909 = vpack.c.b16 %v1895, %v1894
      %v1910 = vpack.c.b16 %v1897, %v1896
      %v1911 = vpack.c.b16 %v1899, %v1898
      %v1912 = vpack.c.b16 %v1901, %v1900
      %v1913 = vpack.c.b16 %v1903, %v1902
      %v1914 = vpack.c.b16 %v1905, %v1904
      %v1915 = vpack.c.b16 %v1907, %v1906
      %1924 = vmatprep.subr.bf16.mxu0 0
      %1925 = vmatpush1.bf16.msra.mxu0 %v1908
      %1926 = vmatprep.subr.bf16.mxu0 0
      %1927 = vmatpush1.bf16.msra.mxu0 %v1909
      %1928 = vmatprep.subr.bf16.mxu0 0
      %1929 = vmatpush1.bf16.msra.mxu0 %v1910
      %1930 = vmatprep.subr.bf16.mxu0 0
      %1931 = vmatpush1.bf16.msra.mxu0 %v1911
      %1932 = vmatprep.subr.bf16.mxu0 0
      %1933 = vmatpush1.bf16.msra.mxu0 %v1912
      %1934 = vmatprep.subr.bf16.mxu0 0
      %1935 = vmatpush1.bf16.msra.mxu0 %v1913
      %1936 = vmatprep.subr.bf16.mxu0 0
      %1937 = vmatpush1.bf16.msra.mxu0 %v1914
      %1938 = vmatprep.subr.bf16.mxu0 0
      %1939 = vmatpush1.bf16.msra.mxu0 %v1915
      %1940 = vmatprep.subr.bf16.mxu0 0
      %1941 = vmatpush1.bf16.msra.mxu0 0
      %1942 = vmatprep.subr.bf16.mxu0 0
      %1943 = vmatpush1.bf16.msra.mxu0 0
      %1944 = vmatprep.subr.bf16.mxu0 0
      %1945 = vmatpush1.bf16.msra.mxu0 0
      %1946 = vmatprep.subr.bf16.mxu0 0
      %1947 = vmatpush1.bf16.msra.mxu0 0
      %1948 = vmatprep.subr.bf16.mxu0 0
      %1949 = vmatpush1.bf16.msra.mxu0 0
      %1950 = vmatprep.subr.bf16.mxu0 0
      %1951 = vmatpush1.bf16.msra.mxu0 0
      %1952 = vmatprep.subr.bf16.mxu0 0
      %1953 = vmatpush1.bf16.msra.mxu0 0
      %1954 = vmatprep.subr.bf16.mxu0 0
      %1955 = vmatpush1.bf16.msra.mxu0 0
      %1956 = vmatprep.mubr.bf16.mxu0 0
      %1957 = vmatmul.mubr.bf16.gmra.mrb[0].mxu0 %v1844
      %v1958 = vpop.f32.mrb[0].mxu0
      %v1959 = vadd.f32 0.0, %v1958
      %v1960 = vpop.f32.mrb[0].mxu0
      %v1961 = vpop.f32.mrb[0].mxu0
      %v1962 = vadd.f32 0.0, %v1961
      %v1963 = vpop.f32.mrb[0].mxu0
      %1964 = vmatprep.mubr.bf16.mxu0 0
      %1965 = vmatmul.mubr.bf16.gmra.mrb[0].mxu0 %v1845
      %v1966 = vpop.f32.mrb[0].mxu0
      %v1967 = vadd.f32 0.0, %v1966
      %v1968 = vpop.f32.mrb[0].mxu0
      %v1969 = vpop.f32.mrb[0].mxu0
      %v1970 = vadd.f32 0.0, %v1969
      %v1971 = vpop.f32.mrb[0].mxu0
      %1972 = vmatprep.mubr.bf16.mxu0 0
      %1973 = vmatmul.mubr.bf16.gmra.mrb[0].mxu0 %v1846
      %v1974 = vpop.f32.mrb[0].mxu0
      %v1975 = vadd.f32 0.0, %v1974
      %v1976 = vpop.f32.mrb[0].mxu0
      %v1977 = vpop.f32.mrb[0].mxu0
      %v1978 = vadd.f32 0.0, %v1977
      %v1979 = vpop.f32.mrb[0].mxu0
      %1980 = vmatprep.mubr.bf16.mxu0 0
      %1981 = vmatmul.mubr.bf16.gmra.mrb[0].mxu0 %v1847
      %v1982 = vpop.f32.mrb[0].mxu0
      %v1983 = vadd.f32 0.0, %v1982
      %v1984 = vpop.f32.mrb[0].mxu0
      %v1985 = vpop.f32.mrb[0].mxu0
      %v1986 = vadd.f32 0.0, %v1985
      %v1987 = vpop.f32.mrb[0].mxu0
      %1988 = vmatprep.mubr.bf16.mxu0 0
      %1989 = vmatmul.mubr.bf16.gmra.mrb[0].mxu0 %v1848
      %v1990 = vpop.f32.mrb[0].mxu0
      %v1991 = vadd.f32 0.0, %v1990
      %v1992 = vpop.f32.mrb[0].mxu0
      %v1993 = vpop.f32.mrb[0].mxu0
      %v1994 = vadd.f32 0.0, %v1993
      %v1995 = vpop.f32.mrb[0].mxu0
      %1996 = vmatprep.mubr.bf16.mxu0 0
      %1997 = vmatmul.mubr.bf16.gmra.mrb[0].mxu0 %v1849
      %v1998 = vpop.f32.mrb[0].mxu0
      %v1999 = vadd.f32 0.0, %v1998
      %v2000 = vpop.f32.mrb[0].mxu0
      %v2001 = vpop.f32.mrb[0].mxu0
      %v2002 = vadd.f32 0.0, %v2001
      %v2003 = vpop.f32.mrb[0].mxu0
      %2004 = vmatprep.mubr.bf16.mxu0 0
      %2005 = vmatmul.mubr.bf16.gmra.mrb[0].mxu0 %v1850
      %v2006 = vpop.f32.mrb[0].mxu0
      %v2007 = vadd.f32 0.0, %v2006
      %v2008 = vpop.f32.mrb[0].mxu0
      %v2009 = vpop.f32.mrb[0].mxu0
      %v2010 = vadd.f32 0.0, %v2009
      %v2011 = vpop.f32.mrb[0].mxu0
      %2012 = vmatprep.mubr.bf16.mxu0 0
      %2013 = vmatmul.mubr.bf16.gmra.mrb[0].mxu0 %v1851
      %v2014 = vpop.f32.mrb[0].mxu0
      %v2015 = vadd.f32 0.0, %v2014
      %v2016 = vpop.f32.mrb[0].mxu0
      %v2017 = vpop.f32.mrb[0].mxu0
      %v2018 = vadd.f32 0.0, %v2017
      %v2019 = vpop.f32.mrb[0].mxu0
      %2020 = vmatprep.mubr.bf16.mxu0 0
      %2021 = vmatmul.mubr.bf16.gmra.mrb[0].mxu0 %v1852
      %v2022 = vpop.f32.mrb[0].mxu0
      %v2023 = vadd.f32 0.0, %v2022
      %v2024 = vpop.f32.mrb[0].mxu0
      %v2025 = vpop.f32.mrb[0].mxu0
      %v2026 = vadd.f32 0.0, %v2025
      %v2027 = vpop.f32.mrb[0].mxu0
      %2028 = vmatprep.mubr.bf16.mxu0 0
      %2029 = vmatmul.mubr.bf16.gmra.mrb[0].mxu0 %v1853
      %v2030 = vpop.f32.mrb[0].mxu0
      %v2031 = vadd.f32 0.0, %v2030
      %v2032 = vpop.f32.mrb[0].mxu0
      %v2033 = vpop.f32.mrb[0].mxu0
      %v2034 = vadd.f32 0.0, %v2033
      %v2035 = vpop.f32.mrb[0].mxu0
      %2036 = vmatprep.mubr.bf16.mxu0 0
      %2037 = vmatmul.mubr.bf16.gmra.mrb[0].mxu0 %v1854
      %v2038 = vpop.f32.mrb[0].mxu0
      %v2039 = vadd.f32 0.0, %v2038
      %v2040 = vpop.f32.mrb[0].mxu0
      %v2041 = vpop.f32.mrb[0].mxu0
      %v2042 = vadd.f32 0.0, %v2041
      %v2043 = vpop.f32.mrb[0].mxu0
      %2044 = vmatprep.mubr.bf16.mxu0 0
      %2045 = vmatmul.mubr.bf16.gmra.mrb[0].mxu0 %v1855
      %v2046 = vpop.f32.mrb[0].mxu0
      %v2047 = vadd.f32 0.0, %v2046
      %v2048 = vpop.f32.mrb[0].mxu0
      %v2049 = vpop.f32.mrb[0].mxu0
      %v2050 = vadd.f32 0.0, %v2049
      %v2051 = vpop.f32.mrb[0].mxu0
      %2052 = vmatprep.mubr.bf16.mxu0 0
      %2053 = vmatmul.mubr.bf16.gmra.mrb[0].mxu0 %v1856
      %v2054 = vpop.f32.mrb[0].mxu0
      %v2055 = vadd.f32 0.0, %v2054
      %v2056 = vpop.f32.mrb[0].mxu0
      %v2057 = vpop.f32.mrb[0].mxu0
      %v2058 = vadd.f32 0.0, %v2057
      %v2059 = vpop.f32.mrb[0].mxu0
      %2060 = vmatprep.mubr.bf16.mxu0 0
      %2061 = vmatmul.mubr.bf16.gmra.mrb[0].mxu0 %v1857
      %v2062 = vpop.f32.mrb[0].mxu0
      %v2063 = vadd.f32 0.0, %v2062
      %v2064 = vpop.f32.mrb[0].mxu0
      %v2065 = vpop.f32.mrb[0].mxu0
      %v2066 = vadd.f32 0.0, %v2065
      %v2067 = vpop.f32.mrb[0].mxu0
      %2068 = vmatprep.mubr.bf16.mxu0 0
      %2069 = vmatmul.mubr.bf16.gmra.mrb[0].mxu0 %v1858
      %v2070 = vpop.f32.mrb[0].mxu0
      %v2071 = vadd.f32 0.0, %v2070
      %v2072 = vpop.f32.mrb[0].mxu0
      %v2073 = vpop.f32.mrb[0].mxu0
      %v2074 = vadd.f32 0.0, %v2073
      %v2075 = vpop.f32.mrb[0].mxu0
      %2076 = vmatprep.mubr.bf16.mxu0 0
      %2077 = vmatmul.mubr.bf16.gmra.mrb[0].mxu0 %v1859
      %v2078 = vpop.f32.mrb[0].mxu0
      %v2079 = vadd.f32 0.0, %v2078
      %v2080 = vpop.f32.mrb[0].mxu0
      %v2081 = vpop.f32.mrb[0].mxu0
      %v2082 = vadd.f32 0.0, %v2081
      %v2083 = vpop.f32.mrb[0].mxu0
      %2084 = vdwg.mxu0
      %v2085 = vadd.f32 %v1698, %v1959
      %v2086 = vadd.f32 %v1699, %v1962
      %v2087 = vadd.f32 %v1700, %v1967
      %v2088 = vadd.f32 %v1701, %v1970
      %v2089 = vadd.f32 %v1702, %v1975
      %v2090 = vadd.f32 %v1703, %v1978
      %v2091 = vadd.f32 %v1704, %v1983
      %v2092 = vadd.f32 %v1705, %v1986
      %v2093 = vadd.f32 %v1706, %v1991
      %v2094 = vadd.f32 %v1707, %v1994
      %v2095 = vadd.f32 %v1708, %v1999
      %v2096 = vadd.f32 %v1709, %v2002
      %v2097 = vadd.f32 %v1710, %v2007
      %v2098 = vadd.f32 %v1711, %v2010
      %v2099 = vadd.f32 %v1712, %v2015
      %v2100 = vadd.f32 %v1713, %v2018
      %v2101 = vadd.f32 %v1714, %v2023
      %v2102 = vadd.f32 %v1715, %v2026
      %v2103 = vadd.f32 %v1716, %v2031
      %v2104 = vadd.f32 %v1717, %v2034
      %v2105 = vadd.f32 %v1718, %v2039
      %v2106 = vadd.f32 %v1719, %v2042
      %v2107 = vadd.f32 %v1720, %v2047
      %v2108 = vadd.f32 %v1721, %v2050
      %v2109 = vadd.f32 %v1722, %v2055
      %v2110 = vadd.f32 %v1723, %v2058
      %v2111 = vadd.f32 %v1724, %v2063
      %v2112 = vadd.f32 %v1725, %v2066
      %v2113 = vadd.f32 %v1726, %v2071
      %v2114 = vadd.f32 %v1727, %v2074
      %v2115 = vadd.f32 %v1728, %v2079
      %v2116 = vadd.f32 %v1729, %v2082
      %v2117 = vld [vmem:[%s1730] sm:$0xf]
      %v2118 = vld [vmem:[%s1730 + $0x4] sm:$0xf]
      %v2119 = vld [vmem:[%s1730 + $0x8] sm:$0x1]
      %v2120 = vld [vmem:[%s1730 + $0xc] sm:$0xf]
      %v2121 = vld [vmem:[%s1730 + $0x10] sm:$0xf]
      %v2122 = vld [vmem:[%s1730 + $0x14] sm:$0x1]
      %v2123 = vld [vmem:[%s1730 + $0x18] sm:$0xf]
      %v2124 = vld [vmem:[%s1730 + $0x1c] sm:$0xf]
      %v2125 = vld [vmem:[%s1730 + $0x20] sm:$0x1]
      %v2126 = vld [vmem:[%s1730 + $0x24] sm:$0xf]
      %v2127 = vld [vmem:[%s1730 + $0x28] sm:$0xf]
      %v2128 = vld [vmem:[%s1730 + $0x2c] sm:$0x1]
      %v2129 = vld [vmem:[%s1730 + $0x30] sm:$0xf]
      %v2130 = vld [vmem:[%s1730 + $0x34] sm:$0xf]
      %v2131 = vld [vmem:[%s1730 + $0x38] sm:$0x1]
      %v2132 = vld [vmem:[%s1730 + $0x3c] sm:$0xf]
      %v2133 = vld [vmem:[%s1730 + $0x40] sm:$0xf]
      %v2134 = vld [vmem:[%s1730 + $0x44] sm:$0x1]
      %v2135 = vld [vmem:[%s1730 + $0x48] sm:$0xf]
      %v2136 = vld [vmem:[%s1730 + $0x4c] sm:$0xf]
      %v2137 = vld [vmem:[%s1730 + $0x50] sm:$0x1]
      %v2138 = vld [vmem:[%s1730 + $0x54] sm:$0xf]
      %v2139 = vld [vmem:[%s1730 + $0x58] sm:$0xf]
      %v2140 = vld [vmem:[%s1730 + $0x5c] sm:$0x1]
      %v2141 = vld [vmem:[%s1730 + $0x60] sm:$0xf]
      %v2142 = vld [vmem:[%s1730 + $0x64] sm:$0xf]
      %v2143 = vld [vmem:[%s1730 + $0x68] sm:$0x1]
      %v2144 = vld [vmem:[%s1730 + $0x6c] sm:$0xf]
      %v2145 = vld [vmem:[%s1730 + $0x70] sm:$0xf]
      %v2146 = vld [vmem:[%s1730 + $0x74] sm:$0x1]
      %v2147 = vld [vmem:[%s1730 + $0x78] sm:$0xf]
      %v2148 = vld [vmem:[%s1730 + $0x7c] sm:$0xf]
      %v2149 = vld [vmem:[%s1730 + $0x80] sm:$0x1]
      %v2150 = vld [vmem:[%s1730 + $0x84] sm:$0xf]
      %v2151 = vld [vmem:[%s1730 + $0x88] sm:$0xf]
      %v2152 = vld [vmem:[%s1730 + $0x8c] sm:$0x1]
      %v2153 = vld [vmem:[%s1730 + $0x90] sm:$0xf]
      %v2154 = vld [vmem:[%s1730 + $0x94] sm:$0xf]
      %v2155 = vld [vmem:[%s1730 + $0x98] sm:$0x1]
      %v2156 = vld [vmem:[%s1730 + $0x9c] sm:$0xf]
      %v2157 = vld [vmem:[%s1730 + $0xa0] sm:$0xf]
      %v2158 = vld [vmem:[%s1730 + $0xa4] sm:$0x1]
      %v2159 = vld [vmem:[%s1730 + $0xa8] sm:$0xf]
      %v2160 = vld [vmem:[%s1730 + $0xac] sm:$0xf]
      %v2161 = vld [vmem:[%s1730 + $0xb0] sm:$0x1]
      %v2162 = vld [vmem:[%s1730 + $0xb4] sm:$0xf]
      %v2163 = vld [vmem:[%s1730 + $0xb8] sm:$0xf]
      %v2164 = vld [vmem:[%s1730 + $0xbc] sm:$0x1]
      %v2166 = vshrl.u32 %v2117, 16
      %v2168 = vrot.slane %v2166, 4
      %v2169 = vshll.u32 %v2117, 16
      %v2171 = vrot.slane %v2169, 5
      %v2172 = vor.u32 %v2168, %v2171
      %v2173 = vrot.slane %v2172, 4
      %v2175 = vshll.u32 %v2118, 16
      %v2177 = vrot.slane %v2175, 5
      %v2178 = vsel %vm265, %v2173, %v2177
      %v2179 = vshrl.u32 %v2118, 16
      %v2181 = vrot.slane %v2179, 4
      %v2182 = vor.u32 %v2181, %v2177
      %v2183 = vrot.slane %v2182, 4
      %v2185 = vshll.u32 %v2119, 16
      %v2187 = vrot.slane %v2185, 5
      %v2188 = vsel %vm265, %v2183, %v2187
      %v2190 = vshrl.u32 %v2120, 16
      %v2192 = vrot.slane %v2190, 4
      %v2193 = vshll.u32 %v2120, 16
      %v2195 = vrot.slane %v2193, 5
      %v2196 = vor.u32 %v2192, %v2195
      %v2197 = vrot.slane %v2196, 4
      %v2199 = vshll.u32 %v2121, 16
      %v2201 = vrot.slane %v2199, 5
      %v2202 = vsel %vm265, %v2197, %v2201
      %v2203 = vshrl.u32 %v2121, 16
      %v2205 = vrot.slane %v2203, 4
      %v2206 = vor.u32 %v2205, %v2201
      %v2207 = vrot.slane %v2206, 4
      %v2209 = vshll.u32 %v2122, 16
      %v2211 = vrot.slane %v2209, 5
      %v2212 = vsel %vm265, %v2207, %v2211
      %v2214 = vshrl.u32 %v2123, 16
      %v2216 = vrot.slane %v2214, 4
      %v2217 = vshll.u32 %v2123, 16
      %v2219 = vrot.slane %v2217, 5
      %v2220 = vor.u32 %v2216, %v2219
      %v2221 = vrot.slane %v2220, 4
      %v2223 = vshll.u32 %v2124, 16
      %v2225 = vrot.slane %v2223, 5
      %v2226 = vsel %vm265, %v2221, %v2225
      %v2227 = vshrl.u32 %v2124, 16
      %v2229 = vrot.slane %v2227, 4
      %v2230 = vor.u32 %v2229, %v2225
      %v2231 = vrot.slane %v2230, 4
      %v2233 = vshll.u32 %v2125, 16
      %v2235 = vrot.slane %v2233, 5
      %v2236 = vsel %vm265, %v2231, %v2235
      %v2238 = vshrl.u32 %v2126, 16
      %v2240 = vrot.slane %v2238, 4
      %v2241 = vshll.u32 %v2126, 16
      %v2243 = vrot.slane %v2241, 5
      %v2244 = vor.u32 %v2240, %v2243
      %v2245 = vrot.slane %v2244, 4
      %v2247 = vshll.u32 %v2127, 16
      %v2249 = vrot.slane %v2247, 5
      %v2250 = vsel %vm265, %v2245, %v2249
      %v2251 = vshrl.u32 %v2127, 16
      %v2253 = vrot.slane %v2251, 4
      %v2254 = vor.u32 %v2253, %v2249
      %v2255 = vrot.slane %v2254, 4
      %v2257 = vshll.u32 %v2128, 16
      %v2259 = vrot.slane %v2257, 5
      %v2260 = vsel %vm265, %v2255, %v2259
      %v2262 = vshrl.u32 %v2129, 16
      %v2264 = vrot.slane %v2262, 4
      %v2265 = vshll.u32 %v2129, 16
      %v2267 = vrot.slane %v2265, 5
      %v2268 = vor.u32 %v2264, %v2267
      %v2269 = vrot.slane %v2268, 4
      %v2271 = vshll.u32 %v2130, 16
      %v2273 = vrot.slane %v2271, 5
      %v2274 = vsel %vm265, %v2269, %v2273
      %v2275 = vshrl.u32 %v2130, 16
      %v2277 = vrot.slane %v2275, 4
      %v2278 = vor.u32 %v2277, %v2273
      %v2279 = vrot.slane %v2278, 4
      %v2281 = vshll.u32 %v2131, 16
      %v2283 = vrot.slane %v2281, 5
      %v2284 = vsel %vm265, %v2279, %v2283
      %v2286 = vshrl.u32 %v2132, 16
      %v2288 = vrot.slane %v2286, 4
      %v2289 = vshll.u32 %v2132, 16
      %v2291 = vrot.slane %v2289, 5
      %v2292 = vor.u32 %v2288, %v2291
      %v2293 = vrot.slane %v2292, 4
      %v2295 = vshll.u32 %v2133, 16
      %v2297 = vrot.slane %v2295, 5
      %v2298 = vsel %vm265, %v2293, %v2297
      %v2299 = vshrl.u32 %v2133, 16
      %v2301 = vrot.slane %v2299, 4
      %v2302 = vor.u32 %v2301, %v2297
      %v2303 = vrot.slane %v2302, 4
      %v2305 = vshll.u32 %v2134, 16
      %v2307 = vrot.slane %v2305, 5
      %v2308 = vsel %vm265, %v2303, %v2307
      %v2310 = vshrl.u32 %v2135, 16
      %v2312 = vrot.slane %v2310, 4
      %v2313 = vshll.u32 %v2135, 16
      %v2315 = vrot.slane %v2313, 5
      %v2316 = vor.u32 %v2312, %v2315
      %v2317 = vrot.slane %v2316, 4
      %v2319 = vshll.u32 %v2136, 16
      %v2321 = vrot.slane %v2319, 5
      %v2322 = vsel %vm265, %v2317, %v2321
      %v2323 = vshrl.u32 %v2136, 16
      %v2325 = vrot.slane %v2323, 4
      %v2326 = vor.u32 %v2325, %v2321
      %v2327 = vrot.slane %v2326, 4
      %v2329 = vshll.u32 %v2137, 16
      %v2331 = vrot.slane %v2329, 5
      %v2332 = vsel %vm265, %v2327, %v2331
      %v2334 = vshrl.u32 %v2138, 16
      %v2336 = vrot.slane %v2334, 4
      %v2337 = vshll.u32 %v2138, 16
      %v2339 = vrot.slane %v2337, 5
      %v2340 = vor.u32 %v2336, %v2339
      %v2341 = vrot.slane %v2340, 4
      %v2343 = vshll.u32 %v2139, 16
      %v2345 = vrot.slane %v2343, 5
      %v2346 = vsel %vm265, %v2341, %v2345
      %v2347 = vshrl.u32 %v2139, 16
      %v2349 = vrot.slane %v2347, 4
      %v2350 = vor.u32 %v2349, %v2345
      %v2351 = vrot.slane %v2350, 4
      %v2353 = vshll.u32 %v2140, 16
      %v2355 = vrot.slane %v2353, 5
      %v2356 = vsel %vm265, %v2351, %v2355
      %v2358 = vshrl.u32 %v2141, 16
      %v2360 = vrot.slane %v2358, 4
      %v2361 = vshll.u32 %v2141, 16
      %v2363 = vrot.slane %v2361, 5
      %v2364 = vor.u32 %v2360, %v2363
      %v2365 = vrot.slane %v2364, 4
      %v2367 = vshll.u32 %v2142, 16
      %v2369 = vrot.slane %v2367, 5
      %v2370 = vsel %vm265, %v2365, %v2369
      %v2371 = vshrl.u32 %v2142, 16
      %v2373 = vrot.slane %v2371, 4
      %v2374 = vor.u32 %v2373, %v2369
      %v2375 = vrot.slane %v2374, 4
      %v2377 = vshll.u32 %v2143, 16
      %v2379 = vrot.slane %v2377, 5
      %v2380 = vsel %vm265, %v2375, %v2379
      %v2382 = vshrl.u32 %v2144, 16
      %v2384 = vrot.slane %v2382, 4
      %v2385 = vshll.u32 %v2144, 16
      %v2387 = vrot.slane %v2385, 5
      %v2388 = vor.u32 %v2384, %v2387
      %v2389 = vrot.slane %v2388, 4
      %v2391 = vshll.u32 %v2145, 16
      %v2393 = vrot.slane %v2391, 5
      %v2394 = vsel %vm265, %v2389, %v2393
      %v2395 = vshrl.u32 %v2145, 16
      %v2397 = vrot.slane %v2395, 4
      %v2398 = vor.u32 %v2397, %v2393
      %v2399 = vrot.slane %v2398, 4
      %v2401 = vshll.u32 %v2146, 16
      %v2403 = vrot.slane %v2401, 5
      %v2404 = vsel %vm265, %v2399, %v2403
      %v2406 = vshrl.u32 %v2147, 16
      %v2408 = vrot.slane %v2406, 4
      %v2409 = vshll.u32 %v2147, 16
      %v2411 = vrot.slane %v2409, 5
      %v2412 = vor.u32 %v2408, %v2411
      %v2413 = vrot.slane %v2412, 4
      %v2415 = vshll.u32 %v2148, 16
      %v2417 = vrot.slane %v2415, 5
      %v2418 = vsel %vm265, %v2413, %v2417
      %v2419 = vshrl.u32 %v2148, 16
      %v2421 = vrot.slane %v2419, 4
      %v2422 = vor.u32 %v2421, %v2417
      %v2423 = vrot.slane %v2422, 4
      %v2425 = vshll.u32 %v2149, 16
      %v2427 = vrot.slane %v2425, 5
      %v2428 = vsel %vm265, %v2423, %v2427
      %v2430 = vshrl.u32 %v2150, 16
      %v2432 = vrot.slane %v2430, 4
      %v2433 = vshll.u32 %v2150, 16
      %v2435 = vrot.slane %v2433, 5
      %v2436 = vor.u32 %v2432, %v2435
      %v2437 = vrot.slane %v2436, 4
      %v2439 = vshll.u32 %v2151, 16
      %v2441 = vrot.slane %v2439, 5
      %v2442 = vsel %vm265, %v2437, %v2441
      %v2443 = vshrl.u32 %v2151, 16
      %v2445 = vrot.slane %v2443, 4
      %v2446 = vor.u32 %v2445, %v2441
      %v2447 = vrot.slane %v2446, 4
      %v2449 = vshll.u32 %v2152, 16
      %v2451 = vrot.slane %v2449, 5
      %v2452 = vsel %vm265, %v2447, %v2451
      %v2454 = vshrl.u32 %v2153, 16
      %v2456 = vrot.slane %v2454, 4
      %v2457 = vshll.u32 %v2153, 16
      %v2459 = vrot.slane %v2457, 5
      %v2460 = vor.u32 %v2456, %v2459
      %v2461 = vrot.slane %v2460, 4
      %v2463 = vshll.u32 %v2154, 16
      %v2465 = vrot.slane %v2463, 5
      %v2466 = vsel %vm265, %v2461, %v2465
      %v2467 = vshrl.u32 %v2154, 16
      %v2469 = vrot.slane %v2467, 4
      %v2470 = vor.u32 %v2469, %v2465
      %v2471 = vrot.slane %v2470, 4
      %v2473 = vshll.u32 %v2155, 16
      %v2475 = vrot.slane %v2473, 5
      %v2476 = vsel %vm265, %v2471, %v2475
      %v2478 = vshrl.u32 %v2156, 16
      %v2480 = vrot.slane %v2478, 4
      %v2481 = vshll.u32 %v2156, 16
      %v2483 = vrot.slane %v2481, 5
      %v2484 = vor.u32 %v2480, %v2483
      %v2485 = vrot.slane %v2484, 4
      %v2487 = vshll.u32 %v2157, 16
      %v2489 = vrot.slane %v2487, 5
      %v2490 = vsel %vm265, %v2485, %v2489
      %v2491 = vshrl.u32 %v2157, 16
      %v2493 = vrot.slane %v2491, 4
      %v2494 = vor.u32 %v2493, %v2489
      %v2495 = vrot.slane %v2494, 4
      %v2497 = vshll.u32 %v2158, 16
      %v2499 = vrot.slane %v2497, 5
      %v2500 = vsel %vm265, %v2495, %v2499
      %v2502 = vshrl.u32 %v2159, 16
      %v2504 = vrot.slane %v2502, 4
      %v2505 = vshll.u32 %v2159, 16
      %v2507 = vrot.slane %v2505, 5
      %v2508 = vor.u32 %v2504, %v2507
      %v2509 = vrot.slane %v2508, 4
      %v2511 = vshll.u32 %v2160, 16
      %v2513 = vrot.slane %v2511, 5
      %v2514 = vsel %vm265, %v2509, %v2513
      %v2515 = vshrl.u32 %v2160, 16
      %v2517 = vrot.slane %v2515, 4
      %v2518 = vor.u32 %v2517, %v2513
      %v2519 = vrot.slane %v2518, 4
      %v2521 = vshll.u32 %v2161, 16
      %v2523 = vrot.slane %v2521, 5
      %v2524 = vsel %vm265, %v2519, %v2523
      %v2526 = vshrl.u32 %v2162, 16
      %v2528 = vrot.slane %v2526, 4
      %v2529 = vshll.u32 %v2162, 16
      %v2531 = vrot.slane %v2529, 5
      %v2532 = vor.u32 %v2528, %v2531
      %v2533 = vrot.slane %v2532, 4
      %v2535 = vshll.u32 %v2163, 16
      %v2537 = vrot.slane %v2535, 5
      %v2538 = vsel %vm265, %v2533, %v2537
      %v2539 = vshrl.u32 %v2163, 16
      %v2541 = vrot.slane %v2539, 4
      %v2542 = vor.u32 %v2541, %v2537
      %v2543 = vrot.slane %v2542, 4
      %v2545 = vshll.u32 %v2164, 16
      %v2547 = vrot.slane %v2545, 5
      %v2548 = vsel %vm265, %v2543, %v2547
      %s2549 = scalar_lea.vmem %s1, 256
      %v2550 = vld [vmem:[%s2549] sm:$0xf]
      %v2551 = vld [vmem:[%s2549 + $0x4] sm:$0xf]
      %v2552 = vld [vmem:[%s2549 + $0x8] sm:$0xf]
      %v2553 = vld [vmem:[%s2549 + $0xc] sm:$0xf]
      %v2554 = vld [vmem:[%s2549 + $0x10] sm:$0xf]
      %v2555 = vld [vmem:[%s2549 + $0x14] sm:$0xf]
      %v2556 = vld [vmem:[%s2549 + $0x18] sm:$0xf]
      %v2557 = vld [vmem:[%s2549 + $0x1c] sm:$0xf]
      %v2558 = vld [vmem:[%s2549 + $0x20] sm:$0xf]
      %v2559 = vld [vmem:[%s2549 + $0x24] sm:$0xf]
      %v2560 = vld [vmem:[%s2549 + $0x28] sm:$0xf]
      %v2561 = vld [vmem:[%s2549 + $0x2c] sm:$0xf]
      %v2562 = vld [vmem:[%s2549 + $0x30] sm:$0xf]
      %v2563 = vld [vmem:[%s2549 + $0x34] sm:$0xf]
      %v2564 = vld [vmem:[%s2549 + $0x38] sm:$0xf]
      %v2565 = vld [vmem:[%s2549 + $0x3c] sm:$0xf]
      %v2566 = vunpack.c.l.b16 %v2178
      %v2567 = vunpack.c.l.b16 %v2188
      %v2568 = vunpack.c.l.b16 %v2202
      %v2569 = vunpack.c.l.b16 %v2212
      %v2570 = vunpack.c.l.b16 %v2226
      %v2571 = vunpack.c.l.b16 %v2236
      %v2572 = vunpack.c.l.b16 %v2250
      %v2573 = vunpack.c.l.b16 %v2260
      %v2574 = vunpack.c.l.b16 %v2274
      %v2575 = vunpack.c.l.b16 %v2284
      %v2576 = vunpack.c.l.b16 %v2298
      %v2577 = vunpack.c.l.b16 %v2308
      %v2578 = vunpack.c.l.b16 %v2322
      %v2579 = vunpack.c.l.b16 %v2332
      %v2580 = vunpack.c.l.b16 %v2346
      %v2581 = vunpack.c.l.b16 %v2356
      %v2582 = vunpack.c.l.b16 %v2370
      %v2583 = vunpack.c.l.b16 %v2380
      %v2584 = vunpack.c.l.b16 %v2394
      %v2585 = vunpack.c.l.b16 %v2404
      %v2586 = vunpack.c.l.b16 %v2418
      %v2587 = vunpack.c.l.b16 %v2428
      %v2588 = vunpack.c.l.b16 %v2442
      %v2589 = vunpack.c.l.b16 %v2452
      %v2590 = vunpack.c.l.b16 %v2466
      %v2591 = vunpack.c.l.b16 %v2476
      %v2592 = vunpack.c.l.b16 %v2490
      %v2593 = vunpack.c.l.b16 %v2500
      %v2594 = vunpack.c.l.b16 %v2514
      %v2595 = vunpack.c.l.b16 %v2524
      %v2596 = vunpack.c.l.b16 %v2538
      %v2597 = vunpack.c.l.b16 %v2548
      %v2598 = vpack.c.b16 %v2567, %v2566
      %v2599 = vpack.c.b16 %v2569, %v2568
      %v2600 = vpack.c.b16 %v2571, %v2570
      %v2601 = vpack.c.b16 %v2573, %v2572
      %v2602 = vpack.c.b16 %v2575, %v2574
      %v2603 = vpack.c.b16 %v2577, %v2576
      %v2604 = vpack.c.b16 %v2579, %v2578
      %v2605 = vpack.c.b16 %v2581, %v2580
      %v2606 = vpack.c.b16 %v2583, %v2582
      %v2607 = vpack.c.b16 %v2585, %v2584
      %v2608 = vpack.c.b16 %v2587, %v2586
      %v2609 = vpack.c.b16 %v2589, %v2588
      %v2610 = vpack.c.b16 %v2591, %v2590
      %v2611 = vpack.c.b16 %v2593, %v2592
      %v2612 = vpack.c.b16 %v2595, %v2594
      %v2613 = vpack.c.b16 %v2597, %v2596
      %v2646 = vunpack.c.l.b16 %v2550
      %v2647 = vunpack.c.l.b16 %v2551
      %v2648 = vunpack.c.l.b16 %v2552
      %v2649 = vunpack.c.l.b16 %v2553
      %v2650 = vunpack.c.l.b16 %v2554
      %v2651 = vunpack.c.l.b16 %v2555
      %v2652 = vunpack.c.l.b16 %v2556
      %v2653 = vunpack.c.l.b16 %v2557
      %v2654 = vunpack.c.l.b16 %v2558
      %v2655 = vunpack.c.l.b16 %v2559
      %v2656 = vunpack.c.l.b16 %v2560
      %v2657 = vunpack.c.l.b16 %v2561
      %v2658 = vunpack.c.l.b16 %v2562
      %v2659 = vunpack.c.l.b16 %v2563
      %v2660 = vunpack.c.l.b16 %v2564
      %v2661 = vunpack.c.l.b16 %v2565
      %v2662 = vpack.c.b16 %v2647, %v2646
      %v2663 = vpack.c.b16 %v2649, %v2648
      %v2664 = vpack.c.b16 %v2651, %v2650
      %v2665 = vpack.c.b16 %v2653, %v2652
      %v2666 = vpack.c.b16 %v2655, %v2654
      %v2667 = vpack.c.b16 %v2657, %v2656
      %v2668 = vpack.c.b16 %v2659, %v2658
      %v2669 = vpack.c.b16 %v2661, %v2660
      %2678 = vmatprep.subr.bf16.mxu0 0
      %2679 = vmatpush1.bf16.msra.mxu0 %v2662
      %2680 = vmatprep.subr.bf16.mxu0 0
      %2681 = vmatpush1.bf16.msra.mxu0 %v2663
      %2682 = vmatprep.subr.bf16.mxu0 0
      %2683 = vmatpush1.bf16.msra.mxu0 %v2664
      %2684 = vmatprep.subr.bf16.mxu0 0
      %2685 = vmatpush1.bf16.msra.mxu0 %v2665
      %2686 = vmatprep.subr.bf16.mxu0 0
      %2687 = vmatpush1.bf16.msra.mxu0 %v2666
      %2688 = vmatprep.subr.bf16.mxu0 0
      %2689 = vmatpush1.bf16.msra.mxu0 %v2667
      %2690 = vmatprep.subr.bf16.mxu0 0
      %2691 = vmatpush1.bf16.msra.mxu0 %v2668
      %2692 = vmatprep.subr.bf16.mxu0 0
      %2693 = vmatpush1.bf16.msra.mxu0 %v2669
      %2694 = vmatprep.subr.bf16.mxu0 0
      %2695 = vmatpush1.bf16.msra.mxu0 0
      %2696 = vmatprep.subr.bf16.mxu0 0
      %2697 = vmatpush1.bf16.msra.mxu0 0
      %2698 = vmatprep.subr.bf16.mxu0 0
      %2699 = vmatpush1.bf16.msra.mxu0 0
      %2700 = vmatprep.subr.bf16.mxu0 0
      %2701 = vmatpush1.bf16.msra.mxu0 0
      %2702 = vmatprep.subr.bf16.mxu0 0
      %2703 = vmatpush1.bf16.msra.mxu0 0
      %2704 = vmatprep.subr.bf16.mxu0 0
      %2705 = vmatpush1.bf16.msra.mxu0 0
      %2706 = vmatprep.subr.bf16.mxu0 0
      %2707 = vmatpush1.bf16.msra.mxu0 0
      %2708 = vmatprep.subr.bf16.mxu0 0
      %2709 = vmatpush1.bf16.msra.mxu0 0
      %2710 = vmatprep.mubr.bf16.mxu0 0
      %2711 = vmatmul.mubr.bf16.gmra.mrb[0].mxu0 %v2598
      %v2712 = vpop.f32.mrb[0].mxu0
      %v2713 = vadd.f32 0.0, %v2712
      %v2714 = vpop.f32.mrb[0].mxu0
      %v2715 = vpop.f32.mrb[0].mxu0
      %v2716 = vadd.f32 0.0, %v2715
      %v2717 = vpop.f32.mrb[0].mxu0
      %2718 = vmatprep.mubr.bf16.mxu0 0
      %2719 = vmatmul.mubr.bf16.gmra.mrb[0].mxu0 %v2599
      %v2720 = vpop.f32.mrb[0].mxu0
      %v2721 = vadd.f32 0.0, %v2720
      %v2722 = vpop.f32.mrb[0].mxu0
      %v2723 = vpop.f32.mrb[0].mxu0
      %v2724 = vadd.f32 0.0, %v2723
      %v2725 = vpop.f32.mrb[0].mxu0
      %2726 = vmatprep.mubr.bf16.mxu0 0
      %2727 = vmatmul.mubr.bf16.gmra.mrb[0].mxu0 %v2600
      %v2728 = vpop.f32.mrb[0].mxu0
      %v2729 = vadd.f32 0.0, %v2728
      %v2730 = vpop.f32.mrb[0].mxu0
      %v2731 = vpop.f32.mrb[0].mxu0
      %v2732 = vadd.f32 0.0, %v2731
      %v2733 = vpop.f32.mrb[0].mxu0
      %2734 = vmatprep.mubr.bf16.mxu0 0
      %2735 = vmatmul.mubr.bf16.gmra.mrb[0].mxu0 %v2601
      %v2736 = vpop.f32.mrb[0].mxu0
      %v2737 = vadd.f32 0.0, %v2736
      %v2738 = vpop.f32.mrb[0].mxu0
      %v2739 = vpop.f32.mrb[0].mxu0
      %v2740 = vadd.f32 0.0, %v2739
      %v2741 = vpop.f32.mrb[0].mxu0
      %2742 = vmatprep.mubr.bf16.mxu0 0
      %2743 = vmatmul.mubr.bf16.gmra.mrb[0].mxu0 %v2602
      %v2744 = vpop.f32.mrb[0].mxu0
      %v2745 = vadd.f32 0.0, %v2744
      %v2746 = vpop.f32.mrb[0].mxu0
      %v2747 = vpop.f32.mrb[0].mxu0
      %v2748 = vadd.f32 0.0, %v2747
      %v2749 = vpop.f32.mrb[0].mxu0
      %2750 = vmatprep.mubr.bf16.mxu0 0
      %2751 = vmatmul.mubr.bf16.gmra.mrb[0].mxu0 %v2603
      %v2752 = vpop.f32.mrb[0].mxu0
      %v2753 = vadd.f32 0.0, %v2752
      %v2754 = vpop.f32.mrb[0].mxu0
      %v2755 = vpop.f32.mrb[0].mxu0
      %v2756 = vadd.f32 0.0, %v2755
      %v2757 = vpop.f32.mrb[0].mxu0
      %2758 = vmatprep.mubr.bf16.mxu0 0
      %2759 = vmatmul.mubr.bf16.gmra.mrb[0].mxu0 %v2604
      %v2760 = vpop.f32.mrb[0].mxu0
      %v2761 = vadd.f32 0.0, %v2760
      %v2762 = vpop.f32.mrb[0].mxu0
      %v2763 = vpop.f32.mrb[0].mxu0
      %v2764 = vadd.f32 0.0, %v2763
      %v2765 = vpop.f32.mrb[0].mxu0
      %2766 = vmatprep.mubr.bf16.mxu0 0
      %2767 = vmatmul.mubr.bf16.gmra.mrb[0].mxu0 %v2605
      %v2768 = vpop.f32.mrb[0].mxu0
      %v2769 = vadd.f32 0.0, %v2768
      %v2770 = vpop.f32.mrb[0].mxu0
      %v2771 = vpop.f32.mrb[0].mxu0
      %v2772 = vadd.f32 0.0, %v2771
      %v2773 = vpop.f32.mrb[0].mxu0
      %2774 = vmatprep.mubr.bf16.mxu0 0
      %2775 = vmatmul.mubr.bf16.gmra.mrb[0].mxu0 %v2606
      %v2776 = vpop.f32.mrb[0].mxu0
      %v2777 = vadd.f32 0.0, %v2776
      %v2778 = vpop.f32.mrb[0].mxu0
      %v2779 = vpop.f32.mrb[0].mxu0
      %v2780 = vadd.f32 0.0, %v2779
      %v2781 = vpop.f32.mrb[0].mxu0
      %2782 = vmatprep.mubr.bf16.mxu0 0
      %2783 = vmatmul.mubr.bf16.gmra.mrb[0].mxu0 %v2607
      %v2784 = vpop.f32.mrb[0].mxu0
      %v2785 = vadd.f32 0.0, %v2784
      %v2786 = vpop.f32.mrb[0].mxu0
      %v2787 = vpop.f32.mrb[0].mxu0
      %v2788 = vadd.f32 0.0, %v2787
      %v2789 = vpop.f32.mrb[0].mxu0
      %2790 = vmatprep.mubr.bf16.mxu0 0
      %2791 = vmatmul.mubr.bf16.gmra.mrb[0].mxu0 %v2608
      %v2792 = vpop.f32.mrb[0].mxu0
      %v2793 = vadd.f32 0.0, %v2792
      %v2794 = vpop.f32.mrb[0].mxu0
      %v2795 = vpop.f32.mrb[0].mxu0
      %v2796 = vadd.f32 0.0, %v2795
      %v2797 = vpop.f32.mrb[0].mxu0
      %2798 = vmatprep.mubr.bf16.mxu0 0
      %2799 = vmatmul.mubr.bf16.gmra.mrb[0].mxu0 %v2609
      %v2800 = vpop.f32.mrb[0].mxu0
      %v2801 = vadd.f32 0.0, %v2800
      %v2802 = vpop.f32.mrb[0].mxu0
      %v2803 = vpop.f32.mrb[0].mxu0
      %v2804 = vadd.f32 0.0, %v2803
      %v2805 = vpop.f32.mrb[0].mxu0
      %2806 = vmatprep.mubr.bf16.mxu0 0
      %2807 = vmatmul.mubr.bf16.gmra.mrb[0].mxu0 %v2610
      %v2808 = vpop.f32.mrb[0].mxu0
      %v2809 = vadd.f32 0.0, %v2808
      %v2810 = vpop.f32.mrb[0].mxu0
      %v2811 = vpop.f32.mrb[0].mxu0
      %v2812 = vadd.f32 0.0, %v2811
      %v2813 = vpop.f32.mrb[0].mxu0
      %2814 = vmatprep.mubr.bf16.mxu0 0
      %2815 = vmatmul.mubr.bf16.gmra.mrb[0].mxu0 %v2611
      %v2816 = vpop.f32.mrb[0].mxu0
      %v2817 = vadd.f32 0.0, %v2816
      %v2818 = vpop.f32.mrb[0].mxu0
      %v2819 = vpop.f32.mrb[0].mxu0
      %v2820 = vadd.f32 0.0, %v2819
      %v2821 = vpop.f32.mrb[0].mxu0
      %2822 = vmatprep.mubr.bf16.mxu0 0
      %2823 = vmatmul.mubr.bf16.gmra.mrb[0].mxu0 %v2612
      %v2824 = vpop.f32.mrb[0].mxu0
      %v2825 = vadd.f32 0.0, %v2824
      %v2826 = vpop.f32.mrb[0].mxu0
      %v2827 = vpop.f32.mrb[0].mxu0
      %v2828 = vadd.f32 0.0, %v2827
      %v2829 = vpop.f32.mrb[0].mxu0
      %2830 = vmatprep.mubr.bf16.mxu0 0
      %2831 = vmatmul.mubr.bf16.gmra.mrb[0].mxu0 %v2613
      %v2832 = vpop.f32.mrb[0].mxu0
      %v2833 = vadd.f32 0.0, %v2832
      %v2834 = vpop.f32.mrb[0].mxu0
      %v2835 = vpop.f32.mrb[0].mxu0
      %v2836 = vadd.f32 0.0, %v2835
      %v2837 = vpop.f32.mrb[0].mxu0
      %2838 = vdwg.mxu0
      %v2839 = vadd.f32 %v2085, %v2713
      %v2840 = vadd.f32 %v2086, %v2716
      %v2841 = vadd.f32 %v2087, %v2721
      %v2842 = vadd.f32 %v2088, %v2724
      %v2843 = vadd.f32 %v2089, %v2729
      %v2844 = vadd.f32 %v2090, %v2732
      %v2845 = vadd.f32 %v2091, %v2737
      %v2846 = vadd.f32 %v2092, %v2740
      %v2847 = vadd.f32 %v2093, %v2745
      %v2848 = vadd.f32 %v2094, %v2748
      %v2849 = vadd.f32 %v2095, %v2753
      %v2850 = vadd.f32 %v2096, %v2756
      %v2851 = vadd.f32 %v2097, %v2761
      %v2852 = vadd.f32 %v2098, %v2764
      %v2853 = vadd.f32 %v2099, %v2769
      %v2854 = vadd.f32 %v2100, %v2772
      %v2855 = vadd.f32 %v2101, %v2777
      %v2856 = vadd.f32 %v2102, %v2780
      %v2857 = vadd.f32 %v2103, %v2785
      %v2858 = vadd.f32 %v2104, %v2788
      %v2859 = vadd.f32 %v2105, %v2793
      %v2860 = vadd.f32 %v2106, %v2796
      %v2861 = vadd.f32 %v2107, %v2801
      %v2862 = vadd.f32 %v2108, %v2804
      %v2863 = vadd.f32 %v2109, %v2809
      %v2864 = vadd.f32 %v2110, %v2812
      %v2865 = vadd.f32 %v2111, %v2817
      %v2866 = vadd.f32 %v2112, %v2820
      %v2867 = vadd.f32 %v2113, %v2825
      %v2868 = vadd.f32 %v2114, %v2828
      %v2869 = vadd.f32 %v2115, %v2833
      %v2870 = vadd.f32 %v2116, %v2836
      %v2871 = vld [vmem:[%s1730] sm:$0xe]
      %v2872 = vld [vmem:[%s1730 + $0xc] sm:$0xe]
      %v2873 = vld [vmem:[%s1730 + $0x18] sm:$0xe]
      %v2874 = vld [vmem:[%s1730 + $0x24] sm:$0xe]
      %v2875 = vld [vmem:[%s1730 + $0x30] sm:$0xe]
      %v2876 = vld [vmem:[%s1730 + $0x3c] sm:$0xe]
      %v2877 = vld [vmem:[%s1730 + $0x48] sm:$0xe]
      %v2878 = vld [vmem:[%s1730 + $0x54] sm:$0xe]
      %v2879 = vld [vmem:[%s1730 + $0x60] sm:$0xe]
      %v2880 = vld [vmem:[%s1730 + $0x6c] sm:$0xe]
      %v2881 = vld [vmem:[%s1730 + $0x78] sm:$0xe]
      %v2882 = vld [vmem:[%s1730 + $0x84] sm:$0xe]
      %v2883 = vld [vmem:[%s1730 + $0x90] sm:$0xe]
      %v2884 = vld [vmem:[%s1730 + $0x9c] sm:$0xe]
      %v2885 = vld [vmem:[%s1730 + $0xa8] sm:$0xe]
      %v2886 = vld [vmem:[%s1730 + $0xb4] sm:$0xe]
      %v2935 = vrot.slane %v2871, 5
      %v2936 = vrot.slane %v2935, 4
      %v2937 = vrot.slane %v2118, 5
      %v2938 = vsel %vm1295, %v2936, %v2937
      %v2939 = vrot.slane %v2937, 4
      %v2940 = vrot.slane %v2119, 5
      %v2941 = vsel %vm1295, %v2939, %v2940
      %v2942 = vrot.slane %v2872, 5
      %v2943 = vrot.slane %v2942, 4
      %v2944 = vrot.slane %v2121, 5
      %v2945 = vsel %vm1295, %v2943, %v2944
      %v2946 = vrot.slane %v2944, 4
      %v2947 = vrot.slane %v2122, 5
      %v2948 = vsel %vm1295, %v2946, %v2947
      %v2949 = vrot.slane %v2873, 5
      %v2950 = vrot.slane %v2949, 4
      %v2951 = vrot.slane %v2124, 5
      %v2952 = vsel %vm1295, %v2950, %v2951
      %v2953 = vrot.slane %v2951, 4
      %v2954 = vrot.slane %v2125, 5
      %v2955 = vsel %vm1295, %v2953, %v2954
      %v2956 = vrot.slane %v2874, 5
      %v2957 = vrot.slane %v2956, 4
      %v2958 = vrot.slane %v2127, 5
      %v2959 = vsel %vm1295, %v2957, %v2958
      %v2960 = vrot.slane %v2958, 4
      %v2961 = vrot.slane %v2128, 5
      %v2962 = vsel %vm1295, %v2960, %v2961
      %v2963 = vrot.slane %v2875, 5
      %v2964 = vrot.slane %v2963, 4
      %v2965 = vrot.slane %v2130, 5
      %v2966 = vsel %vm1295, %v2964, %v2965
      %v2967 = vrot.slane %v2965, 4
      %v2968 = vrot.slane %v2131, 5
      %v2969 = vsel %vm1295, %v2967, %v2968
      %v2970 = vrot.slane %v2876, 5
      %v2971 = vrot.slane %v2970, 4
      %v2972 = vrot.slane %v2133, 5
      %v2973 = vsel %vm1295, %v2971, %v2972
      %v2974 = vrot.slane %v2972, 4
      %v2975 = vrot.slane %v2134, 5
      %v2976 = vsel %vm1295, %v2974, %v2975
      %v2977 = vrot.slane %v2877, 5
      %v2978 = vrot.slane %v2977, 4
      %v2979 = vrot.slane %v2136, 5
      %v2980 = vsel %vm1295, %v2978, %v2979
      %v2981 = vrot.slane %v2979, 4
      %v2982 = vrot.slane %v2137, 5
      %v2983 = vsel %vm1295, %v2981, %v2982
      %v2984 = vrot.slane %v2878, 5
      %v2985 = vrot.slane %v2984, 4
      %v2986 = vrot.slane %v2139, 5
      %v2987 = vsel %vm1295, %v2985, %v2986
      %v2988 = vrot.slane %v2986, 4
      %v2989 = vrot.slane %v2140, 5
      %v2990 = vsel %vm1295, %v2988, %v2989
      %v2991 = vrot.slane %v2879, 5
      %v2992 = vrot.slane %v2991, 4
      %v2993 = vrot.slane %v2142, 5
      %v2994 = vsel %vm1295, %v2992, %v2993
      %v2995 = vrot.slane %v2993, 4
      %v2996 = vrot.slane %v2143, 5
      %v2997 = vsel %vm1295, %v2995, %v2996
      %v2998 = vrot.slane %v2880, 5
      %v2999 = vrot.slane %v2998, 4
      %v3000 = vrot.slane %v2145, 5
      %v3001 = vsel %vm1295, %v2999, %v3000
      %v3002 = vrot.slane %v3000, 4
      %v3003 = vrot.slane %v2146, 5
      %v3004 = vsel %vm1295, %v3002, %v3003
      %v3005 = vrot.slane %v2881, 5
      %v3006 = vrot.slane %v3005, 4
      %v3007 = vrot.slane %v2148, 5
      %v3008 = vsel %vm1295, %v3006, %v3007
      %v3009 = vrot.slane %v3007, 4
      %v3010 = vrot.slane %v2149, 5
      %v3011 = vsel %vm1295, %v3009, %v3010
      %v3012 = vrot.slane %v2882, 5
      %v3013 = vrot.slane %v3012, 4
      %v3014 = vrot.slane %v2151, 5
      %v3015 = vsel %vm1295, %v3013, %v3014
      %v3016 = vrot.slane %v3014, 4
      %v3017 = vrot.slane %v2152, 5
      %v3018 = vsel %vm1295, %v3016, %v3017
      %v3019 = vrot.slane %v2883, 5
      %v3020 = vrot.slane %v3019, 4
      %v3021 = vrot.slane %v2154, 5
      %v3022 = vsel %vm1295, %v3020, %v3021
      %v3023 = vrot.slane %v3021, 4
      %v3024 = vrot.slane %v2155, 5
      %v3025 = vsel %vm1295, %v3023, %v3024
      %v3026 = vrot.slane %v2884, 5
      %v3027 = vrot.slane %v3026, 4
      %v3028 = vrot.slane %v2157, 5
      %v3029 = vsel %vm1295, %v3027, %v3028
      %v3030 = vrot.slane %v3028, 4
      %v3031 = vrot.slane %v2158, 5
      %v3032 = vsel %vm1295, %v3030, %v3031
      %v3033 = vrot.slane %v2885, 5
      %v3034 = vrot.slane %v3033, 4
      %v3035 = vrot.slane %v2160, 5
      %v3036 = vsel %vm1295, %v3034, %v3035
      %v3037 = vrot.slane %v3035, 4
      %v3038 = vrot.slane %v2161, 5
      %v3039 = vsel %vm1295, %v3037, %v3038
      %v3040 = vrot.slane %v2886, 5
      %v3041 = vrot.slane %v3040, 4
      %v3042 = vrot.slane %v2163, 5
      %v3043 = vsel %vm1295, %v3041, %v3042
      %v3044 = vrot.slane %v3042, 4
      %v3045 = vrot.slane %v2164, 5
      %v3046 = vsel %vm1295, %v3044, %v3045
      %s3047 = scalar_lea.vmem %s1, 320
      %v3048 = vld [vmem:[%s3047] sm:$0xf]
      %v3049 = vld [vmem:[%s3047 + $0x4] sm:$0xf]
      %v3050 = vld [vmem:[%s3047 + $0x8] sm:$0xf]
      %v3051 = vld [vmem:[%s3047 + $0xc] sm:$0xf]
      %v3052 = vld [vmem:[%s3047 + $0x10] sm:$0xf]
      %v3053 = vld [vmem:[%s3047 + $0x14] sm:$0xf]
      %v3054 = vld [vmem:[%s3047 + $0x18] sm:$0xf]
      %v3055 = vld [vmem:[%s3047 + $0x1c] sm:$0xf]
      %v3056 = vld [vmem:[%s3047 + $0x20] sm:$0xf]
      %v3057 = vld [vmem:[%s3047 + $0x24] sm:$0xf]
      %v3058 = vld [vmem:[%s3047 + $0x28] sm:$0xf]
      %v3059 = vld [vmem:[%s3047 + $0x2c] sm:$0xf]
      %v3060 = vld [vmem:[%s3047 + $0x30] sm:$0xf]
      %v3061 = vld [vmem:[%s3047 + $0x34] sm:$0xf]
      %v3062 = vld [vmem:[%s3047 + $0x38] sm:$0xf]
      %v3063 = vld [vmem:[%s3047 + $0x3c] sm:$0xf]
      %v3064 = vunpack.c.l.b16 %v2938
      %v3065 = vunpack.c.l.b16 %v2941
      %v3066 = vunpack.c.l.b16 %v2945
      %v3067 = vunpack.c.l.b16 %v2948
      %v3068 = vunpack.c.l.b16 %v2952
      %v3069 = vunpack.c.l.b16 %v2955
      %v3070 = vunpack.c.l.b16 %v2959
      %v3071 = vunpack.c.l.b16 %v2962
      %v3072 = vunpack.c.l.b16 %v2966
      %v3073 = vunpack.c.l.b16 %v2969
      %v3074 = vunpack.c.l.b16 %v2973
      %v3075 = vunpack.c.l.b16 %v2976
      %v3076 = vunpack.c.l.b16 %v2980
      %v3077 = vunpack.c.l.b16 %v2983
      %v3078 = vunpack.c.l.b16 %v2987
      %v3079 = vunpack.c.l.b16 %v2990
      %v3080 = vunpack.c.l.b16 %v2994
      %v3081 = vunpack.c.l.b16 %v2997
      %v3082 = vunpack.c.l.b16 %v3001
      %v3083 = vunpack.c.l.b16 %v3004
      %v3084 = vunpack.c.l.b16 %v3008
      %v3085 = vunpack.c.l.b16 %v3011
      %v3086 = vunpack.c.l.b16 %v3015
      %v3087 = vunpack.c.l.b16 %v3018
      %v3088 = vunpack.c.l.b16 %v3022
      %v3089 = vunpack.c.l.b16 %v3025
      %v3090 = vunpack.c.l.b16 %v3029
      %v3091 = vunpack.c.l.b16 %v3032
      %v3092 = vunpack.c.l.b16 %v3036
      %v3093 = vunpack.c.l.b16 %v3039
      %v3094 = vunpack.c.l.b16 %v3043
      %v3095 = vunpack.c.l.b16 %v3046
      %v3096 = vpack.c.b16 %v3065, %v3064
      %v3097 = vpack.c.b16 %v3067, %v3066
      %v3098 = vpack.c.b16 %v3069, %v3068
      %v3099 = vpack.c.b16 %v3071, %v3070
      %v3100 = vpack.c.b16 %v3073, %v3072
      %v3101 = vpack.c.b16 %v3075, %v3074
      %v3102 = vpack.c.b16 %v3077, %v3076
      %v3103 = vpack.c.b16 %v3079, %v3078
      %v3104 = vpack.c.b16 %v3081, %v3080
      %v3105 = vpack.c.b16 %v3083, %v3082
      %v3106 = vpack.c.b16 %v3085, %v3084
      %v3107 = vpack.c.b16 %v3087, %v3086
      %v3108 = vpack.c.b16 %v3089, %v3088
      %v3109 = vpack.c.b16 %v3091, %v3090
      %v3110 = vpack.c.b16 %v3093, %v3092
      %v3111 = vpack.c.b16 %v3095, %v3094
      %v3144 = vunpack.c.l.b16 %v3048
      %v3145 = vunpack.c.l.b16 %v3049
      %v3146 = vunpack.c.l.b16 %v3050
      %v3147 = vunpack.c.l.b16 %v3051
      %v3148 = vunpack.c.l.b16 %v3052
      %v3149 = vunpack.c.l.b16 %v3053
      %v3150 = vunpack.c.l.b16 %v3054
      %v3151 = vunpack.c.l.b16 %v3055
      %v3152 = vunpack.c.l.b16 %v3056
      %v3153 = vunpack.c.l.b16 %v3057
      %v3154 = vunpack.c.l.b16 %v3058
      %v3155 = vunpack.c.l.b16 %v3059
      %v3156 = vunpack.c.l.b16 %v3060
      %v3157 = vunpack.c.l.b16 %v3061
      %v3158 = vunpack.c.l.b16 %v3062
      %v3159 = vunpack.c.l.b16 %v3063
      %v3160 = vpack.c.b16 %v3145, %v3144
      %v3161 = vpack.c.b16 %v3147, %v3146
      %v3162 = vpack.c.b16 %v3149, %v3148
      %v3163 = vpack.c.b16 %v3151, %v3150
      %v3164 = vpack.c.b16 %v3153, %v3152
      %v3165 = vpack.c.b16 %v3155, %v3154
      %v3166 = vpack.c.b16 %v3157, %v3156
      %v3167 = vpack.c.b16 %v3159, %v3158
      %3176 = vmatprep.subr.bf16.mxu0 0
      %3177 = vmatpush1.bf16.msra.mxu0 %v3160
      %3178 = vmatprep.subr.bf16.mxu0 0
      %3179 = vmatpush1.bf16.msra.mxu0 %v3161
      %3180 = vmatprep.subr.bf16.mxu0 0
      %3181 = vmatpush1.bf16.msra.mxu0 %v3162
      %3182 = vmatprep.subr.bf16.mxu0 0
      %3183 = vmatpush1.bf16.msra.mxu0 %v3163
      %3184 = vmatprep.subr.bf16.mxu0 0
      %3185 = vmatpush1.bf16.msra.mxu0 %v3164
      %3186 = vmatprep.subr.bf16.mxu0 0
      %3187 = vmatpush1.bf16.msra.mxu0 %v3165
      %3188 = vmatprep.subr.bf16.mxu0 0
      %3189 = vmatpush1.bf16.msra.mxu0 %v3166
      %3190 = vmatprep.subr.bf16.mxu0 0
      %3191 = vmatpush1.bf16.msra.mxu0 %v3167
      %3192 = vmatprep.subr.bf16.mxu0 0
      %3193 = vmatpush1.bf16.msra.mxu0 0
      %3194 = vmatprep.subr.bf16.mxu0 0
      %3195 = vmatpush1.bf16.msra.mxu0 0
      %3196 = vmatprep.subr.bf16.mxu0 0
      %3197 = vmatpush1.bf16.msra.mxu0 0
      %3198 = vmatprep.subr.bf16.mxu0 0
      %3199 = vmatpush1.bf16.msra.mxu0 0
      %3200 = vmatprep.subr.bf16.mxu0 0
      %3201 = vmatpush1.bf16.msra.mxu0 0
      %3202 = vmatprep.subr.bf16.mxu0 0
      %3203 = vmatpush1.bf16.msra.mxu0 0
      %3204 = vmatprep.subr.bf16.mxu0 0
      %3205 = vmatpush1.bf16.msra.mxu0 0
      %3206 = vmatprep.subr.bf16.mxu0 0
      %3207 = vmatpush1.bf16.msra.mxu0 0
      %3208 = vmatprep.mubr.bf16.mxu0 0
      %3209 = vmatmul.mubr.bf16.gmra.mrb[0].mxu0 %v3096
      %v3210 = vpop.f32.mrb[0].mxu0
      %v3211 = vadd.f32 0.0, %v3210
      %v3212 = vpop.f32.mrb[0].mxu0
      %v3213 = vpop.f32.mrb[0].mxu0
      %v3214 = vadd.f32 0.0, %v3213
      %v3215 = vpop.f32.mrb[0].mxu0
      %3216 = vmatprep.mubr.bf16.mxu0 0
      %3217 = vmatmul.mubr.bf16.gmra.mrb[0].mxu0 %v3097
      %v3218 = vpop.f32.mrb[0].mxu0
      %v3219 = vadd.f32 0.0, %v3218
      %v3220 = vpop.f32.mrb[0].mxu0
      %v3221 = vpop.f32.mrb[0].mxu0
      %v3222 = vadd.f32 0.0, %v3221
      %v3223 = vpop.f32.mrb[0].mxu0
      %3224 = vmatprep.mubr.bf16.mxu0 0
      %3225 = vmatmul.mubr.bf16.gmra.mrb[0].mxu0 %v3098
      %v3226 = vpop.f32.mrb[0].mxu0
      %v3227 = vadd.f32 0.0, %v3226
      %v3228 = vpop.f32.mrb[0].mxu0
      %v3229 = vpop.f32.mrb[0].mxu0
      %v3230 = vadd.f32 0.0, %v3229
      %v3231 = vpop.f32.mrb[0].mxu0
      %3232 = vmatprep.mubr.bf16.mxu0 0
      %3233 = vmatmul.mubr.bf16.gmra.mrb[0].mxu0 %v3099
      %v3234 = vpop.f32.mrb[0].mxu0
      %v3235 = vadd.f32 0.0, %v3234
      %v3236 = vpop.f32.mrb[0].mxu0
      %v3237 = vpop.f32.mrb[0].mxu0
      %v3238 = vadd.f32 0.0, %v3237
      %v3239 = vpop.f32.mrb[0].mxu0
      %3240 = vmatprep.mubr.bf16.mxu0 0
      %3241 = vmatmul.mubr.bf16.gmra.mrb[0].mxu0 %v3100
      %v3242 = vpop.f32.mrb[0].mxu0
      %v3243 = vadd.f32 0.0, %v3242
      %v3244 = vpop.f32.mrb[0].mxu0
      %v3245 = vpop.f32.mrb[0].mxu0
      %v3246 = vadd.f32 0.0, %v3245
      %v3247 = vpop.f32.mrb[0].mxu0
      %3248 = vmatprep.mubr.bf16.mxu0 0
      %3249 = vmatmul.mubr.bf16.gmra.mrb[0].mxu0 %v3101
      %v3250 = vpop.f32.mrb[0].mxu0
      %v3251 = vadd.f32 0.0, %v3250
      %v3252 = vpop.f32.mrb[0].mxu0
      %v3253 = vpop.f32.mrb[0].mxu0
      %v3254 = vadd.f32 0.0, %v3253
      %v3255 = vpop.f32.mrb[0].mxu0
      %3256 = vmatprep.mubr.bf16.mxu0 0
      %3257 = vmatmul.mubr.bf16.gmra.mrb[0].mxu0 %v3102
      %v3258 = vpop.f32.mrb[0].mxu0
      %v3259 = vadd.f32 0.0, %v3258
      %v3260 = vpop.f32.mrb[0].mxu0
      %v3261 = vpop.f32.mrb[0].mxu0
      %v3262 = vadd.f32 0.0, %v3261
      %v3263 = vpop.f32.mrb[0].mxu0
      %3264 = vmatprep.mubr.bf16.mxu0 0
      %3265 = vmatmul.mubr.bf16.gmra.mrb[0].mxu0 %v3103
      %v3266 = vpop.f32.mrb[0].mxu0
      %v3267 = vadd.f32 0.0, %v3266
      %v3268 = vpop.f32.mrb[0].mxu0
      %v3269 = vpop.f32.mrb[0].mxu0
      %v3270 = vadd.f32 0.0, %v3269
      %v3271 = vpop.f32.mrb[0].mxu0
      %3272 = vmatprep.mubr.bf16.mxu0 0
      %3273 = vmatmul.mubr.bf16.gmra.mrb[0].mxu0 %v3104
      %v3274 = vpop.f32.mrb[0].mxu0
      %v3275 = vadd.f32 0.0, %v3274
      %v3276 = vpop.f32.mrb[0].mxu0
      %v3277 = vpop.f32.mrb[0].mxu0
      %v3278 = vadd.f32 0.0, %v3277
      %v3279 = vpop.f32.mrb[0].mxu0
      %3280 = vmatprep.mubr.bf16.mxu0 0
      %3281 = vmatmul.mubr.bf16.gmra.mrb[0].mxu0 %v3105
      %v3282 = vpop.f32.mrb[0].mxu0
      %v3283 = vadd.f32 0.0, %v3282
      %v3284 = vpop.f32.mrb[0].mxu0
      %v3285 = vpop.f32.mrb[0].mxu0
      %v3286 = vadd.f32 0.0, %v3285
      %v3287 = vpop.f32.mrb[0].mxu0
      %3288 = vmatprep.mubr.bf16.mxu0 0
      %3289 = vmatmul.mubr.bf16.gmra.mrb[0].mxu0 %v3106
      %v3290 = vpop.f32.mrb[0].mxu0
      %v3291 = vadd.f32 0.0, %v3290
      %v3292 = vpop.f32.mrb[0].mxu0
      %v3293 = vpop.f32.mrb[0].mxu0
      %v3294 = vadd.f32 0.0, %v3293
      %v3295 = vpop.f32.mrb[0].mxu0
      %3296 = vmatprep.mubr.bf16.mxu0 0
      %3297 = vmatmul.mubr.bf16.gmra.mrb[0].mxu0 %v3107
      %v3298 = vpop.f32.mrb[0].mxu0
      %v3299 = vadd.f32 0.0, %v3298
      %v3300 = vpop.f32.mrb[0].mxu0
      %v3301 = vpop.f32.mrb[0].mxu0
      %v3302 = vadd.f32 0.0, %v3301
      %v3303 = vpop.f32.mrb[0].mxu0
      %3304 = vmatprep.mubr.bf16.mxu0 0
      %3305 = vmatmul.mubr.bf16.gmra.mrb[0].mxu0 %v3108
      %v3306 = vpop.f32.mrb[0].mxu0
      %v3307 = vadd.f32 0.0, %v3306
      %v3308 = vpop.f32.mrb[0].mxu0
      %v3309 = vpop.f32.mrb[0].mxu0
      %v3310 = vadd.f32 0.0, %v3309
      %v3311 = vpop.f32.mrb[0].mxu0
      %3312 = vmatprep.mubr.bf16.mxu0 0
      %3313 = vmatmul.mubr.bf16.gmra.mrb[0].mxu0 %v3109
      %v3314 = vpop.f32.mrb[0].mxu0
      %v3315 = vadd.f32 0.0, %v3314
      %v3316 = vpop.f32.mrb[0].mxu0
      %v3317 = vpop.f32.mrb[0].mxu0
      %v3318 = vadd.f32 0.0, %v3317
      %v3319 = vpop.f32.mrb[0].mxu0
      %3320 = vmatprep.mubr.bf16.mxu0 0
      %3321 = vmatmul.mubr.bf16.gmra.mrb[0].mxu0 %v3110
      %v3322 = vpop.f32.mrb[0].mxu0
      %v3323 = vadd.f32 0.0, %v3322
      %v3324 = vpop.f32.mrb[0].mxu0
      %v3325 = vpop.f32.mrb[0].mxu0
      %v3326 = vadd.f32 0.0, %v3325
      %v3327 = vpop.f32.mrb[0].mxu0
      %3328 = vmatprep.mubr.bf16.mxu0 0
      %3329 = vmatmul.mubr.bf16.gmra.mrb[0].mxu0 %v3111
      %v3330 = vpop.f32.mrb[0].mxu0
      %v3331 = vadd.f32 0.0, %v3330
      %v3332 = vpop.f32.mrb[0].mxu0
      %v3333 = vpop.f32.mrb[0].mxu0
      %v3334 = vadd.f32 0.0, %v3333
      %v3335 = vpop.f32.mrb[0].mxu0
      %3336 = vdwg.mxu0
      %v3337 = vadd.f32 %v2839, %v3211
      %v3338 = vadd.f32 %v2840, %v3214
      %v3339 = vadd.f32 %v2841, %v3219
      %v3340 = vadd.f32 %v2842, %v3222
      %v3341 = vadd.f32 %v2843, %v3227
      %v3342 = vadd.f32 %v2844, %v3230
      %v3343 = vadd.f32 %v2845, %v3235
      %v3344 = vadd.f32 %v2846, %v3238
      %v3345 = vadd.f32 %v2847, %v3243
      %v3346 = vadd.f32 %v2848, %v3246
      %v3347 = vadd.f32 %v2849, %v3251
      %v3348 = vadd.f32 %v2850, %v3254
      %v3349 = vadd.f32 %v2851, %v3259
      %v3350 = vadd.f32 %v2852, %v3262
      %v3351 = vadd.f32 %v2853, %v3267
      %v3352 = vadd.f32 %v2854, %v3270
      %v3353 = vadd.f32 %v2855, %v3275
      %v3354 = vadd.f32 %v2856, %v3278
      %v3355 = vadd.f32 %v2857, %v3283
      %v3356 = vadd.f32 %v2858, %v3286
      %v3357 = vadd.f32 %v2859, %v3291
      %v3358 = vadd.f32 %v2860, %v3294
      %v3359 = vadd.f32 %v2861, %v3299
      %v3360 = vadd.f32 %v2862, %v3302
      %v3361 = vadd.f32 %v2863, %v3307
      %v3362 = vadd.f32 %v2864, %v3310
      %v3363 = vadd.f32 %v2865, %v3315
      %v3364 = vadd.f32 %v2866, %v3318
      %v3365 = vadd.f32 %v2867, %v3323
      %v3366 = vadd.f32 %v2868, %v3326
      %v3367 = vadd.f32 %v2869, %v3331
      %v3368 = vadd.f32 %v2870, %v3334
      %s3369 = scalar_lea.vmem %s192, 24
      %v3370 = vld [vmem:[%s3369] sm:$0xf]
      %v3371 = vld [vmem:[%s3369 + $0x4] sm:$0xf]
      %v3372 = vld [vmem:[%s3369 + $0xc] sm:$0xf]
      %v3373 = vld [vmem:[%s3369 + $0x10] sm:$0xf]
      %v3374 = vld [vmem:[%s3369 + $0x18] sm:$0xf]
      %v3375 = vld [vmem:[%s3369 + $0x1c] sm:$0xf]
      %v3376 = vld [vmem:[%s3369 + $0x24] sm:$0xf]
      %v3377 = vld [vmem:[%s3369 + $0x28] sm:$0xf]
      %v3378 = vld [vmem:[%s3369 + $0x30] sm:$0xf]
      %v3379 = vld [vmem:[%s3369 + $0x34] sm:$0xf]
      %v3380 = vld [vmem:[%s3369 + $0x3c] sm:$0xf]
      %v3381 = vld [vmem:[%s3369 + $0x40] sm:$0xf]
      %v3382 = vld [vmem:[%s3369 + $0x48] sm:$0xf]
      %v3383 = vld [vmem:[%s3369 + $0x4c] sm:$0xf]
      %v3384 = vld [vmem:[%s3369 + $0x54] sm:$0xf]
      %v3385 = vld [vmem:[%s3369 + $0x58] sm:$0xf]
      %v3386 = vld [vmem:[%s3369 + $0x60] sm:$0xf]
      %v3387 = vld [vmem:[%s3369 + $0x64] sm:$0xf]
      %v3388 = vld [vmem:[%s3369 + $0x6c] sm:$0xf]
      %v3389 = vld [vmem:[%s3369 + $0x70] sm:$0xf]
      %v3390 = vld [vmem:[%s3369 + $0x78] sm:$0xf]
      %v3391 = vld [vmem:[%s3369 + $0x7c] sm:$0xf]
      %v3392 = vld [vmem:[%s3369 + $0x84] sm:$0xf]
      %v3393 = vld [vmem:[%s3369 + $0x88] sm:$0xf]
      %v3394 = vld [vmem:[%s3369 + $0x90] sm:$0xf]
      %v3395 = vld [vmem:[%s3369 + $0x94] sm:$0xf]
      %v3396 = vld [vmem:[%s3369 + $0x9c] sm:$0xf]
      %v3397 = vld [vmem:[%s3369 + $0xa0] sm:$0xf]
      %v3398 = vld [vmem:[%s3369 + $0xa8] sm:$0xf]
      %v3399 = vld [vmem:[%s3369 + $0xac] sm:$0xf]
      %v3400 = vld [vmem:[%s3369 + $0xb4] sm:$0xf]
      %v3401 = vld [vmem:[%s3369 + $0xb8] sm:$0xf]
      %s3402 = scalar_lea.vmem %s1, 384
      %v3403 = vld [vmem:[%s3402] sm:$0xf]
      %v3404 = vld [vmem:[%s3402 + $0x4] sm:$0xf]
      %v3405 = vld [vmem:[%s3402 + $0x8] sm:$0xf]
      %v3406 = vld [vmem:[%s3402 + $0xc] sm:$0xf]
      %v3407 = vld [vmem:[%s3402 + $0x10] sm:$0xf]
      %v3408 = vld [vmem:[%s3402 + $0x14] sm:$0xf]
      %v3409 = vld [vmem:[%s3402 + $0x18] sm:$0xf]
      %v3410 = vld [vmem:[%s3402 + $0x1c] sm:$0xf]
      %v3411 = vld [vmem:[%s3402 + $0x20] sm:$0xf]
      %v3412 = vld [vmem:[%s3402 + $0x24] sm:$0xf]
      %v3413 = vld [vmem:[%s3402 + $0x28] sm:$0xf]
      %v3414 = vld [vmem:[%s3402 + $0x2c] sm:$0xf]
      %v3415 = vld [vmem:[%s3402 + $0x30] sm:$0xf]
      %v3416 = vld [vmem:[%s3402 + $0x34] sm:$0xf]
      %v3417 = vld [vmem:[%s3402 + $0x38] sm:$0xf]
      %v3418 = vld [vmem:[%s3402 + $0x3c] sm:$0xf]
      %v3451 = vunpack.c.l.b16 %v3370
      %v3452 = vunpack.c.l.b16 %v3371
      %v3453 = vunpack.c.l.b16 %v3372
      %v3454 = vunpack.c.l.b16 %v3373
      %v3455 = vunpack.c.l.b16 %v3374
      %v3456 = vunpack.c.l.b16 %v3375
      %v3457 = vunpack.c.l.b16 %v3376
      %v3458 = vunpack.c.l.b16 %v3377
      %v3459 = vunpack.c.l.b16 %v3378
      %v3460 = vunpack.c.l.b16 %v3379
      %v3461 = vunpack.c.l.b16 %v3380
      %v3462 = vunpack.c.l.b16 %v3381
      %v3463 = vunpack.c.l.b16 %v3382
      %v3464 = vunpack.c.l.b16 %v3383
      %v3465 = vunpack.c.l.b16 %v3384
      %v3466 = vunpack.c.l.b16 %v3385
      %v3467 = vunpack.c.l.b16 %v3386
      %v3468 = vunpack.c.l.b16 %v3387
      %v3469 = vunpack.c.l.b16 %v3388
      %v3470 = vunpack.c.l.b16 %v3389
      %v3471 = vunpack.c.l.b16 %v3390
      %v3472 = vunpack.c.l.b16 %v3391
      %v3473 = vunpack.c.l.b16 %v3392
      %v3474 = vunpack.c.l.b16 %v3393
      %v3475 = vunpack.c.l.b16 %v3394
      %v3476 = vunpack.c.l.b16 %v3395
      %v3477 = vunpack.c.l.b16 %v3396
      %v3478 = vunpack.c.l.b16 %v3397
      %v3479 = vunpack.c.l.b16 %v3398
      %v3480 = vunpack.c.l.b16 %v3399
      %v3481 = vunpack.c.l.b16 %v3400
      %v3482 = vunpack.c.l.b16 %v3401
      %v3483 = vpack.c.b16 %v3452, %v3451
      %v3484 = vpack.c.b16 %v3454, %v3453
      %v3485 = vpack.c.b16 %v3456, %v3455
      %v3486 = vpack.c.b16 %v3458, %v3457
      %v3487 = vpack.c.b16 %v3460, %v3459
      %v3488 = vpack.c.b16 %v3462, %v3461
      %v3489 = vpack.c.b16 %v3464, %v3463
      %v3490 = vpack.c.b16 %v3466, %v3465
      %v3491 = vpack.c.b16 %v3468, %v3467
      %v3492 = vpack.c.b16 %v3470, %v3469
      %v3493 = vpack.c.b16 %v3472, %v3471
      %v3494 = vpack.c.b16 %v3474, %v3473
      %v3495 = vpack.c.b16 %v3476, %v3475
      %v3496 = vpack.c.b16 %v3478, %v3477
      %v3497 = vpack.c.b16 %v3480, %v3479
      %v3498 = vpack.c.b16 %v3482, %v3481
      %v3531 = vunpack.c.l.b16 %v3403
      %v3532 = vunpack.c.l.b16 %v3404
      %v3533 = vunpack.c.l.b16 %v3405
      %v3534 = vunpack.c.l.b16 %v3406
      %v3535 = vunpack.c.l.b16 %v3407
      %v3536 = vunpack.c.l.b16 %v3408
      %v3537 = vunpack.c.l.b16 %v3409
      %v3538 = vunpack.c.l.b16 %v3410
      %v3539 = vunpack.c.l.b16 %v3411
      %v3540 = vunpack.c.l.b16 %v3412
      %v3541 = vunpack.c.l.b16 %v3413
      %v3542 = vunpack.c.l.b16 %v3414
      %v3543 = vunpack.c.l.b16 %v3415
      %v3544 = vunpack.c.l.b16 %v3416
      %v3545 = vunpack.c.l.b16 %v3417
      %v3546 = vunpack.c.l.b16 %v3418
      %v3547 = vpack.c.b16 %v3532, %v3531
      %v3548 = vpack.c.b16 %v3534, %v3533
      %v3549 = vpack.c.b16 %v3536, %v3535
      %v3550 = vpack.c.b16 %v3538, %v3537
      %v3551 = vpack.c.b16 %v3540, %v3539
      %v3552 = vpack.c.b16 %v3542, %v3541
      %v3553 = vpack.c.b16 %v3544, %v3543
      %v3554 = vpack.c.b16 %v3546, %v3545
      %3563 = vmatprep.subr.bf16.mxu0 0
      %3564 = vmatpush1.bf16.msra.mxu0 %v3547
      %3565 = vmatprep.subr.bf16.mxu0 0
      %3566 = vmatpush1.bf16.msra.mxu0 %v3548
      %3567 = vmatprep.subr.bf16.mxu0 0
      %3568 = vmatpush1.bf16.msra.mxu0 %v3549
      %3569 = vmatprep.subr.bf16.mxu0 0
      %3570 = vmatpush1.bf16.msra.mxu0 %v3550
      %3571 = vmatprep.subr.bf16.mxu0 0
      %3572 = vmatpush1.bf16.msra.mxu0 %v3551
      %3573 = vmatprep.subr.bf16.mxu0 0
      %3574 = vmatpush1.bf16.msra.mxu0 %v3552
      %3575 = vmatprep.subr.bf16.mxu0 0
      %3576 = vmatpush1.bf16.msra.mxu0 %v3553
      %3577 = vmatprep.subr.bf16.mxu0 0
      %3578 = vmatpush1.bf16.msra.mxu0 %v3554
      %3579 = vmatprep.subr.bf16.mxu0 0
      %3580 = vmatpush1.bf16.msra.mxu0 0
      %3581 = vmatprep.subr.bf16.mxu0 0
      %3582 = vmatpush1.bf16.msra.mxu0 0
      %3583 = vmatprep.subr.bf16.mxu0 0
      %3584 = vmatpush1.bf16.msra.mxu0 0
      %3585 = vmatprep.subr.bf16.mxu0 0
      %3586 = vmatpush1.bf16.msra.mxu0 0
      %3587 = vmatprep.subr.bf16.mxu0 0
      %3588 = vmatpush1.bf16.msra.mxu0 0
      %3589 = vmatprep.subr.bf16.mxu0 0
      %3590 = vmatpush1.bf16.msra.mxu0 0
      %3591 = vmatprep.subr.bf16.mxu0 0
      %3592 = vmatpush1.bf16.msra.mxu0 0
      %3593 = vmatprep.subr.bf16.mxu0 0
      %3594 = vmatpush1.bf16.msra.mxu0 0
      %3595 = vmatprep.mubr.bf16.mxu0 0
      %3596 = vmatmul.mubr.bf16.gmra.mrb[0].mxu0 %v3483
      %v3597 = vpop.f32.mrb[0].mxu0
      %v3598 = vadd.f32 0.0, %v3597
      %v3599 = vpop.f32.mrb[0].mxu0
      %v3600 = vpop.f32.mrb[0].mxu0
      %v3601 = vadd.f32 0.0, %v3600
      %v3602 = vpop.f32.mrb[0].mxu0
      %3603 = vmatprep.mubr.bf16.mxu0 0
      %3604 = vmatmul.mubr.bf16.gmra.mrb[0].mxu0 %v3484
      %v3605 = vpop.f32.mrb[0].mxu0
      %v3606 = vadd.f32 0.0, %v3605
      %v3607 = vpop.f32.mrb[0].mxu0
      %v3608 = vpop.f32.mrb[0].mxu0
      %v3609 = vadd.f32 0.0, %v3608
      %v3610 = vpop.f32.mrb[0].mxu0
      %3611 = vmatprep.mubr.bf16.mxu0 0
      %3612 = vmatmul.mubr.bf16.gmra.mrb[0].mxu0 %v3485
      %v3613 = vpop.f32.mrb[0].mxu0
      %v3614 = vadd.f32 0.0, %v3613
      %v3615 = vpop.f32.mrb[0].mxu0
      %v3616 = vpop.f32.mrb[0].mxu0
      %v3617 = vadd.f32 0.0, %v3616
      %v3618 = vpop.f32.mrb[0].mxu0
      %3619 = vmatprep.mubr.bf16.mxu0 0
      %3620 = vmatmul.mubr.bf16.gmra.mrb[0].mxu0 %v3486
      %v3621 = vpop.f32.mrb[0].mxu0
      %v3622 = vadd.f32 0.0, %v3621
      %v3623 = vpop.f32.mrb[0].mxu0
      %v3624 = vpop.f32.mrb[0].mxu0
      %v3625 = vadd.f32 0.0, %v3624
      %v3626 = vpop.f32.mrb[0].mxu0
      %3627 = vmatprep.mubr.bf16.mxu0 0
      %3628 = vmatmul.mubr.bf16.gmra.mrb[0].mxu0 %v3487
      %v3629 = vpop.f32.mrb[0].mxu0
      %v3630 = vadd.f32 0.0, %v3629
      %v3631 = vpop.f32.mrb[0].mxu0
      %v3632 = vpop.f32.mrb[0].mxu0
      %v3633 = vadd.f32 0.0, %v3632
      %v3634 = vpop.f32.mrb[0].mxu0
      %3635 = vmatprep.mubr.bf16.mxu0 0
      %3636 = vmatmul.mubr.bf16.gmra.mrb[0].mxu0 %v3488
      %v3637 = vpop.f32.mrb[0].mxu0
      %v3638 = vadd.f32 0.0, %v3637
      %v3639 = vpop.f32.mrb[0].mxu0
      %v3640 = vpop.f32.mrb[0].mxu0
      %v3641 = vadd.f32 0.0, %v3640
      %v3642 = vpop.f32.mrb[0].mxu0
      %3643 = vmatprep.mubr.bf16.mxu0 0
      %3644 = vmatmul.mubr.bf16.gmra.mrb[0].mxu0 %v3489
      %v3645 = vpop.f32.mrb[0].mxu0
      %v3646 = vadd.f32 0.0, %v3645
      %v3647 = vpop.f32.mrb[0].mxu0
      %v3648 = vpop.f32.mrb[0].mxu0
      %v3649 = vadd.f32 0.0, %v3648
      %v3650 = vpop.f32.mrb[0].mxu0
      %3651 = vmatprep.mubr.bf16.mxu0 0
      %3652 = vmatmul.mubr.bf16.gmra.mrb[0].mxu0 %v3490
      %v3653 = vpop.f32.mrb[0].mxu0
      %v3654 = vadd.f32 0.0, %v3653
      %v3655 = vpop.f32.mrb[0].mxu0
      %v3656 = vpop.f32.mrb[0].mxu0
      %v3657 = vadd.f32 0.0, %v3656
      %v3658 = vpop.f32.mrb[0].mxu0
      %3659 = vmatprep.mubr.bf16.mxu0 0
      %3660 = vmatmul.mubr.bf16.gmra.mrb[0].mxu0 %v3491
      %v3661 = vpop.f32.mrb[0].mxu0
      %v3662 = vadd.f32 0.0, %v3661
      %v3663 = vpop.f32.mrb[0].mxu0
      %v3664 = vpop.f32.mrb[0].mxu0
      %v3665 = vadd.f32 0.0, %v3664
      %v3666 = vpop.f32.mrb[0].mxu0
      %3667 = vmatprep.mubr.bf16.mxu0 0
      %3668 = vmatmul.mubr.bf16.gmra.mrb[0].mxu0 %v3492
      %v3669 = vpop.f32.mrb[0].mxu0
      %v3670 = vadd.f32 0.0, %v3669
      %v3671 = vpop.f32.mrb[0].mxu0
      %v3672 = vpop.f32.mrb[0].mxu0
      %v3673 = vadd.f32 0.0, %v3672
      %v3674 = vpop.f32.mrb[0].mxu0
      %3675 = vmatprep.mubr.bf16.mxu0 0
      %3676 = vmatmul.mubr.bf16.gmra.mrb[0].mxu0 %v3493
      %v3677 = vpop.f32.mrb[0].mxu0
      %v3678 = vadd.f32 0.0, %v3677
      %v3679 = vpop.f32.mrb[0].mxu0
      %v3680 = vpop.f32.mrb[0].mxu0
      %v3681 = vadd.f32 0.0, %v3680
      %v3682 = vpop.f32.mrb[0].mxu0
      %3683 = vmatprep.mubr.bf16.mxu0 0
      %3684 = vmatmul.mubr.bf16.gmra.mrb[0].mxu0 %v3494
      %v3685 = vpop.f32.mrb[0].mxu0
      %v3686 = vadd.f32 0.0, %v3685
      %v3687 = vpop.f32.mrb[0].mxu0
      %v3688 = vpop.f32.mrb[0].mxu0
      %v3689 = vadd.f32 0.0, %v3688
      %v3690 = vpop.f32.mrb[0].mxu0
      %3691 = vmatprep.mubr.bf16.mxu0 0
      %3692 = vmatmul.mubr.bf16.gmra.mrb[0].mxu0 %v3495
      %v3693 = vpop.f32.mrb[0].mxu0
      %v3694 = vadd.f32 0.0, %v3693
      %v3695 = vpop.f32.mrb[0].mxu0
      %v3696 = vpop.f32.mrb[0].mxu0
      %v3697 = vadd.f32 0.0, %v3696
      %v3698 = vpop.f32.mrb[0].mxu0
      %3699 = vmatprep.mubr.bf16.mxu0 0
      %3700 = vmatmul.mubr.bf16.gmra.mrb[0].mxu0 %v3496
      %v3701 = vpop.f32.mrb[0].mxu0
      %v3702 = vadd.f32 0.0, %v3701
      %v3703 = vpop.f32.mrb[0].mxu0
      %v3704 = vpop.f32.mrb[0].mxu0
      %v3705 = vadd.f32 0.0, %v3704
      %v3706 = vpop.f32.mrb[0].mxu0
      %3707 = vmatprep.mubr.bf16.mxu0 0
      %3708 = vmatmul.mubr.bf16.gmra.mrb[0].mxu0 %v3497
      %v3709 = vpop.f32.mrb[0].mxu0
      %v3710 = vadd.f32 0.0, %v3709
      %v3711 = vpop.f32.mrb[0].mxu0
      %v3712 = vpop.f32.mrb[0].mxu0
      %v3713 = vadd.f32 0.0, %v3712
      %v3714 = vpop.f32.mrb[0].mxu0
      %3715 = vmatprep.mubr.bf16.mxu0 0
      %3716 = vmatmul.mubr.bf16.gmra.mrb[0].mxu0 %v3498
      %v3717 = vpop.f32.mrb[0].mxu0
      %v3718 = vadd.f32 0.0, %v3717
      %v3719 = vpop.f32.mrb[0].mxu0
      %v3720 = vpop.f32.mrb[0].mxu0
      %v3721 = vadd.f32 0.0, %v3720
      %v3722 = vpop.f32.mrb[0].mxu0
      %3723 = vdwg.mxu0
      %v3724 = vadd.f32 %v3337, %v3598
      %v3725 = vadd.f32 %v3338, %v3601
      %v3726 = vadd.f32 %v3339, %v3606
      %v3727 = vadd.f32 %v3340, %v3609
      %v3728 = vadd.f32 %v3341, %v3614
      %v3729 = vadd.f32 %v3342, %v3617
      %v3730 = vadd.f32 %v3343, %v3622
      %v3731 = vadd.f32 %v3344, %v3625
      %v3732 = vadd.f32 %v3345, %v3630
      %v3733 = vadd.f32 %v3346, %v3633
      %v3734 = vadd.f32 %v3347, %v3638
      %v3735 = vadd.f32 %v3348, %v3641
      %v3736 = vadd.f32 %v3349, %v3646
      %v3737 = vadd.f32 %v3350, %v3649
      %v3738 = vadd.f32 %v3351, %v3654
      %v3739 = vadd.f32 %v3352, %v3657
      %v3740 = vadd.f32 %v3353, %v3662
      %v3741 = vadd.f32 %v3354, %v3665
      %v3742 = vadd.f32 %v3355, %v3670
      %v3743 = vadd.f32 %v3356, %v3673
      %v3744 = vadd.f32 %v3357, %v3678
      %v3745 = vadd.f32 %v3358, %v3681
      %v3746 = vadd.f32 %v3359, %v3686
      %v3747 = vadd.f32 %v3360, %v3689
      %v3748 = vadd.f32 %v3361, %v3694
      %v3749 = vadd.f32 %v3362, %v3697
      %v3750 = vadd.f32 %v3363, %v3702
      %v3751 = vadd.f32 %v3364, %v3705
      %v3752 = vadd.f32 %v3365, %v3710
      %v3753 = vadd.f32 %v3366, %v3713
      %v3754 = vadd.f32 %v3367, %v3718
      %v3755 = vadd.f32 %v3368, %v3721
      %v3756 = vld [vmem:[%s3369] sm:$0xf]
      %v3757 = vld [vmem:[%s3369 + $0x4] sm:$0xf]
      %v3758 = vld [vmem:[%s3369 + $0x8] sm:$0x1]
      %v3759 = vld [vmem:[%s3369 + $0xc] sm:$0xf]
      %v3760 = vld [vmem:[%s3369 + $0x10] sm:$0xf]
      %v3761 = vld [vmem:[%s3369 + $0x14] sm:$0x1]
      %v3762 = vld [vmem:[%s3369 + $0x18] sm:$0xf]
      %v3763 = vld [vmem:[%s3369 + $0x1c] sm:$0xf]
      %v3764 = vld [vmem:[%s3369 + $0x20] sm:$0x1]
      %v3765 = vld [vmem:[%s3369 + $0x24] sm:$0xf]
      %v3766 = vld [vmem:[%s3369 + $0x28] sm:$0xf]
      %v3767 = vld [vmem:[%s3369 + $0x2c] sm:$0x1]
      %v3768 = vld [vmem:[%s3369 + $0x30] sm:$0xf]
      %v3769 = vld [vmem:[%s3369 + $0x34] sm:$0xf]
      %v3770 = vld [vmem:[%s3369 + $0x38] sm:$0x1]
      %v3771 = vld [vmem:[%s3369 + $0x3c] sm:$0xf]
      %v3772 = vld [vmem:[%s3369 + $0x40] sm:$0xf]
      %v3773 = vld [vmem:[%s3369 + $0x44] sm:$0x1]
      %v3774 = vld [vmem:[%s3369 + $0x48] sm:$0xf]
      %v3775 = vld [vmem:[%s3369 + $0x4c] sm:$0xf]
      %v3776 = vld [vmem:[%s3369 + $0x50] sm:$0x1]
      %v3777 = vld [vmem:[%s3369 + $0x54] sm:$0xf]
      %v3778 = vld [vmem:[%s3369 + $0x58] sm:$0xf]
      %v3779 = vld [vmem:[%s3369 + $0x5c] sm:$0x1]
      %v3780 = vld [vmem:[%s3369 + $0x60] sm:$0xf]
      %v3781 = vld [vmem:[%s3369 + $0x64] sm:$0xf]
      %v3782 = vld [vmem:[%s3369 + $0x68] sm:$0x1]
      %v3783 = vld [vmem:[%s3369 + $0x6c] sm:$0xf]
      %v3784 = vld [vmem:[%s3369 + $0x70] sm:$0xf]
      %v3785 = vld [vmem:[%s3369 + $0x74] sm:$0x1]
      %v3786 = vld [vmem:[%s3369 + $0x78] sm:$0xf]
      %v3787 = vld [vmem:[%s3369 + $0x7c] sm:$0xf]
      %v3788 = vld [vmem:[%s3369 + $0x80] sm:$0x1]
      %v3789 = vld [vmem:[%s3369 + $0x84] sm:$0xf]
      %v3790 = vld [vmem:[%s3369 + $0x88] sm:$0xf]
      %v3791 = vld [vmem:[%s3369 + $0x8c] sm:$0x1]
      %v3792 = vld [vmem:[%s3369 + $0x90] sm:$0xf]
      %v3793 = vld [vmem:[%s3369 + $0x94] sm:$0xf]
      %v3794 = vld [vmem:[%s3369 + $0x98] sm:$0x1]
      %v3795 = vld [vmem:[%s3369 + $0x9c] sm:$0xf]
      %v3796 = vld [vmem:[%s3369 + $0xa0] sm:$0xf]
      %v3797 = vld [vmem:[%s3369 + $0xa4] sm:$0x1]
      %v3798 = vld [vmem:[%s3369 + $0xa8] sm:$0xf]
      %v3799 = vld [vmem:[%s3369 + $0xac] sm:$0xf]
      %v3800 = vld [vmem:[%s3369 + $0xb0] sm:$0x1]
      %v3801 = vld [vmem:[%s3369 + $0xb4] sm:$0xf]
      %v3802 = vld [vmem:[%s3369 + $0xb8] sm:$0xf]
      %v3803 = vld [vmem:[%s3369 + $0xbc] sm:$0x1]
      %v3805 = vshrl.u32 %v3756, 16
      %v3807 = vrot.slane %v3805, 4
      %v3808 = vshll.u32 %v3756, 16
      %v3810 = vrot.slane %v3808, 5
      %v3811 = vor.u32 %v3807, %v3810
      %v3812 = vrot.slane %v3811, 4
      %v3814 = vshll.u32 %v3757, 16
      %v3816 = vrot.slane %v3814, 5
      %v3817 = vsel %vm265, %v3812, %v3816
      %v3818 = vshrl.u32 %v3757, 16
      %v3820 = vrot.slane %v3818, 4
      %v3821 = vor.u32 %v3820, %v3816
      %v3822 = vrot.slane %v3821, 4
      %v3824 = vshll.u32 %v3758, 16
      %v3826 = vrot.slane %v3824, 5
      %v3827 = vsel %vm265, %v3822, %v3826
      %v3829 = vshrl.u32 %v3759, 16
      %v3831 = vrot.slane %v3829, 4
      %v3832 = vshll.u32 %v3759, 16
      %v3834 = vrot.slane %v3832, 5
      %v3835 = vor.u32 %v3831, %v3834
      %v3836 = vrot.slane %v3835, 4
      %v3838 = vshll.u32 %v3760, 16
      %v3840 = vrot.slane %v3838, 5
      %v3841 = vsel %vm265, %v3836, %v3840
      %v3842 = vshrl.u32 %v3760, 16
      %v3844 = vrot.slane %v3842, 4
      %v3845 = vor.u32 %v3844, %v3840
      %v3846 = vrot.slane %v3845, 4
      %v3848 = vshll.u32 %v3761, 16
      %v3850 = vrot.slane %v3848, 5
      %v3851 = vsel %vm265, %v3846, %v3850
      %v3853 = vshrl.u32 %v3762, 16
      %v3855 = vrot.slane %v3853, 4
      %v3856 = vshll.u32 %v3762, 16
      %v3858 = vrot.slane %v3856, 5
      %v3859 = vor.u32 %v3855, %v3858
      %v3860 = vrot.slane %v3859, 4
      %v3862 = vshll.u32 %v3763, 16
      %v3864 = vrot.slane %v3862, 5
      %v3865 = vsel %vm265, %v3860, %v3864
      %v3866 = vshrl.u32 %v3763, 16
      %v3868 = vrot.slane %v3866, 4
      %v3869 = vor.u32 %v3868, %v3864
      %v3870 = vrot.slane %v3869, 4
      %v3872 = vshll.u32 %v3764, 16
      %v3874 = vrot.slane %v3872, 5
      %v3875 = vsel %vm265, %v3870, %v3874
      %v3877 = vshrl.u32 %v3765, 16
      %v3879 = vrot.slane %v3877, 4
      %v3880 = vshll.u32 %v3765, 16
      %v3882 = vrot.slane %v3880, 5
      %v3883 = vor.u32 %v3879, %v3882
      %v3884 = vrot.slane %v3883, 4
      %v3886 = vshll.u32 %v3766, 16
      %v3888 = vrot.slane %v3886, 5
      %v3889 = vsel %vm265, %v3884, %v3888
      %v3890 = vshrl.u32 %v3766, 16
      %v3892 = vrot.slane %v3890, 4
      %v3893 = vor.u32 %v3892, %v3888
      %v3894 = vrot.slane %v3893, 4
      %v3896 = vshll.u32 %v3767, 16
      %v3898 = vrot.slane %v3896, 5
      %v3899 = vsel %vm265, %v3894, %v3898
      %v3901 = vshrl.u32 %v3768, 16
      %v3903 = vrot.slane %v3901, 4
      %v3904 = vshll.u32 %v3768, 16
      %v3906 = vrot.slane %v3904, 5
      %v3907 = vor.u32 %v3903, %v3906
      %v3908 = vrot.slane %v3907, 4
      %v3910 = vshll.u32 %v3769, 16
      %v3912 = vrot.slane %v3910, 5
      %v3913 = vsel %vm265, %v3908, %v3912
      %v3914 = vshrl.u32 %v3769, 16
      %v3916 = vrot.slane %v3914, 4
      %v3917 = vor.u32 %v3916, %v3912
      %v3918 = vrot.slane %v3917, 4
      %v3920 = vshll.u32 %v3770, 16
      %v3922 = vrot.slane %v3920, 5
      %v3923 = vsel %vm265, %v3918, %v3922
      %v3925 = vshrl.u32 %v3771, 16
      %v3927 = vrot.slane %v3925, 4
      %v3928 = vshll.u32 %v3771, 16
      %v3930 = vrot.slane %v3928, 5
      %v3931 = vor.u32 %v3927, %v3930
      %v3932 = vrot.slane %v3931, 4
      %v3934 = vshll.u32 %v3772, 16
      %v3936 = vrot.slane %v3934, 5
      %v3937 = vsel %vm265, %v3932, %v3936
      %v3938 = vshrl.u32 %v3772, 16
      %v3940 = vrot.slane %v3938, 4
      %v3941 = vor.u32 %v3940, %v3936
      %v3942 = vrot.slane %v3941, 4
      %v3944 = vshll.u32 %v3773, 16
      %v3946 = vrot.slane %v3944, 5
      %v3947 = vsel %vm265, %v3942, %v3946
      %v3949 = vshrl.u32 %v3774, 16
      %v3951 = vrot.slane %v3949, 4
      %v3952 = vshll.u32 %v3774, 16
      %v3954 = vrot.slane %v3952, 5
      %v3955 = vor.u32 %v3951, %v3954
      %v3956 = vrot.slane %v3955, 4
      %v3958 = vshll.u32 %v3775, 16
      %v3960 = vrot.slane %v3958, 5
      %v3961 = vsel %vm265, %v3956, %v3960
      %v3962 = vshrl.u32 %v3775, 16
      %v3964 = vrot.slane %v3962, 4
      %v3965 = vor.u32 %v3964, %v3960
      %v3966 = vrot.slane %v3965, 4
      %v3968 = vshll.u32 %v3776, 16
      %v3970 = vrot.slane %v3968, 5
      %v3971 = vsel %vm265, %v3966, %v3970
      %v3973 = vshrl.u32 %v3777, 16
      %v3975 = vrot.slane %v3973, 4
      %v3976 = vshll.u32 %v3777, 16
      %v3978 = vrot.slane %v3976, 5
      %v3979 = vor.u32 %v3975, %v3978
      %v3980 = vrot.slane %v3979, 4
      %v3982 = vshll.u32 %v3778, 16
      %v3984 = vrot.slane %v3982, 5
      %v3985 = vsel %vm265, %v3980, %v3984
      %v3986 = vshrl.u32 %v3778, 16
      %v3988 = vrot.slane %v3986, 4
      %v3989 = vor.u32 %v3988, %v3984
      %v3990 = vrot.slane %v3989, 4
      %v3992 = vshll.u32 %v3779, 16
      %v3994 = vrot.slane %v3992, 5
      %v3995 = vsel %vm265, %v3990, %v3994
      %v3997 = vshrl.u32 %v3780, 16
      %v3999 = vrot.slane %v3997, 4
      %v4000 = vshll.u32 %v3780, 16
      %v4002 = vrot.slane %v4000, 5
      %v4003 = vor.u32 %v3999, %v4002
      %v4004 = vrot.slane %v4003, 4
      %v4006 = vshll.u32 %v3781, 16
      %v4008 = vrot.slane %v4006, 5
      %v4009 = vsel %vm265, %v4004, %v4008
      %v4010 = vshrl.u32 %v3781, 16
      %v4012 = vrot.slane %v4010, 4
      %v4013 = vor.u32 %v4012, %v4008
      %v4014 = vrot.slane %v4013, 4
      %v4016 = vshll.u32 %v3782, 16
      %v4018 = vrot.slane %v4016, 5
      %v4019 = vsel %vm265, %v4014, %v4018
      %v4021 = vshrl.u32 %v3783, 16
      %v4023 = vrot.slane %v4021, 4
      %v4024 = vshll.u32 %v3783, 16
      %v4026 = vrot.slane %v4024, 5
      %v4027 = vor.u32 %v4023, %v4026
      %v4028 = vrot.slane %v4027, 4
      %v4030 = vshll.u32 %v3784, 16
      %v4032 = vrot.slane %v4030, 5
      %v4033 = vsel %vm265, %v4028, %v4032
      %v4034 = vshrl.u32 %v3784, 16
      %v4036 = vrot.slane %v4034, 4
      %v4037 = vor.u32 %v4036, %v4032
      %v4038 = vrot.slane %v4037, 4
      %v4040 = vshll.u32 %v3785, 16
      %v4042 = vrot.slane %v4040, 5
      %v4043 = vsel %vm265, %v4038, %v4042
      %v4045 = vshrl.u32 %v3786, 16
      %v4047 = vrot.slane %v4045, 4
      %v4048 = vshll.u32 %v3786, 16
      %v4050 = vrot.slane %v4048, 5
      %v4051 = vor.u32 %v4047, %v4050
      %v4052 = vrot.slane %v4051, 4
      %v4054 = vshll.u32 %v3787, 16
      %v4056 = vrot.slane %v4054, 5
      %v4057 = vsel %vm265, %v4052, %v4056
      %v4058 = vshrl.u32 %v3787, 16
      %v4060 = vrot.slane %v4058, 4
      %v4061 = vor.u32 %v4060, %v4056
      %v4062 = vrot.slane %v4061, 4
      %v4064 = vshll.u32 %v3788, 16
      %v4066 = vrot.slane %v4064, 5
      %v4067 = vsel %vm265, %v4062, %v4066
      %v4069 = vshrl.u32 %v3789, 16
      %v4071 = vrot.slane %v4069, 4
      %v4072 = vshll.u32 %v3789, 16
      %v4074 = vrot.slane %v4072, 5
      %v4075 = vor.u32 %v4071, %v4074
      %v4076 = vrot.slane %v4075, 4
      %v4078 = vshll.u32 %v3790, 16
      %v4080 = vrot.slane %v4078, 5
      %v4081 = vsel %vm265, %v4076, %v4080
      %v4082 = vshrl.u32 %v3790, 16
      %v4084 = vrot.slane %v4082, 4
      %v4085 = vor.u32 %v4084, %v4080
      %v4086 = vrot.slane %v4085, 4
      %v4088 = vshll.u32 %v3791, 16
      %v4090 = vrot.slane %v4088, 5
      %v4091 = vsel %vm265, %v4086, %v4090
      %v4093 = vshrl.u32 %v3792, 16
      %v4095 = vrot.slane %v4093, 4
      %v4096 = vshll.u32 %v3792, 16
      %v4098 = vrot.slane %v4096, 5
      %v4099 = vor.u32 %v4095, %v4098
      %v4100 = vrot.slane %v4099, 4
      %v4102 = vshll.u32 %v3793, 16
      %v4104 = vrot.slane %v4102, 5
      %v4105 = vsel %vm265, %v4100, %v4104
      %v4106 = vshrl.u32 %v3793, 16
      %v4108 = vrot.slane %v4106, 4
      %v4109 = vor.u32 %v4108, %v4104
      %v4110 = vrot.slane %v4109, 4
      %v4112 = vshll.u32 %v3794, 16
      %v4114 = vrot.slane %v4112, 5
      %v4115 = vsel %vm265, %v4110, %v4114
      %v4117 = vshrl.u32 %v3795, 16
      %v4119 = vrot.slane %v4117, 4
      %v4120 = vshll.u32 %v3795, 16
      %v4122 = vrot.slane %v4120, 5
      %v4123 = vor.u32 %v4119, %v4122
      %v4124 = vrot.slane %v4123, 4
      %v4126 = vshll.u32 %v3796, 16
      %v4128 = vrot.slane %v4126, 5
      %v4129 = vsel %vm265, %v4124, %v4128
      %v4130 = vshrl.u32 %v3796, 16
      %v4132 = vrot.slane %v4130, 4
      %v4133 = vor.u32 %v4132, %v4128
      %v4134 = vrot.slane %v4133, 4
      %v4136 = vshll.u32 %v3797, 16
      %v4138 = vrot.slane %v4136, 5
      %v4139 = vsel %vm265, %v4134, %v4138
      %v4141 = vshrl.u32 %v3798, 16
      %v4143 = vrot.slane %v4141, 4
      %v4144 = vshll.u32 %v3798, 16
      %v4146 = vrot.slane %v4144, 5
      %v4147 = vor.u32 %v4143, %v4146
      %v4148 = vrot.slane %v4147, 4
      %v4150 = vshll.u32 %v3799, 16
      %v4152 = vrot.slane %v4150, 5
      %v4153 = vsel %vm265, %v4148, %v4152
      %v4154 = vshrl.u32 %v3799, 16
      %v4156 = vrot.slane %v4154, 4
      %v4157 = vor.u32 %v4156, %v4152
      %v4158 = vrot.slane %v4157, 4
      %v4160 = vshll.u32 %v3800, 16
      %v4162 = vrot.slane %v4160, 5
      %v4163 = vsel %vm265, %v4158, %v4162
      %v4165 = vshrl.u32 %v3801, 16
      %v4167 = vrot.slane %v4165, 4
      %v4168 = vshll.u32 %v3801, 16
      %v4170 = vrot.slane %v4168, 5
      %v4171 = vor.u32 %v4167, %v4170
      %v4172 = vrot.slane %v4171, 4
      %v4174 = vshll.u32 %v3802, 16
      %v4176 = vrot.slane %v4174, 5
      %v4177 = vsel %vm265, %v4172, %v4176
      %v4178 = vshrl.u32 %v3802, 16
      %v4180 = vrot.slane %v4178, 4
      %v4181 = vor.u32 %v4180, %v4176
      %v4182 = vrot.slane %v4181, 4
      %v4184 = vshll.u32 %v3803, 16
      %v4186 = vrot.slane %v4184, 5
      %v4187 = vsel %vm265, %v4182, %v4186
      %s4188 = scalar_lea.vmem %s1, 448
      %v4189 = vld [vmem:[%s4188] sm:$0xf]
      %v4190 = vld [vmem:[%s4188 + $0x4] sm:$0xf]
      %v4191 = vld [vmem:[%s4188 + $0x8] sm:$0xf]
      %v4192 = vld [vmem:[%s4188 + $0xc] sm:$0xf]
      %v4193 = vld [vmem:[%s4188 + $0x10] sm:$0xf]
      %v4194 = vld [vmem:[%s4188 + $0x14] sm:$0xf]
      %v4195 = vld [vmem:[%s4188 + $0x18] sm:$0xf]
      %v4196 = vld [vmem:[%s4188 + $0x1c] sm:$0xf]
      %v4197 = vld [vmem:[%s4188 + $0x20] sm:$0xf]
      %v4198 = vld [vmem:[%s4188 + $0x24] sm:$0xf]
      %v4199 = vld [vmem:[%s4188 + $0x28] sm:$0xf]
      %v4200 = vld [vmem:[%s4188 + $0x2c] sm:$0xf]
      %v4201 = vld [vmem:[%s4188 + $0x30] sm:$0xf]
      %v4202 = vld [vmem:[%s4188 + $0x34] sm:$0xf]
      %v4203 = vld [vmem:[%s4188 + $0x38] sm:$0xf]
      %v4204 = vld [vmem:[%s4188 + $0x3c] sm:$0xf]
      %v4205 = vunpack.c.l.b16 %v3817
      %v4206 = vunpack.c.l.b16 %v3827
      %v4207 = vunpack.c.l.b16 %v3841
      %v4208 = vunpack.c.l.b16 %v3851
      %v4209 = vunpack.c.l.b16 %v3865
      %v4210 = vunpack.c.l.b16 %v3875
      %v4211 = vunpack.c.l.b16 %v3889
      %v4212 = vunpack.c.l.b16 %v3899
      %v4213 = vunpack.c.l.b16 %v3913
      %v4214 = vunpack.c.l.b16 %v3923
      %v4215 = vunpack.c.l.b16 %v3937
      %v4216 = vunpack.c.l.b16 %v3947
      %v4217 = vunpack.c.l.b16 %v3961
      %v4218 = vunpack.c.l.b16 %v3971
      %v4219 = vunpack.c.l.b16 %v3985
      %v4220 = vunpack.c.l.b16 %v3995
      %v4221 = vunpack.c.l.b16 %v4009
      %v4222 = vunpack.c.l.b16 %v4019
      %v4223 = vunpack.c.l.b16 %v4033
      %v4224 = vunpack.c.l.b16 %v4043
      %v4225 = vunpack.c.l.b16 %v4057
      %v4226 = vunpack.c.l.b16 %v4067
      %v4227 = vunpack.c.l.b16 %v4081
      %v4228 = vunpack.c.l.b16 %v4091
      %v4229 = vunpack.c.l.b16 %v4105
      %v4230 = vunpack.c.l.b16 %v4115
      %v4231 = vunpack.c.l.b16 %v4129
      %v4232 = vunpack.c.l.b16 %v4139
      %v4233 = vunpack.c.l.b16 %v4153
      %v4234 = vunpack.c.l.b16 %v4163
      %v4235 = vunpack.c.l.b16 %v4177
      %v4236 = vunpack.c.l.b16 %v4187
      %v4237 = vpack.c.b16 %v4206, %v4205
      %v4238 = vpack.c.b16 %v4208, %v4207
      %v4239 = vpack.c.b16 %v4210, %v4209
      %v4240 = vpack.c.b16 %v4212, %v4211
      %v4241 = vpack.c.b16 %v4214, %v4213
      %v4242 = vpack.c.b16 %v4216, %v4215
      %v4243 = vpack.c.b16 %v4218, %v4217
      %v4244 = vpack.c.b16 %v4220, %v4219
      %v4245 = vpack.c.b16 %v4222, %v4221
      %v4246 = vpack.c.b16 %v4224, %v4223
      %v4247 = vpack.c.b16 %v4226, %v4225
      %v4248 = vpack.c.b16 %v4228, %v4227
      %v4249 = vpack.c.b16 %v4230, %v4229
      %v4250 = vpack.c.b16 %v4232, %v4231
      %v4251 = vpack.c.b16 %v4234, %v4233
      %v4252 = vpack.c.b16 %v4236, %v4235
      %v4285 = vunpack.c.l.b16 %v4189
      %v4286 = vunpack.c.l.b16 %v4190
      %v4287 = vunpack.c.l.b16 %v4191
      %v4288 = vunpack.c.l.b16 %v4192
      %v4289 = vunpack.c.l.b16 %v4193
      %v4290 = vunpack.c.l.b16 %v4194
      %v4291 = vunpack.c.l.b16 %v4195
      %v4292 = vunpack.c.l.b16 %v4196
      %v4293 = vunpack.c.l.b16 %v4197
      %v4294 = vunpack.c.l.b16 %v4198
      %v4295 = vunpack.c.l.b16 %v4199
      %v4296 = vunpack.c.l.b16 %v4200
      %v4297 = vunpack.c.l.b16 %v4201
      %v4298 = vunpack.c.l.b16 %v4202
      %v4299 = vunpack.c.l.b16 %v4203
      %v4300 = vunpack.c.l.b16 %v4204
      %v4301 = vpack.c.b16 %v4286, %v4285
      %v4302 = vpack.c.b16 %v4288, %v4287
      %v4303 = vpack.c.b16 %v4290, %v4289
      %v4304 = vpack.c.b16 %v4292, %v4291
      %v4305 = vpack.c.b16 %v4294, %v4293
      %v4306 = vpack.c.b16 %v4296, %v4295
      %v4307 = vpack.c.b16 %v4298, %v4297
      %v4308 = vpack.c.b16 %v4300, %v4299
      %4317 = vmatprep.subr.bf16.mxu0 0
      %4318 = vmatpush1.bf16.msra.mxu0 %v4301
      %4319 = vmatprep.subr.bf16.mxu0 0
      %4320 = vmatpush1.bf16.msra.mxu0 %v4302
      %4321 = vmatprep.subr.bf16.mxu0 0
      %4322 = vmatpush1.bf16.msra.mxu0 %v4303
      %4323 = vmatprep.subr.bf16.mxu0 0
      %4324 = vmatpush1.bf16.msra.mxu0 %v4304
      %4325 = vmatprep.subr.bf16.mxu0 0
      %4326 = vmatpush1.bf16.msra.mxu0 %v4305
      %4327 = vmatprep.subr.bf16.mxu0 0
      %4328 = vmatpush1.bf16.msra.mxu0 %v4306
      %4329 = vmatprep.subr.bf16.mxu0 0
      %4330 = vmatpush1.bf16.msra.mxu0 %v4307
      %4331 = vmatprep.subr.bf16.mxu0 0
      %4332 = vmatpush1.bf16.msra.mxu0 %v4308
      %4333 = vmatprep.subr.bf16.mxu0 0
      %4334 = vmatpush1.bf16.msra.mxu0 0
      %4335 = vmatprep.subr.bf16.mxu0 0
      %4336 = vmatpush1.bf16.msra.mxu0 0
      %4337 = vmatprep.subr.bf16.mxu0 0
      %4338 = vmatpush1.bf16.msra.mxu0 0
      %4339 = vmatprep.subr.bf16.mxu0 0
      %4340 = vmatpush1.bf16.msra.mxu0 0
      %4341 = vmatprep.subr.bf16.mxu0 0
      %4342 = vmatpush1.bf16.msra.mxu0 0
      %4343 = vmatprep.subr.bf16.mxu0 0
      %4344 = vmatpush1.bf16.msra.mxu0 0
      %4345 = vmatprep.subr.bf16.mxu0 0
      %4346 = vmatpush1.bf16.msra.mxu0 0
      %4347 = vmatprep.subr.bf16.mxu0 0
      %4348 = vmatpush1.bf16.msra.mxu0 0
      %4349 = vmatprep.mubr.bf16.mxu0 0
      %4350 = vmatmul.mubr.bf16.gmra.mrb[0].mxu0 %v4237
      %v4351 = vpop.f32.mrb[0].mxu0
      %v4352 = vadd.f32 0.0, %v4351
      %v4353 = vpop.f32.mrb[0].mxu0
      %v4354 = vpop.f32.mrb[0].mxu0
      %v4355 = vadd.f32 0.0, %v4354
      %v4356 = vpop.f32.mrb[0].mxu0
      %4357 = vmatprep.mubr.bf16.mxu0 0
      %4358 = vmatmul.mubr.bf16.gmra.mrb[0].mxu0 %v4238
      %v4359 = vpop.f32.mrb[0].mxu0
      %v4360 = vadd.f32 0.0, %v4359
      %v4361 = vpop.f32.mrb[0].mxu0
      %v4362 = vpop.f32.mrb[0].mxu0
      %v4363 = vadd.f32 0.0, %v4362
      %v4364 = vpop.f32.mrb[0].mxu0
      %4365 = vmatprep.mubr.bf16.mxu0 0
      %4366 = vmatmul.mubr.bf16.gmra.mrb[0].mxu0 %v4239
      %v4367 = vpop.f32.mrb[0].mxu0
      %v4368 = vadd.f32 0.0, %v4367
      %v4369 = vpop.f32.mrb[0].mxu0
      %v4370 = vpop.f32.mrb[0].mxu0
      %v4371 = vadd.f32 0.0, %v4370
      %v4372 = vpop.f32.mrb[0].mxu0
      %4373 = vmatprep.mubr.bf16.mxu0 0
      %4374 = vmatmul.mubr.bf16.gmra.mrb[0].mxu0 %v4240
      %v4375 = vpop.f32.mrb[0].mxu0
      %v4376 = vadd.f32 0.0, %v4375
      %v4377 = vpop.f32.mrb[0].mxu0
      %v4378 = vpop.f32.mrb[0].mxu0
      %v4379 = vadd.f32 0.0, %v4378
      %v4380 = vpop.f32.mrb[0].mxu0
      %4381 = vmatprep.mubr.bf16.mxu0 0
      %4382 = vmatmul.mubr.bf16.gmra.mrb[0].mxu0 %v4241
      %v4383 = vpop.f32.mrb[0].mxu0
      %v4384 = vadd.f32 0.0, %v4383
      %v4385 = vpop.f32.mrb[0].mxu0
      %v4386 = vpop.f32.mrb[0].mxu0
      %v4387 = vadd.f32 0.0, %v4386
      %v4388 = vpop.f32.mrb[0].mxu0
      %4389 = vmatprep.mubr.bf16.mxu0 0
      %4390 = vmatmul.mubr.bf16.gmra.mrb[0].mxu0 %v4242
      %v4391 = vpop.f32.mrb[0].mxu0
      %v4392 = vadd.f32 0.0, %v4391
      %v4393 = vpop.f32.mrb[0].mxu0
      %v4394 = vpop.f32.mrb[0].mxu0
      %v4395 = vadd.f32 0.0, %v4394
      %v4396 = vpop.f32.mrb[0].mxu0
      %4397 = vmatprep.mubr.bf16.mxu0 0
      %4398 = vmatmul.mubr.bf16.gmra.mrb[0].mxu0 %v4243
      %v4399 = vpop.f32.mrb[0].mxu0
      %v4400 = vadd.f32 0.0, %v4399
      %v4401 = vpop.f32.mrb[0].mxu0
      %v4402 = vpop.f32.mrb[0].mxu0
      %v4403 = vadd.f32 0.0, %v4402
      %v4404 = vpop.f32.mrb[0].mxu0
      %4405 = vmatprep.mubr.bf16.mxu0 0
      %4406 = vmatmul.mubr.bf16.gmra.mrb[0].mxu0 %v4244
      %v4407 = vpop.f32.mrb[0].mxu0
      %v4408 = vadd.f32 0.0, %v4407
      %v4409 = vpop.f32.mrb[0].mxu0
      %v4410 = vpop.f32.mrb[0].mxu0
      %v4411 = vadd.f32 0.0, %v4410
      %v4412 = vpop.f32.mrb[0].mxu0
      %4413 = vmatprep.mubr.bf16.mxu0 0
      %4414 = vmatmul.mubr.bf16.gmra.mrb[0].mxu0 %v4245
      %v4415 = vpop.f32.mrb[0].mxu0
      %v4416 = vadd.f32 0.0, %v4415
      %v4417 = vpop.f32.mrb[0].mxu0
      %v4418 = vpop.f32.mrb[0].mxu0
      %v4419 = vadd.f32 0.0, %v4418
      %v4420 = vpop.f32.mrb[0].mxu0
      %4421 = vmatprep.mubr.bf16.mxu0 0
      %4422 = vmatmul.mubr.bf16.gmra.mrb[0].mxu0 %v4246
      %v4423 = vpop.f32.mrb[0].mxu0
      %v4424 = vadd.f32 0.0, %v4423
      %v4425 = vpop.f32.mrb[0].mxu0
      %v4426 = vpop.f32.mrb[0].mxu0
      %v4427 = vadd.f32 0.0, %v4426
      %v4428 = vpop.f32.mrb[0].mxu0
      %4429 = vmatprep.mubr.bf16.mxu0 0
      %4430 = vmatmul.mubr.bf16.gmra.mrb[0].mxu0 %v4247
      %v4431 = vpop.f32.mrb[0].mxu0
      %v4432 = vadd.f32 0.0, %v4431
      %v4433 = vpop.f32.mrb[0].mxu0
      %v4434 = vpop.f32.mrb[0].mxu0
      %v4435 = vadd.f32 0.0, %v4434
      %v4436 = vpop.f32.mrb[0].mxu0
      %4437 = vmatprep.mubr.bf16.mxu0 0
      %4438 = vmatmul.mubr.bf16.gmra.mrb[0].mxu0 %v4248
      %v4439 = vpop.f32.mrb[0].mxu0
      %v4440 = vadd.f32 0.0, %v4439
      %v4441 = vpop.f32.mrb[0].mxu0
      %v4442 = vpop.f32.mrb[0].mxu0
      %v4443 = vadd.f32 0.0, %v4442
      %v4444 = vpop.f32.mrb[0].mxu0
      %4445 = vmatprep.mubr.bf16.mxu0 0
      %4446 = vmatmul.mubr.bf16.gmra.mrb[0].mxu0 %v4249
      %v4447 = vpop.f32.mrb[0].mxu0
      %v4448 = vadd.f32 0.0, %v4447
      %v4449 = vpop.f32.mrb[0].mxu0
      %v4450 = vpop.f32.mrb[0].mxu0
      %v4451 = vadd.f32 0.0, %v4450
      %v4452 = vpop.f32.mrb[0].mxu0
      %4453 = vmatprep.mubr.bf16.mxu0 0
      %4454 = vmatmul.mubr.bf16.gmra.mrb[0].mxu0 %v4250
      %v4455 = vpop.f32.mrb[0].mxu0
      %v4456 = vadd.f32 0.0, %v4455
      %v4457 = vpop.f32.mrb[0].mxu0
      %v4458 = vpop.f32.mrb[0].mxu0
      %v4459 = vadd.f32 0.0, %v4458
      %v4460 = vpop.f32.mrb[0].mxu0
      %4461 = vmatprep.mubr.bf16.mxu0 0
      %4462 = vmatmul.mubr.bf16.gmra.mrb[0].mxu0 %v4251
      %v4463 = vpop.f32.mrb[0].mxu0
      %v4464 = vadd.f32 0.0, %v4463
      %v4465 = vpop.f32.mrb[0].mxu0
      %v4466 = vpop.f32.mrb[0].mxu0
      %v4467 = vadd.f32 0.0, %v4466
      %v4468 = vpop.f32.mrb[0].mxu0
      %4469 = vmatprep.mubr.bf16.mxu0 0
      %4470 = vmatmul.mubr.bf16.gmra.mrb[0].mxu0 %v4252
      %v4471 = vpop.f32.mrb[0].mxu0
      %v4472 = vadd.f32 0.0, %v4471
      %v4473 = vpop.f32.mrb[0].mxu0
      %v4474 = vpop.f32.mrb[0].mxu0
      %v4475 = vadd.f32 0.0, %v4474
      %v4476 = vpop.f32.mrb[0].mxu0
      %4477 = vdwg.mxu0
      %v4478 = vadd.f32 %v3724, %v4352
      %v4479 = vadd.f32 %v3725, %v4355
      %v4480 = vadd.f32 %v3726, %v4360
      %v4481 = vadd.f32 %v3727, %v4363
      %v4482 = vadd.f32 %v3728, %v4368
      %v4483 = vadd.f32 %v3729, %v4371
      %v4484 = vadd.f32 %v3730, %v4376
      %v4485 = vadd.f32 %v3731, %v4379
      %v4486 = vadd.f32 %v3732, %v4384
      %v4487 = vadd.f32 %v3733, %v4387
      %v4488 = vadd.f32 %v3734, %v4392
      %v4489 = vadd.f32 %v3735, %v4395
      %v4490 = vadd.f32 %v3736, %v4400
      %v4491 = vadd.f32 %v3737, %v4403
      %v4492 = vadd.f32 %v3738, %v4408
      %v4493 = vadd.f32 %v3739, %v4411
      %v4494 = vadd.f32 %v3740, %v4416
      %v4495 = vadd.f32 %v3741, %v4419
      %v4496 = vadd.f32 %v3742, %v4424
      %v4497 = vadd.f32 %v3743, %v4427
      %v4498 = vadd.f32 %v3744, %v4432
      %v4499 = vadd.f32 %v3745, %v4435
      %v4500 = vadd.f32 %v3746, %v4440
      %v4501 = vadd.f32 %v3747, %v4443
      %v4502 = vadd.f32 %v3748, %v4448
      %v4503 = vadd.f32 %v3749, %v4451
      %v4504 = vadd.f32 %v3750, %v4456
      %v4505 = vadd.f32 %v3751, %v4459
      %v4506 = vadd.f32 %v3752, %v4464
      %v4507 = vadd.f32 %v3753, %v4467
      %v4508 = vadd.f32 %v3754, %v4472
      %v4509 = vadd.f32 %v3755, %v4475
      %v4510 = vld [vmem:[%s3369] sm:$0xe]
      %v4511 = vld [vmem:[%s3369 + $0xc] sm:$0xe]
      %v4512 = vld [vmem:[%s3369 + $0x18] sm:$0xe]
      %v4513 = vld [vmem:[%s3369 + $0x24] sm:$0xe]
      %v4514 = vld [vmem:[%s3369 + $0x30] sm:$0xe]
      %v4515 = vld [vmem:[%s3369 + $0x3c] sm:$0xe]
      %v4516 = vld [vmem:[%s3369 + $0x48] sm:$0xe]
      %v4517 = vld [vmem:[%s3369 + $0x54] sm:$0xe]
      %v4518 = vld [vmem:[%s3369 + $0x60] sm:$0xe]
      %v4519 = vld [vmem:[%s3369 + $0x6c] sm:$0xe]
      %v4520 = vld [vmem:[%s3369 + $0x78] sm:$0xe]
      %v4521 = vld [vmem:[%s3369 + $0x84] sm:$0xe]
      %v4522 = vld [vmem:[%s3369 + $0x90] sm:$0xe]
      %v4523 = vld [vmem:[%s3369 + $0x9c] sm:$0xe]
      %v4524 = vld [vmem:[%s3369 + $0xa8] sm:$0xe]
      %v4525 = vld [vmem:[%s3369 + $0xb4] sm:$0xe]
      %v4574 = vrot.slane %v4510, 5
      %v4575 = vrot.slane %v4574, 4
      %v4576 = vrot.slane %v3757, 5
      %v4577 = vsel %vm1295, %v4575, %v4576
      %v4578 = vrot.slane %v4576, 4
      %v4579 = vrot.slane %v3758, 5
      %v4580 = vsel %vm1295, %v4578, %v4579
      %v4581 = vrot.slane %v4511, 5
      %v4582 = vrot.slane %v4581, 4
      %v4583 = vrot.slane %v3760, 5
      %v4584 = vsel %vm1295, %v4582, %v4583
      %v4585 = vrot.slane %v4583, 4
      %v4586 = vrot.slane %v3761, 5
      %v4587 = vsel %vm1295, %v4585, %v4586
      %v4588 = vrot.slane %v4512, 5
      %v4589 = vrot.slane %v4588, 4
      %v4590 = vrot.slane %v3763, 5
      %v4591 = vsel %vm1295, %v4589, %v4590
      %v4592 = vrot.slane %v4590, 4
      %v4593 = vrot.slane %v3764, 5
      %v4594 = vsel %vm1295, %v4592, %v4593
      %v4595 = vrot.slane %v4513, 5
      %v4596 = vrot.slane %v4595, 4
      %v4597 = vrot.slane %v3766, 5
      %v4598 = vsel %vm1295, %v4596, %v4597
      %v4599 = vrot.slane %v4597, 4
      %v4600 = vrot.slane %v3767, 5
      %v4601 = vsel %vm1295, %v4599, %v4600
      %v4602 = vrot.slane %v4514, 5
      %v4603 = vrot.slane %v4602, 4
      %v4604 = vrot.slane %v3769, 5
      %v4605 = vsel %vm1295, %v4603, %v4604
      %v4606 = vrot.slane %v4604, 4
      %v4607 = vrot.slane %v3770, 5
      %v4608 = vsel %vm1295, %v4606, %v4607
      %v4609 = vrot.slane %v4515, 5
      %v4610 = vrot.slane %v4609, 4
      %v4611 = vrot.slane %v3772, 5
      %v4612 = vsel %vm1295, %v4610, %v4611
      %v4613 = vrot.slane %v4611, 4
      %v4614 = vrot.slane %v3773, 5
      %v4615 = vsel %vm1295, %v4613, %v4614
      %v4616 = vrot.slane %v4516, 5
      %v4617 = vrot.slane %v4616, 4
      %v4618 = vrot.slane %v3775, 5
      %v4619 = vsel %vm1295, %v4617, %v4618
      %v4620 = vrot.slane %v4618, 4
      %v4621 = vrot.slane %v3776, 5
      %v4622 = vsel %vm1295, %v4620, %v4621
      %v4623 = vrot.slane %v4517, 5
      %v4624 = vrot.slane %v4623, 4
      %v4625 = vrot.slane %v3778, 5
      %v4626 = vsel %vm1295, %v4624, %v4625
      %v4627 = vrot.slane %v4625, 4
      %v4628 = vrot.slane %v3779, 5
      %v4629 = vsel %vm1295, %v4627, %v4628
      %v4630 = vrot.slane %v4518, 5
      %v4631 = vrot.slane %v4630, 4
      %v4632 = vrot.slane %v3781, 5
      %v4633 = vsel %vm1295, %v4631, %v4632
      %v4634 = vrot.slane %v4632, 4
      %v4635 = vrot.slane %v3782, 5
      %v4636 = vsel %vm1295, %v4634, %v4635
      %v4637 = vrot.slane %v4519, 5
      %v4638 = vrot.slane %v4637, 4
      %v4639 = vrot.slane %v3784, 5
      %v4640 = vsel %vm1295, %v4638, %v4639
      %v4641 = vrot.slane %v4639, 4
      %v4642 = vrot.slane %v3785, 5
      %v4643 = vsel %vm1295, %v4641, %v4642
      %v4644 = vrot.slane %v4520, 5
      %v4645 = vrot.slane %v4644, 4
      %v4646 = vrot.slane %v3787, 5
      %v4647 = vsel %vm1295, %v4645, %v4646
      %v4648 = vrot.slane %v4646, 4
      %v4649 = vrot.slane %v3788, 5
      %v4650 = vsel %vm1295, %v4648, %v4649
      %v4651 = vrot.slane %v4521, 5
      %v4652 = vrot.slane %v4651, 4
      %v4653 = vrot.slane %v3790, 5
      %v4654 = vsel %vm1295, %v4652, %v4653
      %v4655 = vrot.slane %v4653, 4
      %v4656 = vrot.slane %v3791, 5
      %v4657 = vsel %vm1295, %v4655, %v4656
      %v4658 = vrot.slane %v4522, 5
      %v4659 = vrot.slane %v4658, 4
      %v4660 = vrot.slane %v3793, 5
      %v4661 = vsel %vm1295, %v4659, %v4660
      %v4662 = vrot.slane %v4660, 4
      %v4663 = vrot.slane %v3794, 5
      %v4664 = vsel %vm1295, %v4662, %v4663
      %v4665 = vrot.slane %v4523, 5
      %v4666 = vrot.slane %v4665, 4
      %v4667 = vrot.slane %v3796, 5
      %v4668 = vsel %vm1295, %v4666, %v4667
      %v4669 = vrot.slane %v4667, 4
      %v4670 = vrot.slane %v3797, 5
      %v4671 = vsel %vm1295, %v4669, %v4670
      %v4672 = vrot.slane %v4524, 5
      %v4673 = vrot.slane %v4672, 4
      %v4674 = vrot.slane %v3799, 5
      %v4675 = vsel %vm1295, %v4673, %v4674
      %v4676 = vrot.slane %v4674, 4
      %v4677 = vrot.slane %v3800, 5
      %v4678 = vsel %vm1295, %v4676, %v4677
      %v4679 = vrot.slane %v4525, 5
      %v4680 = vrot.slane %v4679, 4
      %v4681 = vrot.slane %v3802, 5
      %v4682 = vsel %vm1295, %v4680, %v4681
      %v4683 = vrot.slane %v4681, 4
      %v4684 = vrot.slane %v3803, 5
      %v4685 = vsel %vm1295, %v4683, %v4684
      %s4686 = scalar_lea.vmem %s1, 512
      %v4687 = vld [vmem:[%s4686] sm:$0xf]
      %v4688 = vld [vmem:[%s4686 + $0x4] sm:$0xf]
      %v4689 = vld [vmem:[%s4686 + $0x8] sm:$0xf]
      %v4690 = vld [vmem:[%s4686 + $0xc] sm:$0xf]
      %v4691 = vld [vmem:[%s4686 + $0x10] sm:$0xf]
      %v4692 = vld [vmem:[%s4686 + $0x14] sm:$0xf]
      %v4693 = vld [vmem:[%s4686 + $0x18] sm:$0xf]
      %v4694 = vld [vmem:[%s4686 + $0x1c] sm:$0xf]
      %v4695 = vld [vmem:[%s4686 + $0x20] sm:$0xf]
      %v4696 = vld [vmem:[%s4686 + $0x24] sm:$0xf]
      %v4697 = vld [vmem:[%s4686 + $0x28] sm:$0xf]
      %v4698 = vld [vmem:[%s4686 + $0x2c] sm:$0xf]
      %v4699 = vld [vmem:[%s4686 + $0x30] sm:$0xf]
      %v4700 = vld [vmem:[%s4686 + $0x34] sm:$0xf]
      %v4701 = vld [vmem:[%s4686 + $0x38] sm:$0xf]
      %v4702 = vld [vmem:[%s4686 + $0x3c] sm:$0xf]
      %v4703 = vunpack.c.l.b16 %v4577
      %v4704 = vunpack.c.l.b16 %v4580
      %v4705 = vunpack.c.l.b16 %v4584
      %v4706 = vunpack.c.l.b16 %v4587
      %v4707 = vunpack.c.l.b16 %v4591
      %v4708 = vunpack.c.l.b16 %v4594
      %v4709 = vunpack.c.l.b16 %v4598
      %v4710 = vunpack.c.l.b16 %v4601
      %v4711 = vunpack.c.l.b16 %v4605
      %v4712 = vunpack.c.l.b16 %v4608
      %v4713 = vunpack.c.l.b16 %v4612
      %v4714 = vunpack.c.l.b16 %v4615
      %v4715 = vunpack.c.l.b16 %v4619
      %v4716 = vunpack.c.l.b16 %v4622
      %v4717 = vunpack.c.l.b16 %v4626
      %v4718 = vunpack.c.l.b16 %v4629
      %v4719 = vunpack.c.l.b16 %v4633
      %v4720 = vunpack.c.l.b16 %v4636
      %v4721 = vunpack.c.l.b16 %v4640
      %v4722 = vunpack.c.l.b16 %v4643
      %v4723 = vunpack.c.l.b16 %v4647
      %v4724 = vunpack.c.l.b16 %v4650
      %v4725 = vunpack.c.l.b16 %v4654
      %v4726 = vunpack.c.l.b16 %v4657
      %v4727 = vunpack.c.l.b16 %v4661
      %v4728 = vunpack.c.l.b16 %v4664
      %v4729 = vunpack.c.l.b16 %v4668
      %v4730 = vunpack.c.l.b16 %v4671
      %v4731 = vunpack.c.l.b16 %v4675
      %v4732 = vunpack.c.l.b16 %v4678
      %v4733 = vunpack.c.l.b16 %v4682
      %v4734 = vunpack.c.l.b16 %v4685
      %v4735 = vpack.c.b16 %v4704, %v4703
      %v4736 = vpack.c.b16 %v4706, %v4705
      %v4737 = vpack.c.b16 %v4708, %v4707
      %v4738 = vpack.c.b16 %v4710, %v4709
      %v4739 = vpack.c.b16 %v4712, %v4711
      %v4740 = vpack.c.b16 %v4714, %v4713
      %v4741 = vpack.c.b16 %v4716, %v4715
      %v4742 = vpack.c.b16 %v4718, %v4717
      %v4743 = vpack.c.b16 %v4720, %v4719
      %v4744 = vpack.c.b16 %v4722, %v4721
      %v4745 = vpack.c.b16 %v4724, %v4723
      %v4746 = vpack.c.b16 %v4726, %v4725
      %v4747 = vpack.c.b16 %v4728, %v4727
      %v4748 = vpack.c.b16 %v4730, %v4729
      %v4749 = vpack.c.b16 %v4732, %v4731
      %v4750 = vpack.c.b16 %v4734, %v4733
      %v4783 = vunpack.c.l.b16 %v4687
      %v4784 = vunpack.c.l.b16 %v4688
      %v4785 = vunpack.c.l.b16 %v4689
      %v4786 = vunpack.c.l.b16 %v4690
      %v4787 = vunpack.c.l.b16 %v4691
      %v4788 = vunpack.c.l.b16 %v4692
      %v4789 = vunpack.c.l.b16 %v4693
      %v4790 = vunpack.c.l.b16 %v4694
      %v4791 = vunpack.c.l.b16 %v4695
      %v4792 = vunpack.c.l.b16 %v4696
      %v4793 = vunpack.c.l.b16 %v4697
      %v4794 = vunpack.c.l.b16 %v4698
      %v4795 = vunpack.c.l.b16 %v4699
      %v4796 = vunpack.c.l.b16 %v4700
      %v4797 = vunpack.c.l.b16 %v4701
      %v4798 = vunpack.c.l.b16 %v4702
      %v4799 = vpack.c.b16 %v4784, %v4783
      %v4800 = vpack.c.b16 %v4786, %v4785
      %v4801 = vpack.c.b16 %v4788, %v4787
      %v4802 = vpack.c.b16 %v4790, %v4789
      %v4803 = vpack.c.b16 %v4792, %v4791
      %v4804 = vpack.c.b16 %v4794, %v4793
      %v4805 = vpack.c.b16 %v4796, %v4795
      %v4806 = vpack.c.b16 %v4798, %v4797
      %4815 = vmatprep.subr.bf16.mxu0 0
      %4816 = vmatpush1.bf16.msra.mxu0 %v4799
      %4817 = vmatprep.subr.bf16.mxu0 0
      %4818 = vmatpush1.bf16.msra.mxu0 %v4800
      %4819 = vmatprep.subr.bf16.mxu0 0
      %4820 = vmatpush1.bf16.msra.mxu0 %v4801
      %4821 = vmatprep.subr.bf16.mxu0 0
      %4822 = vmatpush1.bf16.msra.mxu0 %v4802
      %4823 = vmatprep.subr.bf16.mxu0 0
      %4824 = vmatpush1.bf16.msra.mxu0 %v4803
      %4825 = vmatprep.subr.bf16.mxu0 0
      %4826 = vmatpush1.bf16.msra.mxu0 %v4804
      %4827 = vmatprep.subr.bf16.mxu0 0
      %4828 = vmatpush1.bf16.msra.mxu0 %v4805
      %4829 = vmatprep.subr.bf16.mxu0 0
      %4830 = vmatpush1.bf16.msra.mxu0 %v4806
      %4831 = vmatprep.subr.bf16.mxu0 0
      %4832 = vmatpush1.bf16.msra.mxu0 0
      %4833 = vmatprep.subr.bf16.mxu0 0
      %4834 = vmatpush1.bf16.msra.mxu0 0
      %4835 = vmatprep.subr.bf16.mxu0 0
      %4836 = vmatpush1.bf16.msra.mxu0 0
      %4837 = vmatprep.subr.bf16.mxu0 0
      %4838 = vmatpush1.bf16.msra.mxu0 0
      %4839 = vmatprep.subr.bf16.mxu0 0
      %4840 = vmatpush1.bf16.msra.mxu0 0
      %4841 = vmatprep.subr.bf16.mxu0 0
      %4842 = vmatpush1.bf16.msra.mxu0 0
      %4843 = vmatprep.subr.bf16.mxu0 0
      %4844 = vmatpush1.bf16.msra.mxu0 0
      %4845 = vmatprep.subr.bf16.mxu0 0
      %4846 = vmatpush1.bf16.msra.mxu0 0
      %4847 = vmatprep.mubr.bf16.mxu0 0
      %4848 = vmatmul.mubr.bf16.gmra.mrb[0].mxu0 %v4735
      %v4849 = vpop.f32.mrb[0].mxu0
      %v4850 = vadd.f32 0.0, %v4849
      %v4851 = vpop.f32.mrb[0].mxu0
      %v4852 = vpop.f32.mrb[0].mxu0
      %v4853 = vadd.f32 0.0, %v4852
      %v4854 = vpop.f32.mrb[0].mxu0
      %4855 = vmatprep.mubr.bf16.mxu0 0
      %4856 = vmatmul.mubr.bf16.gmra.mrb[0].mxu0 %v4736
      %v4857 = vpop.f32.mrb[0].mxu0
      %v4858 = vadd.f32 0.0, %v4857
      %v4859 = vpop.f32.mrb[0].mxu0
      %v4860 = vpop.f32.mrb[0].mxu0
      %v4861 = vadd.f32 0.0, %v4860
      %v4862 = vpop.f32.mrb[0].mxu0
      %4863 = vmatprep.mubr.bf16.mxu0 0
      %4864 = vmatmul.mubr.bf16.gmra.mrb[0].mxu0 %v4737
      %v4865 = vpop.f32.mrb[0].mxu0
      %v4866 = vadd.f32 0.0, %v4865
      %v4867 = vpop.f32.mrb[0].mxu0
      %v4868 = vpop.f32.mrb[0].mxu0
      %v4869 = vadd.f32 0.0, %v4868
      %v4870 = vpop.f32.mrb[0].mxu0
      %4871 = vmatprep.mubr.bf16.mxu0 0
      %4872 = vmatmul.mubr.bf16.gmra.mrb[0].mxu0 %v4738
      %v4873 = vpop.f32.mrb[0].mxu0
      %v4874 = vadd.f32 0.0, %v4873
      %v4875 = vpop.f32.mrb[0].mxu0
      %v4876 = vpop.f32.mrb[0].mxu0
      %v4877 = vadd.f32 0.0, %v4876
      %v4878 = vpop.f32.mrb[0].mxu0
      %4879 = vmatprep.mubr.bf16.mxu0 0
      %4880 = vmatmul.mubr.bf16.gmra.mrb[0].mxu0 %v4739
      %v4881 = vpop.f32.mrb[0].mxu0
      %v4882 = vadd.f32 0.0, %v4881
      %v4883 = vpop.f32.mrb[0].mxu0
      %v4884 = vpop.f32.mrb[0].mxu0
      %v4885 = vadd.f32 0.0, %v4884
      %v4886 = vpop.f32.mrb[0].mxu0
      %4887 = vmatprep.mubr.bf16.mxu0 0
      %4888 = vmatmul.mubr.bf16.gmra.mrb[0].mxu0 %v4740
      %v4889 = vpop.f32.mrb[0].mxu0
      %v4890 = vadd.f32 0.0, %v4889
      %v4891 = vpop.f32.mrb[0].mxu0
      %v4892 = vpop.f32.mrb[0].mxu0
      %v4893 = vadd.f32 0.0, %v4892
      %v4894 = vpop.f32.mrb[0].mxu0
      %4895 = vmatprep.mubr.bf16.mxu0 0
      %4896 = vmatmul.mubr.bf16.gmra.mrb[0].mxu0 %v4741
      %v4897 = vpop.f32.mrb[0].mxu0
      %v4898 = vadd.f32 0.0, %v4897
      %v4899 = vpop.f32.mrb[0].mxu0
      %v4900 = vpop.f32.mrb[0].mxu0
      %v4901 = vadd.f32 0.0, %v4900
      %v4902 = vpop.f32.mrb[0].mxu0
      %4903 = vmatprep.mubr.bf16.mxu0 0
      %4904 = vmatmul.mubr.bf16.gmra.mrb[0].mxu0 %v4742
      %v4905 = vpop.f32.mrb[0].mxu0
      %v4906 = vadd.f32 0.0, %v4905
      %v4907 = vpop.f32.mrb[0].mxu0
      %v4908 = vpop.f32.mrb[0].mxu0
      %v4909 = vadd.f32 0.0, %v4908
      %v4910 = vpop.f32.mrb[0].mxu0
      %4911 = vmatprep.mubr.bf16.mxu0 0
      %4912 = vmatmul.mubr.bf16.gmra.mrb[0].mxu0 %v4743
      %v4913 = vpop.f32.mrb[0].mxu0
      %v4914 = vadd.f32 0.0, %v4913
      %v4915 = vpop.f32.mrb[0].mxu0
      %v4916 = vpop.f32.mrb[0].mxu0
      %v4917 = vadd.f32 0.0, %v4916
      %v4918 = vpop.f32.mrb[0].mxu0
      %4919 = vmatprep.mubr.bf16.mxu0 0
      %4920 = vmatmul.mubr.bf16.gmra.mrb[0].mxu0 %v4744
      %v4921 = vpop.f32.mrb[0].mxu0
      %v4922 = vadd.f32 0.0, %v4921
      %v4923 = vpop.f32.mrb[0].mxu0
      %v4924 = vpop.f32.mrb[0].mxu0
      %v4925 = vadd.f32 0.0, %v4924
      %v4926 = vpop.f32.mrb[0].mxu0
      %4927 = vmatprep.mubr.bf16.mxu0 0
      %4928 = vmatmul.mubr.bf16.gmra.mrb[0].mxu0 %v4745
      %v4929 = vpop.f32.mrb[0].mxu0
      %v4930 = vadd.f32 0.0, %v4929
      %v4931 = vpop.f32.mrb[0].mxu0
      %v4932 = vpop.f32.mrb[0].mxu0
      %v4933 = vadd.f32 0.0, %v4932
      %v4934 = vpop.f32.mrb[0].mxu0
      %4935 = vmatprep.mubr.bf16.mxu0 0
      %4936 = vmatmul.mubr.bf16.gmra.mrb[0].mxu0 %v4746
      %v4937 = vpop.f32.mrb[0].mxu0
      %v4938 = vadd.f32 0.0, %v4937
      %v4939 = vpop.f32.mrb[0].mxu0
      %v4940 = vpop.f32.mrb[0].mxu0
      %v4941 = vadd.f32 0.0, %v4940
      %v4942 = vpop.f32.mrb[0].mxu0
      %4943 = vmatprep.mubr.bf16.mxu0 0
      %4944 = vmatmul.mubr.bf16.gmra.mrb[0].mxu0 %v4747
      %v4945 = vpop.f32.mrb[0].mxu0
      %v4946 = vadd.f32 0.0, %v4945
      %v4947 = vpop.f32.mrb[0].mxu0
      %v4948 = vpop.f32.mrb[0].mxu0
      %v4949 = vadd.f32 0.0, %v4948
      %v4950 = vpop.f32.mrb[0].mxu0
      %4951 = vmatprep.mubr.bf16.mxu0 0
      %4952 = vmatmul.mubr.bf16.gmra.mrb[0].mxu0 %v4748
      %v4953 = vpop.f32.mrb[0].mxu0
      %v4954 = vadd.f32 0.0, %v4953
      %v4955 = vpop.f32.mrb[0].mxu0
      %v4956 = vpop.f32.mrb[0].mxu0
      %v4957 = vadd.f32 0.0, %v4956
      %v4958 = vpop.f32.mrb[0].mxu0
      %4959 = vmatprep.mubr.bf16.mxu0 0
      %4960 = vmatmul.mubr.bf16.gmra.mrb[0].mxu0 %v4749
      %v4961 = vpop.f32.mrb[0].mxu0
      %v4962 = vadd.f32 0.0, %v4961
      %v4963 = vpop.f32.mrb[0].mxu0
      %v4964 = vpop.f32.mrb[0].mxu0
      %v4965 = vadd.f32 0.0, %v4964
      %v4966 = vpop.f32.mrb[0].mxu0
      %4967 = vmatprep.mubr.bf16.mxu0 0
      %4968 = vmatmul.mubr.bf16.gmra.mrb[0].mxu0 %v4750
      %v4969 = vpop.f32.mrb[0].mxu0
      %v4970 = vadd.f32 0.0, %v4969
      %v4971 = vpop.f32.mrb[0].mxu0
      %v4972 = vpop.f32.mrb[0].mxu0
      %v4973 = vadd.f32 0.0, %v4972
      %v4974 = vpop.f32.mrb[0].mxu0
      %4975 = vdwg.mxu0
      %v4976 = vadd.f32 %v4478, %v4850
      %v4977 = vadd.f32 %v4479, %v4853
      %v4978 = vadd.f32 %v4480, %v4858
      %v4979 = vadd.f32 %v4481, %v4861
      %v4980 = vadd.f32 %v4482, %v4866
      %v4981 = vadd.f32 %v4483, %v4869
      %v4982 = vadd.f32 %v4484, %v4874
      %v4983 = vadd.f32 %v4485, %v4877
      %v4984 = vadd.f32 %v4486, %v4882
      %v4985 = vadd.f32 %v4487, %v4885
      %v4986 = vadd.f32 %v4488, %v4890
      %v4987 = vadd.f32 %v4489, %v4893
      %v4988 = vadd.f32 %v4490, %v4898
      %v4989 = vadd.f32 %v4491, %v4901
      %v4990 = vadd.f32 %v4492, %v4906
      %v4991 = vadd.f32 %v4493, %v4909
      %v4992 = vadd.f32 %v4494, %v4914
      %v4993 = vadd.f32 %v4495, %v4917
      %v4994 = vadd.f32 %v4496, %v4922
      %v4995 = vadd.f32 %v4497, %v4925
      %v4996 = vadd.f32 %v4498, %v4930
      %v4997 = vadd.f32 %v4499, %v4933
      %v4998 = vadd.f32 %v4500, %v4938
      %v4999 = vadd.f32 %v4501, %v4941
      %v5000 = vadd.f32 %v4502, %v4946
      %v5001 = vadd.f32 %v4503, %v4949
      %v5002 = vadd.f32 %v4504, %v4954
      %v5003 = vadd.f32 %v4505, %v4957
      %v5004 = vadd.f32 %v4506, %v4962
      %v5005 = vadd.f32 %v4507, %v4965
      %v5006 = vadd.f32 %v4508, %v4970
      %v5007 = vadd.f32 %v4509, %v4973
      %v5008 = vld [vmem:[%s2] sm:$0x1]
      %v5010 = vlaneseq
      %v5011 = vshrl.u32 %v5010, 7
      %v5012 = vsub.s32 0, %v5011
      %v5013 = vrot.slane %v5008, %v5012
      %v5015 = vadd.f32 %v4976, %v5013
      %v5016 = vadd.f32 %v4977, %v5013
      %v5017 = vadd.f32 %v4978, %v5013
      %v5018 = vadd.f32 %v4979, %v5013
      %v5019 = vadd.f32 %v4980, %v5013
      %v5020 = vadd.f32 %v4981, %v5013
      %v5021 = vadd.f32 %v4982, %v5013
      %v5022 = vadd.f32 %v4983, %v5013
      %v5023 = vadd.f32 %v4984, %v5013
      %v5024 = vadd.f32 %v4985, %v5013
      %v5025 = vadd.f32 %v4986, %v5013
      %v5026 = vadd.f32 %v4987, %v5013
      %v5027 = vadd.f32 %v4988, %v5013
      %v5028 = vadd.f32 %v4989, %v5013
      %v5029 = vadd.f32 %v4990, %v5013
      %v5030 = vadd.f32 %v4991, %v5013
      %v5031 = vadd.f32 %v4992, %v5013
      %v5032 = vadd.f32 %v4993, %v5013
      %v5033 = vadd.f32 %v4994, %v5013
      %v5034 = vadd.f32 %v4995, %v5013
      %v5035 = vadd.f32 %v4996, %v5013
      %v5036 = vadd.f32 %v4997, %v5013
      %v5037 = vadd.f32 %v4998, %v5013
      %v5038 = vadd.f32 %v4999, %v5013
      %v5039 = vadd.f32 %v5000, %v5013
      %v5040 = vadd.f32 %v5001, %v5013
      %v5041 = vadd.f32 %v5002, %v5013
      %v5042 = vadd.f32 %v5003, %v5013
      %v5043 = vadd.f32 %v5004, %v5013
      %v5044 = vadd.f32 %v5005, %v5013
      %v5045 = vadd.f32 %v5006, %v5013
      %v5046 = vadd.f32 %v5007, %v5013
      %vm5047 = vcmp.gt.f32.partialorder %v5015, 0.0
      %vm5048 = vcmp.gt.f32.partialorder %v5016, 0.0
      %vm5049 = vcmp.gt.f32.partialorder %v5017, 0.0
      %vm5050 = vcmp.gt.f32.partialorder %v5018, 0.0
      %vm5051 = vcmp.gt.f32.partialorder %v5019, 0.0
      %vm5052 = vcmp.gt.f32.partialorder %v5020, 0.0
      %vm5053 = vcmp.gt.f32.partialorder %v5021, 0.0
      %vm5054 = vcmp.gt.f32.partialorder %v5022, 0.0
      %vm5055 = vcmp.gt.f32.partialorder %v5023, 0.0
      %vm5056 = vcmp.gt.f32.partialorder %v5024, 0.0
      %vm5057 = vcmp.gt.f32.partialorder %v5025, 0.0
      %vm5058 = vcmp.gt.f32.partialorder %v5026, 0.0
      %vm5059 = vcmp.gt.f32.partialorder %v5027, 0.0
      %vm5060 = vcmp.gt.f32.partialorder %v5028, 0.0
      %vm5061 = vcmp.gt.f32.partialorder %v5029, 0.0
      %vm5062 = vcmp.gt.f32.partialorder %v5030, 0.0
      %vm5063 = vcmp.gt.f32.partialorder %v5031, 0.0
      %vm5064 = vcmp.gt.f32.partialorder %v5032, 0.0
      %vm5065 = vcmp.gt.f32.partialorder %v5033, 0.0
      %vm5066 = vcmp.gt.f32.partialorder %v5034, 0.0
      %vm5067 = vcmp.gt.f32.partialorder %v5035, 0.0
      %vm5068 = vcmp.gt.f32.partialorder %v5036, 0.0
      %vm5069 = vcmp.gt.f32.partialorder %v5037, 0.0
      %vm5070 = vcmp.gt.f32.partialorder %v5038, 0.0
      %vm5071 = vcmp.gt.f32.partialorder %v5039, 0.0
      %vm5072 = vcmp.gt.f32.partialorder %v5040, 0.0
      %vm5073 = vcmp.gt.f32.partialorder %v5041, 0.0
      %vm5074 = vcmp.gt.f32.partialorder %v5042, 0.0
      %vm5075 = vcmp.gt.f32.partialorder %v5043, 0.0
      %vm5076 = vcmp.gt.f32.partialorder %v5044, 0.0
      %vm5077 = vcmp.gt.f32.partialorder %v5045, 0.0
      %vm5078 = vcmp.gt.f32.partialorder %v5046, 0.0
      %v5079 = vld [vmem:[%s3] sm:$0x1]
      %v5081 = vlaneseq
      %v5082 = vshrl.u32 %v5081, 7
      %v5083 = vsub.s32 0, %v5082
      %v5084 = vrot.slane %v5079, %v5083
      %v5086 = vmul.f32 %v5015, %v5084
      %v5087 = vmul.f32 %v5016, %v5084
      %v5088 = vmul.f32 %v5017, %v5084
      %v5089 = vmul.f32 %v5018, %v5084
      %v5090 = vmul.f32 %v5019, %v5084
      %v5091 = vmul.f32 %v5020, %v5084
      %v5092 = vmul.f32 %v5021, %v5084
      %v5093 = vmul.f32 %v5022, %v5084
      %v5094 = vmul.f32 %v5023, %v5084
      %v5095 = vmul.f32 %v5024, %v5084
      %v5096 = vmul.f32 %v5025, %v5084
      %v5097 = vmul.f32 %v5026, %v5084
      %v5098 = vmul.f32 %v5027, %v5084
      %v5099 = vmul.f32 %v5028, %v5084
      %v5100 = vmul.f32 %v5029, %v5084
      %v5101 = vmul.f32 %v5030, %v5084
      %v5102 = vmul.f32 %v5031, %v5084
      %v5103 = vmul.f32 %v5032, %v5084
      %v5104 = vmul.f32 %v5033, %v5084
      %v5105 = vmul.f32 %v5034, %v5084
      %v5106 = vmul.f32 %v5035, %v5084
      %v5107 = vmul.f32 %v5036, %v5084
      %v5108 = vmul.f32 %v5037, %v5084
      %v5109 = vmul.f32 %v5038, %v5084
      %v5110 = vmul.f32 %v5039, %v5084
      %v5111 = vmul.f32 %v5040, %v5084
      %v5112 = vmul.f32 %v5041, %v5084
      %v5113 = vmul.f32 %v5042, %v5084
      %v5114 = vmul.f32 %v5043, %v5084
      %v5115 = vmul.f32 %v5044, %v5084
      %v5116 = vmul.f32 %v5045, %v5084
      %v5117 = vmul.f32 %v5046, %v5084
      %v5118 = vsel %vm5047, %v5015, %v5086
      %v5119 = vsel %vm5048, %v5016, %v5087
      %v5120 = vsel %vm5049, %v5017, %v5088
      %v5121 = vsel %vm5050, %v5018, %v5089
      %v5122 = vsel %vm5051, %v5019, %v5090
      %v5123 = vsel %vm5052, %v5020, %v5091
      %v5124 = vsel %vm5053, %v5021, %v5092
      %v5125 = vsel %vm5054, %v5022, %v5093
      %v5126 = vsel %vm5055, %v5023, %v5094
      %v5127 = vsel %vm5056, %v5024, %v5095
      %v5128 = vsel %vm5057, %v5025, %v5096
      %v5129 = vsel %vm5058, %v5026, %v5097
      %v5130 = vsel %vm5059, %v5027, %v5098
      %v5131 = vsel %vm5060, %v5028, %v5099
      %v5132 = vsel %vm5061, %v5029, %v5100
      %v5133 = vsel %vm5062, %v5030, %v5101
      %v5134 = vsel %vm5063, %v5031, %v5102
      %v5135 = vsel %vm5064, %v5032, %v5103
      %v5136 = vsel %vm5065, %v5033, %v5104
      %v5137 = vsel %vm5066, %v5034, %v5105
      %v5138 = vsel %vm5067, %v5035, %v5106
      %v5139 = vsel %vm5068, %v5036, %v5107
      %v5140 = vsel %vm5069, %v5037, %v5108
      %v5141 = vsel %vm5070, %v5038, %v5109
      %v5142 = vsel %vm5071, %v5039, %v5110
      %v5143 = vsel %vm5072, %v5040, %v5111
      %v5144 = vsel %vm5073, %v5041, %v5112
      %v5145 = vsel %vm5074, %v5042, %v5113
      %v5146 = vsel %vm5075, %v5043, %v5114
      %v5147 = vsel %vm5076, %v5044, %v5115
      %v5148 = vsel %vm5077, %v5045, %v5116
      %v5149 = vsel %vm5078, %v5046, %v5117
      %v5150 = vpack.c.bf16 %v5119, %v5118
      %v5151 = vpack.c.bf16 %v5121, %v5120
      %v5152 = vpack.c.bf16 %v5123, %v5122
      %v5153 = vpack.c.bf16 %v5125, %v5124
      %v5154 = vpack.c.bf16 %v5127, %v5126
      %v5155 = vpack.c.bf16 %v5129, %v5128
      %v5156 = vpack.c.bf16 %v5131, %v5130
      %v5157 = vpack.c.bf16 %v5133, %v5132
      %v5158 = vpack.c.bf16 %v5135, %v5134
      %v5159 = vpack.c.bf16 %v5137, %v5136
      %v5160 = vpack.c.bf16 %v5139, %v5138
      %v5161 = vpack.c.bf16 %v5141, %v5140
      %v5162 = vpack.c.bf16 %v5143, %v5142
      %v5163 = vpack.c.bf16 %v5145, %v5144
      %v5164 = vpack.c.bf16 %v5147, %v5146
      %v5165 = vpack.c.bf16 %v5149, %v5148
      %v5182 = vunpack.c.l.b16 %v5150
      %v5183 = vunpack.c.h.b16 %v5150
      %v5184 = vunpack.c.l.b16 %v5151
      %v5185 = vunpack.c.h.b16 %v5151
      %v5186 = vunpack.c.l.b16 %v5152
      %v5187 = vunpack.c.h.b16 %v5152
      %v5188 = vunpack.c.l.b16 %v5153
      %v5189 = vunpack.c.h.b16 %v5153
      %v5190 = vunpack.c.l.b16 %v5154
      %v5191 = vunpack.c.h.b16 %v5154
      %v5192 = vunpack.c.l.b16 %v5155
      %v5193 = vunpack.c.h.b16 %v5155
      %v5194 = vunpack.c.l.b16 %v5156
      %v5195 = vunpack.c.h.b16 %v5156
      %v5196 = vunpack.c.l.b16 %v5157
      %v5197 = vunpack.c.h.b16 %v5157
      %v5198 = vunpack.c.l.b16 %v5158
      %v5199 = vunpack.c.h.b16 %v5158
      %v5200 = vunpack.c.l.b16 %v5159
      %v5201 = vunpack.c.h.b16 %v5159
      %v5202 = vunpack.c.l.b16 %v5160
      %v5203 = vunpack.c.h.b16 %v5160
      %v5204 = vunpack.c.l.b16 %v5161
      %v5205 = vunpack.c.h.b16 %v5161
      %v5206 = vunpack.c.l.b16 %v5162
      %v5207 = vunpack.c.h.b16 %v5162
      %v5208 = vunpack.c.l.b16 %v5163
      %v5209 = vunpack.c.h.b16 %v5163
      %v5210 = vunpack.c.l.b16 %v5164
      %v5211 = vunpack.c.h.b16 %v5164
      %v5212 = vunpack.c.l.b16 %v5165
      %v5213 = vunpack.c.h.b16 %v5165
      %v5214 = vpack.c.b16 %v5182, %v5182
      %v5215 = vpack.c.b16 %v5183, %v5183
      %v5216 = vpack.c.b16 %v5184, %v5184
      %v5217 = vpack.c.b16 %v5185, %v5185
      %v5218 = vpack.c.b16 %v5186, %v5186
      %v5219 = vpack.c.b16 %v5187, %v5187
      %v5220 = vpack.c.b16 %v5188, %v5188
      %v5221 = vpack.c.b16 %v5189, %v5189
      %v5222 = vpack.c.b16 %v5190, %v5190
      %v5223 = vpack.c.b16 %v5191, %v5191
      %v5224 = vpack.c.b16 %v5192, %v5192
      %v5225 = vpack.c.b16 %v5193, %v5193
      %v5226 = vpack.c.b16 %v5194, %v5194
      %v5227 = vpack.c.b16 %v5195, %v5195
      %v5228 = vpack.c.b16 %v5196, %v5196
      %v5229 = vpack.c.b16 %v5197, %v5197
      %v5230 = vpack.c.b16 %v5198, %v5198
      %v5231 = vpack.c.b16 %v5199, %v5199
      %v5232 = vpack.c.b16 %v5200, %v5200
      %v5233 = vpack.c.b16 %v5201, %v5201
      %v5234 = vpack.c.b16 %v5202, %v5202
      %v5235 = vpack.c.b16 %v5203, %v5203
      %v5236 = vpack.c.b16 %v5204, %v5204
      %v5237 = vpack.c.b16 %v5205, %v5205
      %v5238 = vpack.c.b16 %v5206, %v5206
      %v5239 = vpack.c.b16 %v5207, %v5207
      %v5240 = vpack.c.b16 %v5208, %v5208
      %v5241 = vpack.c.b16 %v5209, %v5209
      %v5242 = vpack.c.b16 %v5210, %v5210
      %v5243 = vpack.c.b16 %v5211, %v5211
      %v5244 = vpack.c.b16 %v5212, %v5212
      %v5245 = vpack.c.b16 %v5213, %v5213
      %5278 = vst [vmem:[%s197] sm:$0xf] %v5214
      %5279 = vst [vmem:[%s197 + $0x4] sm:$0xf] %v5215
      %5280 = vst [vmem:[%s197 + $0x8] sm:$0xf] %v5216
      %5281 = vst [vmem:[%s197 + $0xc] sm:$0xf] %v5217
      %5282 = vst [vmem:[%s197 + $0x10] sm:$0xf] %v5218
      %5283 = vst [vmem:[%s197 + $0x14] sm:$0xf] %v5219
      %5284 = vst [vmem:[%s197 + $0x18] sm:$0xf] %v5220
      %5285 = vst [vmem:[%s197 + $0x1c] sm:$0xf] %v5221
      %5286 = vst [vmem:[%s197 + $0x20] sm:$0xf] %v5222
      %5287 = vst [vmem:[%s197 + $0x24] sm:$0xf] %v5223
      %5288 = vst [vmem:[%s197 + $0x28] sm:$0xf] %v5224
      %5289 = vst [vmem:[%s197 + $0x2c] sm:$0xf] %v5225
      %5290 = vst [vmem:[%s197 + $0x30] sm:$0xf] %v5226
      %5291 = vst [vmem:[%s197 + $0x34] sm:$0xf] %v5227
      %5292 = vst [vmem:[%s197 + $0x38] sm:$0xf] %v5228
      %5293 = vst [vmem:[%s197 + $0x3c] sm:$0xf] %v5229
      %5294 = vst [vmem:[%s197 + $0x40] sm:$0xf] %v5230
      %5295 = vst [vmem:[%s197 + $0x44] sm:$0xf] %v5231
      %5296 = vst [vmem:[%s197 + $0x48] sm:$0xf] %v5232
      %5297 = vst [vmem:[%s197 + $0x4c] sm:$0xf] %v5233
      %5298 = vst [vmem:[%s197 + $0x50] sm:$0xf] %v5234
      %5299 = vst [vmem:[%s197 + $0x54] sm:$0xf] %v5235
      %5300 = vst [vmem:[%s197 + $0x58] sm:$0xf] %v5236
      %5301 = vst [vmem:[%s197 + $0x5c] sm:$0xf] %v5237
      %5302 = vst [vmem:[%s197 + $0x60] sm:$0xf] %v5238
      %5303 = vst [vmem:[%s197 + $0x64] sm:$0xf] %v5239
      %5304 = vst [vmem:[%s197 + $0x68] sm:$0xf] %v5240
      %5305 = vst [vmem:[%s197 + $0x6c] sm:$0xf] %v5241
      %5306 = vst [vmem:[%s197 + $0x70] sm:$0xf] %v5242
      %5307 = vst [vmem:[%s197 + $0x74] sm:$0xf] %v5243
      %5308 = vst [vmem:[%s197 + $0x78] sm:$0xf] %v5244
      %5309 = vst [vmem:[%s197 + $0x7c] sm:$0xf] %v5245
      %p5310 = scmp.lt.s32.totalorder %s15, 1
      %s5311 = scalar_select %p5310, %s15, 1
      %s5312 = smul.addr %s5311, 32
      %s5313 = smul.addr %s5312, 4
      %s5314 = scalar_lea.vmem %s4, %s5313
      // Predicated region
      $region37: #{basic_block_v3_forward.2} parent=35 // pred_check
        %p5315 = pneg %p122
      $region38: #{basic_block_v3_forward.2} parent=35 // pred_check_branch
        %5317 = sbr.rel (%p5315) target = $region40
      $region39: #{basic_block_v3_forward.2} parent=35 // pred_region
        _
      $region40: #{basic_block_v3_forward.2} parent=35 // pred_fallthru
        _
    $region36: #{basic_block_v3_forward.2} parent=5 // pred_fallthru
      _
    %p5318 = scmp.le.s32.totalorder 2, %s10
    // Predicated region
    $region41: #{basic_block_v3_forward.2} parent=5 // pred_check
      %p5319 = pneg %p5318
    $region42: #{basic_block_v3_forward.2} parent=5 // pred_check_branch
      %5321 = sbr.rel (%p5319) target = $region44
    $region43: #{basic_block_v3_forward.2} parent=5 // pred_region
      %s5322 = ssub.s32 %s10, 2
      // Predicated region
      $region45: #{basic_block_v3_forward.2} parent=43 // pred_check
        %p5323 = pneg %p128
      $region46: #{basic_block_v3_forward.2} parent=43 // pred_check_branch
        %5325 = sbr.rel (%p5323) target = $region48
      $region47: #{basic_block_v3_forward.2} parent=43 // pred_region
        %p5326 = scmp.lt.s32.totalorder %s16, 1
        %s5327 = scalar_select %p5326, %s16, 1
        %s5328 = smul.addr %s5327, 32
        %s5329 = smul.addr %s5328, 4
        %s5330 = scalar_lea.vmem %s4, %s5329
      $region48: #{basic_block_v3_forward.2} parent=43 // pred_fallthru
        _
    $region44: #{basic_block_v3_forward.2} parent=5 // pred_fallthru
      _
  $region6: #{basic_block_v3_forward.2} parent=0 // loop_footer
    %s14 = sadd.s32 1, %s10
  $region7: #{basic_block_v3_forward.2} parent=0 // loop_footer_branch
    %9 = sbr.rel target = $region3
  $region8: #{basic_block_v3_forward.2} parent=0 // loop_exit
    _

</llo_original>
